<compile_context>
chip_gen: v7x
topology: tpu7x:2x2x1
jax: 0.10.0
libtpu: 0.0.40
codegen_flags: <defaults>
</compile_context>

<pallas_src>
import functools

import jax
import jax.numpy as jnp
from jax.experimental import pallas as pl
from jax.experimental.pallas import tpu as pltpu


# bf16 MXU inputs on all TPU generations (f32 accumulate via
# preferred_element_type); epilogue math runs on the f32 accumulator.
_MXU_INPUT_DTYPE = jnp.bfloat16
_VMEM_LIMIT = 48 * 1024 * 1024


# ---------------------------------------------------------------------------
# helpers
# ---------------------------------------------------------------------------
def _round_up(x, m):
    return ((x + m - 1) // m) * m


def _choose_tm(m_rows):
    # Larger M tiles amortize per-grid-step overhead; keep >=2 tiles when the
    # row count allows so v7x's 2 TensorCores both get work.
    if m_rows >= 1024:
        return 512
    if m_rows >= 512:
        return 256
    return _round_up(min(m_rows, 256), 8)


# ---------------------------------------------------------------------------
# Pallas fused matmul + bias + activation (the hot path: every conv & resize)
# ---------------------------------------------------------------------------
def _make_mm_kernel(act, alpha):
    def kernel(a_ref, b_ref, bias_ref, o_ref):
        # Single full-extent K block -> no reduction grid axis, no accumulator
        # scratch, no ordering hazard.  bf16/f32 inputs, f32 accumulate on MXU.
        acc = jnp.dot(a_ref[...], b_ref[...],
                      preferred_element_type=jnp.float32)
        acc = acc + bias_ref[...]                 # (1, tn) broadcasts over rows
        if act == "lrelu":
            acc = jnp.where(acc >= 0, acc, alpha * acc)
        elif act == "relu":
            acc = jnp.maximum(acc, 0.0)
        elif act == "tanh":
            acc = jnp.tanh(acc)
        o_ref[...] = acc.astype(o_ref.dtype)
    return kernel


def pallas_matmul_bias_act(a, b, bias, act="none", alpha=0.2,
                           in_dtype=_MXU_INPUT_DTYPE,
                           out_dtype=_MXU_INPUT_DTYPE):
    """act(A @ B + bias).  K is a single full-extent block; N lane-dense."""
    M, K = a.shape
    K2, N = b.shape
    assert K == K2
    tm = _choose_tm(M)
    tn = 128
    Mp = _round_up(M, tm)
    k_align = 16 if in_dtype == jnp.bfloat16 else 8   # bf16 sublane packing
    Kp = _round_up(K, k_align)
    Np = _round_up(N, tn)                             # lane-dense output stores

    a_p = jnp.pad(a.astype(in_dtype), ((0, Mp - M), (0, Kp - K)))
    b_p = jnp.pad(b.astype(in_dtype), ((0, Kp - K), (0, Np - N)))
    bias_p = jnp.pad(bias.astype(jnp.float32), (0, Np - N)).reshape(1, Np)

    out = pl.pallas_call(
        _make_mm_kernel(act, alpha),
        out_shape=jax.ShapeDtypeStruct((Mp, Np), out_dtype),
        grid_spec=pl.GridSpec(
            grid=(Mp // tm, Np // tn),
            in_specs=[
                pl.BlockSpec((tm, Kp), lambda i, j: (i, 0)),
                pl.BlockSpec((Kp, tn), lambda i, j: (0, j)),
                pl.BlockSpec((1, tn), lambda i, j: (0, j)),
            ],
            out_specs=pl.BlockSpec((tm, tn), lambda i, j: (i, j)),
        ),
        compiler_params=pltpu.CompilerParams(
            dimension_semantics=("parallel", "parallel"),
            vmem_limit_bytes=_VMEM_LIMIT),
    )(a_p, b_p, bias_p)
    return out[:M, :N]


# ---------------------------------------------------------------------------
# conv2d (NCHW boundary) = im2col (glue) + fused Pallas matmul epilogue
# ---------------------------------------------------------------------------
def _im2col(x_nhwc, k, stride, pad):
    B, H, W, C = x_nhwc.shape
    xp = jnp.pad(x_nhwc, ((0, 0), (pad, pad), (pad, pad), (0, 0)))
    Ho = (H + 2 * pad - k) // stride + 1
    Wo = (W + 2 * pad - k) // stride + 1
    patches = []
    for di in range(k):
        for dj in range(k):
            patches.append(
                xp[:, di:di + stride * (Ho - 1) + 1:stride,
                      dj:dj + stride * (Wo - 1) + 1:stride, :])
    cols = jnp.concatenate(patches, axis=-1)          # [B,Ho,Wo,k*k*C]
    return cols.reshape(B * Ho * Wo, k * k * C), Ho, Wo


def conv2d_act(x_nchw, w, b, stride=1, pad=1, act="none",
               out_dtype=_MXU_INPUT_DTYPE):
    """PyTorch-style conv + fused bias + activation (single pallas_call)."""
    B, Cin, H, W = x_nchw.shape
    Cout, _, kh, kw = w.shape
    x_nhwc = jnp.transpose(x_nchw, (0, 2, 3, 1))
    cols, Ho, Wo = _im2col(x_nhwc, kh, stride, pad)
    w_mat = jnp.transpose(w, (2, 3, 1, 0)).reshape(kh * kw * Cin, Cout)
    y = pallas_matmul_bias_act(cols, w_mat, b, act=act, out_dtype=out_dtype)
    return jnp.transpose(y.reshape(B, Ho, Wo, Cout), (0, 3, 1, 2))


# ---------------------------------------------------------------------------
# bilinear F.interpolate(align_corners=True) = two separable fused matmuls
# (height pass then width pass; no dense Kronecker matrix is ever built)
# ---------------------------------------------------------------------------
def _resize_matrix(n_in, n_out):
    if n_out == 1:
        pos = jnp.zeros((1,), jnp.float32)
    else:
        pos = jnp.arange(n_out, dtype=jnp.float32) * (n_in - 1) / (n_out - 1)
    i0 = jnp.floor(pos)
    w1 = pos - i0
    i0 = jnp.clip(i0.astype(jnp.int32), 0, n_in - 1)
    i1 = jnp.clip(i0 + 1, 0, n_in - 1)
    return (jax.nn.one_hot(i0, n_in, dtype=jnp.float32) * (1.0 - w1)[:, None]
            + jax.nn.one_hot(i1, n_in, dtype=jnp.float32) * w1[:, None])


def interpolate_bilinear(x_nchw, size, compute_dtype=_MXU_INPUT_DTYPE,
                         out_dtype=None):
    B, C, Hin, Win = x_nchw.shape
    Ho, Wo = size
    out_dtype = compute_dtype if out_dtype is None else out_dtype
    A_h = _resize_matrix(Hin, Ho)                     # [Ho, Hin]
    A_w = _resize_matrix(Win, Wo)                     # [Wo, Win]
    zb_h = jnp.zeros((Ho,), jnp.float32)
    zb_w = jnp.zeros((Wo,), jnp.float32)
    # Height pass: contract Hin.
    xt = jnp.transpose(x_nchw, (0, 1, 3, 2)).reshape(B * C * Win, Hin)
    y = pallas_matmul_bias_act(xt, A_h.T, zb_h, act="none",
                               in_dtype=compute_dtype, out_dtype=compute_dtype)
    # Width pass: contract Win.
    y = jnp.transpose(y.reshape(B, C, Win, Ho), (0, 1, 3, 2))
    y = y.reshape(B * C * Ho, Win)
    z = pallas_matmul_bias_act(y, A_w.T, zb_w, act="none",
                               in_dtype=compute_dtype, out_dtype=out_dtype)
    return z.reshape(B, C, Ho, Wo)


# ---------------------------------------------------------------------------
# F.grid_sample(bilinear, zeros padding, align_corners=False)
# 4 integer taps + weights computed in the wrapper (f32); the sparse sampling
# matrix is built in VMEM inside the kernel (never in HBM), transposed so the
# MXU output is (C, HoWo_tile): lane-dense stores, channel-major result.
# Grid is (batch, output-tile), both "parallel".
# ---------------------------------------------------------------------------
def _grid_sample_taps(grid, Hin, Win):
    gx, gy = grid[..., 0], grid[..., 1]                # x = width, y = height
    x = (gx + 1.0) * Win / 2.0 - 0.5
    y = (gy + 1.0) * Hin / 2.0 - 0.5
    x0, y0 = jnp.floor(x), jnp.floor(y)
    x1, y1 = x0 + 1.0, y0 + 1.0
    wx1, wy1 = x - x0, y - y0
    wx0, wy0 = 1.0 - wx1, 1.0 - wy1

    taps, wts = [], []
    for xi, yi, wv in ((x0, y0, wx0 * wy0), (x1, y0, wx1 * wy0),
                       (x0, y1, wx0 * wy1), (x1, y1, wx1 * wy1)):
        valid = (xi >= 0) & (xi <= Win - 1) & (yi >= 0) & (yi <= Hin - 1)
        xi_c = jnp.clip(xi, 0, Win - 1).astype(jnp.int32)
        yi_c = jnp.clip(yi, 0, Hin - 1).astype(jnp.int32)
        taps.append(yi_c * Win + xi_c)
        wts.append(jnp.where(valid, wv, 0.0))

    B = gx.shape[0]
    idx = jnp.stack([t.reshape(B, -1) for t in taps], axis=1)      # (B,4,HoWo)
    w = jnp.stack([t.reshape(B, -1) for t in wts], axis=1)
    return idx.astype(jnp.int32), w.astype(jnp.float32)


def _grid_sample_kernel(x_ref, idx_ref, w_ref, o_ref):
    x = x_ref[0]                                       # (Cp, HinWin_p) bf16
    idx = idx_ref[0]                                   # (4, TQ) int32
    w = w_ref[0]                                       # (4, TQ) f32
    hinwin, tq = x.shape[1], idx.shape[1]
    rows = jax.lax.broadcasted_iota(jnp.int32, (hinwin, tq), 0)
    m = jnp.where(rows == idx[0:1, :], w[0:1, :], 0.0)
    for t in range(1, 4):                              # 4 bilinear taps
        m = m + jnp.where(rows == idx[t:t + 1, :], w[t:t + 1, :], 0.0)
    o_ref[0] = jnp.dot(x, m.astype(x.dtype),
                       preferred_element_type=jnp.float32).astype(o_ref.dtype)


def grid_sample(x_nchw, grid, out_dtype=_MXU_INPUT_DTYPE):
    B, C, Hin, Win = x_nchw.shape
    _, Ho, Wo, _ = grid.shape
    idx, w = _grid_sample_taps(grid.astype(jnp.float32), Hin, Win)

    HoWo, HinWin = Ho * Wo, Hin * Win
    TQ = min(512, _round_up(HoWo, 128))                # lane-dense output tile
    HoWo_p = _round_up(HoWo, TQ)
    HinWin_p = _round_up(HinWin, 128)
    Cp = _round_up(C, 8)

    # Channel-major (C on sublanes, spatial on lanes): no NHWC round trip.
    x_cm = x_nchw.reshape(B, C, HinWin).astype(_MXU_INPUT_DTYPE)
    x_cm = jnp.pad(x_cm, ((0, 0), (0, Cp - C), (0, HinWin_p - HinWin)))
    idx = jnp.pad(idx, ((0, 0), (0, 0), (0, HoWo_p - HoWo)))
    w = jnp.pad(w, ((0, 0), (0, 0), (0, HoWo_p - HoWo)))

    out = pl.pallas_call(
        _grid_sample_kernel,
        out_shape=jax.ShapeDtypeStruct((B, Cp, HoWo_p), out_dtype),
        grid_spec=pl.GridSpec(
            grid=(B, HoWo_p // TQ),
            in_specs=[
                pl.BlockSpec((1, Cp, HinWin_p), lambda b, q: (b, 0, 0)),
                pl.BlockSpec((1, 4, TQ), lambda b, q: (b, 0, q)),
                pl.BlockSpec((1, 4, TQ), lambda b, q: (b, 0, q)),
            ],
            out_specs=pl.BlockSpec((1, Cp, TQ), lambda b, q: (b, 0, q)),
        ),
        compiler_params=pltpu.CompilerParams(
            dimension_semantics=("parallel", "parallel"),
            vmem_limit_bytes=_VMEM_LIMIT),
    )(x_cm, idx, w)

    return out[:, :C, :HoWo].reshape(B, C, Ho, Wo)


# ---------------------------------------------------------------------------
# sub-networks (synthetic but deterministic weights; see TODO above)
# ---------------------------------------------------------------------------
def _conv_param(key, cout, cin, k=3):
    w = jax.random.normal(key, (cout, cin, k, k), jnp.float32) * 0.02
    b = jnp.zeros((cout,), jnp.float32)
    return w, b


def make_params(key, input_dim=3):
    ks = jax.random.split(key, 16)
    p = {}
    # content encoder: 3 -> 8 (s1) -> 16 (s2) -> 16 (s2)
    p['enc_c'] = dict(zip(['w1', 'b1', 'w2', 'b2', 'w3', 'b3'],
                          sum([list(_conv_param(ks[0], 8, input_dim)),
                               list(_conv_param(ks[1], 16, 8)),
                               list(_conv_param(ks[2], 16, 16))], [])))
    # attribute encoder: same shapes, different weights
    p['enc_a'] = dict(zip(['w1', 'b1', 'w2', 'b2', 'w3', 'b3'],
                          sum([list(_conv_param(ks[3], 8, input_dim)),
                               list(_conv_param(ks[4], 16, 8)),
                               list(_conv_param(ks[5], 16, 16))], [])))
    # generator: concat(16+16)=32 -> 16, res(16), up -> 8, up -> 3
    p['gen'] = dict(zip(['w1', 'b1', 'rw1', 'rb1', 'rw2', 'rb2',
                         'w2', 'b2', 'w3', 'b3'],
                        sum([list(_conv_param(ks[6], 16, 32)),
                             list(_conv_param(ks[7], 16, 16)),
                             list(_conv_param(ks[8], 16, 16)),
                             list(_conv_param(ks[9], 8, 16)),
                             list(_conv_param(ks[10], input_dim, 8))], [])))
    # semantic warp net: concat(6) -> 8 (s2) -> 4 (s2), tanh -> two 2-ch grids
    p['sem'] = dict(zip(['w1', 'b1', 'w2', 'b2'],
                        sum([list(_conv_param(ks[11], 8, 2 * input_dim)),
                             list(_conv_param(ks[12], 4, 8))], [])))
    return p


def enc_forward(p, x):
    # TODO(synk): fuse the whole encoder into one pallas_call with all weights
    # VMEM-resident (emit_pipeline over spatial tiles) at realistic crops.
    h = conv2d_act(x, p['w1'], p['b1'], stride=1, act='lrelu')
    h = conv2d_act(h, p['w2'], p['b2'], stride=2, act='lrelu')
    h = conv2d_act(h, p['w3'], p['b3'], stride=2, act='lrelu')
    return h


def gen_forward(p, content, attr):
    x = jnp.concatenate([content.astype(_MXU_INPUT_DTYPE),
                         attr.astype(_MXU_INPUT_DTYPE)], axis=1)
    h = conv2d_act(x, p['w1'], p['b1'], act='relu')
    r = conv2d_act(h, p['rw1'], p['rb1'], act='relu')
    r = conv2d_act(r, p['rw2'], p['rb2'], act='none')
    h = h + r
    h = interpolate_bilinear(h, (h.shape[2] * 2, h.shape[3] * 2))
    h = conv2d_act(h, p['w2'], p['b2'], act='relu')
    h = interpolate_bilinear(h, (h.shape[2] * 2, h.shape[3] * 2))
    # final tanh image stays f32 (module output)
    h = conv2d_act(h, p['w3'], p['b3'], act='tanh', out_dtype=jnp.float32)
    return h


def semantic_forward(p, src_norm, tgt_norm):
    x = jnp.concatenate([src_norm, tgt_norm], axis=1)
    h = conv2d_act(x, p['w1'], p['b1'], stride=2, act='lrelu')
    # warp grids stay f32 so sampling coordinates keep full precision
    h = conv2d_act(h, p['w2'], p['b2'], stride=2, act='tanh',
                   out_dtype=jnp.float32)                        # [B,4,fh,fw]
    grid_S2T = jnp.transpose(h[:, 0:2], (0, 2, 3, 1))            # [B,fh,fw,2]
    grid_T2S = jnp.transpose(h[:, 2:4], (0, 2, 3, 1))
    return {'grid_S2T': grid_S2T, 'grid_T2S': grid_T2S}


# ---------------------------------------------------------------------------
# MakeupGAN.forward (== test_pair_forward compute path)
# ---------------------------------------------------------------------------
def makeup_gan_forward(params, non_makeup, makeup, non_makeup_norm,
                       makeup_norm, crop_size):
    z_non_makeup_c = enc_forward(params['enc_c'], non_makeup)
    z_non_makeup_a = enc_forward(params['enc_a'], non_makeup)
    z_makeup_c = enc_forward(params['enc_c'], makeup)
    z_makeup_a = enc_forward(params['enc_a'], makeup)

    warp = semantic_forward(params['sem'], non_makeup_norm, makeup_norm)
    grid_S2T1 = jnp.transpose(warp['grid_S2T'], (0, 3, 1, 2))
    grid_T2S1 = jnp.transpose(warp['grid_T2S'], (0, 3, 1, 2))
    # warp-grid resizes run the f32 path (sampling coords need full precision)
    grid_S2T1 = interpolate_bilinear(grid_S2T1,
                                     (crop_size // 4, crop_size // 4),
                                     compute_dtype=jnp.float32)
    grid_T2S1 = interpolate_bilinear(grid_T2S1,
                                     (crop_size // 4, crop_size // 4),
                                     compute_dtype=jnp.float32)
    grid_S2T2 = interpolate_bilinear(grid_S2T1, (crop_size, crop_size),
                                     compute_dtype=jnp.float32)
    grid_T2S2 = interpolate_bilinear(grid_T2S1, (crop_size, crop_size),
                                     compute_dtype=jnp.float32)
    grid_S2T1 = jnp.transpose(grid_S2T1, (0, 2, 3, 1))
    grid_T2S1 = jnp.transpose(grid_T2S1, (0, 2, 3, 1))
    grid_S2T2 = jnp.transpose(grid_S2T2, (0, 2, 3, 1))
    grid_T2S2 = jnp.transpose(grid_T2S2, (0, 2, 3, 1))

    makeup_semantic = grid_sample(makeup, grid_S2T2, out_dtype=jnp.float32)
    non_makeup_semantic = grid_sample(non_makeup, grid_T2S2,
                                      out_dtype=jnp.float32)
    z_makeup_a = grid_sample(z_makeup_a, grid_S2T1)
    z_non_makeup_a = grid_sample(z_non_makeup_a, grid_T2S1)

    z_transfer = gen_forward(params['gen'], z_non_makeup_c, z_makeup_a)
    z_removal = gen_forward(params['gen'], z_makeup_c, z_non_makeup_a)

    z_transfer_c = enc_forward(params['enc_c'], z_transfer)
    z_transfer_a = enc_forward(params['enc_a'], z_transfer)
    z_removal_c = enc_forward(params['enc_c'], z_removal)
    z_removal_a = enc_forward(params['enc_a'], z_removal)

    z_removal_a = grid_sample(z_removal_a, grid_S2T1)
    z_transfer_a = grid_sample(z_transfer_a, grid_T2S1)

    z_cycle_non_makeup = gen_forward(params['gen'], z_transfer_c, z_removal_a)
    z_cycle_makeup = gen_forward(params['gen'], z_removal_c, z_transfer_a)

    return {
        'z_transfer': z_transfer,
        'z_removal': z_removal,
        'z_cycle_non_makeup': z_cycle_non_makeup,
        'z_cycle_makeup': z_cycle_makeup,
        'makeup_semantic': makeup_semantic,
        'non_makeup_semantic': non_makeup_semantic,
    }


if __name__ == "__main__":
    B, C, CROP = 2, 3, 16          # small shapes: batch=2, RGB, 16x16 crop
    key = jax.random.PRNGKey(0)
    kp, k1, k2, k3, k4 = jax.random.split(key, 5)

    params = make_params(kp, input_dim=C)
    non_makeup = jax.random.uniform(k1, (B, C, CROP, CROP), jnp.float32, -1, 1)
    makeup = jax.random.uniform(k2, (B, C, CROP, CROP), jnp.float32, -1, 1)
    non_makeup_norm = jax.random.uniform(k3, (B, C, CROP, CROP), jnp.float32, -1, 1)
    makeup_norm = jax.random.uniform(k4, (B, C, CROP, CROP), jnp.float32, -1, 1)

    fwd = jax.jit(functools.partial(makeup_gan_forward, crop_size=CROP))
    out = fwd(params, non_makeup, makeup, non_makeup_norm, makeup_norm)
    jax.block_until_ready(out)

    assert out['z_transfer'].shape == (B, C, CROP, CROP)
    assert out['z_removal'].shape == (B, C, CROP, CROP)
    assert out['z_cycle_non_makeup'].shape == (B, C, CROP, CROP)
    assert out['z_cycle_makeup'].shape == (B, C, CROP, CROP)
    assert out['makeup_semantic'].shape == (B, C, CROP, CROP)
    assert out['non_makeup_semantic'].shape == (B, C, CROP, CROP)
    assert bool(jnp.all(jnp.isfinite(out['z_transfer'])))
    assert bool(jnp.all(jnp.isfinite(out['makeup_semantic'])))
    print("KERNEL_OK")
</pallas_src>

<mosaic_0001>
module attributes {stable_mosaic.version = 11 : i64} {
  func.func @kernel(%arg0: i32, %arg1: i32, %arg2: memref<128x64xbf16, #tpu.memory_space<vmem>>, %arg3: memref<64x128xbf16, #tpu.memory_space<vmem>>, %arg4: memref<1x128xf32, #tpu.memory_space<vmem>>, %arg5: memref<128x128xbf16, #tpu.memory_space<vmem>>) attributes {dimension_semantics = [#tpu.dimension_semantics<parallel>, #tpu.dimension_semantics<parallel>], iteration_bounds = array<i64: 1, 1>, scalar_prefetch = 0 : i64, scratch_operands = 0 : i64, tpu.core_type = #tpu.core_type<tc>, window_params = [{transform_indices = @transform_0, window_bounds = array<i64: 128, 64>}, {transform_indices = @transform_1, window_bounds = array<i64: 64, 128>}, {transform_indices = @transform_2, window_bounds = array<i64: 1, 128>}, {transform_indices = @transform_3, window_bounds = array<i64: 128, 128>}]} {
    %c0 = arith.constant 0 : index
    %c0_0 = arith.constant 0 : index
    %0 = vector.load %arg2[%c0, %c0_0] : memref<128x64xbf16, #tpu.memory_space<vmem>>, vector<128x64xbf16>
    %c0_1 = arith.constant 0 : index
    %c0_2 = arith.constant 0 : index
    %1 = vector.load %arg3[%c0_1, %c0_2] : memref<64x128xbf16, #tpu.memory_space<vmem>>, vector<64x128xbf16>
    %cst = arith.constant dense<0.000000e+00> : vector<128x128xf32>
    %2 = tpu.matmul %0, %1, %cst {dimension_numbers = #tpu.dot_dimension_numbers<[1], [0], [0], [1], [0, 0, 1, 1], [], []>} : vector<128x64xbf16>, vector<64x128xbf16>, vector<128x128xf32> -> vector<128x128xf32>
    %c0_3 = arith.constant 0 : index
    %c0_4 = arith.constant 0 : index
    %3 = vector.load %arg4[%c0_3, %c0_4] : memref<1x128xf32, #tpu.memory_space<vmem>>, vector<1x128xf32>
    %4 = vector.broadcast %3 : vector<1x128xf32> to vector<128x128xf32>
    %5 = arith.addf %2, %4 : vector<128x128xf32>
    %cst_5 = arith.constant 0.000000e+00 : f32
    %6 = vector.broadcast %cst_5 : f32 to vector<128x128xf32>
    %7 = arith.cmpf oge, %5, %6 : vector<128x128xf32>
    %cst_6 = arith.constant 2.000000e-01 : f32
    %8 = vector.broadcast %cst_6 : f32 to vector<128x128xf32>
    %9 = arith.mulf %8, %5 : vector<128x128xf32>
    %10 = arith.select %7, %5, %9 : vector<128x128xi1>, vector<128x128xf32>
    %11 = arith.truncf %10 : vector<128x128xf32> to vector<128x128xbf16>
    %c0_7 = arith.constant 0 : index
    %c0_8 = arith.constant 0 : index
    %12 = vector.load %arg5[%c0_7, %c0_8] : memref<128x128xbf16, #tpu.memory_space<vmem>>, vector<128x128xbf16>
    tpu.vector_store %arg5[%c0_7, %c0_8], %11 {strides = array<i32>} : memref<128x128xbf16, #tpu.memory_space<vmem>>, vector<128x128xbf16>,
    return
  }
  func.func @transform_0(%arg0: i32, %arg1: i32) -> (i32, i32) {
    %c0_i32 = arith.constant 0 : i32
    %c0_i32_0 = arith.constant 0 : i32
    return %arg0, %c0_i32 : i32, i32
  }
  func.func @transform_1(%arg0: i32, %arg1: i32) -> (i32, i32) {
    %c0_i32 = arith.constant 0 : i32
    %c0_i32_0 = arith.constant 0 : i32
    return %c0_i32, %arg1 : i32, i32
  }
  func.func @transform_2(%arg0: i32, %arg1: i32) -> (i32, i32) {
    %c0_i32 = arith.constant 0 : i32
    %c0_i32_0 = arith.constant 0 : i32
    return %c0_i32, %arg1 : i32, i32
  }
  func.func @transform_3(%arg0: i32, %arg1: i32) -> (i32, i32) {
    %c0_i32 = arith.constant 0 : i32
    return %arg0, %arg1 : i32, i32
  }
}

module attributes {stable_mosaic.version = 11 : i64} {
  func.func @kernel(%arg0: i32, %arg1: i32, %arg2: memref<32x80xbf16, #tpu.memory_space<vmem>>, %arg3: memref<80x128xbf16, #tpu.memory_space<vmem>>, %arg4: memref<1x128xf32, #tpu.memory_space<vmem>>, %arg5: memref<32x128xf32, #tpu.memory_space<vmem>>) attributes {dimension_semantics = [#tpu.dimension_semantics<parallel>, #tpu.dimension_semantics<parallel>], iteration_bounds = array<i64: 1, 1>, scalar_prefetch = 0 : i64, scratch_operands = 0 : i64, tpu.core_type = #tpu.core_type<tc>, window_params = [{transform_indices = @transform_0, window_bounds = array<i64: 32, 80>}, {transform_indices = @transform_1, window_bounds = array<i64: 80, 128>}, {transform_indices = @transform_2, window_bounds = array<i64: 1, 128>}, {transform_indices = @transform_3, window_bounds = array<i64: 32, 128>}]} {
    %c0 = arith.constant 0 : index
    %c0_0 = arith.constant 0 : index
    %0 = vector.load %arg2[%c0, %c0_0] : memref<32x80xbf16, #tpu.memory_space<vmem>>, vector<32x80xbf16>
    %c0_1 = arith.constant 0 : index
    %c0_2 = arith.constant 0 : index
    %1 = vector.load %arg3[%c0_1, %c0_2] : memref<80x128xbf16, #tpu.memory_space<vmem>>, vector<80x128xbf16>
    %cst = arith.constant dense<0.000000e+00> : vector<32x128xf32>
    %2 = tpu.matmul %0, %1, %cst {dimension_numbers = #tpu.dot_dimension_numbers<[1], [0], [0], [1], [0, 0, 1, 1], [], []>} : vector<32x80xbf16>, vector<80x128xbf16>, vector<32x128xf32> -> vector<32x128xf32>
    %c0_3 = arith.constant 0 : index
    %c0_4 = arith.constant 0 : index
    %3 = vector.load %arg4[%c0_3, %c0_4] : memref<1x128xf32, #tpu.memory_space<vmem>>, vector<1x128xf32>
    %4 = vector.broadcast %3 : vector<1x128xf32> to vector<32x128xf32>
    %5 = arith.addf %2, %4 : vector<32x128xf32>
    %6 = math.tanh %5 : vector<32x128xf32>
    %c0_5 = arith.constant 0 : index
    %c0_6 = arith.constant 0 : index
    %7 = vector.load %arg5[%c0_5, %c0_6] : memref<32x128xf32, #tpu.memory_space<vmem>>, vector<32x128xf32>
    tpu.vector_store %arg5[%c0_5, %c0_6], %6 {strides = array<i32>} : memref<32x128xf32, #tpu.memory_space<vmem>>, vector<32x128xf32>,
    return
  }
  func.func @transform_0(%arg0: i32, %arg1: i32) -> (i32, i32) {
    %c0_i32 = arith.constant 0 : i32
    %c0_i32_0 = arith.constant 0 : i32
    return %arg0, %c0_i32 : i32, i32
  }
  func.func @transform_1(%arg0: i32, %arg1: i32) -> (i32, i32) {
    %c0_i32 = arith.constant 0 : i32
    %c0_i32_0 = arith.constant 0 : i32
    return %c0_i32, %arg1 : i32, i32
  }
  func.func @transform_2(%arg0: i32, %arg1: i32) -> (i32, i32) {
    %c0_i32 = arith.constant 0 : i32
    %c0_i32_0 = arith.constant 0 : i32
    return %c0_i32, %arg1 : i32, i32
  }
  func.func @transform_3(%arg0: i32, %arg1: i32) -> (i32, i32) {
    %c0_i32 = arith.constant 0 : i32
    return %arg0, %arg1 : i32, i32
  }
}

module attributes {stable_mosaic.version = 11 : i64} {
  func.func @kernel(%arg0: i32, %arg1: i32, %arg2: memref<16x8xf32, #tpu.memory_space<vmem>>, %arg3: memref<8x128xf32, #tpu.memory_space<vmem>>, %arg4: memref<1x128xf32, #tpu.memory_space<vmem>>, %arg5: memref<16x128xf32, #tpu.memory_space<vmem>>) attributes {dimension_semantics = [#tpu.dimension_semantics<parallel>, #tpu.dimension_semantics<parallel>], iteration_bounds = array<i64: 1, 1>, scalar_prefetch = 0 : i64, scratch_operands = 0 : i64, tpu.core_type = #tpu.core_type<tc>, window_params = [{transform_indices = @transform_0, window_bounds = array<i64: 16, 8>}, {transform_indices = @transform_1, window_bounds = array<i64: 8, 128>}, {transform_indices = @transform_2, window_bounds = array<i64: 1, 128>}, {transform_indices = @transform_3, window_bounds = array<i64: 16, 128>}]} {
    %c0 = arith.constant 0 : index
    %c0_0 = arith.constant 0 : index
    %0 = vector.load %arg2[%c0, %c0_0] : memref<16x8xf32, #tpu.memory_space<vmem>>, vector<16x8xf32>
    %c0_1 = arith.constant 0 : index
    %c0_2 = arith.constant 0 : index
    %1 = vector.load %arg3[%c0_1, %c0_2] : memref<8x128xf32, #tpu.memory_space<vmem>>, vector<8x128xf32>
    %cst = arith.constant dense<0.000000e+00> : vector<16x128xf32>
    %2 = tpu.matmul %0, %1, %cst {dimension_numbers = #tpu.dot_dimension_numbers<[1], [0], [0], [1], [0, 0, 1, 1], [], []>} : vector<16x8xf32>, vector<8x128xf32>, vector<16x128xf32> -> vector<16x128xf32>
    %c0_3 = arith.constant 0 : index
    %c0_4 = arith.constant 0 : index
    %3 = vector.load %arg4[%c0_3, %c0_4] : memref<1x128xf32, #tpu.memory_space<vmem>>, vector<1x128xf32>
    %4 = vector.broadcast %3 : vector<1x128xf32> to vector<16x128xf32>
    %5 = arith.addf %2, %4 : vector<16x128xf32>
    %c0_5 = arith.constant 0 : index
    %c0_6 = arith.constant 0 : index
    %6 = vector.load %arg5[%c0_5, %c0_6] : memref<16x128xf32, #tpu.memory_space<vmem>>, vector<16x128xf32>
    tpu.vector_store %arg5[%c0_5, %c0_6], %5 {strides = array<i32>} : memref<16x128xf32, #tpu.memory_space<vmem>>, vector<16x128xf32>,
    return
  }
  func.func @transform_0(%arg0: i32, %arg1: i32) -> (i32, i32) {
    %c0_i32 = arith.constant 0 : i32
    %c0_i32_0 = arith.constant 0 : i32
    return %arg0, %c0_i32 : i32, i32
  }
  func.func @transform_1(%arg0: i32, %arg1: i32) -> (i32, i32) {
    %c0_i32 = arith.constant 0 : i32
    %c0_i32_0 = arith.constant 0 : i32
    return %c0_i32, %arg1 : i32, i32
  }
  func.func @transform_2(%arg0: i32, %arg1: i32) -> (i32, i32) {
    %c0_i32 = arith.constant 0 : i32
    %c0_i32_0 = arith.constant 0 : i32
    return %c0_i32, %arg1 : i32, i32
  }
  func.func @transform_3(%arg0: i32, %arg1: i32) -> (i32, i32) {
    %c0_i32 = arith.constant 0 : i32
    return %arg0, %arg1 : i32, i32
  }
}

module attributes {stable_mosaic.version = 11 : i64} {
  func.func @kernel(%arg0: i32, %arg1: i32, %arg2: memref<64x8xf32, #tpu.memory_space<vmem>>, %arg3: memref<8x128xf32, #tpu.memory_space<vmem>>, %arg4: memref<1x128xf32, #tpu.memory_space<vmem>>, %arg5: memref<64x128xf32, #tpu.memory_space<vmem>>) attributes {dimension_semantics = [#tpu.dimension_semantics<parallel>, #tpu.dimension_semantics<parallel>], iteration_bounds = array<i64: 1, 1>, scalar_prefetch = 0 : i64, scratch_operands = 0 : i64, tpu.core_type = #tpu.core_type<tc>, window_params = [{transform_indices = @transform_0, window_bounds = array<i64: 64, 8>}, {transform_indices = @transform_1, window_bounds = array<i64: 8, 128>}, {transform_indices = @transform_2, window_bounds = array<i64: 1, 128>}, {transform_indices = @transform_3, window_bounds = array<i64: 64, 128>}]} {
    %c0 = arith.constant 0 : index
    %c0_0 = arith.constant 0 : index
    %0 = vector.load %arg2[%c0, %c0_0] : memref<64x8xf32, #tpu.memory_space<vmem>>, vector<64x8xf32>
    %c0_1 = arith.constant 0 : index
    %c0_2 = arith.constant 0 : index
    %1 = vector.load %arg3[%c0_1, %c0_2] : memref<8x128xf32, #tpu.memory_space<vmem>>, vector<8x128xf32>
    %cst = arith.constant dense<0.000000e+00> : vector<64x128xf32>
    %2 = tpu.matmul %0, %1, %cst {dimension_numbers = #tpu.dot_dimension_numbers<[1], [0], [0], [1], [0, 0, 1, 1], [], []>} : vector<64x8xf32>, vector<8x128xf32>, vector<64x128xf32> -> vector<64x128xf32>
    %c0_3 = arith.constant 0 : index
    %c0_4 = arith.constant 0 : index
    %3 = vector.load %arg4[%c0_3, %c0_4] : memref<1x128xf32, #tpu.memory_space<vmem>>, vector<1x128xf32>
    %4 = vector.broadcast %3 : vector<1x128xf32> to vector<64x128xf32>
    %5 = arith.addf %2, %4 : vector<64x128xf32>
    %c0_5 = arith.constant 0 : index
    %c0_6 = arith.constant 0 : index
    %6 = vector.load %arg5[%c0_5, %c0_6] : memref<64x128xf32, #tpu.memory_space<vmem>>, vector<64x128xf32>
    tpu.vector_store %arg5[%c0_5, %c0_6], %5 {strides = array<i32>} : memref<64x128xf32, #tpu.memory_space<vmem>>, vector<64x128xf32>,
    return
  }
  func.func @transform_0(%arg0: i32, %arg1: i32) -> (i32, i32) {
    %c0_i32 = arith.constant 0 : i32
    %c0_i32_0 = arith.constant 0 : i32
    return %arg0, %c0_i32 : i32, i32
  }
  func.func @transform_1(%arg0: i32, %arg1: i32) -> (i32, i32) {
    %c0_i32 = arith.constant 0 : i32
    %c0_i32_0 = arith.constant 0 : i32
    return %c0_i32, %arg1 : i32, i32
  }
  func.func @transform_2(%arg0: i32, %arg1: i32) -> (i32, i32) {
    %c0_i32 = arith.constant 0 : i32
    %c0_i32_0 = arith.constant 0 : i32
    return %c0_i32, %arg1 : i32, i32
  }
  func.func @transform_3(%arg0: i32, %arg1: i32) -> (i32, i32) {
    %c0_i32 = arith.constant 0 : i32
    return %arg0, %arg1 : i32, i32
  }
}

module attributes {stable_mosaic.version = 11 : i64} {
  func.func @_grid_sample_kernel(%arg0: i32, %arg1: i32, %arg2: memref<1x8x256xbf16, #tpu.memory_space<vmem>>, %arg3: memref<1x4x256xi32, #tpu.memory_space<vmem>>, %arg4: memref<1x4x256xf32, #tpu.memory_space<vmem>>, %arg5: memref<1x8x256xf32, #tpu.memory_space<vmem>>) attributes {dimension_semantics = [#tpu.dimension_semantics<parallel>, #tpu.dimension_semantics<parallel>], iteration_bounds = array<i64: 2, 1>, scalar_prefetch = 0 : i64, scratch_operands = 0 : i64, tpu.core_type = #tpu.core_type<tc>, window_params = [{transform_indices = @transform_0, window_bounds = array<i64: 1, 8, 256>}, {transform_indices = @transform_1, window_bounds = array<i64: 1, 4, 256>}, {transform_indices = @transform_2, window_bounds = array<i64: 1, 4, 256>}, {transform_indices = @transform_3, window_bounds = array<i64: 1, 8, 256>}]} {
    %c0 = arith.constant 0 : index
    %c0_0 = arith.constant 0 : index
    %c0_1 = arith.constant 0 : index
    %0 = vector.load %arg2[%c0, %c0_0, %c0_1] : memref<1x8x256xbf16, #tpu.memory_space<vmem>>, vector<1x8x256xbf16>
    %1 = vector.shape_cast %0 : vector<1x8x256xbf16> to vector<8x256xbf16>
    %c0_2 = arith.constant 0 : index
    %c0_3 = arith.constant 0 : index
    %c0_4 = arith.constant 0 : index
    %2 = vector.load %arg3[%c0_2, %c0_3, %c0_4] : memref<1x4x256xi32, #tpu.memory_space<vmem>>, vector<1x4x256xi32>
    %3 = vector.shape_cast %2 : vector<1x4x256xi32> to vector<4x256xi32>
    %c0_5 = arith.constant 0 : index
    %c0_6 = arith.constant 0 : index
    %c0_7 = arith.constant 0 : index
    %4 = vector.load %arg4[%c0_5, %c0_6, %c0_7] : memref<1x4x256xf32, #tpu.memory_space<vmem>>, vector<1x4x256xf32>
    %5 = vector.shape_cast %4 : vector<1x4x256xf32> to vector<4x256xf32>
    %6 = tpu.iota {dimensions = array<i32: 0>} : vector<256x256xi32>
    %7 = vector.extract_strided_slice %3 {offsets = [0, 0], sizes = [1, 256], strides = [1, 1]} : vector<4x256xi32> to vector<1x256xi32>
    %8 = vector.broadcast %7 : vector<1x256xi32> to vector<256x256xi32>
    %9 = arith.cmpi eq, %6, %8 : vector<256x256xi32>
    %10 = vector.extract_strided_slice %5 {offsets = [0, 0], sizes = [1, 256], strides = [1, 1]} : vector<4x256xf32> to vector<1x256xf32>
    %cst = arith.constant 0.000000e+00 : f32
    %11 = vector.shape_cast %10 : vector<1x256xf32> to vector<1x256xf32>
    %12 = vector.broadcast %11 : vector<1x256xf32> to vector<256x256xf32>
    %13 = vector.broadcast %cst : f32 to vector<256x256xf32>
    %14 = arith.select %9, %12, %13 : vector<256x256xi1>, vector<256x256xf32>
    %15 = vector.extract_strided_slice %3 {offsets = [1, 0], sizes = [1, 256], strides = [1, 1]} : vector<4x256xi32> to vector<1x256xi32>
    %16 = vector.broadcast %15 : vector<1x256xi32> to vector<256x256xi32>
    %17 = arith.cmpi eq, %6, %16 : vector<256x256xi32>
    %18 = vector.extract_strided_slice %5 {offsets = [1, 0], sizes = [1, 256], strides = [1, 1]} : vector<4x256xf32> to vector<1x256xf32>
    %cst_8 = arith.constant 0.000000e+00 : f32
    %19 = vector.shape_cast %18 : vector<1x256xf32> to vector<1x256xf32>
    %20 = vector.broadcast %19 : vector<1x256xf32> to vector<256x256xf32>
    %21 = vector.broadcast %cst_8 : f32 to vector<256x256xf32>
    %22 = arith.select %17, %20, %21 : vector<256x256xi1>, vector<256x256xf32>
    %23 = arith.addf %14, %22 : vector<256x256xf32>
    %24 = vector.extract_strided_slice %3 {offsets = [2, 0], sizes = [1, 256], strides = [1, 1]} : vector<4x256xi32> to vector<1x256xi32>
    %25 = vector.broadcast %24 : vector<1x256xi32> to vector<256x256xi32>
    %26 = arith.cmpi eq, %6, %25 : vector<256x256xi32>
    %27 = vector.extract_strided_slice %5 {offsets = [2, 0], sizes = [1, 256], strides = [1, 1]} : vector<4x256xf32> to vector<1x256xf32>
    %cst_9 = arith.constant 0.000000e+00 : f32
    %28 = vector.shape_cast %27 : vector<1x256xf32> to vector<1x256xf32>
    %29 = vector.broadcast %28 : vector<1x256xf32> to vector<256x256xf32>
    %30 = vector.broadcast %cst_9 : f32 to vector<256x256xf32>
    %31 = arith.select %26, %29, %30 : vector<256x256xi1>, vector<256x256xf32>
    %32 = arith.addf %23, %31 : vector<256x256xf32>
    %33 = vector.extract_strided_slice %3 {offsets = [3, 0], sizes = [1, 256], strides = [1, 1]} : vector<4x256xi32> to vector<1x256xi32>
    %34 = vector.broadcast %33 : vector<1x256xi32> to vector<256x256xi32>
    %35 = arith.cmpi eq, %6, %34 : vector<256x256xi32>
    %36 = vector.extract_strided_slice %5 {offsets = [3, 0], sizes = [1, 256], strides = [1, 1]} : vector<4x256xf32> to vector<1x256xf32>
    %cst_10 = arith.constant 0.000000e+00 : f32
    %37 = vector.shape_cast %36 : vector<1x256xf32> to vector<1x256xf32>
    %38 = vector.broadcast %37 : vector<1x256xf32> to vector<256x256xf32>
    %39 = vector.broadcast %cst_10 : f32 to vector<256x256xf32>
    %40 = arith.select %35, %38, %39 : vector<256x256xi1>, vector<256x256xf32>
    %41 = arith.addf %32, %40 : vector<256x256xf32>
    %42 = arith.truncf %41 : vector<256x256xf32> to vector<256x256xbf16>
    %cst_11 = arith.constant dense<0.000000e+00> : vector<8x256xf32>
    %43 = tpu.matmul %1, %42, %cst_11 {dimension_numbers = #tpu.dot_dimension_numbers<[1], [0], [0], [1], [0, 0, 1, 1], [], []>} : vector<8x256xbf16>, vector<256x256xbf16>, vector<8x256xf32> -> vector<8x256xf32>
    %c0_12 = arith.constant 0 : index
    %c0_13 = arith.constant 0 : index
    %c0_14 = arith.constant 0 : index
    %44 = vector.load %arg5[%c0_12, %c0_13, %c0_14] : memref<1x8x256xf32, #tpu.memory_space<vmem>>, vector<1x8x256xf32>
    %45 = vector.shape_cast %44 : vector<1x8x256xf32> to vector<8x256xf32>
    %46 = vector.shape_cast %43 : vector<8x256xf32> to vector<1x8x256xf32>
    tpu.vector_store %arg5[%c0_12, %c0_13, %c0_14], %46 {strides = array<i32>} : memref<1x8x256xf32, #tpu.memory_space<vmem>>, vector<1x8x256xf32>,
    return
  }
  func.func @transform_0(%arg0: i32, %arg1: i32) -> (i32, i32, i32) {
    %c0_i32 = arith.constant 0 : i32
    %c0_i32_0 = arith.constant 0 : i32
    %c0_i32_1 = arith.constant 0 : i32
    return %arg0, %c0_i32, %c0_i32_0 : i32, i32, i32
  }
  func.func @transform_1(%arg0: i32, %arg1: i32) -> (i32, i32, i32) {
    %c0_i32 = arith.constant 0 : i32
    %c0_i32_0 = arith.constant 0 : i32
    return %arg0, %c0_i32, %arg1 : i32, i32, i32
  }
  func.func @transform_2(%arg0: i32, %arg1: i32) -> (i32, i32, i32) {
    %c0_i32 = arith.constant 0 : i32
    %c0_i32_0 = arith.constant 0 : i32
    return %arg0, %c0_i32, %arg1 : i32, i32, i32
  }
  func.func @transform_3(%arg0: i32, %arg1: i32) -> (i32, i32, i32) {
    %c0_i32 = arith.constant 0 : i32
    %c0_i32_0 = arith.constant 0 : i32
    return %arg0, %c0_i32, %arg1 : i32, i32, i32
  }
}

module attributes {stable_mosaic.version = 11 : i64} {
  func.func @kernel(%arg0: i32, %arg1: i32, %arg2: memref<256x32xbf16, #tpu.memory_space<vmem>>, %arg3: memref<32x128xbf16, #tpu.memory_space<vmem>>, %arg4: memref<1x128xf32, #tpu.memory_space<vmem>>, %arg5: memref<256x128xbf16, #tpu.memory_space<vmem>>) attributes {dimension_semantics = [#tpu.dimension_semantics<parallel>, #tpu.dimension_semantics<parallel>], iteration_bounds = array<i64: 2, 1>, scalar_prefetch = 0 : i64, scratch_operands = 0 : i64, tpu.core_type = #tpu.core_type<tc>, window_params = [{transform_indices = @transform_0, window_bounds = array<i64: 256, 32>}, {transform_indices = @transform_1, window_bounds = array<i64: 32, 128>}, {transform_indices = @transform_2, window_bounds = array<i64: 1, 128>}, {transform_indices = @transform_3, window_bounds = array<i64: 256, 128>}]} {
    %c0 = arith.constant 0 : index
    %c0_0 = arith.constant 0 : index
    %0 = vector.load %arg2[%c0, %c0_0] : memref<256x32xbf16, #tpu.memory_space<vmem>>, vector<256x32xbf16>
    %c0_1 = arith.constant 0 : index
    %c0_2 = arith.constant 0 : index
    %1 = vector.load %arg3[%c0_1, %c0_2] : memref<32x128xbf16, #tpu.memory_space<vmem>>, vector<32x128xbf16>
    %cst = arith.constant dense<0.000000e+00> : vector<256x128xf32>
    %2 = tpu.matmul %0, %1, %cst {dimension_numbers = #tpu.dot_dimension_numbers<[1], [0], [0], [1], [0, 0, 1, 1], [], []>} : vector<256x32xbf16>, vector<32x128xbf16>, vector<256x128xf32> -> vector<256x128xf32>
    %c0_3 = arith.constant 0 : index
    %c0_4 = arith.constant 0 : index
    %3 = vector.load %arg4[%c0_3, %c0_4] : memref<1x128xf32, #tpu.memory_space<vmem>>, vector<1x128xf32>
    %4 = vector.broadcast %3 : vector<1x128xf32> to vector<256x128xf32>
    %5 = arith.addf %2, %4 : vector<256x128xf32>
    %cst_5 = arith.constant 0.000000e+00 : f32
    %6 = vector.broadcast %cst_5 : f32 to vector<256x128xf32>
    %7 = arith.cmpf oge, %5, %6 : vector<256x128xf32>
    %cst_6 = arith.constant 2.000000e-01 : f32
    %8 = vector.broadcast %cst_6 : f32 to vector<256x128xf32>
    %9 = arith.mulf %8, %5 : vector<256x128xf32>
    %10 = arith.select %7, %5, %9 : vector<256x128xi1>, vector<256x128xf32>
    %11 = arith.truncf %10 : vector<256x128xf32> to vector<256x128xbf16>
    %c0_7 = arith.constant 0 : index
    %c0_8 = arith.constant 0 : index
    %12 = vector.load %arg5[%c0_7, %c0_8] : memref<256x128xbf16, #tpu.memory_space<vmem>>, vector<256x128xbf16>
    tpu.vector_store %arg5[%c0_7, %c0_8], %11 {strides = array<i32>} : memref<256x128xbf16, #tpu.memory_space<vmem>>, vector<256x128xbf16>,
    return
  }
  func.func @transform_0(%arg0: i32, %arg1: i32) -> (i32, i32) {
    %c0_i32 = arith.constant 0 : i32
    %c0_i32_0 = arith.constant 0 : i32
    return %arg0, %c0_i32 : i32, i32
  }
  func.func @transform_1(%arg0: i32, %arg1: i32) -> (i32, i32) {
    %c0_i32 = arith.constant 0 : i32
    %c0_i32_0 = arith.constant 0 : i32
    return %c0_i32, %arg1 : i32, i32
  }
  func.func @transform_2(%arg0: i32, %arg1: i32) -> (i32, i32) {
    %c0_i32 = arith.constant 0 : i32
    %c0_i32_0 = arith.constant 0 : i32
    return %c0_i32, %arg1 : i32, i32
  }
  func.func @transform_3(%arg0: i32, %arg1: i32) -> (i32, i32) {
    %c0_i32 = arith.constant 0 : i32
    return %arg0, %arg1 : i32, i32
  }
}

module attributes {stable_mosaic.version = 11 : i64} {
  func.func @kernel(%arg0: i32, %arg1: i32, %arg2: memref<128x80xbf16, #tpu.memory_space<vmem>>, %arg3: memref<80x128xbf16, #tpu.memory_space<vmem>>, %arg4: memref<1x128xf32, #tpu.memory_space<vmem>>, %arg5: memref<128x128xbf16, #tpu.memory_space<vmem>>) attributes {dimension_semantics = [#tpu.dimension_semantics<parallel>, #tpu.dimension_semantics<parallel>], iteration_bounds = array<i64: 1, 1>, scalar_prefetch = 0 : i64, scratch_operands = 0 : i64, tpu.core_type = #tpu.core_type<tc>, window_params = [{transform_indices = @transform_0, window_bounds = array<i64: 128, 80>}, {transform_indices = @transform_1, window_bounds = array<i64: 80, 128>}, {transform_indices = @transform_2, window_bounds = array<i64: 1, 128>}, {transform_indices = @transform_3, window_bounds = array<i64: 128, 128>}]} {
    %c0 = arith.constant 0 : index
    %c0_0 = arith.constant 0 : index
    %0 = vector.load %arg2[%c0, %c0_0] : memref<128x80xbf16, #tpu.memory_space<vmem>>, vector<128x80xbf16>
    %c0_1 = arith.constant 0 : index
    %c0_2 = arith.constant 0 : index
    %1 = vector.load %arg3[%c0_1, %c0_2] : memref<80x128xbf16, #tpu.memory_space<vmem>>, vector<80x128xbf16>
    %cst = arith.constant dense<0.000000e+00> : vector<128x128xf32>
    %2 = tpu.matmul %0, %1, %cst {dimension_numbers = #tpu.dot_dimension_numbers<[1], [0], [0], [1], [0, 0, 1, 1], [], []>} : vector<128x80xbf16>, vector<80x128xbf16>, vector<128x128xf32> -> vector<128x128xf32>
    %c0_3 = arith.constant 0 : index
    %c0_4 = arith.constant 0 : index
    %3 = vector.load %arg4[%c0_3, %c0_4] : memref<1x128xf32, #tpu.memory_space<vmem>>, vector<1x128xf32>
    %4 = vector.broadcast %3 : vector<1x128xf32> to vector<128x128xf32>
    %5 = arith.addf %2, %4 : vector<128x128xf32>
    %cst_5 = arith.constant 0.000000e+00 : f32
    %6 = vector.broadcast %cst_5 : f32 to vector<128x128xf32>
    %7 = arith.cmpf oge, %5, %6 : vector<128x128xf32>
    %cst_6 = arith.constant 2.000000e-01 : f32
    %8 = vector.broadcast %cst_6 : f32 to vector<128x128xf32>
    %9 = arith.mulf %8, %5 : vector<128x128xf32>
    %10 = arith.select %7, %5, %9 : vector<128x128xi1>, vector<128x128xf32>
    %11 = arith.truncf %10 : vector<128x128xf32> to vector<128x128xbf16>
    %c0_7 = arith.constant 0 : index
    %c0_8 = arith.constant 0 : index
    %12 = vector.load %arg5[%c0_7, %c0_8] : memref<128x128xbf16, #tpu.memory_space<vmem>>, vector<128x128xbf16>
    tpu.vector_store %arg5[%c0_7, %c0_8], %11 {strides = array<i32>} : memref<128x128xbf16, #tpu.memory_space<vmem>>, vector<128x128xbf16>,
    return
  }
  func.func @transform_0(%arg0: i32, %arg1: i32) -> (i32, i32) {
    %c0_i32 = arith.constant 0 : i32
    %c0_i32_0 = arith.constant 0 : i32
    return %arg0, %c0_i32 : i32, i32
  }
  func.func @transform_1(%arg0: i32, %arg1: i32) -> (i32, i32) {
    %c0_i32 = arith.constant 0 : i32
    %c0_i32_0 = arith.constant 0 : i32
    return %c0_i32, %arg1 : i32, i32
  }
  func.func @transform_2(%arg0: i32, %arg1: i32) -> (i32, i32) {
    %c0_i32 = arith.constant 0 : i32
    %c0_i32_0 = arith.constant 0 : i32
    return %c0_i32, %arg1 : i32, i32
  }
  func.func @transform_3(%arg0: i32, %arg1: i32) -> (i32, i32) {
    %c0_i32 = arith.constant 0 : i32
    return %arg0, %arg1 : i32, i32
  }
}

module attributes {stable_mosaic.version = 11 : i64} {
  func.func @kernel(%arg0: i32, %arg1: i32, %arg2: memref<32x144xbf16, #tpu.memory_space<vmem>>, %arg3: memref<144x128xbf16, #tpu.memory_space<vmem>>, %arg4: memref<1x128xf32, #tpu.memory_space<vmem>>, %arg5: memref<32x128xbf16, #tpu.memory_space<vmem>>) attributes {dimension_semantics = [#tpu.dimension_semantics<parallel>, #tpu.dimension_semantics<parallel>], iteration_bounds = array<i64: 1, 1>, scalar_prefetch = 0 : i64, scratch_operands = 0 : i64, tpu.core_type = #tpu.core_type<tc>, window_params = [{transform_indices = @transform_0, window_bounds = array<i64: 32, 144>}, {transform_indices = @transform_1, window_bounds = array<i64: 144, 128>}, {transform_indices = @transform_2, window_bounds = array<i64: 1, 128>}, {transform_indices = @transform_3, window_bounds = array<i64: 32, 128>}]} {
    %c0 = arith.constant 0 : index
    %c0_0 = arith.constant 0 : index
    %0 = vector.load %arg2[%c0, %c0_0] : memref<32x144xbf16, #tpu.memory_space<vmem>>, vector<32x144xbf16>
    %c0_1 = arith.constant 0 : index
    %c0_2 = arith.constant 0 : index
    %1 = vector.load %arg3[%c0_1, %c0_2] : memref<144x128xbf16, #tpu.memory_space<vmem>>, vector<144x128xbf16>
    %cst = arith.constant dense<0.000000e+00> : vector<32x128xf32>
    %2 = tpu.matmul %0, %1, %cst {dimension_numbers = #tpu.dot_dimension_numbers<[1], [0], [0], [1], [0, 0, 1, 1], [], []>} : vector<32x144xbf16>, vector<144x128xbf16>, vector<32x128xf32> -> vector<32x128xf32>
    %c0_3 = arith.constant 0 : index
    %c0_4 = arith.constant 0 : index
    %3 = vector.load %arg4[%c0_3, %c0_4] : memref<1x128xf32, #tpu.memory_space<vmem>>, vector<1x128xf32>
    %4 = vector.broadcast %3 : vector<1x128xf32> to vector<32x128xf32>
    %5 = arith.addf %2, %4 : vector<32x128xf32>
    %cst_5 = arith.constant 0.000000e+00 : f32
    %6 = vector.broadcast %cst_5 : f32 to vector<32x128xf32>
    %7 = arith.cmpf oge, %5, %6 : vector<32x128xf32>
    %cst_6 = arith.constant 2.000000e-01 : f32
    %8 = vector.broadcast %cst_6 : f32 to vector<32x128xf32>
    %9 = arith.mulf %8, %5 : vector<32x128xf32>
    %10 = arith.select %7, %5, %9 : vector<32x128xi1>, vector<32x128xf32>
    %11 = arith.truncf %10 : vector<32x128xf32> to vector<32x128xbf16>
    %c0_7 = arith.constant 0 : index
    %c0_8 = arith.constant 0 : index
    %12 = vector.load %arg5[%c0_7, %c0_8] : memref<32x128xbf16, #tpu.memory_space<vmem>>, vector<32x128xbf16>
    tpu.vector_store %arg5[%c0_7, %c0_8], %11 {strides = array<i32>} : memref<32x128xbf16, #tpu.memory_space<vmem>>, vector<32x128xbf16>,
    return
  }
  func.func @transform_0(%arg0: i32, %arg1: i32) -> (i32, i32) {
    %c0_i32 = arith.constant 0 : i32
    %c0_i32_0 = arith.constant 0 : i32
    return %arg0, %c0_i32 : i32, i32
  }
  func.func @transform_1(%arg0: i32, %arg1: i32) -> (i32, i32) {
    %c0_i32 = arith.constant 0 : i32
    %c0_i32_0 = arith.constant 0 : i32
    return %c0_i32, %arg1 : i32, i32
  }
  func.func @transform_2(%arg0: i32, %arg1: i32) -> (i32, i32) {
    %c0_i32 = arith.constant 0 : i32
    %c0_i32_0 = arith.constant 0 : i32
    return %c0_i32, %arg1 : i32, i32
  }
  func.func @transform_3(%arg0: i32, %arg1: i32) -> (i32, i32) {
    %c0_i32 = arith.constant 0 : i32
    return %arg0, %arg1 : i32, i32
  }
}

module attributes {stable_mosaic.version = 11 : i64} {
  func.func @_grid_sample_kernel(%arg0: i32, %arg1: i32, %arg2: memref<1x16x128xbf16, #tpu.memory_space<vmem>>, %arg3: memref<1x4x128xi32, #tpu.memory_space<vmem>>, %arg4: memref<1x4x128xf32, #tpu.memory_space<vmem>>, %arg5: memref<1x16x128xbf16, #tpu.memory_space<vmem>>) attributes {dimension_semantics = [#tpu.dimension_semantics<parallel>, #tpu.dimension_semantics<parallel>], iteration_bounds = array<i64: 2, 1>, scalar_prefetch = 0 : i64, scratch_operands = 0 : i64, tpu.core_type = #tpu.core_type<tc>, window_params = [{transform_indices = @transform_0, window_bounds = array<i64: 1, 16, 128>}, {transform_indices = @transform_1, window_bounds = array<i64: 1, 4, 128>}, {transform_indices = @transform_2, window_bounds = array<i64: 1, 4, 128>}, {transform_indices = @transform_3, window_bounds = array<i64: 1, 16, 128>}]} {
    %c0 = arith.constant 0 : index
    %c0_0 = arith.constant 0 : index
    %c0_1 = arith.constant 0 : index
    %0 = vector.load %arg2[%c0, %c0_0, %c0_1] : memref<1x16x128xbf16, #tpu.memory_space<vmem>>, vector<1x16x128xbf16>
    %1 = vector.shape_cast %0 : vector<1x16x128xbf16> to vector<16x128xbf16>
    %c0_2 = arith.constant 0 : index
    %c0_3 = arith.constant 0 : index
    %c0_4 = arith.constant 0 : index
    %2 = vector.load %arg3[%c0_2, %c0_3, %c0_4] : memref<1x4x128xi32, #tpu.memory_space<vmem>>, vector<1x4x128xi32>
    %3 = vector.shape_cast %2 : vector<1x4x128xi32> to vector<4x128xi32>
    %c0_5 = arith.constant 0 : index
    %c0_6 = arith.constant 0 : index
    %c0_7 = arith.constant 0 : index
    %4 = vector.load %arg4[%c0_5, %c0_6, %c0_7] : memref<1x4x128xf32, #tpu.memory_space<vmem>>, vector<1x4x128xf32>
    %5 = vector.shape_cast %4 : vector<1x4x128xf32> to vector<4x128xf32>
    %6 = tpu.iota {dimensions = array<i32: 0>} : vector<128x128xi32>
    %7 = vector.extract_strided_slice %3 {offsets = [0, 0], sizes = [1, 128], strides = [1, 1]} : vector<4x128xi32> to vector<1x128xi32>
    %8 = vector.broadcast %7 : vector<1x128xi32> to vector<128x128xi32>
    %9 = arith.cmpi eq, %6, %8 : vector<128x128xi32>
    %10 = vector.extract_strided_slice %5 {offsets = [0, 0], sizes = [1, 128], strides = [1, 1]} : vector<4x128xf32> to vector<1x128xf32>
    %cst = arith.constant 0.000000e+00 : f32
    %11 = vector.shape_cast %10 : vector<1x128xf32> to vector<1x128xf32>
    %12 = vector.broadcast %11 : vector<1x128xf32> to vector<128x128xf32>
    %13 = vector.broadcast %cst : f32 to vector<128x128xf32>
    %14 = arith.select %9, %12, %13 : vector<128x128xi1>, vector<128x128xf32>
    %15 = vector.extract_strided_slice %3 {offsets = [1, 0], sizes = [1, 128], strides = [1, 1]} : vector<4x128xi32> to vector<1x128xi32>
    %16 = vector.broadcast %15 : vector<1x128xi32> to vector<128x128xi32>
    %17 = arith.cmpi eq, %6, %16 : vector<128x128xi32>
    %18 = vector.extract_strided_slice %5 {offsets = [1, 0], sizes = [1, 128], strides = [1, 1]} : vector<4x128xf32> to vector<1x128xf32>
    %cst_8 = arith.constant 0.000000e+00 : f32
    %19 = vector.shape_cast %18 : vector<1x128xf32> to vector<1x128xf32>
    %20 = vector.broadcast %19 : vector<1x128xf32> to vector<128x128xf32>
    %21 = vector.broadcast %cst_8 : f32 to vector<128x128xf32>
    %22 = arith.select %17, %20, %21 : vector<128x128xi1>, vector<128x128xf32>
    %23 = arith.addf %14, %22 : vector<128x128xf32>
    %24 = vector.extract_strided_slice %3 {offsets = [2, 0], sizes = [1, 128], strides = [1, 1]} : vector<4x128xi32> to vector<1x128xi32>
    %25 = vector.broadcast %24 : vector<1x128xi32> to vector<128x128xi32>
    %26 = arith.cmpi eq, %6, %25 : vector<128x128xi32>
    %27 = vector.extract_strided_slice %5 {offsets = [2, 0], sizes = [1, 128], strides = [1, 1]} : vector<4x128xf32> to vector<1x128xf32>
    %cst_9 = arith.constant 0.000000e+00 : f32
    %28 = vector.shape_cast %27 : vector<1x128xf32> to vector<1x128xf32>
    %29 = vector.broadcast %28 : vector<1x128xf32> to vector<128x128xf32>
    %30 = vector.broadcast %cst_9 : f32 to vector<128x128xf32>
    %31 = arith.select %26, %29, %30 : vector<128x128xi1>, vector<128x128xf32>
    %32 = arith.addf %23, %31 : vector<128x128xf32>
    %33 = vector.extract_strided_slice %3 {offsets = [3, 0], sizes = [1, 128], strides = [1, 1]} : vector<4x128xi32> to vector<1x128xi32>
    %34 = vector.broadcast %33 : vector<1x128xi32> to vector<128x128xi32>
    %35 = arith.cmpi eq, %6, %34 : vector<128x128xi32>
    %36 = vector.extract_strided_slice %5 {offsets = [3, 0], sizes = [1, 128], strides = [1, 1]} : vector<4x128xf32> to vector<1x128xf32>
    %cst_10 = arith.constant 0.000000e+00 : f32
    %37 = vector.shape_cast %36 : vector<1x128xf32> to vector<1x128xf32>
    %38 = vector.broadcast %37 : vector<1x128xf32> to vector<128x128xf32>
    %39 = vector.broadcast %cst_10 : f32 to vector<128x128xf32>
    %40 = arith.select %35, %38, %39 : vector<128x128xi1>, vector<128x128xf32>
    %41 = arith.addf %32, %40 : vector<128x128xf32>
    %42 = arith.truncf %41 : vector<128x128xf32> to vector<128x128xbf16>
    %cst_11 = arith.constant dense<0.000000e+00> : vector<16x128xf32>
    %43 = tpu.matmul %1, %42, %cst_11 {dimension_numbers = #tpu.dot_dimension_numbers<[1], [0], [0], [1], [0, 0, 1, 1], [], []>} : vector<16x128xbf16>, vector<128x128xbf16>, vector<16x128xf32> -> vector<16x128xf32>
    %44 = arith.truncf %43 : vector<16x128xf32> to vector<16x128xbf16>
    %c0_12 = arith.constant 0 : index
    %c0_13 = arith.constant 0 : index
    %c0_14 = arith.constant 0 : index
    %45 = vector.load %arg5[%c0_12, %c0_13, %c0_14] : memref<1x16x128xbf16, #tpu.memory_space<vmem>>, vector<1x16x128xbf16>
    %46 = vector.shape_cast %45 : vector<1x16x128xbf16> to vector<16x128xbf16>
    %47 = vector.shape_cast %44 : vector<16x128xbf16> to vector<1x16x128xbf16>
    tpu.vector_store %arg5[%c0_12, %c0_13, %c0_14], %47 {strides = array<i32>} : memref<1x16x128xbf16, #tpu.memory_space<vmem>>, vector<1x16x128xbf16>,
    return
  }
  func.func @transform_0(%arg0: i32, %arg1: i32) -> (i32, i32, i32) {
    %c0_i32 = arith.constant 0 : i32
    %c0_i32_0 = arith.constant 0 : i32
    %c0_i32_1 = arith.constant 0 : i32
    return %arg0, %c0_i32, %c0_i32_0 : i32, i32, i32
  }
  func.func @transform_1(%arg0: i32, %arg1: i32) -> (i32, i32, i32) {
    %c0_i32 = arith.constant 0 : i32
    %c0_i32_0 = arith.constant 0 : i32
    return %arg0, %c0_i32, %arg1 : i32, i32, i32
  }
  func.func @transform_2(%arg0: i32, %arg1: i32) -> (i32, i32, i32) {
    %c0_i32 = arith.constant 0 : i32
    %c0_i32_0 = arith.constant 0 : i32
    return %arg0, %c0_i32, %arg1 : i32, i32, i32
  }
  func.func @transform_3(%arg0: i32, %arg1: i32) -> (i32, i32, i32) {
    %c0_i32 = arith.constant 0 : i32
    %c0_i32_0 = arith.constant 0 : i32
    return %arg0, %c0_i32, %arg1 : i32, i32, i32
  }
}

module attributes {stable_mosaic.version = 11 : i64} {
  func.func @kernel(%arg0: i32, %arg1: i32, %arg2: memref<32x288xbf16, #tpu.memory_space<vmem>>, %arg3: memref<288x128xbf16, #tpu.memory_space<vmem>>, %arg4: memref<1x128xf32, #tpu.memory_space<vmem>>, %arg5: memref<32x128xbf16, #tpu.memory_space<vmem>>) attributes {dimension_semantics = [#tpu.dimension_semantics<parallel>, #tpu.dimension_semantics<parallel>], iteration_bounds = array<i64: 1, 1>, scalar_prefetch = 0 : i64, scratch_operands = 0 : i64, tpu.core_type = #tpu.core_type<tc>, window_params = [{transform_indices = @transform_0, window_bounds = array<i64: 32, 288>}, {transform_indices = @transform_1, window_bounds = array<i64: 288, 128>}, {transform_indices = @transform_2, window_bounds = array<i64: 1, 128>}, {transform_indices = @transform_3, window_bounds = array<i64: 32, 128>}]} {
    %c0 = arith.constant 0 : index
    %c0_0 = arith.constant 0 : index
    %0 = vector.load %arg2[%c0, %c0_0] : memref<32x288xbf16, #tpu.memory_space<vmem>>, vector<32x288xbf16>
    %c0_1 = arith.constant 0 : index
    %c0_2 = arith.constant 0 : index
    %1 = vector.load %arg3[%c0_1, %c0_2] : memref<288x128xbf16, #tpu.memory_space<vmem>>, vector<288x128xbf16>
    %cst = arith.constant dense<0.000000e+00> : vector<32x128xf32>
    %2 = tpu.matmul %0, %1, %cst {dimension_numbers = #tpu.dot_dimension_numbers<[1], [0], [0], [1], [0, 0, 1, 1], [], []>} : vector<32x288xbf16>, vector<288x128xbf16>, vector<32x128xf32> -> vector<32x128xf32>
    %c0_3 = arith.constant 0 : index
    %c0_4 = arith.constant 0 : index
    %3 = vector.load %arg4[%c0_3, %c0_4] : memref<1x128xf32, #tpu.memory_space<vmem>>, vector<1x128xf32>
    %4 = vector.broadcast %3 : vector<1x128xf32> to vector<32x128xf32>
    %5 = arith.addf %2, %4 : vector<32x128xf32>
    %cst_5 = arith.constant 0.000000e+00 : f32
    %6 = vector.broadcast %cst_5 : f32 to vector<32x128xf32>
    %7 = arith.maximumf %5, %6 : vector<32x128xf32>
    %8 = arith.truncf %7 : vector<32x128xf32> to vector<32x128xbf16>
    %c0_6 = arith.constant 0 : index
    %c0_7 = arith.constant 0 : index
    %9 = vector.load %arg5[%c0_6, %c0_7] : memref<32x128xbf16, #tpu.memory_space<vmem>>, vector<32x128xbf16>
    tpu.vector_store %arg5[%c0_6, %c0_7], %8 {strides = array<i32>} : memref<32x128xbf16, #tpu.memory_space<vmem>>, vector<32x128xbf16>,
    return
  }
  func.func @transform_0(%arg0: i32, %arg1: i32) -> (i32, i32) {
    %c0_i32 = arith.constant 0 : i32
    %c0_i32_0 = arith.constant 0 : i32
    return %arg0, %c0_i32 : i32, i32
  }
  func.func @transform_1(%arg0: i32, %arg1: i32) -> (i32, i32) {
    %c0_i32 = arith.constant 0 : i32
    %c0_i32_0 = arith.constant 0 : i32
    return %c0_i32, %arg1 : i32, i32
  }
  func.func @transform_2(%arg0: i32, %arg1: i32) -> (i32, i32) {
    %c0_i32 = arith.constant 0 : i32
    %c0_i32_0 = arith.constant 0 : i32
    return %c0_i32, %arg1 : i32, i32
  }
  func.func @transform_3(%arg0: i32, %arg1: i32) -> (i32, i32) {
    %c0_i32 = arith.constant 0 : i32
    return %arg0, %arg1 : i32, i32
  }
}

module attributes {stable_mosaic.version = 11 : i64} {
  func.func @kernel(%arg0: i32, %arg1: i32, %arg2: memref<32x144xbf16, #tpu.memory_space<vmem>>, %arg3: memref<144x128xbf16, #tpu.memory_space<vmem>>, %arg4: memref<1x128xf32, #tpu.memory_space<vmem>>, %arg5: memref<32x128xbf16, #tpu.memory_space<vmem>>) attributes {dimension_semantics = [#tpu.dimension_semantics<parallel>, #tpu.dimension_semantics<parallel>], iteration_bounds = array<i64: 1, 1>, scalar_prefetch = 0 : i64, scratch_operands = 0 : i64, tpu.core_type = #tpu.core_type<tc>, window_params = [{transform_indices = @transform_0, window_bounds = array<i64: 32, 144>}, {transform_indices = @transform_1, window_bounds = array<i64: 144, 128>}, {transform_indices = @transform_2, window_bounds = array<i64: 1, 128>}, {transform_indices = @transform_3, window_bounds = array<i64: 32, 128>}]} {
    %c0 = arith.constant 0 : index
    %c0_0 = arith.constant 0 : index
    %0 = vector.load %arg2[%c0, %c0_0] : memref<32x144xbf16, #tpu.memory_space<vmem>>, vector<32x144xbf16>
    %c0_1 = arith.constant 0 : index
    %c0_2 = arith.constant 0 : index
    %1 = vector.load %arg3[%c0_1, %c0_2] : memref<144x128xbf16, #tpu.memory_space<vmem>>, vector<144x128xbf16>
    %cst = arith.constant dense<0.000000e+00> : vector<32x128xf32>
    %2 = tpu.matmul %0, %1, %cst {dimension_numbers = #tpu.dot_dimension_numbers<[1], [0], [0], [1], [0, 0, 1, 1], [], []>} : vector<32x144xbf16>, vector<144x128xbf16>, vector<32x128xf32> -> vector<32x128xf32>
    %c0_3 = arith.constant 0 : index
    %c0_4 = arith.constant 0 : index
    %3 = vector.load %arg4[%c0_3, %c0_4] : memref<1x128xf32, #tpu.memory_space<vmem>>, vector<1x128xf32>
    %4 = vector.broadcast %3 : vector<1x128xf32> to vector<32x128xf32>
    %5 = arith.addf %2, %4 : vector<32x128xf32>
    %cst_5 = arith.constant 0.000000e+00 : f32
    %6 = vector.broadcast %cst_5 : f32 to vector<32x128xf32>
    %7 = arith.maximumf %5, %6 : vector<32x128xf32>
    %8 = arith.truncf %7 : vector<32x128xf32> to vector<32x128xbf16>
    %c0_6 = arith.constant 0 : index
    %c0_7 = arith.constant 0 : index
    %9 = vector.load %arg5[%c0_6, %c0_7] : memref<32x128xbf16, #tpu.memory_space<vmem>>, vector<32x128xbf16>
    tpu.vector_store %arg5[%c0_6, %c0_7], %8 {strides = array<i32>} : memref<32x128xbf16, #tpu.memory_space<vmem>>, vector<32x128xbf16>,
    return
  }
  func.func @transform_0(%arg0: i32, %arg1: i32) -> (i32, i32) {
    %c0_i32 = arith.constant 0 : i32
    %c0_i32_0 = arith.constant 0 : i32
    return %arg0, %c0_i32 : i32, i32
  }
  func.func @transform_1(%arg0: i32, %arg1: i32) -> (i32, i32) {
    %c0_i32 = arith.constant 0 : i32
    %c0_i32_0 = arith.constant 0 : i32
    return %c0_i32, %arg1 : i32, i32
  }
  func.func @transform_2(%arg0: i32, %arg1: i32) -> (i32, i32) {
    %c0_i32 = arith.constant 0 : i32
    %c0_i32_0 = arith.constant 0 : i32
    return %c0_i32, %arg1 : i32, i32
  }
  func.func @transform_3(%arg0: i32, %arg1: i32) -> (i32, i32) {
    %c0_i32 = arith.constant 0 : i32
    return %arg0, %arg1 : i32, i32
  }
}

module attributes {stable_mosaic.version = 11 : i64} {
  func.func @kernel(%arg0: i32, %arg1: i32, %arg2: memref<32x144xbf16, #tpu.memory_space<vmem>>, %arg3: memref<144x128xbf16, #tpu.memory_space<vmem>>, %arg4: memref<1x128xf32, #tpu.memory_space<vmem>>, %arg5: memref<32x128xbf16, #tpu.memory_space<vmem>>) attributes {dimension_semantics = [#tpu.dimension_semantics<parallel>, #tpu.dimension_semantics<parallel>], iteration_bounds = array<i64: 1, 1>, scalar_prefetch = 0 : i64, scratch_operands = 0 : i64, tpu.core_type = #tpu.core_type<tc>, window_params = [{transform_indices = @transform_0, window_bounds = array<i64: 32, 144>}, {transform_indices = @transform_1, window_bounds = array<i64: 144, 128>}, {transform_indices = @transform_2, window_bounds = array<i64: 1, 128>}, {transform_indices = @transform_3, window_bounds = array<i64: 32, 128>}]} {
    %c0 = arith.constant 0 : index
    %c0_0 = arith.constant 0 : index
    %0 = vector.load %arg2[%c0, %c0_0] : memref<32x144xbf16, #tpu.memory_space<vmem>>, vector<32x144xbf16>
    %c0_1 = arith.constant 0 : index
    %c0_2 = arith.constant 0 : index
    %1 = vector.load %arg3[%c0_1, %c0_2] : memref<144x128xbf16, #tpu.memory_space<vmem>>, vector<144x128xbf16>
    %cst = arith.constant dense<0.000000e+00> : vector<32x128xf32>
    %2 = tpu.matmul %0, %1, %cst {dimension_numbers = #tpu.dot_dimension_numbers<[1], [0], [0], [1], [0, 0, 1, 1], [], []>} : vector<32x144xbf16>, vector<144x128xbf16>, vector<32x128xf32> -> vector<32x128xf32>
    %c0_3 = arith.constant 0 : index
    %c0_4 = arith.constant 0 : index
    %3 = vector.load %arg4[%c0_3, %c0_4] : memref<1x128xf32, #tpu.memory_space<vmem>>, vector<1x128xf32>
    %4 = vector.broadcast %3 : vector<1x128xf32> to vector<32x128xf32>
    %5 = arith.addf %2, %4 : vector<32x128xf32>
    %6 = arith.truncf %5 : vector<32x128xf32> to vector<32x128xbf16>
    %c0_5 = arith.constant 0 : index
    %c0_6 = arith.constant 0 : index
    %7 = vector.load %arg5[%c0_5, %c0_6] : memref<32x128xbf16, #tpu.memory_space<vmem>>, vector<32x128xbf16>
    tpu.vector_store %arg5[%c0_5, %c0_6], %6 {strides = array<i32>} : memref<32x128xbf16, #tpu.memory_space<vmem>>, vector<32x128xbf16>,
    return
  }
  func.func @transform_0(%arg0: i32, %arg1: i32) -> (i32, i32) {
    %c0_i32 = arith.constant 0 : i32
    %c0_i32_0 = arith.constant 0 : i32
    return %arg0, %c0_i32 : i32, i32
  }
  func.func @transform_1(%arg0: i32, %arg1: i32) -> (i32, i32) {
    %c0_i32 = arith.constant 0 : i32
    %c0_i32_0 = arith.constant 0 : i32
    return %c0_i32, %arg1 : i32, i32
  }
  func.func @transform_2(%arg0: i32, %arg1: i32) -> (i32, i32) {
    %c0_i32 = arith.constant 0 : i32
    %c0_i32_0 = arith.constant 0 : i32
    return %c0_i32, %arg1 : i32, i32
  }
  func.func @transform_3(%arg0: i32, %arg1: i32) -> (i32, i32) {
    %c0_i32 = arith.constant 0 : i32
    return %arg0, %arg1 : i32, i32
  }
}

module attributes {stable_mosaic.version = 11 : i64} {
  func.func @kernel(%arg0: i32, %arg1: i32, %arg2: memref<128x16xbf16, #tpu.memory_space<vmem>>, %arg3: memref<16x128xbf16, #tpu.memory_space<vmem>>, %arg4: memref<1x128xf32, #tpu.memory_space<vmem>>, %arg5: memref<128x128xbf16, #tpu.memory_space<vmem>>) attributes {dimension_semantics = [#tpu.dimension_semantics<parallel>, #tpu.dimension_semantics<parallel>], iteration_bounds = array<i64: 1, 1>, scalar_prefetch = 0 : i64, scratch_operands = 0 : i64, tpu.core_type = #tpu.core_type<tc>, window_params = [{transform_indices = @transform_0, window_bounds = array<i64: 128, 16>}, {transform_indices = @transform_1, window_bounds = array<i64: 16, 128>}, {transform_indices = @transform_2, window_bounds = array<i64: 1, 128>}, {transform_indices = @transform_3, window_bounds = array<i64: 128, 128>}]} {
    %c0 = arith.constant 0 : index
    %c0_0 = arith.constant 0 : index
    %0 = vector.load %arg2[%c0, %c0_0] : memref<128x16xbf16, #tpu.memory_space<vmem>>, vector<128x16xbf16>
    %c0_1 = arith.constant 0 : index
    %c0_2 = arith.constant 0 : index
    %1 = vector.load %arg3[%c0_1, %c0_2] : memref<16x128xbf16, #tpu.memory_space<vmem>>, vector<16x128xbf16>
    %cst = arith.constant dense<0.000000e+00> : vector<128x128xf32>
    %2 = tpu.matmul %0, %1, %cst {dimension_numbers = #tpu.dot_dimension_numbers<[1], [0], [0], [1], [0, 0, 1, 1], [], []>} : vector<128x16xbf16>, vector<16x128xbf16>, vector<128x128xf32> -> vector<128x128xf32>
    %c0_3 = arith.constant 0 : index
    %c0_4 = arith.constant 0 : index
    %3 = vector.load %arg4[%c0_3, %c0_4] : memref<1x128xf32, #tpu.memory_space<vmem>>, vector<1x128xf32>
    %4 = vector.broadcast %3 : vector<1x128xf32> to vector<128x128xf32>
    %5 = arith.addf %2, %4 : vector<128x128xf32>
    %6 = arith.truncf %5 : vector<128x128xf32> to vector<128x128xbf16>
    %c0_5 = arith.constant 0 : index
    %c0_6 = arith.constant 0 : index
    %7 = vector.load %arg5[%c0_5, %c0_6] : memref<128x128xbf16, #tpu.memory_space<vmem>>, vector<128x128xbf16>
    tpu.vector_store %arg5[%c0_5, %c0_6], %6 {strides = array<i32>} : memref<128x128xbf16, #tpu.memory_space<vmem>>, vector<128x128xbf16>,
    return
  }
  func.func @transform_0(%arg0: i32, %arg1: i32) -> (i32, i32) {
    %c0_i32 = arith.constant 0 : i32
    %c0_i32_0 = arith.constant 0 : i32
    return %arg0, %c0_i32 : i32, i32
  }
  func.func @transform_1(%arg0: i32, %arg1: i32) -> (i32, i32) {
    %c0_i32 = arith.constant 0 : i32
    %c0_i32_0 = arith.constant 0 : i32
    return %c0_i32, %arg1 : i32, i32
  }
  func.func @transform_2(%arg0: i32, %arg1: i32) -> (i32, i32) {
    %c0_i32 = arith.constant 0 : i32
    %c0_i32_0 = arith.constant 0 : i32
    return %c0_i32, %arg1 : i32, i32
  }
  func.func @transform_3(%arg0: i32, %arg1: i32) -> (i32, i32) {
    %c0_i32 = arith.constant 0 : i32
    return %arg0, %arg1 : i32, i32
  }
}

module attributes {stable_mosaic.version = 11 : i64} {
  func.func @kernel(%arg0: i32, %arg1: i32, %arg2: memref<256x16xbf16, #tpu.memory_space<vmem>>, %arg3: memref<16x128xbf16, #tpu.memory_space<vmem>>, %arg4: memref<1x128xf32, #tpu.memory_space<vmem>>, %arg5: memref<256x128xbf16, #tpu.memory_space<vmem>>) attributes {dimension_semantics = [#tpu.dimension_semantics<parallel>, #tpu.dimension_semantics<parallel>], iteration_bounds = array<i64: 1, 1>, scalar_prefetch = 0 : i64, scratch_operands = 0 : i64, tpu.core_type = #tpu.core_type<tc>, window_params = [{transform_indices = @transform_0, window_bounds = array<i64: 256, 16>}, {transform_indices = @transform_1, window_bounds = array<i64: 16, 128>}, {transform_indices = @transform_2, window_bounds = array<i64: 1, 128>}, {transform_indices = @transform_3, window_bounds = array<i64: 256, 128>}]} {
    %c0 = arith.constant 0 : index
    %c0_0 = arith.constant 0 : index
    %0 = vector.load %arg2[%c0, %c0_0] : memref<256x16xbf16, #tpu.memory_space<vmem>>, vector<256x16xbf16>
    %c0_1 = arith.constant 0 : index
    %c0_2 = arith.constant 0 : index
    %1 = vector.load %arg3[%c0_1, %c0_2] : memref<16x128xbf16, #tpu.memory_space<vmem>>, vector<16x128xbf16>
    %cst = arith.constant dense<0.000000e+00> : vector<256x128xf32>
    %2 = tpu.matmul %0, %1, %cst {dimension_numbers = #tpu.dot_dimension_numbers<[1], [0], [0], [1], [0, 0, 1, 1], [], []>} : vector<256x16xbf16>, vector<16x128xbf16>, vector<256x128xf32> -> vector<256x128xf32>
    %c0_3 = arith.constant 0 : index
    %c0_4 = arith.constant 0 : index
    %3 = vector.load %arg4[%c0_3, %c0_4] : memref<1x128xf32, #tpu.memory_space<vmem>>, vector<1x128xf32>
    %4 = vector.broadcast %3 : vector<1x128xf32> to vector<256x128xf32>
    %5 = arith.addf %2, %4 : vector<256x128xf32>
    %6 = arith.truncf %5 : vector<256x128xf32> to vector<256x128xbf16>
    %c0_5 = arith.constant 0 : index
    %c0_6 = arith.constant 0 : index
    %7 = vector.load %arg5[%c0_5, %c0_6] : memref<256x128xbf16, #tpu.memory_space<vmem>>, vector<256x128xbf16>
    tpu.vector_store %arg5[%c0_5, %c0_6], %6 {strides = array<i32>} : memref<256x128xbf16, #tpu.memory_space<vmem>>, vector<256x128xbf16>,
    return
  }
  func.func @transform_0(%arg0: i32, %arg1: i32) -> (i32, i32) {
    %c0_i32 = arith.constant 0 : i32
    %c0_i32_0 = arith.constant 0 : i32
    return %arg0, %c0_i32 : i32, i32
  }
  func.func @transform_1(%arg0: i32, %arg1: i32) -> (i32, i32) {
    %c0_i32 = arith.constant 0 : i32
    %c0_i32_0 = arith.constant 0 : i32
    return %c0_i32, %arg1 : i32, i32
  }
  func.func @transform_2(%arg0: i32, %arg1: i32) -> (i32, i32) {
    %c0_i32 = arith.constant 0 : i32
    %c0_i32_0 = arith.constant 0 : i32
    return %c0_i32, %arg1 : i32, i32
  }
  func.func @transform_3(%arg0: i32, %arg1: i32) -> (i32, i32) {
    %c0_i32 = arith.constant 0 : i32
    return %arg0, %arg1 : i32, i32
  }
}

module attributes {stable_mosaic.version = 11 : i64} {
  func.func @kernel(%arg0: i32, %arg1: i32, %arg2: memref<128x144xbf16, #tpu.memory_space<vmem>>, %arg3: memref<144x128xbf16, #tpu.memory_space<vmem>>, %arg4: memref<1x128xf32, #tpu.memory_space<vmem>>, %arg5: memref<128x128xbf16, #tpu.memory_space<vmem>>) attributes {dimension_semantics = [#tpu.dimension_semantics<parallel>, #tpu.dimension_semantics<parallel>], iteration_bounds = array<i64: 1, 1>, scalar_prefetch = 0 : i64, scratch_operands = 0 : i64, tpu.core_type = #tpu.core_type<tc>, window_params = [{transform_indices = @transform_0, window_bounds = array<i64: 128, 144>}, {transform_indices = @transform_1, window_bounds = array<i64: 144, 128>}, {transform_indices = @transform_2, window_bounds = array<i64: 1, 128>}, {transform_indices = @transform_3, window_bounds = array<i64: 128, 128>}]} {
    %c0 = arith.constant 0 : index
    %c0_0 = arith.constant 0 : index
    %0 = vector.load %arg2[%c0, %c0_0] : memref<128x144xbf16, #tpu.memory_space<vmem>>, vector<128x144xbf16>
    %c0_1 = arith.constant 0 : index
    %c0_2 = arith.constant 0 : index
    %1 = vector.load %arg3[%c0_1, %c0_2] : memref<144x128xbf16, #tpu.memory_space<vmem>>, vector<144x128xbf16>
    %cst = arith.constant dense<0.000000e+00> : vector<128x128xf32>
    %2 = tpu.matmul %0, %1, %cst {dimension_numbers = #tpu.dot_dimension_numbers<[1], [0], [0], [1], [0, 0, 1, 1], [], []>} : vector<128x144xbf16>, vector<144x128xbf16>, vector<128x128xf32> -> vector<128x128xf32>
    %c0_3 = arith.constant 0 : index
    %c0_4 = arith.constant 0 : index
    %3 = vector.load %arg4[%c0_3, %c0_4] : memref<1x128xf32, #tpu.memory_space<vmem>>, vector<1x128xf32>
    %4 = vector.broadcast %3 : vector<1x128xf32> to vector<128x128xf32>
    %5 = arith.addf %2, %4 : vector<128x128xf32>
    %cst_5 = arith.constant 0.000000e+00 : f32
    %6 = vector.broadcast %cst_5 : f32 to vector<128x128xf32>
    %7 = arith.maximumf %5, %6 : vector<128x128xf32>
    %8 = arith.truncf %7 : vector<128x128xf32> to vector<128x128xbf16>
    %c0_6 = arith.constant 0 : index
    %c0_7 = arith.constant 0 : index
    %9 = vector.load %arg5[%c0_6, %c0_7] : memref<128x128xbf16, #tpu.memory_space<vmem>>, vector<128x128xbf16>
    tpu.vector_store %arg5[%c0_6, %c0_7], %8 {strides = array<i32>} : memref<128x128xbf16, #tpu.memory_space<vmem>>, vector<128x128xbf16>,
    return
  }
  func.func @transform_0(%arg0: i32, %arg1: i32) -> (i32, i32) {
    %c0_i32 = arith.constant 0 : i32
    %c0_i32_0 = arith.constant 0 : i32
    return %arg0, %c0_i32 : i32, i32
  }
  func.func @transform_1(%arg0: i32, %arg1: i32) -> (i32, i32) {
    %c0_i32 = arith.constant 0 : i32
    %c0_i32_0 = arith.constant 0 : i32
    return %c0_i32, %arg1 : i32, i32
  }
  func.func @transform_2(%arg0: i32, %arg1: i32) -> (i32, i32) {
    %c0_i32 = arith.constant 0 : i32
    %c0_i32_0 = arith.constant 0 : i32
    return %c0_i32, %arg1 : i32, i32
  }
  func.func @transform_3(%arg0: i32, %arg1: i32) -> (i32, i32) {
    %c0_i32 = arith.constant 0 : i32
    return %arg0, %arg1 : i32, i32
  }
}

module attributes {stable_mosaic.version = 11 : i64} {
  func.func @kernel(%arg0: i32, %arg1: i32, %arg2: memref<256x80xbf16, #tpu.memory_space<vmem>>, %arg3: memref<80x128xbf16, #tpu.memory_space<vmem>>, %arg4: memref<1x128xf32, #tpu.memory_space<vmem>>, %arg5: memref<256x128xf32, #tpu.memory_space<vmem>>) attributes {dimension_semantics = [#tpu.dimension_semantics<parallel>, #tpu.dimension_semantics<parallel>], iteration_bounds = array<i64: 2, 1>, scalar_prefetch = 0 : i64, scratch_operands = 0 : i64, tpu.core_type = #tpu.core_type<tc>, window_params = [{transform_indices = @transform_0, window_bounds = array<i64: 256, 80>}, {transform_indices = @transform_1, window_bounds = array<i64: 80, 128>}, {transform_indices = @transform_2, window_bounds = array<i64: 1, 128>}, {transform_indices = @transform_3, window_bounds = array<i64: 256, 128>}]} {
    %c0 = arith.constant 0 : index
    %c0_0 = arith.constant 0 : index
    %0 = vector.load %arg2[%c0, %c0_0] : memref<256x80xbf16, #tpu.memory_space<vmem>>, vector<256x80xbf16>
    %c0_1 = arith.constant 0 : index
    %c0_2 = arith.constant 0 : index
    %1 = vector.load %arg3[%c0_1, %c0_2] : memref<80x128xbf16, #tpu.memory_space<vmem>>, vector<80x128xbf16>
    %cst = arith.constant dense<0.000000e+00> : vector<256x128xf32>
    %2 = tpu.matmul %0, %1, %cst {dimension_numbers = #tpu.dot_dimension_numbers<[1], [0], [0], [1], [0, 0, 1, 1], [], []>} : vector<256x80xbf16>, vector<80x128xbf16>, vector<256x128xf32> -> vector<256x128xf32>
    %c0_3 = arith.constant 0 : index
    %c0_4 = arith.constant 0 : index
    %3 = vector.load %arg4[%c0_3, %c0_4] : memref<1x128xf32, #tpu.memory_space<vmem>>, vector<1x128xf32>
    %4 = vector.broadcast %3 : vector<1x128xf32> to vector<256x128xf32>
    %5 = arith.addf %2, %4 : vector<256x128xf32>
    %6 = math.tanh %5 : vector<256x128xf32>
    %c0_5 = arith.constant 0 : index
    %c0_6 = arith.constant 0 : index
    %7 = vector.load %arg5[%c0_5, %c0_6] : memref<256x128xf32, #tpu.memory_space<vmem>>, vector<256x128xf32>
    tpu.vector_store %arg5[%c0_5, %c0_6], %6 {strides = array<i32>} : memref<256x128xf32, #tpu.memory_space<vmem>>, vector<256x128xf32>,
    return
  }
  func.func @transform_0(%arg0: i32, %arg1: i32) -> (i32, i32) {
    %c0_i32 = arith.constant 0 : i32
    %c0_i32_0 = arith.constant 0 : i32
    return %arg0, %c0_i32 : i32, i32
  }
  func.func @transform_1(%arg0: i32, %arg1: i32) -> (i32, i32) {
    %c0_i32 = arith.constant 0 : i32
    %c0_i32_0 = arith.constant 0 : i32
    return %c0_i32, %arg1 : i32, i32
  }
  func.func @transform_2(%arg0: i32, %arg1: i32) -> (i32, i32) {
    %c0_i32 = arith.constant 0 : i32
    %c0_i32_0 = arith.constant 0 : i32
    return %c0_i32, %arg1 : i32, i32
  }
  func.func @transform_3(%arg0: i32, %arg1: i32) -> (i32, i32) {
    %c0_i32 = arith.constant 0 : i32
    return %arg0, %arg1 : i32, i32
  }
}

</mosaic_0001>

<llo_original>
// kernel: makeup_gan_forward.88
$region0: #{makeup_gan_forward.88}
  #allocation0 [shape = 'u32[]', space=smem, size = 0x4, offset = 0x4, fixed_abs, tag = 'smem constant byte address 0x4 - core index']
  #allocation1 [shape = 'u32[144,128]{1,0:T(1,128)}', space=vmem, size = 0x12000, scoped, tag = 'internal scratch']
  %s0 = inlined_call_operand.vmem [shape: bf16[128,64], index: 0, kind: input, shape index: {}]
  %s1 = inlined_call_operand.vmem [shape: bf16[64,128], index: 1, kind: input, shape index: {}]
  %s2 = inlined_call_operand.vmem [shape: f32[1,128], index: 2, kind: input, shape index: {}]
  %s3 = inlined_call_operand.vmem [shape: bf16[128,128], index: 3, kind: output, shape index: {}]
  %s4 = sld [smem:[#allocation0]]
  $region22: #{makeup_gan_forward.88} parent=0
    _
  %s6 = ssub.s32 1, %s4
  %s7 = scalar_select 0, %s6, %s4
  // Predicated region
  $region2: #{makeup_gan_forward.88} parent=0 // pred_check
    _
  $region3: #{makeup_gan_forward.88} parent=0 // pred_check_branch
    %9 = sbr.rel (0) target = $region5
  $region4: #{makeup_gan_forward.88} parent=0 // pred_region
    _
  $region5: #{makeup_gan_forward.88} parent=0 // pred_fallthru
    _
  // Predicated region
  $region6: #{makeup_gan_forward.88} parent=0 // pred_check
    _
  $region7: #{makeup_gan_forward.88} parent=0 // pred_check_branch
    %11 = sbr.rel (0) target = $region9
  $region8: #{makeup_gan_forward.88} parent=0 // pred_region
    _
  $region9: #{makeup_gan_forward.88} parent=0 // pred_fallthru
    _
  // Predicated region
  $region10: #{makeup_gan_forward.88} parent=0 // pred_check
    _
  $region11: #{makeup_gan_forward.88} parent=0 // pred_check_branch
    %13 = sbr.rel (0) target = $region13
  $region12: #{makeup_gan_forward.88} parent=0 // pred_region
    _
  $region13: #{makeup_gan_forward.88} parent=0 // pred_fallthru
    _
  %v15 = vld [vmem:[%s0] sm:$0xf]
  %v16 = vld [vmem:[%s0 + $0x4] sm:$0xf]
  %v17 = vld [vmem:[%s0 + $0x8] sm:$0xf]
  %v18 = vld [vmem:[%s0 + $0xc] sm:$0xf]
  %v19 = vld [vmem:[%s0 + $0x10] sm:$0xf]
  %v20 = vld [vmem:[%s0 + $0x14] sm:$0xf]
  %v21 = vld [vmem:[%s0 + $0x18] sm:$0xf]
  %v22 = vld [vmem:[%s0 + $0x1c] sm:$0xf]
  %v23 = vld [vmem:[%s0 + $0x20] sm:$0xf]
  %v24 = vld [vmem:[%s0 + $0x24] sm:$0xf]
  %v25 = vld [vmem:[%s0 + $0x28] sm:$0xf]
  %v26 = vld [vmem:[%s0 + $0x2c] sm:$0xf]
  %v27 = vld [vmem:[%s0 + $0x30] sm:$0xf]
  %v28 = vld [vmem:[%s0 + $0x34] sm:$0xf]
  %v29 = vld [vmem:[%s0 + $0x38] sm:$0xf]
  %v30 = vld [vmem:[%s0 + $0x3c] sm:$0xf]
  %v31 = vld [vmem:[%s1] sm:$0xf]
  %v32 = vld [vmem:[%s1 + $0x4] sm:$0xf]
  %v33 = vld [vmem:[%s1 + $0x8] sm:$0xf]
  %v34 = vld [vmem:[%s1 + $0xc] sm:$0xf]
  %v35 = vld [vmem:[%s1 + $0x10] sm:$0xf]
  %v36 = vld [vmem:[%s1 + $0x14] sm:$0xf]
  %v37 = vld [vmem:[%s1 + $0x18] sm:$0xf]
  %v38 = vld [vmem:[%s1 + $0x1c] sm:$0xf]
  %v39 = vld [vmem:[%s2] sm:$0x1]
  %v41 = vlaneseq
  %v42 = vshrl.u32 %v41, 7
  %v43 = vsub.s32 0, %v42
  %v44 = vrot.slane %v39, %v43
  %v62 = vunpack.c.l.b16 %v15
  %v63 = vunpack.c.l.b16 %v16
  %v64 = vunpack.c.l.b16 %v17
  %v65 = vunpack.c.l.b16 %v18
  %v66 = vunpack.c.l.b16 %v19
  %v67 = vunpack.c.l.b16 %v20
  %v68 = vunpack.c.l.b16 %v21
  %v69 = vunpack.c.l.b16 %v22
  %v70 = vunpack.c.l.b16 %v23
  %v71 = vunpack.c.l.b16 %v24
  %v72 = vunpack.c.l.b16 %v25
  %v73 = vunpack.c.l.b16 %v26
  %v74 = vunpack.c.l.b16 %v27
  %v75 = vunpack.c.l.b16 %v28
  %v76 = vunpack.c.l.b16 %v29
  %v77 = vunpack.c.l.b16 %v30
  %v78 = vpack.c.b16 %v63, %v62
  %v79 = vpack.c.b16 %v65, %v64
  %v80 = vpack.c.b16 %v67, %v66
  %v81 = vpack.c.b16 %v69, %v68
  %v82 = vpack.c.b16 %v71, %v70
  %v83 = vpack.c.b16 %v73, %v72
  %v84 = vpack.c.b16 %v75, %v74
  %v85 = vpack.c.b16 %v77, %v76
  %v94 = vunpack.c.l.b16 %v31
  %v95 = vunpack.c.l.b16 %v32
  %v96 = vunpack.c.l.b16 %v33
  %v97 = vunpack.c.l.b16 %v34
  %v98 = vunpack.c.l.b16 %v35
  %v99 = vunpack.c.l.b16 %v36
  %v100 = vunpack.c.l.b16 %v37
  %v101 = vunpack.c.l.b16 %v38
  %v102 = vpack.c.b16 %v95, %v94
  %v103 = vpack.c.b16 %v97, %v96
  %v104 = vpack.c.b16 %v99, %v98
  %v105 = vpack.c.b16 %v101, %v100
  %vm110 = vcmask 523264
  %v112 = vsel %vm110, %v78, 0
  %v115 = vsel %vm110, %v79, 0
  %v118 = vsel %vm110, %v80, 0
  %v121 = vsel %vm110, %v81, 0
  %v124 = vsel %vm110, %v82, 0
  %v127 = vsel %vm110, %v83, 0
  %v130 = vsel %vm110, %v84, 0
  %v133 = vsel %vm110, %v85, 0
  %135 = vmatprep.subr.bf16.mxu0 0
  %136 = vmatpush1.bf16.msra.mxu0 %v102
  %137 = vmatprep.subr.bf16.mxu0 0
  %138 = vmatpush1.bf16.msra.mxu0 %v103
  %139 = vmatprep.subr.bf16.mxu0 0
  %140 = vmatpush1.bf16.msra.mxu0 %v104
  %141 = vmatprep.subr.bf16.mxu0 0
  %142 = vmatpush1.bf16.msra.mxu0 %v105
  %143 = vmatprep.subr.bf16.mxu0 0
  %144 = vmatpush1.bf16.msra.mxu0 0
  %145 = vmatprep.subr.bf16.mxu0 0
  %146 = vmatpush1.bf16.msra.mxu0 0
  %147 = vmatprep.subr.bf16.mxu0 0
  %148 = vmatpush1.bf16.msra.mxu0 0
  %149 = vmatprep.subr.bf16.mxu0 0
  %150 = vmatpush1.bf16.msra.mxu0 0
  %151 = vmatprep.subr.bf16.mxu0 0
  %152 = vmatpush1.bf16.msra.mxu0 0
  %153 = vmatprep.subr.bf16.mxu0 0
  %154 = vmatpush1.bf16.msra.mxu0 0
  %155 = vmatprep.subr.bf16.mxu0 0
  %156 = vmatpush1.bf16.msra.mxu0 0
  %157 = vmatprep.subr.bf16.mxu0 0
  %158 = vmatpush1.bf16.msra.mxu0 0
  %159 = vmatprep.subr.bf16.mxu0 0
  %160 = vmatpush1.bf16.msra.mxu0 0
  %161 = vmatprep.subr.bf16.mxu0 0
  %162 = vmatpush1.bf16.msra.mxu0 0
  %163 = vmatprep.subr.bf16.mxu0 0
  %164 = vmatpush1.bf16.msra.mxu0 0
  %165 = vmatprep.subr.bf16.mxu0 0
  %166 = vmatpush1.bf16.msra.mxu0 0
  %167 = vmatprep.mubr.bf16.mxu0 0
  %168 = vmatmul.mubr.bf16.gmra.mrb[0].mxu0 %v112
  %v169 = vpop.f32.mrb[0].mxu0
  %v170 = vadd.f32 %v44, %v169
  %v171 = vpop.f32.mrb[0].mxu0
  %v172 = vpop.f32.mrb[0].mxu0
  %v173 = vadd.f32 %v44, %v172
  %v174 = vpop.f32.mrb[0].mxu0
  %175 = vmatprep.mubr.bf16.mxu0 0
  %176 = vmatmul.mubr.bf16.gmra.mrb[0].mxu0 %v115
  %v177 = vpop.f32.mrb[0].mxu0
  %v178 = vadd.f32 %v44, %v177
  %v179 = vpop.f32.mrb[0].mxu0
  %v180 = vpop.f32.mrb[0].mxu0
  %v181 = vadd.f32 %v44, %v180
  %v182 = vpop.f32.mrb[0].mxu0
  %183 = vmatprep.mubr.bf16.mxu0 0
  %184 = vmatmul.mubr.bf16.gmra.mrb[0].mxu0 %v118
  %v185 = vpop.f32.mrb[0].mxu0
  %v186 = vadd.f32 %v44, %v185
  %v187 = vpop.f32.mrb[0].mxu0
  %v188 = vpop.f32.mrb[0].mxu0
  %v189 = vadd.f32 %v44, %v188
  %v190 = vpop.f32.mrb[0].mxu0
  %191 = vmatprep.mubr.bf16.mxu0 0
  %192 = vmatmul.mubr.bf16.gmra.mrb[0].mxu0 %v121
  %v193 = vpop.f32.mrb[0].mxu0
  %v194 = vadd.f32 %v44, %v193
  %v195 = vpop.f32.mrb[0].mxu0
  %v196 = vpop.f32.mrb[0].mxu0
  %v197 = vadd.f32 %v44, %v196
  %v198 = vpop.f32.mrb[0].mxu0
  %199 = vmatprep.mubr.bf16.mxu0 0
  %200 = vmatmul.mubr.bf16.gmra.mrb[0].mxu0 %v124
  %v201 = vpop.f32.mrb[0].mxu0
  %v202 = vadd.f32 %v44, %v201
  %v203 = vpop.f32.mrb[0].mxu0
  %v204 = vpop.f32.mrb[0].mxu0
  %v205 = vadd.f32 %v44, %v204
  %v206 = vpop.f32.mrb[0].mxu0
  %207 = vmatprep.mubr.bf16.mxu0 0
  %208 = vmatmul.mubr.bf16.gmra.mrb[0].mxu0 %v127
  %v209 = vpop.f32.mrb[0].mxu0
  %v210 = vadd.f32 %v44, %v209
  %v211 = vpop.f32.mrb[0].mxu0
  %v212 = vpop.f32.mrb[0].mxu0
  %v213 = vadd.f32 %v44, %v212
  %v214 = vpop.f32.mrb[0].mxu0
  %215 = vmatprep.mubr.bf16.mxu0 0
  %216 = vmatmul.mubr.bf16.gmra.mrb[0].mxu0 %v130
  %v217 = vpop.f32.mrb[0].mxu0
  %v218 = vadd.f32 %v44, %v217
  %v219 = vpop.f32.mrb[0].mxu0
  %v220 = vpop.f32.mrb[0].mxu0
  %v221 = vadd.f32 %v44, %v220
  %v222 = vpop.f32.mrb[0].mxu0
  %223 = vmatprep.mubr.bf16.mxu0 0
  %224 = vmatmul.mubr.bf16.gmra.mrb[0].mxu0 %v133
  %v225 = vpop.f32.mrb[0].mxu0
  %v226 = vadd.f32 %v44, %v225
  %v227 = vpop.f32.mrb[0].mxu0
  %v228 = vpop.f32.mrb[0].mxu0
  %v229 = vadd.f32 %v44, %v228
  %v230 = vpop.f32.mrb[0].mxu0
  %231 = vdwg.mxu0
  %vm232 = vcmp.ge.f32.partialorder %v170, 0.0
  %vm233 = vcmp.ge.f32.partialorder %v173, 0.0
  %vm234 = vcmp.ge.f32.partialorder %v178, 0.0
  %vm235 = vcmp.ge.f32.partialorder %v181, 0.0
  %vm236 = vcmp.ge.f32.partialorder %v186, 0.0
  %vm237 = vcmp.ge.f32.partialorder %v189, 0.0
  %vm238 = vcmp.ge.f32.partialorder %v194, 0.0
  %vm239 = vcmp.ge.f32.partialorder %v197, 0.0
  %vm240 = vcmp.ge.f32.partialorder %v202, 0.0
  %vm241 = vcmp.ge.f32.partialorder %v205, 0.0
  %vm242 = vcmp.ge.f32.partialorder %v210, 0.0
  %vm243 = vcmp.ge.f32.partialorder %v213, 0.0
  %vm244 = vcmp.ge.f32.partialorder %v218, 0.0
  %vm245 = vcmp.ge.f32.partialorder %v221, 0.0
  %vm246 = vcmp.ge.f32.partialorder %v226, 0.0
  %vm247 = vcmp.ge.f32.partialorder %v229, 0.0
  %v248 = vmul.f32 %v170, 0.2
  %v249 = vmul.f32 %v173, 0.2
  %v250 = vmul.f32 %v178, 0.2
  %v251 = vmul.f32 %v181, 0.2
  %v252 = vmul.f32 %v186, 0.2
  %v253 = vmul.f32 %v189, 0.2
  %v254 = vmul.f32 %v194, 0.2
  %v255 = vmul.f32 %v197, 0.2
  %v256 = vmul.f32 %v202, 0.2
  %v257 = vmul.f32 %v205, 0.2
  %v258 = vmul.f32 %v210, 0.2
  %v259 = vmul.f32 %v213, 0.2
  %v260 = vmul.f32 %v218, 0.2
  %v261 = vmul.f32 %v221, 0.2
  %v262 = vmul.f32 %v226, 0.2
  %v263 = vmul.f32 %v229, 0.2
  %v264 = vsel %vm232, %v170, %v248
  %v265 = vsel %vm233, %v173, %v249
  %v266 = vsel %vm234, %v178, %v250
  %v267 = vsel %vm235, %v181, %v251
  %v268 = vsel %vm236, %v186, %v252
  %v269 = vsel %vm237, %v189, %v253
  %v270 = vsel %vm238, %v194, %v254
  %v271 = vsel %vm239, %v197, %v255
  %v272 = vsel %vm240, %v202, %v256
  %v273 = vsel %vm241, %v205, %v257
  %v274 = vsel %vm242, %v210, %v258
  %v275 = vsel %vm243, %v213, %v259
  %v276 = vsel %vm244, %v218, %v260
  %v277 = vsel %vm245, %v221, %v261
  %v278 = vsel %vm246, %v226, %v262
  %v279 = vsel %vm247, %v229, %v263
  %v280 = vpack.c.bf16 %v265, %v264
  %v281 = vpack.c.bf16 %v267, %v266
  %v282 = vpack.c.bf16 %v269, %v268
  %v283 = vpack.c.bf16 %v271, %v270
  %v284 = vpack.c.bf16 %v273, %v272
  %v285 = vpack.c.bf16 %v275, %v274
  %v286 = vpack.c.bf16 %v277, %v276
  %v287 = vpack.c.bf16 %v279, %v278
  %v296 = vunpack.c.l.b16 %v280
  %v297 = vunpack.c.h.b16 %v280
  %v298 = vunpack.c.l.b16 %v281
  %v299 = vunpack.c.h.b16 %v281
  %v300 = vunpack.c.l.b16 %v282
  %v301 = vunpack.c.h.b16 %v282
  %v302 = vunpack.c.l.b16 %v283
  %v303 = vunpack.c.h.b16 %v283
  %v304 = vunpack.c.l.b16 %v284
  %v305 = vunpack.c.h.b16 %v284
  %v306 = vunpack.c.l.b16 %v285
  %v307 = vunpack.c.h.b16 %v285
  %v308 = vunpack.c.l.b16 %v286
  %v309 = vunpack.c.h.b16 %v286
  %v310 = vunpack.c.l.b16 %v287
  %v311 = vunpack.c.h.b16 %v287
  %v312 = vpack.c.b16 %v296, %v296
  %v313 = vpack.c.b16 %v297, %v297
  %v314 = vpack.c.b16 %v298, %v298
  %v315 = vpack.c.b16 %v299, %v299
  %v316 = vpack.c.b16 %v300, %v300
  %v317 = vpack.c.b16 %v301, %v301
  %v318 = vpack.c.b16 %v302, %v302
  %v319 = vpack.c.b16 %v303, %v303
  %v320 = vpack.c.b16 %v304, %v304
  %v321 = vpack.c.b16 %v305, %v305
  %v322 = vpack.c.b16 %v306, %v306
  %v323 = vpack.c.b16 %v307, %v307
  %v324 = vpack.c.b16 %v308, %v308
  %v325 = vpack.c.b16 %v309, %v309
  %v326 = vpack.c.b16 %v310, %v310
  %v327 = vpack.c.b16 %v311, %v311
  %344 = vst [vmem:[%s3] sm:$0xf] %v312
  %345 = vst [vmem:[%s3 + $0x4] sm:$0xf] %v313
  %346 = vst [vmem:[%s3 + $0x8] sm:$0xf] %v314
  %347 = vst [vmem:[%s3 + $0xc] sm:$0xf] %v315
  %348 = vst [vmem:[%s3 + $0x10] sm:$0xf] %v316
  %349 = vst [vmem:[%s3 + $0x14] sm:$0xf] %v317
  %350 = vst [vmem:[%s3 + $0x18] sm:$0xf] %v318
  %351 = vst [vmem:[%s3 + $0x1c] sm:$0xf] %v319
  %352 = vst [vmem:[%s3 + $0x20] sm:$0xf] %v320
  %353 = vst [vmem:[%s3 + $0x24] sm:$0xf] %v321
  %354 = vst [vmem:[%s3 + $0x28] sm:$0xf] %v322
  %355 = vst [vmem:[%s3 + $0x2c] sm:$0xf] %v323
  %356 = vst [vmem:[%s3 + $0x30] sm:$0xf] %v324
  %357 = vst [vmem:[%s3 + $0x34] sm:$0xf] %v325
  %358 = vst [vmem:[%s3 + $0x38] sm:$0xf] %v326
  %359 = vst [vmem:[%s3 + $0x3c] sm:$0xf] %v327
  // Predicated region
  $region14: #{makeup_gan_forward.88} parent=0 // pred_check
    _
  $region15: #{makeup_gan_forward.88} parent=0 // pred_check_branch
    %361 = sbr.rel (0) target = $region17
  $region16: #{makeup_gan_forward.88} parent=0 // pred_region
    _
  $region17: #{makeup_gan_forward.88} parent=0 // pred_fallthru
    _
  // Predicated region
  $region18: #{makeup_gan_forward.88} parent=0 // pred_check
    _
  $region19: #{makeup_gan_forward.88} parent=0 // pred_check_branch
    %363 = sbr.rel (0) target = $region21
  $region20: #{makeup_gan_forward.88} parent=0 // pred_region
    _
  $region21: #{makeup_gan_forward.88} parent=0 // pred_fallthru
    _

// kernel: makeup_gan_forward.89
$region0: #{makeup_gan_forward.89}
  #allocation0 [shape = 'u32[]', space=smem, size = 0x4, offset = 0x4, fixed_abs, tag = 'smem constant byte address 0x4 - core index']
  #allocation1 [shape = 'u32[144,128]{1,0:T(1,128)}', space=vmem, size = 0x12000, scoped, tag = 'internal scratch']
  %s0 = inlined_call_operand.vmem [shape: bf16[32,80], index: 0, kind: input, shape index: {}]
  %s1 = inlined_call_operand.vmem [shape: bf16[80,128], index: 1, kind: input, shape index: {}]
  %s2 = inlined_call_operand.vmem [shape: f32[1,128], index: 2, kind: input, shape index: {}]
  %s3 = inlined_call_operand.vmem [shape: f32[32,128], index: 3, kind: output, shape index: {}]
  %s4 = sld [smem:[#allocation0]]
  $region22: #{makeup_gan_forward.89} parent=0
    _
  %s6 = ssub.s32 1, %s4
  %s7 = scalar_select 0, %s6, %s4
  // Predicated region
  $region2: #{makeup_gan_forward.89} parent=0 // pred_check
    _
  $region3: #{makeup_gan_forward.89} parent=0 // pred_check_branch
    %9 = sbr.rel (0) target = $region5
  $region4: #{makeup_gan_forward.89} parent=0 // pred_region
    _
  $region5: #{makeup_gan_forward.89} parent=0 // pred_fallthru
    _
  // Predicated region
  $region6: #{makeup_gan_forward.89} parent=0 // pred_check
    _
  $region7: #{makeup_gan_forward.89} parent=0 // pred_check_branch
    %11 = sbr.rel (0) target = $region9
  $region8: #{makeup_gan_forward.89} parent=0 // pred_region
    _
  $region9: #{makeup_gan_forward.89} parent=0 // pred_fallthru
    _
  // Predicated region
  $region10: #{makeup_gan_forward.89} parent=0 // pred_check
    _
  $region11: #{makeup_gan_forward.89} parent=0 // pred_check_branch
    %13 = sbr.rel (0) target = $region13
  $region12: #{makeup_gan_forward.89} parent=0 // pred_region
    _
  $region13: #{makeup_gan_forward.89} parent=0 // pred_fallthru
    _
  %v15 = vld [vmem:[%s0] sm:$0xf]
  %v16 = vld [vmem:[%s0 + $0x4] sm:$0xf]
  %v17 = vld [vmem:[%s0 + $0x8] sm:$0xf]
  %v18 = vld [vmem:[%s0 + $0xc] sm:$0xf]
  %v19 = vld [vmem:[%s1] sm:$0xf]
  %v20 = vld [vmem:[%s1 + $0x4] sm:$0xf]
  %v21 = vld [vmem:[%s1 + $0x8] sm:$0xf]
  %v22 = vld [vmem:[%s1 + $0xc] sm:$0xf]
  %v23 = vld [vmem:[%s1 + $0x10] sm:$0xf]
  %v24 = vld [vmem:[%s1 + $0x14] sm:$0xf]
  %v25 = vld [vmem:[%s1 + $0x18] sm:$0xf]
  %v26 = vld [vmem:[%s1 + $0x1c] sm:$0xf]
  %v27 = vld [vmem:[%s1 + $0x20] sm:$0xf]
  %v28 = vld [vmem:[%s1 + $0x24] sm:$0xf]
  %v29 = vld [vmem:[%s2] sm:$0x1]
  %v31 = vlaneseq
  %v32 = vshrl.u32 %v31, 7
  %v33 = vsub.s32 0, %v32
  %v34 = vrot.slane %v29, %v33
  %v40 = vunpack.c.l.b16 %v15
  %v41 = vunpack.c.l.b16 %v16
  %v42 = vunpack.c.l.b16 %v17
  %v43 = vunpack.c.l.b16 %v18
  %v44 = vpack.c.b16 %v41, %v40
  %v45 = vpack.c.b16 %v43, %v42
  %v56 = vunpack.c.l.b16 %v19
  %v57 = vunpack.c.l.b16 %v20
  %v58 = vunpack.c.l.b16 %v21
  %v59 = vunpack.c.l.b16 %v22
  %v60 = vunpack.c.l.b16 %v23
  %v61 = vunpack.c.l.b16 %v24
  %v62 = vunpack.c.l.b16 %v25
  %v63 = vunpack.c.l.b16 %v26
  %v64 = vunpack.c.l.b16 %v27
  %v65 = vunpack.c.l.b16 %v28
  %v66 = vpack.c.b16 %v57, %v56
  %v67 = vpack.c.b16 %v59, %v58
  %v68 = vpack.c.b16 %v61, %v60
  %v69 = vpack.c.b16 %v63, %v62
  %v70 = vpack.c.b16 %v65, %v64
  %vm76 = vcmask 654336
  %v78 = vsel %vm76, %v44, 0
  %v81 = vsel %vm76, %v45, 0
  %83 = vmatprep.subr.bf16.mxu0 0
  %84 = vmatpush1.bf16.msra.mxu0 %v66
  %85 = vmatprep.subr.bf16.mxu0 0
  %86 = vmatpush1.bf16.msra.mxu0 %v67
  %87 = vmatprep.subr.bf16.mxu0 0
  %88 = vmatpush1.bf16.msra.mxu0 %v68
  %89 = vmatprep.subr.bf16.mxu0 0
  %90 = vmatpush1.bf16.msra.mxu0 %v69
  %91 = vmatprep.subr.bf16.mxu0 0
  %92 = vmatpush1.bf16.msra.mxu0 %v70
  %93 = vmatprep.subr.bf16.mxu0 0
  %94 = vmatpush1.bf16.msra.mxu0 0
  %95 = vmatprep.subr.bf16.mxu0 0
  %96 = vmatpush1.bf16.msra.mxu0 0
  %97 = vmatprep.subr.bf16.mxu0 0
  %98 = vmatpush1.bf16.msra.mxu0 0
  %99 = vmatprep.subr.bf16.mxu0 0
  %100 = vmatpush1.bf16.msra.mxu0 0
  %101 = vmatprep.subr.bf16.mxu0 0
  %102 = vmatpush1.bf16.msra.mxu0 0
  %103 = vmatprep.subr.bf16.mxu0 0
  %104 = vmatpush1.bf16.msra.mxu0 0
  %105 = vmatprep.subr.bf16.mxu0 0
  %106 = vmatpush1.bf16.msra.mxu0 0
  %107 = vmatprep.subr.bf16.mxu0 0
  %108 = vmatpush1.bf16.msra.mxu0 0
  %109 = vmatprep.subr.bf16.mxu0 0
  %110 = vmatpush1.bf16.msra.mxu0 0
  %111 = vmatprep.subr.bf16.mxu0 0
  %112 = vmatpush1.bf16.msra.mxu0 0
  %113 = vmatprep.subr.bf16.mxu0 0
  %114 = vmatpush1.bf16.msra.mxu0 0
  %115 = vmatprep.mubr.bf16.mxu0 0
  %116 = vmatmul.mubr.bf16.gmra.mrb[0].mxu0 %v78
  %v117 = vpop.f32.mrb[0].mxu0
  %v118 = vadd.f32 %v34, %v117
  %v119 = vpop.f32.mrb[0].mxu0
  %v120 = vpop.f32.mrb[0].mxu0
  %v121 = vadd.f32 %v34, %v120
  %v122 = vpop.f32.mrb[0].mxu0
  %123 = vmatprep.mubr.bf16.mxu0 0
  %124 = vmatmul.mubr.bf16.gmra.mrb[0].mxu0 %v81
  %v125 = vpop.f32.mrb[0].mxu0
  %v126 = vadd.f32 %v34, %v125
  %v127 = vpop.f32.mrb[0].mxu0
  %v128 = vpop.f32.mrb[0].mxu0
  %v129 = vadd.f32 %v34, %v128
  %v130 = vpop.f32.mrb[0].mxu0
  %131 = vdwg.mxu0
  %v132 = vtanh.pop %v118
  %v133 = vtanh.pop %v121
  %v134 = vtanh.pop %v126
  %v135 = vtanh.pop %v129
  %136 = vst [vmem:[%s3] sm:$0xff] %v132
  %137 = vst [vmem:[%s3 + $0x8] sm:$0xff] %v133
  %138 = vst [vmem:[%s3 + $0x10] sm:$0xff] %v134
  %139 = vst [vmem:[%s3 + $0x18] sm:$0xff] %v135
  // Predicated region
  $region14: #{makeup_gan_forward.89} parent=0 // pred_check
    _
  $region15: #{makeup_gan_forward.89} parent=0 // pred_check_branch
    %141 = sbr.rel (0) target = $region17
  $region16: #{makeup_gan_forward.89} parent=0 // pred_region
    _
  $region17: #{makeup_gan_forward.89} parent=0 // pred_fallthru
    _
  // Predicated region
  $region18: #{makeup_gan_forward.89} parent=0 // pred_check
    _
  $region19: #{makeup_gan_forward.89} parent=0 // pred_check_branch
    %143 = sbr.rel (0) target = $region21
  $region20: #{makeup_gan_forward.89} parent=0 // pred_region
    _
  $region21: #{makeup_gan_forward.89} parent=0 // pred_fallthru
    _

// kernel: makeup_gan_forward.92
$region0: #{makeup_gan_forward.92}
  #allocation0 [shape = 'u32[]', space=smem, size = 0x4, offset = 0x4, fixed_abs, tag = 'smem constant byte address 0x4 - core index']
  #allocation1 [shape = 'u32[144,128]{1,0:T(1,128)}', space=vmem, size = 0x12000, scoped, tag = 'internal scratch']
  %s0 = inlined_call_operand.vmem [shape: f32[16,8], index: 0, kind: input, shape index: {}]
  %s1 = inlined_call_operand.vmem [shape: f32[8,128], index: 1, kind: input, shape index: {}]
  %s2 = inlined_call_operand.vmem [shape: f32[1,128], index: 2, kind: input, shape index: {}]
  %s3 = inlined_call_operand.vmem [shape: f32[16,128], index: 3, kind: output, shape index: {}]
  %s4 = sld [smem:[#allocation0]]
  $region22: #{makeup_gan_forward.92} parent=0
    _
  %s6 = ssub.s32 1, %s4
  %s7 = scalar_select 0, %s6, %s4
  // Predicated region
  $region2: #{makeup_gan_forward.92} parent=0 // pred_check
    _
  $region3: #{makeup_gan_forward.92} parent=0 // pred_check_branch
    %9 = sbr.rel (0) target = $region5
  $region4: #{makeup_gan_forward.92} parent=0 // pred_region
    _
  $region5: #{makeup_gan_forward.92} parent=0 // pred_fallthru
    _
  // Predicated region
  $region6: #{makeup_gan_forward.92} parent=0 // pred_check
    _
  $region7: #{makeup_gan_forward.92} parent=0 // pred_check_branch
    %11 = sbr.rel (0) target = $region9
  $region8: #{makeup_gan_forward.92} parent=0 // pred_region
    _
  $region9: #{makeup_gan_forward.92} parent=0 // pred_fallthru
    _
  // Predicated region
  $region10: #{makeup_gan_forward.92} parent=0 // pred_check
    _
  $region11: #{makeup_gan_forward.92} parent=0 // pred_check_branch
    %13 = sbr.rel (0) target = $region13
  $region12: #{makeup_gan_forward.92} parent=0 // pred_region
    _
  $region13: #{makeup_gan_forward.92} parent=0 // pred_fallthru
    _
  %v14 = vld [vmem:[%s0] sm:$0xff]
  %v15 = vld [vmem:[%s0 + $0x8] sm:$0xff]
  %v16 = vld [vmem:[%s1] sm:$0xff]
  %v17 = vld [vmem:[%s2] sm:$0x1]
  %v19 = vlaneseq
  %v20 = vshrl.u32 %v19, 7
  %v21 = vsub.s32 0, %v20
  %v22 = vrot.slane %v17, %v21
  %vm24 = vcmask 64512
  %v26 = vsel %vm24, %v14, 0
  %v29 = vsel %vm24, %v15, 0
  %31 = vmatprep.subr.mxu0 0.0
  %32 = vmatpush1.msra.mxu0 %v16
  %33 = vmatprep.subr.mxu0 0.0
  %34 = vmatpush1.msra.mxu0 0.0
  %35 = vmatprep.subr.mxu0 0.0
  %36 = vmatpush1.msra.mxu0 0.0
  %37 = vmatprep.subr.mxu0 0.0
  %38 = vmatpush1.msra.mxu0 0.0
  %39 = vmatprep.subr.mxu0 0.0
  %40 = vmatpush1.msra.mxu0 0.0
  %41 = vmatprep.subr.mxu0 0.0
  %42 = vmatpush1.msra.mxu0 0.0
  %43 = vmatprep.subr.mxu0 0.0
  %44 = vmatpush1.msra.mxu0 0.0
  %45 = vmatprep.subr.mxu0 0.0
  %46 = vmatpush1.msra.mxu0 0.0
  %47 = vmatprep.subr.mxu0 0.0
  %48 = vmatpush1.msra.mxu0 0.0
  %49 = vmatprep.subr.mxu0 0.0
  %50 = vmatpush1.msra.mxu0 0.0
  %51 = vmatprep.subr.mxu0 0.0
  %52 = vmatpush1.msra.mxu0 0.0
  %53 = vmatprep.subr.mxu0 0.0
  %54 = vmatpush1.msra.mxu0 0.0
  %55 = vmatprep.subr.mxu0 0.0
  %56 = vmatpush1.msra.mxu0 0.0
  %57 = vmatprep.subr.mxu0 0.0
  %58 = vmatpush1.msra.mxu0 0.0
  %59 = vmatprep.subr.mxu0 0.0
  %60 = vmatpush1.msra.mxu0 0.0
  %61 = vmatprep.subr.mxu0 0.0
  %62 = vmatpush1.msra.mxu0 0.0
  %63 = vmatprep.subr.mxu0 0.0
  %64 = vmatpush1.msra.mxu0 0.0
  %65 = vmatprep.subr.mxu0 0.0
  %66 = vmatpush1.msra.mxu0 0.0
  %67 = vmatprep.subr.mxu0 0.0
  %68 = vmatpush1.msra.mxu0 0.0
  %69 = vmatprep.subr.mxu0 0.0
  %70 = vmatpush1.msra.mxu0 0.0
  %71 = vmatprep.subr.mxu0 0.0
  %72 = vmatpush1.msra.mxu0 0.0
  %73 = vmatprep.subr.mxu0 0.0
  %74 = vmatpush1.msra.mxu0 0.0
  %75 = vmatprep.subr.mxu0 0.0
  %76 = vmatpush1.msra.mxu0 0.0
  %77 = vmatprep.subr.mxu0 0.0
  %78 = vmatpush1.msra.mxu0 0.0
  %79 = vmatprep.subr.mxu0 0.0
  %80 = vmatpush1.msra.mxu0 0.0
  %81 = vmatprep.subr.mxu0 0.0
  %82 = vmatpush1.msra.mxu0 0.0
  %83 = vmatprep.subr.mxu0 0.0
  %84 = vmatpush1.msra.mxu0 0.0
  %85 = vmatprep.subr.mxu0 0.0
  %86 = vmatpush1.msra.mxu0 0.0
  %87 = vmatprep.subr.mxu0 0.0
  %88 = vmatpush1.msra.mxu0 0.0
  %89 = vmatprep.subr.mxu0 0.0
  %90 = vmatpush1.msra.mxu0 0.0
  %91 = vmatprep.subr.mxu0 0.0
  %92 = vmatpush1.msra.mxu0 0.0
  %93 = vmatprep.subr.mxu0 0.0
  %94 = vmatpush1.msra.mxu0 0.0
  %95 = vmatprep.mubr.f32.mxu0 0.0
  %96 = vmatmul.mubr.f32.gmra.mrb[0].mxu0 %v26
  %v97 = vpop.f32.mrb[0].mxu0
  %v98 = vadd.f32 %v22, %v97
  %v99 = vpop.f32.mrb[0].mxu0
  %100 = vmatprep.mubr.f32.mxu0 0.0
  %101 = vmatmul.mubr.f32.gmra.mrb[0].mxu0 %v29
  %v102 = vpop.f32.mrb[0].mxu0
  %v103 = vadd.f32 %v22, %v102
  %v104 = vpop.f32.mrb[0].mxu0
  %105 = vdwg.mxu0
  %106 = vst [vmem:[%s3] sm:$0xff] %v98
  %107 = vst [vmem:[%s3 + $0x8] sm:$0xff] %v103
  // Predicated region
  $region14: #{makeup_gan_forward.92} parent=0 // pred_check
    _
  $region15: #{makeup_gan_forward.92} parent=0 // pred_check_branch
    %109 = sbr.rel (0) target = $region17
  $region16: #{makeup_gan_forward.92} parent=0 // pred_region
    _
  $region17: #{makeup_gan_forward.92} parent=0 // pred_fallthru
    _
  // Predicated region
  $region18: #{makeup_gan_forward.92} parent=0 // pred_check
    _
  $region19: #{makeup_gan_forward.92} parent=0 // pred_check_branch
    %111 = sbr.rel (0) target = $region21
  $region20: #{makeup_gan_forward.92} parent=0 // pred_region
    _
  $region21: #{makeup_gan_forward.92} parent=0 // pred_fallthru
    _

// kernel: makeup_gan_forward.95
$region0: #{makeup_gan_forward.95}
  #allocation0 [shape = 'u32[]', space=smem, size = 0x4, offset = 0x4, fixed_abs, tag = 'smem constant byte address 0x4 - core index']
  #allocation1 [shape = 'u32[144,128]{1,0:T(1,128)}', space=vmem, size = 0x12000, scoped, tag = 'internal scratch']
  %s0 = inlined_call_operand.vmem [shape: f32[64,8], index: 0, kind: input, shape index: {}]
  %s1 = inlined_call_operand.vmem [shape: f32[8,128], index: 1, kind: input, shape index: {}]
  %s2 = inlined_call_operand.vmem [shape: f32[1,128], index: 2, kind: input, shape index: {}]
  %s3 = inlined_call_operand.vmem [shape: f32[64,128], index: 3, kind: output, shape index: {}]
  %s4 = sld [smem:[#allocation0]]
  $region22: #{makeup_gan_forward.95} parent=0
    _
  %s6 = ssub.s32 1, %s4
  %s7 = scalar_select 0, %s6, %s4
  // Predicated region
  $region2: #{makeup_gan_forward.95} parent=0 // pred_check
    _
  $region3: #{makeup_gan_forward.95} parent=0 // pred_check_branch
    %9 = sbr.rel (0) target = $region5
  $region4: #{makeup_gan_forward.95} parent=0 // pred_region
    _
  $region5: #{makeup_gan_forward.95} parent=0 // pred_fallthru
    _
  // Predicated region
  $region6: #{makeup_gan_forward.95} parent=0 // pred_check
    _
  $region7: #{makeup_gan_forward.95} parent=0 // pred_check_branch
    %11 = sbr.rel (0) target = $region9
  $region8: #{makeup_gan_forward.95} parent=0 // pred_region
    _
  $region9: #{makeup_gan_forward.95} parent=0 // pred_fallthru
    _
  // Predicated region
  $region10: #{makeup_gan_forward.95} parent=0 // pred_check
    _
  $region11: #{makeup_gan_forward.95} parent=0 // pred_check_branch
    %13 = sbr.rel (0) target = $region13
  $region12: #{makeup_gan_forward.95} parent=0 // pred_region
    _
  $region13: #{makeup_gan_forward.95} parent=0 // pred_fallthru
    _
  %v14 = vld [vmem:[%s0] sm:$0xff]
  %v15 = vld [vmem:[%s0 + $0x8] sm:$0xff]
  %v16 = vld [vmem:[%s0 + $0x10] sm:$0xff]
  %v17 = vld [vmem:[%s0 + $0x18] sm:$0xff]
  %v18 = vld [vmem:[%s0 + $0x20] sm:$0xff]
  %v19 = vld [vmem:[%s0 + $0x28] sm:$0xff]
  %v20 = vld [vmem:[%s0 + $0x30] sm:$0xff]
  %v21 = vld [vmem:[%s0 + $0x38] sm:$0xff]
  %v22 = vld [vmem:[%s1] sm:$0xff]
  %v23 = vld [vmem:[%s2] sm:$0x1]
  %v25 = vlaneseq
  %v26 = vshrl.u32 %v25, 7
  %v27 = vsub.s32 0, %v26
  %v28 = vrot.slane %v23, %v27
  %vm30 = vcmask 64512
  %v32 = vsel %vm30, %v14, 0
  %v35 = vsel %vm30, %v15, 0
  %v38 = vsel %vm30, %v16, 0
  %v41 = vsel %vm30, %v17, 0
  %v44 = vsel %vm30, %v18, 0
  %v47 = vsel %vm30, %v19, 0
  %v50 = vsel %vm30, %v20, 0
  %v53 = vsel %vm30, %v21, 0
  %55 = vmatprep.subr.mxu0 0.0
  %56 = vmatpush1.msra.mxu0 %v22
  %57 = vmatprep.subr.mxu0 0.0
  %58 = vmatpush1.msra.mxu0 0.0
  %59 = vmatprep.subr.mxu0 0.0
  %60 = vmatpush1.msra.mxu0 0.0
  %61 = vmatprep.subr.mxu0 0.0
  %62 = vmatpush1.msra.mxu0 0.0
  %63 = vmatprep.subr.mxu0 0.0
  %64 = vmatpush1.msra.mxu0 0.0
  %65 = vmatprep.subr.mxu0 0.0
  %66 = vmatpush1.msra.mxu0 0.0
  %67 = vmatprep.subr.mxu0 0.0
  %68 = vmatpush1.msra.mxu0 0.0
  %69 = vmatprep.subr.mxu0 0.0
  %70 = vmatpush1.msra.mxu0 0.0
  %71 = vmatprep.subr.mxu0 0.0
  %72 = vmatpush1.msra.mxu0 0.0
  %73 = vmatprep.subr.mxu0 0.0
  %74 = vmatpush1.msra.mxu0 0.0
  %75 = vmatprep.subr.mxu0 0.0
  %76 = vmatpush1.msra.mxu0 0.0
  %77 = vmatprep.subr.mxu0 0.0
  %78 = vmatpush1.msra.mxu0 0.0
  %79 = vmatprep.subr.mxu0 0.0
  %80 = vmatpush1.msra.mxu0 0.0
  %81 = vmatprep.subr.mxu0 0.0
  %82 = vmatpush1.msra.mxu0 0.0
  %83 = vmatprep.subr.mxu0 0.0
  %84 = vmatpush1.msra.mxu0 0.0
  %85 = vmatprep.subr.mxu0 0.0
  %86 = vmatpush1.msra.mxu0 0.0
  %87 = vmatprep.subr.mxu0 0.0
  %88 = vmatpush1.msra.mxu0 0.0
  %89 = vmatprep.subr.mxu0 0.0
  %90 = vmatpush1.msra.mxu0 0.0
  %91 = vmatprep.subr.mxu0 0.0
  %92 = vmatpush1.msra.mxu0 0.0
  %93 = vmatprep.subr.mxu0 0.0
  %94 = vmatpush1.msra.mxu0 0.0
  %95 = vmatprep.subr.mxu0 0.0
  %96 = vmatpush1.msra.mxu0 0.0
  %97 = vmatprep.subr.mxu0 0.0
  %98 = vmatpush1.msra.mxu0 0.0
  %99 = vmatprep.subr.mxu0 0.0
  %100 = vmatpush1.msra.mxu0 0.0
  %101 = vmatprep.subr.mxu0 0.0
  %102 = vmatpush1.msra.mxu0 0.0
  %103 = vmatprep.subr.mxu0 0.0
  %104 = vmatpush1.msra.mxu0 0.0
  %105 = vmatprep.subr.mxu0 0.0
  %106 = vmatpush1.msra.mxu0 0.0
  %107 = vmatprep.subr.mxu0 0.0
  %108 = vmatpush1.msra.mxu0 0.0
  %109 = vmatprep.subr.mxu0 0.0
  %110 = vmatpush1.msra.mxu0 0.0
  %111 = vmatprep.subr.mxu0 0.0
  %112 = vmatpush1.msra.mxu0 0.0
  %113 = vmatprep.subr.mxu0 0.0
  %114 = vmatpush1.msra.mxu0 0.0
  %115 = vmatprep.subr.mxu0 0.0
  %116 = vmatpush1.msra.mxu0 0.0
  %117 = vmatprep.subr.mxu0 0.0
  %118 = vmatpush1.msra.mxu0 0.0
  %119 = vmatprep.mubr.f32.mxu0 0.0
  %120 = vmatmul.mubr.f32.gmra.mrb[0].mxu0 %v32
  %v121 = vpop.f32.mrb[0].mxu0
  %v122 = vadd.f32 %v28, %v121
  %v123 = vpop.f32.mrb[0].mxu0
  %124 = vmatprep.mubr.f32.mxu0 0.0
  %125 = vmatmul.mubr.f32.gmra.mrb[0].mxu0 %v35
  %v126 = vpop.f32.mrb[0].mxu0
  %v127 = vadd.f32 %v28, %v126
  %v128 = vpop.f32.mrb[0].mxu0
  %129 = vmatprep.mubr.f32.mxu0 0.0
  %130 = vmatmul.mubr.f32.gmra.mrb[0].mxu0 %v38
  %v131 = vpop.f32.mrb[0].mxu0
  %v132 = vadd.f32 %v28, %v131
  %v133 = vpop.f32.mrb[0].mxu0
  %134 = vmatprep.mubr.f32.mxu0 0.0
  %135 = vmatmul.mubr.f32.gmra.mrb[0].mxu0 %v41
  %v136 = vpop.f32.mrb[0].mxu0
  %v137 = vadd.f32 %v28, %v136
  %v138 = vpop.f32.mrb[0].mxu0
  %139 = vmatprep.mubr.f32.mxu0 0.0
  %140 = vmatmul.mubr.f32.gmra.mrb[0].mxu0 %v44
  %v141 = vpop.f32.mrb[0].mxu0
  %v142 = vadd.f32 %v28, %v141
  %v143 = vpop.f32.mrb[0].mxu0
  %144 = vmatprep.mubr.f32.mxu0 0.0
  %145 = vmatmul.mubr.f32.gmra.mrb[0].mxu0 %v47
  %v146 = vpop.f32.mrb[0].mxu0
  %v147 = vadd.f32 %v28, %v146
  %v148 = vpop.f32.mrb[0].mxu0
  %149 = vmatprep.mubr.f32.mxu0 0.0
  %150 = vmatmul.mubr.f32.gmra.mrb[0].mxu0 %v50
  %v151 = vpop.f32.mrb[0].mxu0
  %v152 = vadd.f32 %v28, %v151
  %v153 = vpop.f32.mrb[0].mxu0
  %154 = vmatprep.mubr.f32.mxu0 0.0
  %155 = vmatmul.mubr.f32.gmra.mrb[0].mxu0 %v53
  %v156 = vpop.f32.mrb[0].mxu0
  %v157 = vadd.f32 %v28, %v156
  %v158 = vpop.f32.mrb[0].mxu0
  %159 = vdwg.mxu0
  %160 = vst [vmem:[%s3] sm:$0xff] %v122
  %161 = vst [vmem:[%s3 + $0x8] sm:$0xff] %v127
  %162 = vst [vmem:[%s3 + $0x10] sm:$0xff] %v132
  %163 = vst [vmem:[%s3 + $0x18] sm:$0xff] %v137
  %164 = vst [vmem:[%s3 + $0x20] sm:$0xff] %v142
  %165 = vst [vmem:[%s3 + $0x28] sm:$0xff] %v147
  %166 = vst [vmem:[%s3 + $0x30] sm:$0xff] %v152
  %167 = vst [vmem:[%s3 + $0x38] sm:$0xff] %v157
  // Predicated region
  $region14: #{makeup_gan_forward.95} parent=0 // pred_check
    _
  $region15: #{makeup_gan_forward.95} parent=0 // pred_check_branch
    %169 = sbr.rel (0) target = $region17
  $region16: #{makeup_gan_forward.95} parent=0 // pred_region
    _
  $region17: #{makeup_gan_forward.95} parent=0 // pred_fallthru
    _
  // Predicated region
  $region18: #{makeup_gan_forward.95} parent=0 // pred_check
    _
  $region19: #{makeup_gan_forward.95} parent=0 // pred_check_branch
    %171 = sbr.rel (0) target = $region21
  $region20: #{makeup_gan_forward.95} parent=0 // pred_region
    _
  $region21: #{makeup_gan_forward.95} parent=0 // pred_fallthru
    _

// kernel: makeup_gan_forward.98
$region0: #{makeup_gan_forward.98}
  #allocation0 [shape = 'u32[]', space=smem, size = 0x4, offset = 0x4, fixed_abs, tag = 'smem constant byte address 0x4 - core index']
  #allocation1 [shape = 'u32[144,128]{1,0:T(1,128)}', space=vmem, size = 0x12000, scoped, tag = 'internal scratch']
  %s0 = inlined_call_operand.vmem [shape: bf16[2,8,256], index: 0, kind: input, shape index: {}]
  %s1 = inlined_call_operand.vmem [shape: s32[2,4,256], index: 1, kind: input, shape index: {}]
  %s2 = inlined_call_operand.vmem [shape: f32[2,4,256], index: 2, kind: input, shape index: {}]
  %s3 = inlined_call_operand.vmem [shape: f32[2,8,256], index: 3, kind: output, shape index: {}]
  %s4 = sld [smem:[#allocation0]]
  $region45: #{makeup_gan_forward.98} parent=0
    _
  %s6 = ssub.s32 1, %s4
  %s7 = scalar_select 0, %s6, %s4
  loop: start=0, step=1, limit=4
  $region2: #{makeup_gan_forward.98} parent=0 // loop_pre_header
    _
  $region3: #{makeup_gan_forward.98} parent=0 // loop_header
    %s9 = sphi 0, %s13
    %p10 = scmp.ge.s32.totalorder %s9, 4
    %s16 = sphi 0, %s28
    %s17 = sphi 0, %s24
    %s18 = sphi 0, %s16
    %s19 = sphi 0, %s17
    %s20 = sphi 0, %s18
    %s21 = sphi 0, %s19
    %s31 = sphi 0, %s33
    %s34 = sphi 0, %s31
    %s35 = sphi 0, %s34
    %s51 = sphi 0, %s35
    %s59 = sphi 0, %s61
    %s62 = sphi 0, %s59
    %s63 = sphi 0, %s62
    %s79 = sphi 0, %s63
    %s87 = sphi 0, %s89
    %s90 = sphi 0, %s87
    %s91 = sphi 0, %s90
    %s107 = sphi 0, %s91
    %s115 = sphi 0, %s117
    %s118 = sphi 0, %s115
    %s119 = sphi 0, %s118
    %s135 = sphi 0, %s119
  $region4: #{makeup_gan_forward.98} parent=0 // loop_header_branch
    %12 = sbr.rel (%p10) target = $region8
  $region5: #{makeup_gan_forward.98} parent=0 // loop_body
    %s14 = ssub.s32 %s9, 1
    %s15 = ssub.s32 %s9, 2
    %s22 = sadd.s32 1, %s17
    %p23 = scmp.ge.s32.totalorder %s22, 1
    %s24 = scalar_select %p23, 0, %s22
    %s25 = sadd.s32 1, %s16
    %s26 = scalar_select %p23, %s25, %s16
    %p27 = scmp.ge.s32.totalorder %s26, 2
    %s28 = scalar_select %p27, 0, %s26
    %s29 = ssub.s32 %s16, %s28
    %p30 = scmp.eq.s32.totalorder %s29, 0
    %s32 = sadd.s32 %s31, 1
    %s33 = scalar_select %p30, %s31, %s32
    %p36 = pneg %p30
    %p37 = scmp.eq.s32.totalorder %s9, 1
    %p38 = por %p36, %p37
    %p39 = scmp.ne.s32.totalorder %s31, %s34
    %p40 = scmp.eq.s32.totalorder %s9, 0
    %p41 = por %p39, %p40
    %p42 = scmp.ne.s32.totalorder %s31, %s34
    %p43 = scmp.eq.s32.totalorder %s14, 1
    %p44 = por %p42, %p43
    %p45 = scmp.ne.s32.totalorder %s34, %s35
    %p46 = scmp.eq.s32.totalorder %s14, 0
    %p47 = por %p45, %p46
    %p48 = scmp.ne.s32.totalorder %s34, %s35
    %p49 = scmp.eq.s32.totalorder %s15, 1
    %p50 = por %p48, %p49
    %p52 = scmp.ne.s32.totalorder %s35, %s51
    %p53 = scmp.eq.s32.totalorder %s15, 0
    %p54 = por %p52, %p53
    %s55 = ssub.s32 %s16, %s28
    %s56 = ssub.s32 %s17, %s24
    %s57 = sor.u32 %s55, %s56
    %p58 = scmp.eq.s32.totalorder %s57, 0
    %s60 = sadd.s32 %s59, 1
    %s61 = scalar_select %p58, %s59, %s60
    %p64 = pneg %p58
    %p65 = scmp.eq.s32.totalorder %s9, 1
    %p66 = por %p64, %p65
    %p67 = scmp.ne.s32.totalorder %s59, %s62
    %p68 = scmp.eq.s32.totalorder %s9, 0
    %p69 = por %p67, %p68
    %p70 = scmp.ne.s32.totalorder %s59, %s62
    %p71 = scmp.eq.s32.totalorder %s14, 1
    %p72 = por %p70, %p71
    %p73 = scmp.ne.s32.totalorder %s62, %s63
    %p74 = scmp.eq.s32.totalorder %s14, 0
    %p75 = por %p73, %p74
    %p76 = scmp.ne.s32.totalorder %s62, %s63
    %p77 = scmp.eq.s32.totalorder %s15, 1
    %p78 = por %p76, %p77
    %p80 = scmp.ne.s32.totalorder %s63, %s79
    %p81 = scmp.eq.s32.totalorder %s15, 0
    %p82 = por %p80, %p81
    %s83 = ssub.s32 %s16, %s28
    %s84 = ssub.s32 %s17, %s24
    %s85 = sor.u32 %s83, %s84
    %p86 = scmp.eq.s32.totalorder %s85, 0
    %s88 = sadd.s32 %s87, 1
    %s89 = scalar_select %p86, %s87, %s88
    %p92 = pneg %p86
    %p93 = scmp.eq.s32.totalorder %s9, 1
    %p94 = por %p92, %p93
    %p95 = scmp.ne.s32.totalorder %s87, %s90
    %p96 = scmp.eq.s32.totalorder %s9, 0
    %p97 = por %p95, %p96
    %p98 = scmp.ne.s32.totalorder %s87, %s90
    %p99 = scmp.eq.s32.totalorder %s14, 1
    %p100 = por %p98, %p99
    %p101 = scmp.ne.s32.totalorder %s90, %s91
    %p102 = scmp.eq.s32.totalorder %s14, 0
    %p103 = por %p101, %p102
    %p104 = scmp.ne.s32.totalorder %s90, %s91
    %p105 = scmp.eq.s32.totalorder %s15, 1
    %p106 = por %p104, %p105
    %p108 = scmp.ne.s32.totalorder %s91, %s107
    %p109 = scmp.eq.s32.totalorder %s15, 0
    %p110 = por %p108, %p109
    %s111 = ssub.s32 %s16, %s28
    %s112 = ssub.s32 %s17, %s24
    %s113 = sor.u32 %s111, %s112
    %p114 = scmp.eq.s32.totalorder %s113, 0
    %s116 = sadd.s32 %s115, 1
    %s117 = scalar_select %p114, %s115, %s116
    %p120 = pneg %p114
    %p121 = scmp.eq.s32.totalorder %s9, 1
    %p122 = por %p120, %p121
    %p123 = scmp.ne.s32.totalorder %s115, %s118
    %p124 = scmp.eq.s32.totalorder %s9, 0
    %p125 = por %p123, %p124
    %p126 = scmp.ne.s32.totalorder %s115, %s118
    %p127 = scmp.eq.s32.totalorder %s14, 1
    %p128 = por %p126, %p127
    %p129 = scmp.ne.s32.totalorder %s118, %s119
    %p130 = scmp.eq.s32.totalorder %s14, 0
    %p131 = por %p129, %p130
    %p132 = scmp.ne.s32.totalorder %s118, %s119
    %p133 = scmp.eq.s32.totalorder %s15, 1
    %p134 = por %p132, %p133
    %p136 = scmp.ne.s32.totalorder %s119, %s135
    %p137 = scmp.eq.s32.totalorder %s15, 0
    %p138 = por %p136, %p137
    %p139 = scmp.le.s32.totalorder 1, %s9
    %p140 = scmp.lt.s32.totalorder %s9, 3
    %p141 = pnand %p139, %p140
    %p142 = pneg %p141
    // Predicated region
    $region9: #{makeup_gan_forward.98} parent=5 // pred_check
      _
    $region10: #{makeup_gan_forward.98} parent=5 // pred_check_branch
      %144 = sbr.rel (%p141) target = $region12
    $region11: #{makeup_gan_forward.98} parent=5 // pred_region
      %s145 = ssub.s32 %s9, 1
    $region12: #{makeup_gan_forward.98} parent=5 // pred_fallthru
      _
    %p146 = scmp.lt.s32.totalorder %s9, 2
    // Predicated region
    $region13: #{makeup_gan_forward.98} parent=5 // pred_check
      %p147 = pneg %p146
    $region14: #{makeup_gan_forward.98} parent=5 // pred_check_branch
      %149 = sbr.rel (%p147) target = $region16
    $region15: #{makeup_gan_forward.98} parent=5 // pred_region
      // Predicated region
      $region17: #{makeup_gan_forward.98} parent=15 // pred_check
        %p150 = pneg %p41
      $region18: #{makeup_gan_forward.98} parent=15 // pred_check_branch
        %152 = sbr.rel (%p150) target = $region20
      $region19: #{makeup_gan_forward.98} parent=15 // pred_region
        %p153 = scmp.lt.s32.totalorder %s16, 1
        %s154 = scalar_select %p153, %s16, 1
        %s155 = smul.addr %s154, 2
        %s156 = smul.addr %s155, 4
        %s157 = scalar_lea.vmem %s0, %s156
      $region20: #{makeup_gan_forward.98} parent=15 // pred_fallthru
        _
      // Predicated region
      $region21: #{makeup_gan_forward.98} parent=15 // pred_check
        %p158 = pneg %p69
      $region22: #{makeup_gan_forward.98} parent=15 // pred_check_branch
        %160 = sbr.rel (%p158) target = $region24
      $region23: #{makeup_gan_forward.98} parent=15 // pred_region
        %s161 = smul.u32 2, %s17
        %p162 = scmp.lt.s32.totalorder %s16, 1
        %s163 = scalar_select %p162, %s16, 1
        %p164 = scmp.lt.s32.totalorder %s161, 1
        %s165 = scalar_select %p164, %s161, 1
        %s166 = smul.addr %s163, 2
        %s167 = sadd.s32 %s165, %s166
        %s168 = smul.addr %s167, 4
        %s169 = scalar_lea.vmem %s1, %s168
        %s170 = smul.u32 2, %s17
      $region24: #{makeup_gan_forward.98} parent=15 // pred_fallthru
        _
      // Predicated region
      $region25: #{makeup_gan_forward.98} parent=15 // pred_check
        %p171 = pneg %p97
      $region26: #{makeup_gan_forward.98} parent=15 // pred_check_branch
        %173 = sbr.rel (%p171) target = $region28
      $region27: #{makeup_gan_forward.98} parent=15 // pred_region
        %s174 = smul.u32 2, %s17
        %p175 = scmp.lt.s32.totalorder %s16, 1
        %s176 = scalar_select %p175, %s16, 1
        %p177 = scmp.lt.s32.totalorder %s174, 1
        %s178 = scalar_select %p177, %s174, 1
        %s179 = smul.addr %s176, 2
        %s180 = sadd.s32 %s178, %s179
        %s181 = smul.addr %s180, 4
        %s182 = scalar_lea.vmem %s2, %s181
        %s183 = smul.u32 2, %s17
      $region28: #{makeup_gan_forward.98} parent=15 // pred_fallthru
        _
    $region16: #{makeup_gan_forward.98} parent=5 // pred_fallthru
      _
    %p184 = scmp.le.s32.totalorder 1, %s9
    %p185 = scmp.lt.s32.totalorder %s9, 3
    %p186 = pnand %p184, %p185
    %p187 = pneg %p186
    // Predicated region
    $region29: #{makeup_gan_forward.98} parent=5 // pred_check
      _
    $region30: #{makeup_gan_forward.98} parent=5 // pred_check_branch
      %189 = sbr.rel (%p186) target = $region32
    $region31: #{makeup_gan_forward.98} parent=5 // pred_region
      %s190 = ssub.s32 %s9, 1
      %p191 = scmp.lt.s32.totalorder %s18, 1
      %s192 = scalar_select %p191, %s18, 1
      %s193 = smul.addr %s192, 2
      %s194 = smul.addr %s193, 4
      %s195 = scalar_lea.vmem %s0, %s194
      %p196 = pneg %p47
      %p197 = pneg %p44
      %s198 = smul.u32 2, %s19
      %p199 = scmp.lt.s32.totalorder %s18, 1
      %s200 = scalar_select %p199, %s18, 1
      %p201 = scmp.lt.s32.totalorder %s198, 1
      %s202 = scalar_select %p201, %s198, 1
      %s203 = smul.addr %s200, 2
      %s204 = sadd.s32 %s202, %s203
      %s205 = smul.addr %s204, 4
      %s206 = scalar_lea.vmem %s1, %s205
      %p207 = pneg %p75
      %p208 = pneg %p72
      %s209 = smul.u32 2, %s19
      %p210 = scmp.lt.s32.totalorder %s18, 1
      %s211 = scalar_select %p210, %s18, 1
      %p212 = scmp.lt.s32.totalorder %s209, 1
      %s213 = scalar_select %p212, %s209, 1
      %s214 = smul.addr %s211, 2
      %s215 = sadd.s32 %s213, %s214
      %s216 = smul.addr %s215, 4
      %s217 = scalar_lea.vmem %s2, %s216
      %p218 = pneg %p103
      %p219 = pneg %p100
      %p220 = pneg %p131
      %p221 = pneg %p128
      %s222 = smul.u32 2, %s19
      %p223 = scmp.lt.s32.totalorder %s18, 1
      %s224 = scalar_select %p223, %s18, 1
      %p225 = scmp.lt.s32.totalorder %s222, 1
      %s226 = scalar_select %p225, %s222, 1
      %s227 = smul.addr %s224, 2
      %s228 = sadd.s32 %s226, %s227
      %s229 = smul.addr %s228, 8
      %s230 = scalar_lea.vmem %s3, %s229
      %p231 = scmp.lt.s32.totalorder %s18, 1
      %s232 = scalar_select %p231, %s18, 1
      %s233 = smul.addr %s232, 2
      %s234 = smul.addr %s233, 4
      %s235 = scalar_lea.vmem %s0, %s234
      %s236 = smul.u32 2, %s19
      %p237 = scmp.lt.s32.totalorder %s18, 1
      %s238 = scalar_select %p237, %s18, 1
      %p239 = scmp.lt.s32.totalorder %s236, 1
      %s240 = scalar_select %p239, %s236, 1
      %s241 = smul.addr %s238, 2
      %s242 = sadd.s32 %s240, %s241
      %s243 = smul.addr %s242, 4
      %s244 = scalar_lea.vmem %s1, %s243
      %s245 = smul.u32 2, %s19
      %s246 = smul.u32 2, %s19
      %p247 = scmp.lt.s32.totalorder %s18, 1
      %s248 = scalar_select %p247, %s18, 1
      %p249 = scmp.lt.s32.totalorder %s246, 1
      %s250 = scalar_select %p249, %s246, 1
      %s251 = smul.addr %s248, 2
      %s252 = sadd.s32 %s250, %s251
      %s253 = smul.addr %s252, 4
      %s254 = scalar_lea.vmem %s2, %s253
      %s255 = smul.u32 2, %s19
      %s256 = smul.u32 2, %s19
      %p257 = scmp.lt.s32.totalorder %s18, 1
      %s258 = scalar_select %p257, %s18, 1
      %p259 = scmp.lt.s32.totalorder %s256, 1
      %s260 = scalar_select %p259, %s256, 1
      %s261 = smul.addr %s258, 2
      %s262 = sadd.s32 %s260, %s261
      %s263 = smul.addr %s262, 8
      %s264 = scalar_lea.vmem %s3, %s263
      %s265 = smul.u32 2, %s19
      %v266 = vld [vmem:[%s235] sm:$0xff]
      %v267 = vld [vmem:[%s244] sm:$0xff]
      %v268 = vld [vmem:[%s254] sm:$0xff]
      %v269 = vlaneseq
      %v270 = vshrl.u32 %v269, 7
      %v271 = vadd.s32 %v270, 8
      %v272 = vadd.s32 %v270, 16
      %v273 = vadd.s32 %v270, 24
      %v274 = vadd.s32 %v270, 32
      %v275 = vadd.s32 %v270, 40
      %v276 = vadd.s32 %v270, 48
      %v277 = vadd.s32 %v270, 56
      %v278 = vadd.s32 %v270, 64
      %v279 = vadd.s32 %v270, 72
      %v280 = vadd.s32 %v270, 80
      %v281 = vadd.s32 %v270, 88
      %v282 = vadd.s32 %v270, 96
      %v283 = vadd.s32 %v270, 104
      %v284 = vadd.s32 %v270, 112
      %v285 = vadd.s32 %v270, 120
      %v286 = vadd.s32 %v270, 128
      %v287 = vadd.s32 %v270, 136
      %v288 = vadd.s32 %v270, 144
      %v289 = vadd.s32 %v270, 152
      %v290 = vadd.s32 %v270, 160
      %v291 = vadd.s32 %v270, 168
      %v292 = vadd.s32 %v270, 176
      %v293 = vadd.s32 %v270, 184
      %v294 = vadd.s32 %v270, 192
      %v295 = vadd.s32 %v270, 200
      %v296 = vadd.s32 %v270, 208
      %v297 = vadd.s32 %v270, 216
      %v298 = vadd.s32 %v270, 224
      %v299 = vadd.s32 %v270, 232
      %v300 = vadd.s32 %v270, 240
      %v301 = vadd.s32 %v270, 248
      %v302 = vlaneseq
      %v303 = vshrl.u32 %v302, 7
      %v304 = vsub.s32 0, %v303
      %v305 = vrot.slane %v267, %v304
      %v306 = vlaneseq
      %v307 = vshrl.u32 %v306, 7
      %v308 = vsub.s32 4, %v307
      %v309 = vrot.slane %v267, %v308
      %v310 = vlaneseq
      %v311 = vshrl.u32 %v310, 7
      %v312 = vsub.s32 0, %v311
      %v313 = vrot.slane %v305, %v312
      %v314 = vlaneseq
      %v315 = vshrl.u32 %v314, 7
      %v316 = vsub.s32 0, %v315
      %v317 = vrot.slane %v309, %v316
      %vm318 = vcmp.eq.s32.totalorder %v270, %v313
      %vm319 = vcmp.eq.s32.totalorder %v270, %v317
      %vm320 = vcmp.eq.s32.totalorder %v271, %v313
      %vm321 = vcmp.eq.s32.totalorder %v271, %v317
      %vm322 = vcmp.eq.s32.totalorder %v272, %v313
      %vm323 = vcmp.eq.s32.totalorder %v272, %v317
      %vm324 = vcmp.eq.s32.totalorder %v273, %v313
      %vm325 = vcmp.eq.s32.totalorder %v273, %v317
      %vm326 = vcmp.eq.s32.totalorder %v274, %v313
      %vm327 = vcmp.eq.s32.totalorder %v274, %v317
      %vm328 = vcmp.eq.s32.totalorder %v275, %v313
      %vm329 = vcmp.eq.s32.totalorder %v275, %v317
      %vm330 = vcmp.eq.s32.totalorder %v276, %v313
      %vm331 = vcmp.eq.s32.totalorder %v276, %v317
      %vm332 = vcmp.eq.s32.totalorder %v277, %v313
      %vm333 = vcmp.eq.s32.totalorder %v277, %v317
      %vm334 = vcmp.eq.s32.totalorder %v278, %v313
      %vm335 = vcmp.eq.s32.totalorder %v278, %v317
      %vm336 = vcmp.eq.s32.totalorder %v279, %v313
      %vm337 = vcmp.eq.s32.totalorder %v279, %v317
      %vm338 = vcmp.eq.s32.totalorder %v280, %v313
      %vm339 = vcmp.eq.s32.totalorder %v280, %v317
      %vm340 = vcmp.eq.s32.totalorder %v281, %v313
      %vm341 = vcmp.eq.s32.totalorder %v281, %v317
      %vm342 = vcmp.eq.s32.totalorder %v282, %v313
      %vm343 = vcmp.eq.s32.totalorder %v282, %v317
      %vm344 = vcmp.eq.s32.totalorder %v283, %v313
      %vm345 = vcmp.eq.s32.totalorder %v283, %v317
      %vm346 = vcmp.eq.s32.totalorder %v284, %v313
      %vm347 = vcmp.eq.s32.totalorder %v284, %v317
      %vm348 = vcmp.eq.s32.totalorder %v285, %v313
      %vm349 = vcmp.eq.s32.totalorder %v285, %v317
      %vm350 = vcmp.eq.s32.totalorder %v286, %v313
      %vm351 = vcmp.eq.s32.totalorder %v286, %v317
      %vm352 = vcmp.eq.s32.totalorder %v287, %v313
      %vm353 = vcmp.eq.s32.totalorder %v287, %v317
      %vm354 = vcmp.eq.s32.totalorder %v288, %v313
      %vm355 = vcmp.eq.s32.totalorder %v288, %v317
      %vm356 = vcmp.eq.s32.totalorder %v289, %v313
      %vm357 = vcmp.eq.s32.totalorder %v289, %v317
      %vm358 = vcmp.eq.s32.totalorder %v290, %v313
      %vm359 = vcmp.eq.s32.totalorder %v290, %v317
      %vm360 = vcmp.eq.s32.totalorder %v291, %v313
      %vm361 = vcmp.eq.s32.totalorder %v291, %v317
      %vm362 = vcmp.eq.s32.totalorder %v292, %v313
      %vm363 = vcmp.eq.s32.totalorder %v292, %v317
      %vm364 = vcmp.eq.s32.totalorder %v293, %v313
      %vm365 = vcmp.eq.s32.totalorder %v293, %v317
      %vm366 = vcmp.eq.s32.totalorder %v294, %v313
      %vm367 = vcmp.eq.s32.totalorder %v294, %v317
      %vm368 = vcmp.eq.s32.totalorder %v295, %v313
      %vm369 = vcmp.eq.s32.totalorder %v295, %v317
      %vm370 = vcmp.eq.s32.totalorder %v296, %v313
      %vm371 = vcmp.eq.s32.totalorder %v296, %v317
      %vm372 = vcmp.eq.s32.totalorder %v297, %v313
      %vm373 = vcmp.eq.s32.totalorder %v297, %v317
      %vm374 = vcmp.eq.s32.totalorder %v298, %v313
      %vm375 = vcmp.eq.s32.totalorder %v298, %v317
      %vm376 = vcmp.eq.s32.totalorder %v299, %v313
      %vm377 = vcmp.eq.s32.totalorder %v299, %v317
      %vm378 = vcmp.eq.s32.totalorder %v300, %v313
      %vm379 = vcmp.eq.s32.totalorder %v300, %v317
      %vm380 = vcmp.eq.s32.totalorder %v301, %v313
      %vm381 = vcmp.eq.s32.totalorder %v301, %v317
      %v383 = vlaneseq
      %v384 = vshrl.u32 %v383, 7
      %v385 = vsub.s32 0, %v384
      %v386 = vrot.slane %v268, %v385
      %v387 = vlaneseq
      %v388 = vshrl.u32 %v387, 7
      %v389 = vsub.s32 4, %v388
      %v390 = vrot.slane %v268, %v389
      %v393 = vlaneseq
      %v394 = vshrl.u32 %v393, 7
      %v395 = vsub.s32 0, %v394
      %v396 = vrot.slane %v386, %v395
      %v397 = vlaneseq
      %v398 = vshrl.u32 %v397, 7
      %v399 = vsub.s32 0, %v398
      %v400 = vrot.slane %v390, %v399
      %v401 = vsel %vm318, %v396, 0.0
      %v402 = vsel %vm319, %v400, 0.0
      %v403 = vsel %vm320, %v396, 0.0
      %v404 = vsel %vm321, %v400, 0.0
      %v405 = vsel %vm322, %v396, 0.0
      %v406 = vsel %vm323, %v400, 0.0
      %v407 = vsel %vm324, %v396, 0.0
      %v408 = vsel %vm325, %v400, 0.0
      %v409 = vsel %vm326, %v396, 0.0
      %v410 = vsel %vm327, %v400, 0.0
      %v411 = vsel %vm328, %v396, 0.0
      %v412 = vsel %vm329, %v400, 0.0
      %v413 = vsel %vm330, %v396, 0.0
      %v414 = vsel %vm331, %v400, 0.0
      %v415 = vsel %vm332, %v396, 0.0
      %v416 = vsel %vm333, %v400, 0.0
      %v417 = vsel %vm334, %v396, 0.0
      %v418 = vsel %vm335, %v400, 0.0
      %v419 = vsel %vm336, %v396, 0.0
      %v420 = vsel %vm337, %v400, 0.0
      %v421 = vsel %vm338, %v396, 0.0
      %v422 = vsel %vm339, %v400, 0.0
      %v423 = vsel %vm340, %v396, 0.0
      %v424 = vsel %vm341, %v400, 0.0
      %v425 = vsel %vm342, %v396, 0.0
      %v426 = vsel %vm343, %v400, 0.0
      %v427 = vsel %vm344, %v396, 0.0
      %v428 = vsel %vm345, %v400, 0.0
      %v429 = vsel %vm346, %v396, 0.0
      %v430 = vsel %vm347, %v400, 0.0
      %v431 = vsel %vm348, %v396, 0.0
      %v432 = vsel %vm349, %v400, 0.0
      %v433 = vsel %vm350, %v396, 0.0
      %v434 = vsel %vm351, %v400, 0.0
      %v435 = vsel %vm352, %v396, 0.0
      %v436 = vsel %vm353, %v400, 0.0
      %v437 = vsel %vm354, %v396, 0.0
      %v438 = vsel %vm355, %v400, 0.0
      %v439 = vsel %vm356, %v396, 0.0
      %v440 = vsel %vm357, %v400, 0.0
      %v441 = vsel %vm358, %v396, 0.0
      %v442 = vsel %vm359, %v400, 0.0
      %v443 = vsel %vm360, %v396, 0.0
      %v444 = vsel %vm361, %v400, 0.0
      %v445 = vsel %vm362, %v396, 0.0
      %v446 = vsel %vm363, %v400, 0.0
      %v447 = vsel %vm364, %v396, 0.0
      %v448 = vsel %vm365, %v400, 0.0
      %v449 = vsel %vm366, %v396, 0.0
      %v450 = vsel %vm367, %v400, 0.0
      %v451 = vsel %vm368, %v396, 0.0
      %v452 = vsel %vm369, %v400, 0.0
      %v453 = vsel %vm370, %v396, 0.0
      %v454 = vsel %vm371, %v400, 0.0
      %v455 = vsel %vm372, %v396, 0.0
      %v456 = vsel %vm373, %v400, 0.0
      %v457 = vsel %vm374, %v396, 0.0
      %v458 = vsel %vm375, %v400, 0.0
      %v459 = vsel %vm376, %v396, 0.0
      %v460 = vsel %vm377, %v400, 0.0
      %v461 = vsel %vm378, %v396, 0.0
      %v462 = vsel %vm379, %v400, 0.0
      %v463 = vsel %vm380, %v396, 0.0
      %v464 = vsel %vm381, %v400, 0.0
      %v465 = vlaneseq
      %v466 = vshrl.u32 %v465, 7
      %v467 = vsub.s32 1, %v466
      %v468 = vrot.slane %v267, %v467
      %v469 = vlaneseq
      %v470 = vshrl.u32 %v469, 7
      %v471 = vsub.s32 5, %v470
      %v472 = vrot.slane %v267, %v471
      %v473 = vlaneseq
      %v474 = vshrl.u32 %v473, 7
      %v475 = vsub.s32 1, %v474
      %v476 = vrot.slane %v468, %v475
      %v477 = vlaneseq
      %v478 = vshrl.u32 %v477, 7
      %v479 = vsub.s32 1, %v478
      %v480 = vrot.slane %v472, %v479
      %vm481 = vcmp.eq.s32.totalorder %v270, %v476
      %vm482 = vcmp.eq.s32.totalorder %v270, %v480
      %vm483 = vcmp.eq.s32.totalorder %v271, %v476
      %vm484 = vcmp.eq.s32.totalorder %v271, %v480
      %vm485 = vcmp.eq.s32.totalorder %v272, %v476
      %vm486 = vcmp.eq.s32.totalorder %v272, %v480
      %vm487 = vcmp.eq.s32.totalorder %v273, %v476
      %vm488 = vcmp.eq.s32.totalorder %v273, %v480
      %vm489 = vcmp.eq.s32.totalorder %v274, %v476
      %vm490 = vcmp.eq.s32.totalorder %v274, %v480
      %vm491 = vcmp.eq.s32.totalorder %v275, %v476
      %vm492 = vcmp.eq.s32.totalorder %v275, %v480
      %vm493 = vcmp.eq.s32.totalorder %v276, %v476
      %vm494 = vcmp.eq.s32.totalorder %v276, %v480
      %vm495 = vcmp.eq.s32.totalorder %v277, %v476
      %vm496 = vcmp.eq.s32.totalorder %v277, %v480
      %vm497 = vcmp.eq.s32.totalorder %v278, %v476
      %vm498 = vcmp.eq.s32.totalorder %v278, %v480
      %vm499 = vcmp.eq.s32.totalorder %v279, %v476
      %vm500 = vcmp.eq.s32.totalorder %v279, %v480
      %vm501 = vcmp.eq.s32.totalorder %v280, %v476
      %vm502 = vcmp.eq.s32.totalorder %v280, %v480
      %vm503 = vcmp.eq.s32.totalorder %v281, %v476
      %vm504 = vcmp.eq.s32.totalorder %v281, %v480
      %vm505 = vcmp.eq.s32.totalorder %v282, %v476
      %vm506 = vcmp.eq.s32.totalorder %v282, %v480
      %vm507 = vcmp.eq.s32.totalorder %v283, %v476
      %vm508 = vcmp.eq.s32.totalorder %v283, %v480
      %vm509 = vcmp.eq.s32.totalorder %v284, %v476
      %vm510 = vcmp.eq.s32.totalorder %v284, %v480
      %vm511 = vcmp.eq.s32.totalorder %v285, %v476
      %vm512 = vcmp.eq.s32.totalorder %v285, %v480
      %vm513 = vcmp.eq.s32.totalorder %v286, %v476
      %vm514 = vcmp.eq.s32.totalorder %v286, %v480
      %vm515 = vcmp.eq.s32.totalorder %v287, %v476
      %vm516 = vcmp.eq.s32.totalorder %v287, %v480
      %vm517 = vcmp.eq.s32.totalorder %v288, %v476
      %vm518 = vcmp.eq.s32.totalorder %v288, %v480
      %vm519 = vcmp.eq.s32.totalorder %v289, %v476
      %vm520 = vcmp.eq.s32.totalorder %v289, %v480
      %vm521 = vcmp.eq.s32.totalorder %v290, %v476
      %vm522 = vcmp.eq.s32.totalorder %v290, %v480
      %vm523 = vcmp.eq.s32.totalorder %v291, %v476
      %vm524 = vcmp.eq.s32.totalorder %v291, %v480
      %vm525 = vcmp.eq.s32.totalorder %v292, %v476
      %vm526 = vcmp.eq.s32.totalorder %v292, %v480
      %vm527 = vcmp.eq.s32.totalorder %v293, %v476
      %vm528 = vcmp.eq.s32.totalorder %v293, %v480
      %vm529 = vcmp.eq.s32.totalorder %v294, %v476
      %vm530 = vcmp.eq.s32.totalorder %v294, %v480
      %vm531 = vcmp.eq.s32.totalorder %v295, %v476
      %vm532 = vcmp.eq.s32.totalorder %v295, %v480
      %vm533 = vcmp.eq.s32.totalorder %v296, %v476
      %vm534 = vcmp.eq.s32.totalorder %v296, %v480
      %vm535 = vcmp.eq.s32.totalorder %v297, %v476
      %vm536 = vcmp.eq.s32.totalorder %v297, %v480
      %vm537 = vcmp.eq.s32.totalorder %v298, %v476
      %vm538 = vcmp.eq.s32.totalorder %v298, %v480
      %vm539 = vcmp.eq.s32.totalorder %v299, %v476
      %vm540 = vcmp.eq.s32.totalorder %v299, %v480
      %vm541 = vcmp.eq.s32.totalorder %v300, %v476
      %vm542 = vcmp.eq.s32.totalorder %v300, %v480
      %vm543 = vcmp.eq.s32.totalorder %v301, %v476
      %vm544 = vcmp.eq.s32.totalorder %v301, %v480
      %v545 = vlaneseq
      %v546 = vshrl.u32 %v545, 7
      %v547 = vsub.s32 1, %v546
      %v548 = vrot.slane %v268, %v547
      %v549 = vlaneseq
      %v550 = vshrl.u32 %v549, 7
      %v551 = vsub.s32 5, %v550
      %v552 = vrot.slane %v268, %v551
      %v555 = vlaneseq
      %v556 = vshrl.u32 %v555, 7
      %v557 = vsub.s32 1, %v556
      %v558 = vrot.slane %v548, %v557
      %v559 = vlaneseq
      %v560 = vshrl.u32 %v559, 7
      %v561 = vsub.s32 1, %v560
      %v562 = vrot.slane %v552, %v561
      %v563 = vsel %vm481, %v558, 0.0
      %v564 = vsel %vm482, %v562, 0.0
      %v565 = vsel %vm483, %v558, 0.0
      %v566 = vsel %vm484, %v562, 0.0
      %v567 = vsel %vm485, %v558, 0.0
      %v568 = vsel %vm486, %v562, 0.0
      %v569 = vsel %vm487, %v558, 0.0
      %v570 = vsel %vm488, %v562, 0.0
      %v571 = vsel %vm489, %v558, 0.0
      %v572 = vsel %vm490, %v562, 0.0
      %v573 = vsel %vm491, %v558, 0.0
      %v574 = vsel %vm492, %v562, 0.0
      %v575 = vsel %vm493, %v558, 0.0
      %v576 = vsel %vm494, %v562, 0.0
      %v577 = vsel %vm495, %v558, 0.0
      %v578 = vsel %vm496, %v562, 0.0
      %v579 = vsel %vm497, %v558, 0.0
      %v580 = vsel %vm498, %v562, 0.0
      %v581 = vsel %vm499, %v558, 0.0
      %v582 = vsel %vm500, %v562, 0.0
      %v583 = vsel %vm501, %v558, 0.0
      %v584 = vsel %vm502, %v562, 0.0
      %v585 = vsel %vm503, %v558, 0.0
      %v586 = vsel %vm504, %v562, 0.0
      %v587 = vsel %vm505, %v558, 0.0
      %v588 = vsel %vm506, %v562, 0.0
      %v589 = vsel %vm507, %v558, 0.0
      %v590 = vsel %vm508, %v562, 0.0
      %v591 = vsel %vm509, %v558, 0.0
      %v592 = vsel %vm510, %v562, 0.0
      %v593 = vsel %vm511, %v558, 0.0
      %v594 = vsel %vm512, %v562, 0.0
      %v595 = vsel %vm513, %v558, 0.0
      %v596 = vsel %vm514, %v562, 0.0
      %v597 = vsel %vm515, %v558, 0.0
      %v598 = vsel %vm516, %v562, 0.0
      %v599 = vsel %vm517, %v558, 0.0
      %v600 = vsel %vm518, %v562, 0.0
      %v601 = vsel %vm519, %v558, 0.0
      %v602 = vsel %vm520, %v562, 0.0
      %v603 = vsel %vm521, %v558, 0.0
      %v604 = vsel %vm522, %v562, 0.0
      %v605 = vsel %vm523, %v558, 0.0
      %v606 = vsel %vm524, %v562, 0.0
      %v607 = vsel %vm525, %v558, 0.0
      %v608 = vsel %vm526, %v562, 0.0
      %v609 = vsel %vm527, %v558, 0.0
      %v610 = vsel %vm528, %v562, 0.0
      %v611 = vsel %vm529, %v558, 0.0
      %v612 = vsel %vm530, %v562, 0.0
      %v613 = vsel %vm531, %v558, 0.0
      %v614 = vsel %vm532, %v562, 0.0
      %v615 = vsel %vm533, %v558, 0.0
      %v616 = vsel %vm534, %v562, 0.0
      %v617 = vsel %vm535, %v558, 0.0
      %v618 = vsel %vm536, %v562, 0.0
      %v619 = vsel %vm537, %v558, 0.0
      %v620 = vsel %vm538, %v562, 0.0
      %v621 = vsel %vm539, %v558, 0.0
      %v622 = vsel %vm540, %v562, 0.0
      %v623 = vsel %vm541, %v558, 0.0
      %v624 = vsel %vm542, %v562, 0.0
      %v625 = vsel %vm543, %v558, 0.0
      %v626 = vsel %vm544, %v562, 0.0
      %v627 = vadd.f32 %v401, %v563
      %v628 = vadd.f32 %v402, %v564
      %v629 = vadd.f32 %v403, %v565
      %v630 = vadd.f32 %v404, %v566
      %v631 = vadd.f32 %v405, %v567
      %v632 = vadd.f32 %v406, %v568
      %v633 = vadd.f32 %v407, %v569
      %v634 = vadd.f32 %v408, %v570
      %v635 = vadd.f32 %v409, %v571
      %v636 = vadd.f32 %v410, %v572
      %v637 = vadd.f32 %v411, %v573
      %v638 = vadd.f32 %v412, %v574
      %v639 = vadd.f32 %v413, %v575
      %v640 = vadd.f32 %v414, %v576
      %v641 = vadd.f32 %v415, %v577
      %v642 = vadd.f32 %v416, %v578
      %v643 = vadd.f32 %v417, %v579
      %v644 = vadd.f32 %v418, %v580
      %v645 = vadd.f32 %v419, %v581
      %v646 = vadd.f32 %v420, %v582
      %v647 = vadd.f32 %v421, %v583
      %v648 = vadd.f32 %v422, %v584
      %v649 = vadd.f32 %v423, %v585
      %v650 = vadd.f32 %v424, %v586
      %v651 = vadd.f32 %v425, %v587
      %v652 = vadd.f32 %v426, %v588
      %v653 = vadd.f32 %v427, %v589
      %v654 = vadd.f32 %v428, %v590
      %v655 = vadd.f32 %v429, %v591
      %v656 = vadd.f32 %v430, %v592
      %v657 = vadd.f32 %v431, %v593
      %v658 = vadd.f32 %v432, %v594
      %v659 = vadd.f32 %v433, %v595
      %v660 = vadd.f32 %v434, %v596
      %v661 = vadd.f32 %v435, %v597
      %v662 = vadd.f32 %v436, %v598
      %v663 = vadd.f32 %v437, %v599
      %v664 = vadd.f32 %v438, %v600
      %v665 = vadd.f32 %v439, %v601
      %v666 = vadd.f32 %v440, %v602
      %v667 = vadd.f32 %v441, %v603
      %v668 = vadd.f32 %v442, %v604
      %v669 = vadd.f32 %v443, %v605
      %v670 = vadd.f32 %v444, %v606
      %v671 = vadd.f32 %v445, %v607
      %v672 = vadd.f32 %v446, %v608
      %v673 = vadd.f32 %v447, %v609
      %v674 = vadd.f32 %v448, %v610
      %v675 = vadd.f32 %v449, %v611
      %v676 = vadd.f32 %v450, %v612
      %v677 = vadd.f32 %v451, %v613
      %v678 = vadd.f32 %v452, %v614
      %v679 = vadd.f32 %v453, %v615
      %v680 = vadd.f32 %v454, %v616
      %v681 = vadd.f32 %v455, %v617
      %v682 = vadd.f32 %v456, %v618
      %v683 = vadd.f32 %v457, %v619
      %v684 = vadd.f32 %v458, %v620
      %v685 = vadd.f32 %v459, %v621
      %v686 = vadd.f32 %v460, %v622
      %v687 = vadd.f32 %v461, %v623
      %v688 = vadd.f32 %v462, %v624
      %v689 = vadd.f32 %v463, %v625
      %v690 = vadd.f32 %v464, %v626
      %v691 = vlaneseq
      %v692 = vshrl.u32 %v691, 7
      %v693 = vsub.s32 2, %v692
      %v694 = vrot.slane %v267, %v693
      %v695 = vlaneseq
      %v696 = vshrl.u32 %v695, 7
      %v697 = vsub.s32 6, %v696
      %v698 = vrot.slane %v267, %v697
      %v699 = vlaneseq
      %v700 = vshrl.u32 %v699, 7
      %v701 = vsub.s32 2, %v700
      %v702 = vrot.slane %v694, %v701
      %v703 = vlaneseq
      %v704 = vshrl.u32 %v703, 7
      %v705 = vsub.s32 2, %v704
      %v706 = vrot.slane %v698, %v705
      %vm707 = vcmp.eq.s32.totalorder %v270, %v702
      %vm708 = vcmp.eq.s32.totalorder %v270, %v706
      %vm709 = vcmp.eq.s32.totalorder %v271, %v702
      %vm710 = vcmp.eq.s32.totalorder %v271, %v706
      %vm711 = vcmp.eq.s32.totalorder %v272, %v702
      %vm712 = vcmp.eq.s32.totalorder %v272, %v706
      %vm713 = vcmp.eq.s32.totalorder %v273, %v702
      %vm714 = vcmp.eq.s32.totalorder %v273, %v706
      %vm715 = vcmp.eq.s32.totalorder %v274, %v702
      %vm716 = vcmp.eq.s32.totalorder %v274, %v706
      %vm717 = vcmp.eq.s32.totalorder %v275, %v702
      %vm718 = vcmp.eq.s32.totalorder %v275, %v706
      %vm719 = vcmp.eq.s32.totalorder %v276, %v702
      %vm720 = vcmp.eq.s32.totalorder %v276, %v706
      %vm721 = vcmp.eq.s32.totalorder %v277, %v702
      %vm722 = vcmp.eq.s32.totalorder %v277, %v706
      %vm723 = vcmp.eq.s32.totalorder %v278, %v702
      %vm724 = vcmp.eq.s32.totalorder %v278, %v706
      %vm725 = vcmp.eq.s32.totalorder %v279, %v702
      %vm726 = vcmp.eq.s32.totalorder %v279, %v706
      %vm727 = vcmp.eq.s32.totalorder %v280, %v702
      %vm728 = vcmp.eq.s32.totalorder %v280, %v706
      %vm729 = vcmp.eq.s32.totalorder %v281, %v702
      %vm730 = vcmp.eq.s32.totalorder %v281, %v706
      %vm731 = vcmp.eq.s32.totalorder %v282, %v702
      %vm732 = vcmp.eq.s32.totalorder %v282, %v706
      %vm733 = vcmp.eq.s32.totalorder %v283, %v702
      %vm734 = vcmp.eq.s32.totalorder %v283, %v706
      %vm735 = vcmp.eq.s32.totalorder %v284, %v702
      %vm736 = vcmp.eq.s32.totalorder %v284, %v706
      %vm737 = vcmp.eq.s32.totalorder %v285, %v702
      %vm738 = vcmp.eq.s32.totalorder %v285, %v706
      %vm739 = vcmp.eq.s32.totalorder %v286, %v702
      %vm740 = vcmp.eq.s32.totalorder %v286, %v706
      %vm741 = vcmp.eq.s32.totalorder %v287, %v702
      %vm742 = vcmp.eq.s32.totalorder %v287, %v706
      %vm743 = vcmp.eq.s32.totalorder %v288, %v702
      %vm744 = vcmp.eq.s32.totalorder %v288, %v706
      %vm745 = vcmp.eq.s32.totalorder %v289, %v702
      %vm746 = vcmp.eq.s32.totalorder %v289, %v706
      %vm747 = vcmp.eq.s32.totalorder %v290, %v702
      %vm748 = vcmp.eq.s32.totalorder %v290, %v706
      %vm749 = vcmp.eq.s32.totalorder %v291, %v702
      %vm750 = vcmp.eq.s32.totalorder %v291, %v706
      %vm751 = vcmp.eq.s32.totalorder %v292, %v702
      %vm752 = vcmp.eq.s32.totalorder %v292, %v706
      %vm753 = vcmp.eq.s32.totalorder %v293, %v702
      %vm754 = vcmp.eq.s32.totalorder %v293, %v706
      %vm755 = vcmp.eq.s32.totalorder %v294, %v702
      %vm756 = vcmp.eq.s32.totalorder %v294, %v706
      %vm757 = vcmp.eq.s32.totalorder %v295, %v702
      %vm758 = vcmp.eq.s32.totalorder %v295, %v706
      %vm759 = vcmp.eq.s32.totalorder %v296, %v702
      %vm760 = vcmp.eq.s32.totalorder %v296, %v706
      %vm761 = vcmp.eq.s32.totalorder %v297, %v702
      %vm762 = vcmp.eq.s32.totalorder %v297, %v706
      %vm763 = vcmp.eq.s32.totalorder %v298, %v702
      %vm764 = vcmp.eq.s32.totalorder %v298, %v706
      %vm765 = vcmp.eq.s32.totalorder %v299, %v702
      %vm766 = vcmp.eq.s32.totalorder %v299, %v706
      %vm767 = vcmp.eq.s32.totalorder %v300, %v702
      %vm768 = vcmp.eq.s32.totalorder %v300, %v706
      %vm769 = vcmp.eq.s32.totalorder %v301, %v702
      %vm770 = vcmp.eq.s32.totalorder %v301, %v706
      %v771 = vlaneseq
      %v772 = vshrl.u32 %v771, 7
      %v773 = vsub.s32 2, %v772
      %v774 = vrot.slane %v268, %v773
      %v775 = vlaneseq
      %v776 = vshrl.u32 %v775, 7
      %v777 = vsub.s32 6, %v776
      %v778 = vrot.slane %v268, %v777
      %v781 = vlaneseq
      %v782 = vshrl.u32 %v781, 7
      %v783 = vsub.s32 2, %v782
      %v784 = vrot.slane %v774, %v783
      %v785 = vlaneseq
      %v786 = vshrl.u32 %v785, 7
      %v787 = vsub.s32 2, %v786
      %v788 = vrot.slane %v778, %v787
      %v789 = vsel %vm707, %v784, 0.0
      %v790 = vsel %vm708, %v788, 0.0
      %v791 = vsel %vm709, %v784, 0.0
      %v792 = vsel %vm710, %v788, 0.0
      %v793 = vsel %vm711, %v784, 0.0
      %v794 = vsel %vm712, %v788, 0.0
      %v795 = vsel %vm713, %v784, 0.0
      %v796 = vsel %vm714, %v788, 0.0
      %v797 = vsel %vm715, %v784, 0.0
      %v798 = vsel %vm716, %v788, 0.0
      %v799 = vsel %vm717, %v784, 0.0
      %v800 = vsel %vm718, %v788, 0.0
      %v801 = vsel %vm719, %v784, 0.0
      %v802 = vsel %vm720, %v788, 0.0
      %v803 = vsel %vm721, %v784, 0.0
      %v804 = vsel %vm722, %v788, 0.0
      %v805 = vsel %vm723, %v784, 0.0
      %v806 = vsel %vm724, %v788, 0.0
      %v807 = vsel %vm725, %v784, 0.0
      %v808 = vsel %vm726, %v788, 0.0
      %v809 = vsel %vm727, %v784, 0.0
      %v810 = vsel %vm728, %v788, 0.0
      %v811 = vsel %vm729, %v784, 0.0
      %v812 = vsel %vm730, %v788, 0.0
      %v813 = vsel %vm731, %v784, 0.0
      %v814 = vsel %vm732, %v788, 0.0
      %v815 = vsel %vm733, %v784, 0.0
      %v816 = vsel %vm734, %v788, 0.0
      %v817 = vsel %vm735, %v784, 0.0
      %v818 = vsel %vm736, %v788, 0.0
      %v819 = vsel %vm737, %v784, 0.0
      %v820 = vsel %vm738, %v788, 0.0
      %v821 = vsel %vm739, %v784, 0.0
      %v822 = vsel %vm740, %v788, 0.0
      %v823 = vsel %vm741, %v784, 0.0
      %v824 = vsel %vm742, %v788, 0.0
      %v825 = vsel %vm743, %v784, 0.0
      %v826 = vsel %vm744, %v788, 0.0
      %v827 = vsel %vm745, %v784, 0.0
      %v828 = vsel %vm746, %v788, 0.0
      %v829 = vsel %vm747, %v784, 0.0
      %v830 = vsel %vm748, %v788, 0.0
      %v831 = vsel %vm749, %v784, 0.0
      %v832 = vsel %vm750, %v788, 0.0
      %v833 = vsel %vm751, %v784, 0.0
      %v834 = vsel %vm752, %v788, 0.0
      %v835 = vsel %vm753, %v784, 0.0
      %v836 = vsel %vm754, %v788, 0.0
      %v837 = vsel %vm755, %v784, 0.0
      %v838 = vsel %vm756, %v788, 0.0
      %v839 = vsel %vm757, %v784, 0.0
      %v840 = vsel %vm758, %v788, 0.0
      %v841 = vsel %vm759, %v784, 0.0
      %v842 = vsel %vm760, %v788, 0.0
      %v843 = vsel %vm761, %v784, 0.0
      %v844 = vsel %vm762, %v788, 0.0
      %v845 = vsel %vm763, %v784, 0.0
      %v846 = vsel %vm764, %v788, 0.0
      %v847 = vsel %vm765, %v784, 0.0
      %v848 = vsel %vm766, %v788, 0.0
      %v849 = vsel %vm767, %v784, 0.0
      %v850 = vsel %vm768, %v788, 0.0
      %v851 = vsel %vm769, %v784, 0.0
      %v852 = vsel %vm770, %v788, 0.0
      %v853 = vadd.f32 %v627, %v789
      %v854 = vadd.f32 %v628, %v790
      %v855 = vadd.f32 %v629, %v791
      %v856 = vadd.f32 %v630, %v792
      %v857 = vadd.f32 %v631, %v793
      %v858 = vadd.f32 %v632, %v794
      %v859 = vadd.f32 %v633, %v795
      %v860 = vadd.f32 %v634, %v796
      %v861 = vadd.f32 %v635, %v797
      %v862 = vadd.f32 %v636, %v798
      %v863 = vadd.f32 %v637, %v799
      %v864 = vadd.f32 %v638, %v800
      %v865 = vadd.f32 %v639, %v801
      %v866 = vadd.f32 %v640, %v802
      %v867 = vadd.f32 %v641, %v803
      %v868 = vadd.f32 %v642, %v804
      %v869 = vadd.f32 %v643, %v805
      %v870 = vadd.f32 %v644, %v806
      %v871 = vadd.f32 %v645, %v807
      %v872 = vadd.f32 %v646, %v808
      %v873 = vadd.f32 %v647, %v809
      %v874 = vadd.f32 %v648, %v810
      %v875 = vadd.f32 %v649, %v811
      %v876 = vadd.f32 %v650, %v812
      %v877 = vadd.f32 %v651, %v813
      %v878 = vadd.f32 %v652, %v814
      %v879 = vadd.f32 %v653, %v815
      %v880 = vadd.f32 %v654, %v816
      %v881 = vadd.f32 %v655, %v817
      %v882 = vadd.f32 %v656, %v818
      %v883 = vadd.f32 %v657, %v819
      %v884 = vadd.f32 %v658, %v820
      %v885 = vadd.f32 %v659, %v821
      %v886 = vadd.f32 %v660, %v822
      %v887 = vadd.f32 %v661, %v823
      %v888 = vadd.f32 %v662, %v824
      %v889 = vadd.f32 %v663, %v825
      %v890 = vadd.f32 %v664, %v826
      %v891 = vadd.f32 %v665, %v827
      %v892 = vadd.f32 %v666, %v828
      %v893 = vadd.f32 %v667, %v829
      %v894 = vadd.f32 %v668, %v830
      %v895 = vadd.f32 %v669, %v831
      %v896 = vadd.f32 %v670, %v832
      %v897 = vadd.f32 %v671, %v833
      %v898 = vadd.f32 %v672, %v834
      %v899 = vadd.f32 %v673, %v835
      %v900 = vadd.f32 %v674, %v836
      %v901 = vadd.f32 %v675, %v837
      %v902 = vadd.f32 %v676, %v838
      %v903 = vadd.f32 %v677, %v839
      %v904 = vadd.f32 %v678, %v840
      %v905 = vadd.f32 %v679, %v841
      %v906 = vadd.f32 %v680, %v842
      %v907 = vadd.f32 %v681, %v843
      %v908 = vadd.f32 %v682, %v844
      %v909 = vadd.f32 %v683, %v845
      %v910 = vadd.f32 %v684, %v846
      %v911 = vadd.f32 %v685, %v847
      %v912 = vadd.f32 %v686, %v848
      %v913 = vadd.f32 %v687, %v849
      %v914 = vadd.f32 %v688, %v850
      %v915 = vadd.f32 %v689, %v851
      %v916 = vadd.f32 %v690, %v852
      %v917 = vlaneseq
      %v918 = vshrl.u32 %v917, 7
      %v919 = vsub.s32 3, %v918
      %v920 = vrot.slane %v267, %v919
      %v921 = vlaneseq
      %v922 = vshrl.u32 %v921, 7
      %v923 = vsub.s32 7, %v922
      %v924 = vrot.slane %v267, %v923
      %v925 = vlaneseq
      %v926 = vshrl.u32 %v925, 7
      %v927 = vsub.s32 3, %v926
      %v928 = vrot.slane %v920, %v927
      %v929 = vlaneseq
      %v930 = vshrl.u32 %v929, 7
      %v931 = vsub.s32 3, %v930
      %v932 = vrot.slane %v924, %v931
      %vm933 = vcmp.eq.s32.totalorder %v270, %v928
      %vm934 = vcmp.eq.s32.totalorder %v270, %v932
      %vm935 = vcmp.eq.s32.totalorder %v271, %v928
      %vm936 = vcmp.eq.s32.totalorder %v271, %v932
      %vm937 = vcmp.eq.s32.totalorder %v272, %v928
      %vm938 = vcmp.eq.s32.totalorder %v272, %v932
      %vm939 = vcmp.eq.s32.totalorder %v273, %v928
      %vm940 = vcmp.eq.s32.totalorder %v273, %v932
      %vm941 = vcmp.eq.s32.totalorder %v274, %v928
      %vm942 = vcmp.eq.s32.totalorder %v274, %v932
      %vm943 = vcmp.eq.s32.totalorder %v275, %v928
      %vm944 = vcmp.eq.s32.totalorder %v275, %v932
      %vm945 = vcmp.eq.s32.totalorder %v276, %v928
      %vm946 = vcmp.eq.s32.totalorder %v276, %v932
      %vm947 = vcmp.eq.s32.totalorder %v277, %v928
      %vm948 = vcmp.eq.s32.totalorder %v277, %v932
      %vm949 = vcmp.eq.s32.totalorder %v278, %v928
      %vm950 = vcmp.eq.s32.totalorder %v278, %v932
      %vm951 = vcmp.eq.s32.totalorder %v279, %v928
      %vm952 = vcmp.eq.s32.totalorder %v279, %v932
      %vm953 = vcmp.eq.s32.totalorder %v280, %v928
      %vm954 = vcmp.eq.s32.totalorder %v280, %v932
      %vm955 = vcmp.eq.s32.totalorder %v281, %v928
      %vm956 = vcmp.eq.s32.totalorder %v281, %v932
      %vm957 = vcmp.eq.s32.totalorder %v282, %v928
      %vm958 = vcmp.eq.s32.totalorder %v282, %v932
      %vm959 = vcmp.eq.s32.totalorder %v283, %v928
      %vm960 = vcmp.eq.s32.totalorder %v283, %v932
      %vm961 = vcmp.eq.s32.totalorder %v284, %v928
      %vm962 = vcmp.eq.s32.totalorder %v284, %v932
      %vm963 = vcmp.eq.s32.totalorder %v285, %v928
      %vm964 = vcmp.eq.s32.totalorder %v285, %v932
      %vm965 = vcmp.eq.s32.totalorder %v286, %v928
      %vm966 = vcmp.eq.s32.totalorder %v286, %v932
      %vm967 = vcmp.eq.s32.totalorder %v287, %v928
      %vm968 = vcmp.eq.s32.totalorder %v287, %v932
      %vm969 = vcmp.eq.s32.totalorder %v288, %v928
      %vm970 = vcmp.eq.s32.totalorder %v288, %v932
      %vm971 = vcmp.eq.s32.totalorder %v289, %v928
      %vm972 = vcmp.eq.s32.totalorder %v289, %v932
      %vm973 = vcmp.eq.s32.totalorder %v290, %v928
      %vm974 = vcmp.eq.s32.totalorder %v290, %v932
      %vm975 = vcmp.eq.s32.totalorder %v291, %v928
      %vm976 = vcmp.eq.s32.totalorder %v291, %v932
      %vm977 = vcmp.eq.s32.totalorder %v292, %v928
      %vm978 = vcmp.eq.s32.totalorder %v292, %v932
      %vm979 = vcmp.eq.s32.totalorder %v293, %v928
      %vm980 = vcmp.eq.s32.totalorder %v293, %v932
      %vm981 = vcmp.eq.s32.totalorder %v294, %v928
      %vm982 = vcmp.eq.s32.totalorder %v294, %v932
      %vm983 = vcmp.eq.s32.totalorder %v295, %v928
      %vm984 = vcmp.eq.s32.totalorder %v295, %v932
      %vm985 = vcmp.eq.s32.totalorder %v296, %v928
      %vm986 = vcmp.eq.s32.totalorder %v296, %v932
      %vm987 = vcmp.eq.s32.totalorder %v297, %v928
      %vm988 = vcmp.eq.s32.totalorder %v297, %v932
      %vm989 = vcmp.eq.s32.totalorder %v298, %v928
      %vm990 = vcmp.eq.s32.totalorder %v298, %v932
      %vm991 = vcmp.eq.s32.totalorder %v299, %v928
      %vm992 = vcmp.eq.s32.totalorder %v299, %v932
      %vm993 = vcmp.eq.s32.totalorder %v300, %v928
      %vm994 = vcmp.eq.s32.totalorder %v300, %v932
      %vm995 = vcmp.eq.s32.totalorder %v301, %v928
      %vm996 = vcmp.eq.s32.totalorder %v301, %v932
      %v997 = vlaneseq
      %v998 = vshrl.u32 %v997, 7
      %v999 = vsub.s32 3, %v998
      %v1000 = vrot.slane %v268, %v999
      %v1001 = vlaneseq
      %v1002 = vshrl.u32 %v1001, 7
      %v1003 = vsub.s32 7, %v1002
      %v1004 = vrot.slane %v268, %v1003
      %v1007 = vlaneseq
      %v1008 = vshrl.u32 %v1007, 7
      %v1009 = vsub.s32 3, %v1008
      %v1010 = vrot.slane %v1000, %v1009
      %v1011 = vlaneseq
      %v1012 = vshrl.u32 %v1011, 7
      %v1013 = vsub.s32 3, %v1012
      %v1014 = vrot.slane %v1004, %v1013
      %v1015 = vsel %vm933, %v1010, 0.0
      %v1016 = vsel %vm934, %v1014, 0.0
      %v1017 = vsel %vm935, %v1010, 0.0
      %v1018 = vsel %vm936, %v1014, 0.0
      %v1019 = vsel %vm937, %v1010, 0.0
      %v1020 = vsel %vm938, %v1014, 0.0
      %v1021 = vsel %vm939, %v1010, 0.0
      %v1022 = vsel %vm940, %v1014, 0.0
      %v1023 = vsel %vm941, %v1010, 0.0
      %v1024 = vsel %vm942, %v1014, 0.0
      %v1025 = vsel %vm943, %v1010, 0.0
      %v1026 = vsel %vm944, %v1014, 0.0
      %v1027 = vsel %vm945, %v1010, 0.0
      %v1028 = vsel %vm946, %v1014, 0.0
      %v1029 = vsel %vm947, %v1010, 0.0
      %v1030 = vsel %vm948, %v1014, 0.0
      %v1031 = vsel %vm949, %v1010, 0.0
      %v1032 = vsel %vm950, %v1014, 0.0
      %v1033 = vsel %vm951, %v1010, 0.0
      %v1034 = vsel %vm952, %v1014, 0.0
      %v1035 = vsel %vm953, %v1010, 0.0
      %v1036 = vsel %vm954, %v1014, 0.0
      %v1037 = vsel %vm955, %v1010, 0.0
      %v1038 = vsel %vm956, %v1014, 0.0
      %v1039 = vsel %vm957, %v1010, 0.0
      %v1040 = vsel %vm958, %v1014, 0.0
      %v1041 = vsel %vm959, %v1010, 0.0
      %v1042 = vsel %vm960, %v1014, 0.0
      %v1043 = vsel %vm961, %v1010, 0.0
      %v1044 = vsel %vm962, %v1014, 0.0
      %v1045 = vsel %vm963, %v1010, 0.0
      %v1046 = vsel %vm964, %v1014, 0.0
      %v1047 = vsel %vm965, %v1010, 0.0
      %v1048 = vsel %vm966, %v1014, 0.0
      %v1049 = vsel %vm967, %v1010, 0.0
      %v1050 = vsel %vm968, %v1014, 0.0
      %v1051 = vsel %vm969, %v1010, 0.0
      %v1052 = vsel %vm970, %v1014, 0.0
      %v1053 = vsel %vm971, %v1010, 0.0
      %v1054 = vsel %vm972, %v1014, 0.0
      %v1055 = vsel %vm973, %v1010, 0.0
      %v1056 = vsel %vm974, %v1014, 0.0
      %v1057 = vsel %vm975, %v1010, 0.0
      %v1058 = vsel %vm976, %v1014, 0.0
      %v1059 = vsel %vm977, %v1010, 0.0
      %v1060 = vsel %vm978, %v1014, 0.0
      %v1061 = vsel %vm979, %v1010, 0.0
      %v1062 = vsel %vm980, %v1014, 0.0
      %v1063 = vsel %vm981, %v1010, 0.0
      %v1064 = vsel %vm982, %v1014, 0.0
      %v1065 = vsel %vm983, %v1010, 0.0
      %v1066 = vsel %vm984, %v1014, 0.0
      %v1067 = vsel %vm985, %v1010, 0.0
      %v1068 = vsel %vm986, %v1014, 0.0
      %v1069 = vsel %vm987, %v1010, 0.0
      %v1070 = vsel %vm988, %v1014, 0.0
      %v1071 = vsel %vm989, %v1010, 0.0
      %v1072 = vsel %vm990, %v1014, 0.0
      %v1073 = vsel %vm991, %v1010, 0.0
      %v1074 = vsel %vm992, %v1014, 0.0
      %v1075 = vsel %vm993, %v1010, 0.0
      %v1076 = vsel %vm994, %v1014, 0.0
      %v1077 = vsel %vm995, %v1010, 0.0
      %v1078 = vsel %vm996, %v1014, 0.0
      %v1079 = vadd.f32 %v853, %v1015
      %v1080 = vadd.f32 %v854, %v1016
      %v1081 = vadd.f32 %v855, %v1017
      %v1082 = vadd.f32 %v856, %v1018
      %v1083 = vadd.f32 %v857, %v1019
      %v1084 = vadd.f32 %v858, %v1020
      %v1085 = vadd.f32 %v859, %v1021
      %v1086 = vadd.f32 %v860, %v1022
      %v1087 = vadd.f32 %v861, %v1023
      %v1088 = vadd.f32 %v862, %v1024
      %v1089 = vadd.f32 %v863, %v1025
      %v1090 = vadd.f32 %v864, %v1026
      %v1091 = vadd.f32 %v865, %v1027
      %v1092 = vadd.f32 %v866, %v1028
      %v1093 = vadd.f32 %v867, %v1029
      %v1094 = vadd.f32 %v868, %v1030
      %v1095 = vadd.f32 %v869, %v1031
      %v1096 = vadd.f32 %v870, %v1032
      %v1097 = vadd.f32 %v871, %v1033
      %v1098 = vadd.f32 %v872, %v1034
      %v1099 = vadd.f32 %v873, %v1035
      %v1100 = vadd.f32 %v874, %v1036
      %v1101 = vadd.f32 %v875, %v1037
      %v1102 = vadd.f32 %v876, %v1038
      %v1103 = vadd.f32 %v877, %v1039
      %v1104 = vadd.f32 %v878, %v1040
      %v1105 = vadd.f32 %v879, %v1041
      %v1106 = vadd.f32 %v880, %v1042
      %v1107 = vadd.f32 %v881, %v1043
      %v1108 = vadd.f32 %v882, %v1044
      %v1109 = vadd.f32 %v883, %v1045
      %v1110 = vadd.f32 %v884, %v1046
      %v1111 = vadd.f32 %v885, %v1047
      %v1112 = vadd.f32 %v886, %v1048
      %v1113 = vadd.f32 %v887, %v1049
      %v1114 = vadd.f32 %v888, %v1050
      %v1115 = vadd.f32 %v889, %v1051
      %v1116 = vadd.f32 %v890, %v1052
      %v1117 = vadd.f32 %v891, %v1053
      %v1118 = vadd.f32 %v892, %v1054
      %v1119 = vadd.f32 %v893, %v1055
      %v1120 = vadd.f32 %v894, %v1056
      %v1121 = vadd.f32 %v895, %v1057
      %v1122 = vadd.f32 %v896, %v1058
      %v1123 = vadd.f32 %v897, %v1059
      %v1124 = vadd.f32 %v898, %v1060
      %v1125 = vadd.f32 %v899, %v1061
      %v1126 = vadd.f32 %v900, %v1062
      %v1127 = vadd.f32 %v901, %v1063
      %v1128 = vadd.f32 %v902, %v1064
      %v1129 = vadd.f32 %v903, %v1065
      %v1130 = vadd.f32 %v904, %v1066
      %v1131 = vadd.f32 %v905, %v1067
      %v1132 = vadd.f32 %v906, %v1068
      %v1133 = vadd.f32 %v907, %v1069
      %v1134 = vadd.f32 %v908, %v1070
      %v1135 = vadd.f32 %v909, %v1071
      %v1136 = vadd.f32 %v910, %v1072
      %v1137 = vadd.f32 %v911, %v1073
      %v1138 = vadd.f32 %v912, %v1074
      %v1139 = vadd.f32 %v913, %v1075
      %v1140 = vadd.f32 %v914, %v1076
      %v1141 = vadd.f32 %v915, %v1077
      %v1142 = vadd.f32 %v916, %v1078
      %v1143 = vpack.c.bf16 %v1081, %v1079
      %v1144 = vpack.c.bf16 %v1082, %v1080
      %v1145 = vpack.c.bf16 %v1085, %v1083
      %v1146 = vpack.c.bf16 %v1086, %v1084
      %v1147 = vpack.c.bf16 %v1089, %v1087
      %v1148 = vpack.c.bf16 %v1090, %v1088
      %v1149 = vpack.c.bf16 %v1093, %v1091
      %v1150 = vpack.c.bf16 %v1094, %v1092
      %v1151 = vpack.c.bf16 %v1097, %v1095
      %v1152 = vpack.c.bf16 %v1098, %v1096
      %v1153 = vpack.c.bf16 %v1101, %v1099
      %v1154 = vpack.c.bf16 %v1102, %v1100
      %v1155 = vpack.c.bf16 %v1105, %v1103
      %v1156 = vpack.c.bf16 %v1106, %v1104
      %v1157 = vpack.c.bf16 %v1109, %v1107
      %v1158 = vpack.c.bf16 %v1110, %v1108
      %v1159 = vpack.c.bf16 %v1113, %v1111
      %v1160 = vpack.c.bf16 %v1114, %v1112
      %v1161 = vpack.c.bf16 %v1117, %v1115
      %v1162 = vpack.c.bf16 %v1118, %v1116
      %v1163 = vpack.c.bf16 %v1121, %v1119
      %v1164 = vpack.c.bf16 %v1122, %v1120
      %v1165 = vpack.c.bf16 %v1125, %v1123
      %v1166 = vpack.c.bf16 %v1126, %v1124
      %v1167 = vpack.c.bf16 %v1129, %v1127
      %v1168 = vpack.c.bf16 %v1130, %v1128
      %v1169 = vpack.c.bf16 %v1133, %v1131
      %v1170 = vpack.c.bf16 %v1134, %v1132
      %v1171 = vpack.c.bf16 %v1137, %v1135
      %v1172 = vpack.c.bf16 %v1138, %v1136
      %v1173 = vpack.c.bf16 %v1141, %v1139
      %v1174 = vpack.c.bf16 %v1142, %v1140
      %v1176 = vunpack.c.l.b16 %v266
      %v1177 = vunpack.c.h.b16 %v266
      %v1178 = vpack.c.b16 %v1176, %v1176
      %v1179 = vpack.c.b16 %v1177, %v1177
      %1182 = vmatprep.subr.bf16.mxu0 %v1144
      %1183 = vmatpush1.bf16.msra.mxu0 %v1143
      %1184 = vmatprep.subr.bf16.mxu0 %v1146
      %1185 = vmatpush1.bf16.msra.mxu0 %v1145
      %1186 = vmatprep.subr.bf16.mxu0 %v1148
      %1187 = vmatpush1.bf16.msra.mxu0 %v1147
      %1188 = vmatprep.subr.bf16.mxu0 %v1150
      %1189 = vmatpush1.bf16.msra.mxu0 %v1149
      %1190 = vmatprep.subr.bf16.mxu0 %v1152
      %1191 = vmatpush1.bf16.msra.mxu0 %v1151
      %1192 = vmatprep.subr.bf16.mxu0 %v1154
      %1193 = vmatpush1.bf16.msra.mxu0 %v1153
      %1194 = vmatprep.subr.bf16.mxu0 %v1156
      %1195 = vmatpush1.bf16.msra.mxu0 %v1155
      %1196 = vmatprep.subr.bf16.mxu0 %v1158
      %1197 = vmatpush1.bf16.msra.mxu0 %v1157
      %1198 = vmatprep.subr.bf16.mxu0 %v1160
      %1199 = vmatpush1.bf16.msra.mxu0 %v1159
      %1200 = vmatprep.subr.bf16.mxu0 %v1162
      %1201 = vmatpush1.bf16.msra.mxu0 %v1161
      %1202 = vmatprep.subr.bf16.mxu0 %v1164
      %1203 = vmatpush1.bf16.msra.mxu0 %v1163
      %1204 = vmatprep.subr.bf16.mxu0 %v1166
      %1205 = vmatpush1.bf16.msra.mxu0 %v1165
      %1206 = vmatprep.subr.bf16.mxu0 %v1168
      %1207 = vmatpush1.bf16.msra.mxu0 %v1167
      %1208 = vmatprep.subr.bf16.mxu0 %v1170
      %1209 = vmatpush1.bf16.msra.mxu0 %v1169
      %1210 = vmatprep.subr.bf16.mxu0 %v1172
      %1211 = vmatpush1.bf16.msra.mxu0 %v1171
      %1212 = vmatprep.subr.bf16.mxu0 %v1174
      %1213 = vmatpush1.bf16.msra.mxu0 %v1173
      %1214 = vmatprep.mubr.bf16.mxu0 %v1179
      %1215 = vmatmul.mubr.bf16.gmra.mrb[0].mxu0 %v1178
      %v1216 = vpop.f32.mrb[0].mxu0
      %v1217 = vadd.f32 0.0, %v1216
      %v1218 = vpop.f32.mrb[0].mxu0
      %v1219 = vadd.f32 0.0, %v1218
      %v1220 = vpop.f32.mrb[0].mxu0
      %v1221 = vpop.f32.mrb[0].mxu0
      %1222 = vdwg.mxu0
      %1223 = vst [vmem:[%s264] sm:$0xff] %v1217
      %1224 = vst [vmem:[%s264 + $0x8] sm:$0xff] %v1219
      %s1225 = smul.u32 2, %s19
      %p1226 = scmp.lt.s32.totalorder %s18, 1
      %s1227 = scalar_select %p1226, %s18, 1
      %p1228 = scmp.lt.s32.totalorder %s1225, 1
      %s1229 = scalar_select %p1228, %s1225, 1
      %s1230 = smul.addr %s1227, 2
      %s1231 = sadd.s32 %s1229, %s1230
      %s1232 = smul.addr %s1231, 8
      %s1233 = scalar_lea.vmem %s3, %s1232
      // Predicated region
      $region33: #{makeup_gan_forward.98} parent=31 // pred_check
        %p1234 = pneg %p128
      $region34: #{makeup_gan_forward.98} parent=31 // pred_check_branch
        %1236 = sbr.rel (%p1234) target = $region36
      $region35: #{makeup_gan_forward.98} parent=31 // pred_region
        %s1237 = smul.u32 2, %s19
      $region36: #{makeup_gan_forward.98} parent=31 // pred_fallthru
        _
    $region32: #{makeup_gan_forward.98} parent=5 // pred_fallthru
      _
    %p1238 = scmp.le.s32.totalorder 2, %s9
    // Predicated region
    $region37: #{makeup_gan_forward.98} parent=5 // pred_check
      %p1239 = pneg %p1238
    $region38: #{makeup_gan_forward.98} parent=5 // pred_check_branch
      %1241 = sbr.rel (%p1239) target = $region40
    $region39: #{makeup_gan_forward.98} parent=5 // pred_region
      %s1242 = ssub.s32 %s9, 2
      // Predicated region
      $region41: #{makeup_gan_forward.98} parent=39 // pred_check
        %p1243 = pneg %p134
      $region42: #{makeup_gan_forward.98} parent=39 // pred_check_branch
        %1245 = sbr.rel (%p1243) target = $region44
      $region43: #{makeup_gan_forward.98} parent=39 // pred_region
        %s1246 = smul.u32 2, %s21
        %p1247 = scmp.lt.s32.totalorder %s20, 1
        %s1248 = scalar_select %p1247, %s20, 1
        %p1249 = scmp.lt.s32.totalorder %s1246, 1
        %s1250 = scalar_select %p1249, %s1246, 1
        %s1251 = smul.addr %s1248, 2
        %s1252 = sadd.s32 %s1250, %s1251
        %s1253 = smul.addr %s1252, 8
        %s1254 = scalar_lea.vmem %s3, %s1253
      $region44: #{makeup_gan_forward.98} parent=39 // pred_fallthru
        _
    $region40: #{makeup_gan_forward.98} parent=5 // pred_fallthru
      _
  $region6: #{makeup_gan_forward.98} parent=0 // loop_footer
    %s13 = sadd.s32 1, %s9
  $region7: #{makeup_gan_forward.98} parent=0 // loop_footer_branch
    %8 = sbr.rel target = $region3
  $region8: #{makeup_gan_forward.98} parent=0 // loop_exit
    _

// kernel: makeup_gan_forward.76
$region0: #{makeup_gan_forward.76}
  #allocation0 [shape = 'u32[]', space=smem, size = 0x4, offset = 0x4, fixed_abs, tag = 'smem constant byte address 0x4 - core index']
  #allocation1 [shape = 'u32[144,128]{1,0:T(1,128)}', space=vmem, size = 0x12000, scoped, tag = 'internal scratch']
  %s0 = inlined_call_operand.vmem [shape: bf16[512,32], index: 0, kind: input, shape index: {}]
  %s1 = inlined_call_operand.vmem [shape: bf16[32,128], index: 1, kind: input, shape index: {}]
  %s2 = inlined_call_operand.vmem [shape: f32[1,128], index: 2, kind: input, shape index: {}]
  %s3 = inlined_call_operand.vmem [shape: bf16[512,128], index: 3, kind: output, shape index: {}]
  %s4 = sld [smem:[#allocation0]]
  $region45: #{makeup_gan_forward.76} parent=0
    _
  %s6 = ssub.s32 1, %s4
  %s7 = scalar_select 0, %s6, %s4
  loop: start=0, step=1, limit=4
  $region2: #{makeup_gan_forward.76} parent=0 // loop_pre_header
    _
  $region3: #{makeup_gan_forward.76} parent=0 // loop_header
    %s9 = sphi 0, %s13
    %p10 = scmp.ge.s32.totalorder %s9, 4
    %s16 = sphi 0, %s28
    %s17 = sphi 0, %s24
    %s18 = sphi 0, %s16
    %s19 = sphi 0, %s17
    %s20 = sphi 0, %s18
    %s21 = sphi 0, %s19
    %s31 = sphi 0, %s33
    %s34 = sphi 0, %s31
    %s35 = sphi 0, %s34
    %s51 = sphi 0, %s35
    %s57 = sphi 0, %s59
    %s60 = sphi 0, %s57
    %s61 = sphi 0, %s60
    %s77 = sphi 0, %s61
    %s83 = sphi 0, %s85
    %s86 = sphi 0, %s83
    %s87 = sphi 0, %s86
    %s103 = sphi 0, %s87
    %s111 = sphi 0, %s113
    %s114 = sphi 0, %s111
    %s115 = sphi 0, %s114
    %s131 = sphi 0, %s115
  $region4: #{makeup_gan_forward.76} parent=0 // loop_header_branch
    %12 = sbr.rel (%p10) target = $region8
  $region5: #{makeup_gan_forward.76} parent=0 // loop_body
    %s14 = ssub.s32 %s9, 1
    %s15 = ssub.s32 %s9, 2
    %s22 = sadd.s32 1, %s17
    %p23 = scmp.ge.s32.totalorder %s22, 1
    %s24 = scalar_select %p23, 0, %s22
    %s25 = sadd.s32 1, %s16
    %s26 = scalar_select %p23, %s25, %s16
    %p27 = scmp.ge.s32.totalorder %s26, 2
    %s28 = scalar_select %p27, 0, %s26
    %s29 = ssub.s32 %s16, %s28
    %p30 = scmp.eq.s32.totalorder %s29, 0
    %s32 = sadd.s32 %s31, 1
    %s33 = scalar_select %p30, %s31, %s32
    %p36 = pneg %p30
    %p37 = scmp.eq.s32.totalorder %s9, 1
    %p38 = por %p36, %p37
    %p39 = scmp.ne.s32.totalorder %s31, %s34
    %p40 = scmp.eq.s32.totalorder %s9, 0
    %p41 = por %p39, %p40
    %p42 = scmp.ne.s32.totalorder %s31, %s34
    %p43 = scmp.eq.s32.totalorder %s14, 1
    %p44 = por %p42, %p43
    %p45 = scmp.ne.s32.totalorder %s34, %s35
    %p46 = scmp.eq.s32.totalorder %s14, 0
    %p47 = por %p45, %p46
    %p48 = scmp.ne.s32.totalorder %s34, %s35
    %p49 = scmp.eq.s32.totalorder %s15, 1
    %p50 = por %p48, %p49
    %p52 = scmp.ne.s32.totalorder %s35, %s51
    %p53 = scmp.eq.s32.totalorder %s15, 0
    %p54 = por %p52, %p53
    %s55 = ssub.s32 %s17, %s24
    %p56 = scmp.eq.s32.totalorder %s55, 0
    %s58 = sadd.s32 %s57, 1
    %s59 = scalar_select %p56, %s57, %s58
    %p62 = pneg %p56
    %p63 = scmp.eq.s32.totalorder %s9, 1
    %p64 = por %p62, %p63
    %p65 = scmp.ne.s32.totalorder %s57, %s60
    %p66 = scmp.eq.s32.totalorder %s9, 0
    %p67 = por %p65, %p66
    %p68 = scmp.ne.s32.totalorder %s57, %s60
    %p69 = scmp.eq.s32.totalorder %s14, 1
    %p70 = por %p68, %p69
    %p71 = scmp.ne.s32.totalorder %s60, %s61
    %p72 = scmp.eq.s32.totalorder %s14, 0
    %p73 = por %p71, %p72
    %p74 = scmp.ne.s32.totalorder %s60, %s61
    %p75 = scmp.eq.s32.totalorder %s15, 1
    %p76 = por %p74, %p75
    %p78 = scmp.ne.s32.totalorder %s61, %s77
    %p79 = scmp.eq.s32.totalorder %s15, 0
    %p80 = por %p78, %p79
    %s81 = ssub.s32 %s17, %s24
    %p82 = scmp.eq.s32.totalorder %s81, 0
    %s84 = sadd.s32 %s83, 1
    %s85 = scalar_select %p82, %s83, %s84
    %p88 = pneg %p82
    %p89 = scmp.eq.s32.totalorder %s9, 1
    %p90 = por %p88, %p89
    %p91 = scmp.ne.s32.totalorder %s83, %s86
    %p92 = scmp.eq.s32.totalorder %s9, 0
    %p93 = por %p91, %p92
    %p94 = scmp.ne.s32.totalorder %s83, %s86
    %p95 = scmp.eq.s32.totalorder %s14, 1
    %p96 = por %p94, %p95
    %p97 = scmp.ne.s32.totalorder %s86, %s87
    %p98 = scmp.eq.s32.totalorder %s14, 0
    %p99 = por %p97, %p98
    %p100 = scmp.ne.s32.totalorder %s86, %s87
    %p101 = scmp.eq.s32.totalorder %s15, 1
    %p102 = por %p100, %p101
    %p104 = scmp.ne.s32.totalorder %s87, %s103
    %p105 = scmp.eq.s32.totalorder %s15, 0
    %p106 = por %p104, %p105
    %s107 = ssub.s32 %s16, %s28
    %s108 = ssub.s32 %s17, %s24
    %s109 = sor.u32 %s107, %s108
    %p110 = scmp.eq.s32.totalorder %s109, 0
    %s112 = sadd.s32 %s111, 1
    %s113 = scalar_select %p110, %s111, %s112
    %p116 = pneg %p110
    %p117 = scmp.eq.s32.totalorder %s9, 1
    %p118 = por %p116, %p117
    %p119 = scmp.ne.s32.totalorder %s111, %s114
    %p120 = scmp.eq.s32.totalorder %s9, 0
    %p121 = por %p119, %p120
    %p122 = scmp.ne.s32.totalorder %s111, %s114
    %p123 = scmp.eq.s32.totalorder %s14, 1
    %p124 = por %p122, %p123
    %p125 = scmp.ne.s32.totalorder %s114, %s115
    %p126 = scmp.eq.s32.totalorder %s14, 0
    %p127 = por %p125, %p126
    %p128 = scmp.ne.s32.totalorder %s114, %s115
    %p129 = scmp.eq.s32.totalorder %s15, 1
    %p130 = por %p128, %p129
    %p132 = scmp.ne.s32.totalorder %s115, %s131
    %p133 = scmp.eq.s32.totalorder %s15, 0
    %p134 = por %p132, %p133
    %p135 = scmp.le.s32.totalorder 1, %s9
    %p136 = scmp.lt.s32.totalorder %s9, 3
    %p137 = pnand %p135, %p136
    %p138 = pneg %p137
    // Predicated region
    $region9: #{makeup_gan_forward.76} parent=5 // pred_check
      _
    $region10: #{makeup_gan_forward.76} parent=5 // pred_check_branch
      %140 = sbr.rel (%p137) target = $region12
    $region11: #{makeup_gan_forward.76} parent=5 // pred_region
      %s141 = ssub.s32 %s9, 1
      // Predicated region
      $region13: #{makeup_gan_forward.76} parent=11 // pred_check
        %p142 = pneg %p73
      $region14: #{makeup_gan_forward.76} parent=11 // pred_check_branch
        %144 = sbr.rel (%p142) target = $region16
      $region15: #{makeup_gan_forward.76} parent=11 // pred_region
        %p145 = scmp.lt.s32.totalorder %s19, 0
        %s146 = scalar_select %p145, %s19, 0
        %s147 = smul.addr %s146, 4
        %s148 = scalar_lea.vmem %s1, %s147
      $region16: #{makeup_gan_forward.76} parent=11 // pred_fallthru
        _
      // Predicated region
      $region17: #{makeup_gan_forward.76} parent=11 // pred_check
        %p149 = pneg %p99
      $region18: #{makeup_gan_forward.76} parent=11 // pred_check_branch
        %151 = sbr.rel (%p149) target = $region20
      $region19: #{makeup_gan_forward.76} parent=11 // pred_region
        %p152 = scmp.lt.s32.totalorder %s19, 0
        %s153 = scalar_select %p152, %s19, 0
        %s154 = scalar_lea.vmem %s2, %s153
      $region20: #{makeup_gan_forward.76} parent=11 // pred_fallthru
        _
    $region12: #{makeup_gan_forward.76} parent=5 // pred_fallthru
      _
    %p155 = scmp.lt.s32.totalorder %s9, 2
    // Predicated region
    $region21: #{makeup_gan_forward.76} parent=5 // pred_check
      %p156 = pneg %p155
    $region22: #{makeup_gan_forward.76} parent=5 // pred_check_branch
      %158 = sbr.rel (%p156) target = $region24
    $region23: #{makeup_gan_forward.76} parent=5 // pred_region
      // Predicated region
      $region25: #{makeup_gan_forward.76} parent=23 // pred_check
        %p159 = pneg %p41
      $region26: #{makeup_gan_forward.76} parent=23 // pred_check_branch
        %161 = sbr.rel (%p159) target = $region28
      $region27: #{makeup_gan_forward.76} parent=23 // pred_region
        %s162 = smul.u32 32, %s16
        %p163 = scmp.lt.s32.totalorder %s162, 63
        %s164 = scalar_select %p163, %s162, 63
        %s165 = smul.addr %s164, 4
        %s166 = scalar_lea.vmem %s0, %s165
        %s167 = smul.u32 32, %s16
      $region28: #{makeup_gan_forward.76} parent=23 // pred_fallthru
        _
    $region24: #{makeup_gan_forward.76} parent=5 // pred_fallthru
      _
    %p168 = scmp.le.s32.totalorder 1, %s9
    %p169 = scmp.lt.s32.totalorder %s9, 3
    %p170 = pnand %p168, %p169
    %p171 = pneg %p170
    // Predicated region
    $region29: #{makeup_gan_forward.76} parent=5 // pred_check
      _
    $region30: #{makeup_gan_forward.76} parent=5 // pred_check_branch
      %173 = sbr.rel (%p170) target = $region32
    $region31: #{makeup_gan_forward.76} parent=5 // pred_region
      %s174 = ssub.s32 %s9, 1
      %s175 = smul.u32 32, %s18
      %p176 = scmp.lt.s32.totalorder %s175, 63
      %s177 = scalar_select %p176, %s175, 63
      %s178 = smul.addr %s177, 4
      %s179 = scalar_lea.vmem %s0, %s178
      %p180 = pneg %p47
      %p181 = pneg %p44
      %p182 = scmp.lt.s32.totalorder %s19, 0
      %s183 = scalar_select %p182, %s19, 0
      %s184 = smul.addr %s183, 4
      %s185 = scalar_lea.vmem %s1, %s184
      %p186 = pneg %p73
      %p187 = pneg %p70
      %p188 = scmp.lt.s32.totalorder %s19, 0
      %s189 = scalar_select %p188, %s19, 0
      %s190 = scalar_lea.vmem %s2, %s189
      %p191 = pneg %p99
      %p192 = pneg %p96
      %p193 = pneg %p127
      %p194 = pneg %p124
      %s195 = smul.u32 32, %s18
      %p196 = scmp.lt.s32.totalorder %s195, 63
      %s197 = scalar_select %p196, %s195, 63
      %p198 = scmp.lt.s32.totalorder %s19, 0
      %s199 = scalar_select %p198, %s19, 0
      %s200 = sadd.s32 %s199, %s197
      %s201 = smul.addr %s200, 4
      %s202 = scalar_lea.vmem %s3, %s201
      %s203 = smul.u32 32, %s18
      %p204 = scmp.lt.s32.totalorder %s203, 63
      %s205 = scalar_select %p204, %s203, 63
      %s206 = smul.addr %s205, 4
      %s207 = scalar_lea.vmem %s0, %s206
      %s208 = smul.u32 32, %s18
      %p209 = scmp.lt.s32.totalorder %s19, 0
      %s210 = scalar_select %p209, %s19, 0
      %s211 = smul.addr %s210, 4
      %s212 = scalar_lea.vmem %s1, %s211
      %p213 = scmp.lt.s32.totalorder %s19, 0
      %s214 = scalar_select %p213, %s19, 0
      %s215 = scalar_lea.vmem %s2, %s214
      %s216 = smul.u32 32, %s18
      %p217 = scmp.lt.s32.totalorder %s216, 63
      %s218 = scalar_select %p217, %s216, 63
      %p219 = scmp.lt.s32.totalorder %s19, 0
      %s220 = scalar_select %p219, %s19, 0
      %s221 = sadd.s32 %s220, %s218
      %s222 = smul.addr %s221, 4
      %s223 = scalar_lea.vmem %s3, %s222
      %s224 = smul.u32 32, %s18
      %v226 = vld [vmem:[%s207] sm:$0xf]
      %v227 = vld [vmem:[%s207 + $0x4] sm:$0xf]
      %v228 = vld [vmem:[%s207 + $0x8] sm:$0xf]
      %v229 = vld [vmem:[%s207 + $0xc] sm:$0xf]
      %v230 = vld [vmem:[%s207 + $0x10] sm:$0xf]
      %v231 = vld [vmem:[%s207 + $0x14] sm:$0xf]
      %v232 = vld [vmem:[%s207 + $0x18] sm:$0xf]
      %v233 = vld [vmem:[%s207 + $0x1c] sm:$0xf]
      %v234 = vld [vmem:[%s207 + $0x20] sm:$0xf]
      %v235 = vld [vmem:[%s207 + $0x24] sm:$0xf]
      %v236 = vld [vmem:[%s207 + $0x28] sm:$0xf]
      %v237 = vld [vmem:[%s207 + $0x2c] sm:$0xf]
      %v238 = vld [vmem:[%s207 + $0x30] sm:$0xf]
      %v239 = vld [vmem:[%s207 + $0x34] sm:$0xf]
      %v240 = vld [vmem:[%s207 + $0x38] sm:$0xf]
      %v241 = vld [vmem:[%s207 + $0x3c] sm:$0xf]
      %v242 = vld [vmem:[%s207 + $0x40] sm:$0xf]
      %v243 = vld [vmem:[%s207 + $0x44] sm:$0xf]
      %v244 = vld [vmem:[%s207 + $0x48] sm:$0xf]
      %v245 = vld [vmem:[%s207 + $0x4c] sm:$0xf]
      %v246 = vld [vmem:[%s207 + $0x50] sm:$0xf]
      %v247 = vld [vmem:[%s207 + $0x54] sm:$0xf]
      %v248 = vld [vmem:[%s207 + $0x58] sm:$0xf]
      %v249 = vld [vmem:[%s207 + $0x5c] sm:$0xf]
      %v250 = vld [vmem:[%s207 + $0x60] sm:$0xf]
      %v251 = vld [vmem:[%s207 + $0x64] sm:$0xf]
      %v252 = vld [vmem:[%s207 + $0x68] sm:$0xf]
      %v253 = vld [vmem:[%s207 + $0x6c] sm:$0xf]
      %v254 = vld [vmem:[%s207 + $0x70] sm:$0xf]
      %v255 = vld [vmem:[%s207 + $0x74] sm:$0xf]
      %v256 = vld [vmem:[%s207 + $0x78] sm:$0xf]
      %v257 = vld [vmem:[%s207 + $0x7c] sm:$0xf]
      %v258 = vld [vmem:[%s212] sm:$0xf]
      %v259 = vld [vmem:[%s212 + $0x4] sm:$0xf]
      %v260 = vld [vmem:[%s212 + $0x8] sm:$0xf]
      %v261 = vld [vmem:[%s212 + $0xc] sm:$0xf]
      %v262 = vld [vmem:[%s215] sm:$0x1]
      %v264 = vlaneseq
      %v265 = vshrl.u32 %v264, 7
      %v266 = vsub.s32 0, %v265
      %v267 = vrot.slane %v262, %v266
      %v301 = vunpack.c.l.b16 %v226
      %v302 = vunpack.c.l.b16 %v227
      %v303 = vunpack.c.l.b16 %v228
      %v304 = vunpack.c.l.b16 %v229
      %v305 = vunpack.c.l.b16 %v230
      %v306 = vunpack.c.l.b16 %v231
      %v307 = vunpack.c.l.b16 %v232
      %v308 = vunpack.c.l.b16 %v233
      %v309 = vunpack.c.l.b16 %v234
      %v310 = vunpack.c.l.b16 %v235
      %v311 = vunpack.c.l.b16 %v236
      %v312 = vunpack.c.l.b16 %v237
      %v313 = vunpack.c.l.b16 %v238
      %v314 = vunpack.c.l.b16 %v239
      %v315 = vunpack.c.l.b16 %v240
      %v316 = vunpack.c.l.b16 %v241
      %v317 = vunpack.c.l.b16 %v242
      %v318 = vunpack.c.l.b16 %v243
      %v319 = vunpack.c.l.b16 %v244
      %v320 = vunpack.c.l.b16 %v245
      %v321 = vunpack.c.l.b16 %v246
      %v322 = vunpack.c.l.b16 %v247
      %v323 = vunpack.c.l.b16 %v248
      %v324 = vunpack.c.l.b16 %v249
      %v325 = vunpack.c.l.b16 %v250
      %v326 = vunpack.c.l.b16 %v251
      %v327 = vunpack.c.l.b16 %v252
      %v328 = vunpack.c.l.b16 %v253
      %v329 = vunpack.c.l.b16 %v254
      %v330 = vunpack.c.l.b16 %v255
      %v331 = vunpack.c.l.b16 %v256
      %v332 = vunpack.c.l.b16 %v257
      %v333 = vpack.c.b16 %v302, %v301
      %v334 = vpack.c.b16 %v304, %v303
      %v335 = vpack.c.b16 %v306, %v305
      %v336 = vpack.c.b16 %v308, %v307
      %v337 = vpack.c.b16 %v310, %v309
      %v338 = vpack.c.b16 %v312, %v311
      %v339 = vpack.c.b16 %v314, %v313
      %v340 = vpack.c.b16 %v316, %v315
      %v341 = vpack.c.b16 %v318, %v317
      %v342 = vpack.c.b16 %v320, %v319
      %v343 = vpack.c.b16 %v322, %v321
      %v344 = vpack.c.b16 %v324, %v323
      %v345 = vpack.c.b16 %v326, %v325
      %v346 = vpack.c.b16 %v328, %v327
      %v347 = vpack.c.b16 %v330, %v329
      %v348 = vpack.c.b16 %v332, %v331
      %v353 = vunpack.c.l.b16 %v258
      %v354 = vunpack.c.l.b16 %v259
      %v355 = vunpack.c.l.b16 %v260
      %v356 = vunpack.c.l.b16 %v261
      %v357 = vpack.c.b16 %v354, %v353
      %v358 = vpack.c.b16 %v356, %v355
      %vm361 = vcmask 261120
      %v363 = vsel %vm361, %v333, 0
      %v366 = vsel %vm361, %v334, 0
      %v369 = vsel %vm361, %v335, 0
      %v372 = vsel %vm361, %v336, 0
      %v375 = vsel %vm361, %v337, 0
      %v378 = vsel %vm361, %v338, 0
      %v381 = vsel %vm361, %v339, 0
      %v384 = vsel %vm361, %v340, 0
      %v387 = vsel %vm361, %v341, 0
      %v390 = vsel %vm361, %v342, 0
      %v393 = vsel %vm361, %v343, 0
      %v396 = vsel %vm361, %v344, 0
      %v399 = vsel %vm361, %v345, 0
      %v402 = vsel %vm361, %v346, 0
      %v405 = vsel %vm361, %v347, 0
      %v408 = vsel %vm361, %v348, 0
      %410 = vmatprep.subr.bf16.mxu0 0
      %411 = vmatpush1.bf16.msra.mxu0 %v357
      %412 = vmatprep.subr.bf16.mxu0 0
      %413 = vmatpush1.bf16.msra.mxu0 %v358
      %414 = vmatprep.subr.bf16.mxu0 0
      %415 = vmatpush1.bf16.msra.mxu0 0
      %416 = vmatprep.subr.bf16.mxu0 0
      %417 = vmatpush1.bf16.msra.mxu0 0
      %418 = vmatprep.subr.bf16.mxu0 0
      %419 = vmatpush1.bf16.msra.mxu0 0
      %420 = vmatprep.subr.bf16.mxu0 0
      %421 = vmatpush1.bf16.msra.mxu0 0
      %422 = vmatprep.subr.bf16.mxu0 0
      %423 = vmatpush1.bf16.msra.mxu0 0
      %424 = vmatprep.subr.bf16.mxu0 0
      %425 = vmatpush1.bf16.msra.mxu0 0
      %426 = vmatprep.subr.bf16.mxu0 0
      %427 = vmatpush1.bf16.msra.mxu0 0
      %428 = vmatprep.subr.bf16.mxu0 0
      %429 = vmatpush1.bf16.msra.mxu0 0
      %430 = vmatprep.subr.bf16.mxu0 0
      %431 = vmatpush1.bf16.msra.mxu0 0
      %432 = vmatprep.subr.bf16.mxu0 0
      %433 = vmatpush1.bf16.msra.mxu0 0
      %434 = vmatprep.subr.bf16.mxu0 0
      %435 = vmatpush1.bf16.msra.mxu0 0
      %436 = vmatprep.subr.bf16.mxu0 0
      %437 = vmatpush1.bf16.msra.mxu0 0
      %438 = vmatprep.subr.bf16.mxu0 0
      %439 = vmatpush1.bf16.msra.mxu0 0
      %440 = vmatprep.subr.bf16.mxu0 0
      %441 = vmatpush1.bf16.msra.mxu0 0
      %442 = vmatprep.mubr.bf16.mxu0 0
      %443 = vmatmul.mubr.bf16.gmra.mrb[0].mxu0 %v363
      %v444 = vpop.f32.mrb[0].mxu0
      %v445 = vadd.f32 %v267, %v444
      %v446 = vpop.f32.mrb[0].mxu0
      %v447 = vpop.f32.mrb[0].mxu0
      %v448 = vadd.f32 %v267, %v447
      %v449 = vpop.f32.mrb[0].mxu0
      %450 = vmatprep.mubr.bf16.mxu0 0
      %451 = vmatmul.mubr.bf16.gmra.mrb[0].mxu0 %v366
      %v452 = vpop.f32.mrb[0].mxu0
      %v453 = vadd.f32 %v267, %v452
      %v454 = vpop.f32.mrb[0].mxu0
      %v455 = vpop.f32.mrb[0].mxu0
      %v456 = vadd.f32 %v267, %v455
      %v457 = vpop.f32.mrb[0].mxu0
      %458 = vmatprep.mubr.bf16.mxu0 0
      %459 = vmatmul.mubr.bf16.gmra.mrb[0].mxu0 %v369
      %v460 = vpop.f32.mrb[0].mxu0
      %v461 = vadd.f32 %v267, %v460
      %v462 = vpop.f32.mrb[0].mxu0
      %v463 = vpop.f32.mrb[0].mxu0
      %v464 = vadd.f32 %v267, %v463
      %v465 = vpop.f32.mrb[0].mxu0
      %466 = vmatprep.mubr.bf16.mxu0 0
      %467 = vmatmul.mubr.bf16.gmra.mrb[0].mxu0 %v372
      %v468 = vpop.f32.mrb[0].mxu0
      %v469 = vadd.f32 %v267, %v468
      %v470 = vpop.f32.mrb[0].mxu0
      %v471 = vpop.f32.mrb[0].mxu0
      %v472 = vadd.f32 %v267, %v471
      %v473 = vpop.f32.mrb[0].mxu0
      %474 = vmatprep.mubr.bf16.mxu0 0
      %475 = vmatmul.mubr.bf16.gmra.mrb[0].mxu0 %v375
      %v476 = vpop.f32.mrb[0].mxu0
      %v477 = vadd.f32 %v267, %v476
      %v478 = vpop.f32.mrb[0].mxu0
      %v479 = vpop.f32.mrb[0].mxu0
      %v480 = vadd.f32 %v267, %v479
      %v481 = vpop.f32.mrb[0].mxu0
      %482 = vmatprep.mubr.bf16.mxu0 0
      %483 = vmatmul.mubr.bf16.gmra.mrb[0].mxu0 %v378
      %v484 = vpop.f32.mrb[0].mxu0
      %v485 = vadd.f32 %v267, %v484
      %v486 = vpop.f32.mrb[0].mxu0
      %v487 = vpop.f32.mrb[0].mxu0
      %v488 = vadd.f32 %v267, %v487
      %v489 = vpop.f32.mrb[0].mxu0
      %490 = vmatprep.mubr.bf16.mxu0 0
      %491 = vmatmul.mubr.bf16.gmra.mrb[0].mxu0 %v381
      %v492 = vpop.f32.mrb[0].mxu0
      %v493 = vadd.f32 %v267, %v492
      %v494 = vpop.f32.mrb[0].mxu0
      %v495 = vpop.f32.mrb[0].mxu0
      %v496 = vadd.f32 %v267, %v495
      %v497 = vpop.f32.mrb[0].mxu0
      %498 = vmatprep.mubr.bf16.mxu0 0
      %499 = vmatmul.mubr.bf16.gmra.mrb[0].mxu0 %v384
      %v500 = vpop.f32.mrb[0].mxu0
      %v501 = vadd.f32 %v267, %v500
      %v502 = vpop.f32.mrb[0].mxu0
      %v503 = vpop.f32.mrb[0].mxu0
      %v504 = vadd.f32 %v267, %v503
      %v505 = vpop.f32.mrb[0].mxu0
      %506 = vmatprep.mubr.bf16.mxu0 0
      %507 = vmatmul.mubr.bf16.gmra.mrb[0].mxu0 %v387
      %v508 = vpop.f32.mrb[0].mxu0
      %v509 = vadd.f32 %v267, %v508
      %v510 = vpop.f32.mrb[0].mxu0
      %v511 = vpop.f32.mrb[0].mxu0
      %v512 = vadd.f32 %v267, %v511
      %v513 = vpop.f32.mrb[0].mxu0
      %514 = vmatprep.mubr.bf16.mxu0 0
      %515 = vmatmul.mubr.bf16.gmra.mrb[0].mxu0 %v390
      %v516 = vpop.f32.mrb[0].mxu0
      %v517 = vadd.f32 %v267, %v516
      %v518 = vpop.f32.mrb[0].mxu0
      %v519 = vpop.f32.mrb[0].mxu0
      %v520 = vadd.f32 %v267, %v519
      %v521 = vpop.f32.mrb[0].mxu0
      %522 = vmatprep.mubr.bf16.mxu0 0
      %523 = vmatmul.mubr.bf16.gmra.mrb[0].mxu0 %v393
      %v524 = vpop.f32.mrb[0].mxu0
      %v525 = vadd.f32 %v267, %v524
      %v526 = vpop.f32.mrb[0].mxu0
      %v527 = vpop.f32.mrb[0].mxu0
      %v528 = vadd.f32 %v267, %v527
      %v529 = vpop.f32.mrb[0].mxu0
      %530 = vmatprep.mubr.bf16.mxu0 0
      %531 = vmatmul.mubr.bf16.gmra.mrb[0].mxu0 %v396
      %v532 = vpop.f32.mrb[0].mxu0
      %v533 = vadd.f32 %v267, %v532
      %v534 = vpop.f32.mrb[0].mxu0
      %v535 = vpop.f32.mrb[0].mxu0
      %v536 = vadd.f32 %v267, %v535
      %v537 = vpop.f32.mrb[0].mxu0
      %538 = vmatprep.mubr.bf16.mxu0 0
      %539 = vmatmul.mubr.bf16.gmra.mrb[0].mxu0 %v399
      %v540 = vpop.f32.mrb[0].mxu0
      %v541 = vadd.f32 %v267, %v540
      %v542 = vpop.f32.mrb[0].mxu0
      %v543 = vpop.f32.mrb[0].mxu0
      %v544 = vadd.f32 %v267, %v543
      %v545 = vpop.f32.mrb[0].mxu0
      %546 = vmatprep.mubr.bf16.mxu0 0
      %547 = vmatmul.mubr.bf16.gmra.mrb[0].mxu0 %v402
      %v548 = vpop.f32.mrb[0].mxu0
      %v549 = vadd.f32 %v267, %v548
      %v550 = vpop.f32.mrb[0].mxu0
      %v551 = vpop.f32.mrb[0].mxu0
      %v552 = vadd.f32 %v267, %v551
      %v553 = vpop.f32.mrb[0].mxu0
      %554 = vmatprep.mubr.bf16.mxu0 0
      %555 = vmatmul.mubr.bf16.gmra.mrb[0].mxu0 %v405
      %v556 = vpop.f32.mrb[0].mxu0
      %v557 = vadd.f32 %v267, %v556
      %v558 = vpop.f32.mrb[0].mxu0
      %v559 = vpop.f32.mrb[0].mxu0
      %v560 = vadd.f32 %v267, %v559
      %v561 = vpop.f32.mrb[0].mxu0
      %562 = vmatprep.mubr.bf16.mxu0 0
      %563 = vmatmul.mubr.bf16.gmra.mrb[0].mxu0 %v408
      %v564 = vpop.f32.mrb[0].mxu0
      %v565 = vadd.f32 %v267, %v564
      %v566 = vpop.f32.mrb[0].mxu0
      %v567 = vpop.f32.mrb[0].mxu0
      %v568 = vadd.f32 %v267, %v567
      %v569 = vpop.f32.mrb[0].mxu0
      %570 = vdwg.mxu0
      %vm571 = vcmp.ge.f32.partialorder %v445, 0.0
      %vm572 = vcmp.ge.f32.partialorder %v448, 0.0
      %vm573 = vcmp.ge.f32.partialorder %v453, 0.0
      %vm574 = vcmp.ge.f32.partialorder %v456, 0.0
      %vm575 = vcmp.ge.f32.partialorder %v461, 0.0
      %vm576 = vcmp.ge.f32.partialorder %v464, 0.0
      %vm577 = vcmp.ge.f32.partialorder %v469, 0.0
      %vm578 = vcmp.ge.f32.partialorder %v472, 0.0
      %vm579 = vcmp.ge.f32.partialorder %v477, 0.0
      %vm580 = vcmp.ge.f32.partialorder %v480, 0.0
      %vm581 = vcmp.ge.f32.partialorder %v485, 0.0
      %vm582 = vcmp.ge.f32.partialorder %v488, 0.0
      %vm583 = vcmp.ge.f32.partialorder %v493, 0.0
      %vm584 = vcmp.ge.f32.partialorder %v496, 0.0
      %vm585 = vcmp.ge.f32.partialorder %v501, 0.0
      %vm586 = vcmp.ge.f32.partialorder %v504, 0.0
      %vm587 = vcmp.ge.f32.partialorder %v509, 0.0
      %vm588 = vcmp.ge.f32.partialorder %v512, 0.0
      %vm589 = vcmp.ge.f32.partialorder %v517, 0.0
      %vm590 = vcmp.ge.f32.partialorder %v520, 0.0
      %vm591 = vcmp.ge.f32.partialorder %v525, 0.0
      %vm592 = vcmp.ge.f32.partialorder %v528, 0.0
      %vm593 = vcmp.ge.f32.partialorder %v533, 0.0
      %vm594 = vcmp.ge.f32.partialorder %v536, 0.0
      %vm595 = vcmp.ge.f32.partialorder %v541, 0.0
      %vm596 = vcmp.ge.f32.partialorder %v544, 0.0
      %vm597 = vcmp.ge.f32.partialorder %v549, 0.0
      %vm598 = vcmp.ge.f32.partialorder %v552, 0.0
      %vm599 = vcmp.ge.f32.partialorder %v557, 0.0
      %vm600 = vcmp.ge.f32.partialorder %v560, 0.0
      %vm601 = vcmp.ge.f32.partialorder %v565, 0.0
      %vm602 = vcmp.ge.f32.partialorder %v568, 0.0
      %v603 = vmul.f32 %v445, 0.2
      %v604 = vmul.f32 %v448, 0.2
      %v605 = vmul.f32 %v453, 0.2
      %v606 = vmul.f32 %v456, 0.2
      %v607 = vmul.f32 %v461, 0.2
      %v608 = vmul.f32 %v464, 0.2
      %v609 = vmul.f32 %v469, 0.2
      %v610 = vmul.f32 %v472, 0.2
      %v611 = vmul.f32 %v477, 0.2
      %v612 = vmul.f32 %v480, 0.2
      %v613 = vmul.f32 %v485, 0.2
      %v614 = vmul.f32 %v488, 0.2
      %v615 = vmul.f32 %v493, 0.2
      %v616 = vmul.f32 %v496, 0.2
      %v617 = vmul.f32 %v501, 0.2
      %v618 = vmul.f32 %v504, 0.2
      %v619 = vmul.f32 %v509, 0.2
      %v620 = vmul.f32 %v512, 0.2
      %v621 = vmul.f32 %v517, 0.2
      %v622 = vmul.f32 %v520, 0.2
      %v623 = vmul.f32 %v525, 0.2
      %v624 = vmul.f32 %v528, 0.2
      %v625 = vmul.f32 %v533, 0.2
      %v626 = vmul.f32 %v536, 0.2
      %v627 = vmul.f32 %v541, 0.2
      %v628 = vmul.f32 %v544, 0.2
      %v629 = vmul.f32 %v549, 0.2
      %v630 = vmul.f32 %v552, 0.2
      %v631 = vmul.f32 %v557, 0.2
      %v632 = vmul.f32 %v560, 0.2
      %v633 = vmul.f32 %v565, 0.2
      %v634 = vmul.f32 %v568, 0.2
      %v635 = vsel %vm571, %v445, %v603
      %v636 = vsel %vm572, %v448, %v604
      %v637 = vsel %vm573, %v453, %v605
      %v638 = vsel %vm574, %v456, %v606
      %v639 = vsel %vm575, %v461, %v607
      %v640 = vsel %vm576, %v464, %v608
      %v641 = vsel %vm577, %v469, %v609
      %v642 = vsel %vm578, %v472, %v610
      %v643 = vsel %vm579, %v477, %v611
      %v644 = vsel %vm580, %v480, %v612
      %v645 = vsel %vm581, %v485, %v613
      %v646 = vsel %vm582, %v488, %v614
      %v647 = vsel %vm583, %v493, %v615
      %v648 = vsel %vm584, %v496, %v616
      %v649 = vsel %vm585, %v501, %v617
      %v650 = vsel %vm586, %v504, %v618
      %v651 = vsel %vm587, %v509, %v619
      %v652 = vsel %vm588, %v512, %v620
      %v653 = vsel %vm589, %v517, %v621
      %v654 = vsel %vm590, %v520, %v622
      %v655 = vsel %vm591, %v525, %v623
      %v656 = vsel %vm592, %v528, %v624
      %v657 = vsel %vm593, %v533, %v625
      %v658 = vsel %vm594, %v536, %v626
      %v659 = vsel %vm595, %v541, %v627
      %v660 = vsel %vm596, %v544, %v628
      %v661 = vsel %vm597, %v549, %v629
      %v662 = vsel %vm598, %v552, %v630
      %v663 = vsel %vm599, %v557, %v631
      %v664 = vsel %vm600, %v560, %v632
      %v665 = vsel %vm601, %v565, %v633
      %v666 = vsel %vm602, %v568, %v634
      %v667 = vpack.c.bf16 %v636, %v635
      %v668 = vpack.c.bf16 %v638, %v637
      %v669 = vpack.c.bf16 %v640, %v639
      %v670 = vpack.c.bf16 %v642, %v641
      %v671 = vpack.c.bf16 %v644, %v643
      %v672 = vpack.c.bf16 %v646, %v645
      %v673 = vpack.c.bf16 %v648, %v647
      %v674 = vpack.c.bf16 %v650, %v649
      %v675 = vpack.c.bf16 %v652, %v651
      %v676 = vpack.c.bf16 %v654, %v653
      %v677 = vpack.c.bf16 %v656, %v655
      %v678 = vpack.c.bf16 %v658, %v657
      %v679 = vpack.c.bf16 %v660, %v659
      %v680 = vpack.c.bf16 %v662, %v661
      %v681 = vpack.c.bf16 %v664, %v663
      %v682 = vpack.c.bf16 %v666, %v665
      %v699 = vunpack.c.l.b16 %v667
      %v700 = vunpack.c.h.b16 %v667
      %v701 = vunpack.c.l.b16 %v668
      %v702 = vunpack.c.h.b16 %v668
      %v703 = vunpack.c.l.b16 %v669
      %v704 = vunpack.c.h.b16 %v669
      %v705 = vunpack.c.l.b16 %v670
      %v706 = vunpack.c.h.b16 %v670
      %v707 = vunpack.c.l.b16 %v671
      %v708 = vunpack.c.h.b16 %v671
      %v709 = vunpack.c.l.b16 %v672
      %v710 = vunpack.c.h.b16 %v672
      %v711 = vunpack.c.l.b16 %v673
      %v712 = vunpack.c.h.b16 %v673
      %v713 = vunpack.c.l.b16 %v674
      %v714 = vunpack.c.h.b16 %v674
      %v715 = vunpack.c.l.b16 %v675
      %v716 = vunpack.c.h.b16 %v675
      %v717 = vunpack.c.l.b16 %v676
      %v718 = vunpack.c.h.b16 %v676
      %v719 = vunpack.c.l.b16 %v677
      %v720 = vunpack.c.h.b16 %v677
      %v721 = vunpack.c.l.b16 %v678
      %v722 = vunpack.c.h.b16 %v678
      %v723 = vunpack.c.l.b16 %v679
      %v724 = vunpack.c.h.b16 %v679
      %v725 = vunpack.c.l.b16 %v680
      %v726 = vunpack.c.h.b16 %v680
      %v727 = vunpack.c.l.b16 %v681
      %v728 = vunpack.c.h.b16 %v681
      %v729 = vunpack.c.l.b16 %v682
      %v730 = vunpack.c.h.b16 %v682
      %v731 = vpack.c.b16 %v699, %v699
      %v732 = vpack.c.b16 %v700, %v700
      %v733 = vpack.c.b16 %v701, %v701
      %v734 = vpack.c.b16 %v702, %v702
      %v735 = vpack.c.b16 %v703, %v703
      %v736 = vpack.c.b16 %v704, %v704
      %v737 = vpack.c.b16 %v705, %v705
      %v738 = vpack.c.b16 %v706, %v706
      %v739 = vpack.c.b16 %v707, %v707
      %v740 = vpack.c.b16 %v708, %v708
      %v741 = vpack.c.b16 %v709, %v709
      %v742 = vpack.c.b16 %v710, %v710
      %v743 = vpack.c.b16 %v711, %v711
      %v744 = vpack.c.b16 %v712, %v712
      %v745 = vpack.c.b16 %v713, %v713
      %v746 = vpack.c.b16 %v714, %v714
      %v747 = vpack.c.b16 %v715, %v715
      %v748 = vpack.c.b16 %v716, %v716
      %v749 = vpack.c.b16 %v717, %v717
      %v750 = vpack.c.b16 %v718, %v718
      %v751 = vpack.c.b16 %v719, %v719
      %v752 = vpack.c.b16 %v720, %v720
      %v753 = vpack.c.b16 %v721, %v721
      %v754 = vpack.c.b16 %v722, %v722
      %v755 = vpack.c.b16 %v723, %v723
      %v756 = vpack.c.b16 %v724, %v724
      %v757 = vpack.c.b16 %v725, %v725
      %v758 = vpack.c.b16 %v726, %v726
      %v759 = vpack.c.b16 %v727, %v727
      %v760 = vpack.c.b16 %v728, %v728
      %v761 = vpack.c.b16 %v729, %v729
      %v762 = vpack.c.b16 %v730, %v730
      %795 = vst [vmem:[%s223] sm:$0xf] %v731
      %796 = vst [vmem:[%s223 + $0x4] sm:$0xf] %v732
      %797 = vst [vmem:[%s223 + $0x8] sm:$0xf] %v733
      %798 = vst [vmem:[%s223 + $0xc] sm:$0xf] %v734
      %799 = vst [vmem:[%s223 + $0x10] sm:$0xf] %v735
      %800 = vst [vmem:[%s223 + $0x14] sm:$0xf] %v736
      %801 = vst [vmem:[%s223 + $0x18] sm:$0xf] %v737
      %802 = vst [vmem:[%s223 + $0x1c] sm:$0xf] %v738
      %803 = vst [vmem:[%s223 + $0x20] sm:$0xf] %v739
      %804 = vst [vmem:[%s223 + $0x24] sm:$0xf] %v740
      %805 = vst [vmem:[%s223 + $0x28] sm:$0xf] %v741
      %806 = vst [vmem:[%s223 + $0x2c] sm:$0xf] %v742
      %807 = vst [vmem:[%s223 + $0x30] sm:$0xf] %v743
      %808 = vst [vmem:[%s223 + $0x34] sm:$0xf] %v744
      %809 = vst [vmem:[%s223 + $0x38] sm:$0xf] %v745
      %810 = vst [vmem:[%s223 + $0x3c] sm:$0xf] %v746
      %811 = vst [vmem:[%s223 + $0x40] sm:$0xf] %v747
      %812 = vst [vmem:[%s223 + $0x44] sm:$0xf] %v748
      %813 = vst [vmem:[%s223 + $0x48] sm:$0xf] %v749
      %814 = vst [vmem:[%s223 + $0x4c] sm:$0xf] %v750
      %815 = vst [vmem:[%s223 + $0x50] sm:$0xf] %v751
      %816 = vst [vmem:[%s223 + $0x54] sm:$0xf] %v752
      %817 = vst [vmem:[%s223 + $0x58] sm:$0xf] %v753
      %818 = vst [vmem:[%s223 + $0x5c] sm:$0xf] %v754
      %819 = vst [vmem:[%s223 + $0x60] sm:$0xf] %v755
      %820 = vst [vmem:[%s223 + $0x64] sm:$0xf] %v756
      %821 = vst [vmem:[%s223 + $0x68] sm:$0xf] %v757
      %822 = vst [vmem:[%s223 + $0x6c] sm:$0xf] %v758
      %823 = vst [vmem:[%s223 + $0x70] sm:$0xf] %v759
      %824 = vst [vmem:[%s223 + $0x74] sm:$0xf] %v760
      %825 = vst [vmem:[%s223 + $0x78] sm:$0xf] %v761
      %826 = vst [vmem:[%s223 + $0x7c] sm:$0xf] %v762
      %s827 = smul.u32 32, %s18
      %p828 = scmp.lt.s32.totalorder %s827, 63
      %s829 = scalar_select %p828, %s827, 63
      %p830 = scmp.lt.s32.totalorder %s19, 0
      %s831 = scalar_select %p830, %s19, 0
      %s832 = sadd.s32 %s831, %s829
      %s833 = smul.addr %s832, 4
      %s834 = scalar_lea.vmem %s3, %s833
      // Predicated region
      $region33: #{makeup_gan_forward.76} parent=31 // pred_check
        %p835 = pneg %p124
      $region34: #{makeup_gan_forward.76} parent=31 // pred_check_branch
        %837 = sbr.rel (%p835) target = $region36
      $region35: #{makeup_gan_forward.76} parent=31 // pred_region
        %s838 = smul.u32 32, %s18
      $region36: #{makeup_gan_forward.76} parent=31 // pred_fallthru
        _
    $region32: #{makeup_gan_forward.76} parent=5 // pred_fallthru
      _
    %p839 = scmp.le.s32.totalorder 2, %s9
    // Predicated region
    $region37: #{makeup_gan_forward.76} parent=5 // pred_check
      %p840 = pneg %p839
    $region38: #{makeup_gan_forward.76} parent=5 // pred_check_branch
      %842 = sbr.rel (%p840) target = $region40
    $region39: #{makeup_gan_forward.76} parent=5 // pred_region
      %s843 = ssub.s32 %s9, 2
      // Predicated region
      $region41: #{makeup_gan_forward.76} parent=39 // pred_check
        %p844 = pneg %p130
      $region42: #{makeup_gan_forward.76} parent=39 // pred_check_branch
        %846 = sbr.rel (%p844) target = $region44
      $region43: #{makeup_gan_forward.76} parent=39 // pred_region
        %s847 = smul.u32 32, %s20
        %p848 = scmp.lt.s32.totalorder %s847, 63
        %s849 = scalar_select %p848, %s847, 63
        %p850 = scmp.lt.s32.totalorder %s21, 0
        %s851 = scalar_select %p850, %s21, 0
        %s852 = sadd.s32 %s851, %s849
        %s853 = smul.addr %s852, 4
        %s854 = scalar_lea.vmem %s3, %s853
      $region44: #{makeup_gan_forward.76} parent=39 // pred_fallthru
        _
    $region40: #{makeup_gan_forward.76} parent=5 // pred_fallthru
      _
  $region6: #{makeup_gan_forward.76} parent=0 // loop_footer
    %s13 = sadd.s32 1, %s9
  $region7: #{makeup_gan_forward.76} parent=0 // loop_footer_branch
    %8 = sbr.rel target = $region3
  $region8: #{makeup_gan_forward.76} parent=0 // loop_exit
    _

// kernel: makeup_gan_forward.77
$region0: #{makeup_gan_forward.77}
  #allocation0 [shape = 'u32[]', space=smem, size = 0x4, offset = 0x4, fixed_abs, tag = 'smem constant byte address 0x4 - core index']
  #allocation1 [shape = 'u32[144,128]{1,0:T(1,128)}', space=vmem, size = 0x12000, scoped, tag = 'internal scratch']
  %s0 = inlined_call_operand.vmem [shape: bf16[128,80], index: 0, kind: input, shape index: {}]
  %s1 = inlined_call_operand.vmem [shape: bf16[80,128], index: 1, kind: input, shape index: {}]
  %s2 = inlined_call_operand.vmem [shape: f32[1,128], index: 2, kind: input, shape index: {}]
  %s3 = inlined_call_operand.vmem [shape: bf16[128,128], index: 3, kind: output, shape index: {}]
  %s4 = sld [smem:[#allocation0]]
  $region22: #{makeup_gan_forward.77} parent=0
    _
  %s6 = ssub.s32 1, %s4
  %s7 = scalar_select 0, %s6, %s4
  // Predicated region
  $region2: #{makeup_gan_forward.77} parent=0 // pred_check
    _
  $region3: #{makeup_gan_forward.77} parent=0 // pred_check_branch
    %9 = sbr.rel (0) target = $region5
  $region4: #{makeup_gan_forward.77} parent=0 // pred_region
    _
  $region5: #{makeup_gan_forward.77} parent=0 // pred_fallthru
    _
  // Predicated region
  $region6: #{makeup_gan_forward.77} parent=0 // pred_check
    _
  $region7: #{makeup_gan_forward.77} parent=0 // pred_check_branch
    %11 = sbr.rel (0) target = $region9
  $region8: #{makeup_gan_forward.77} parent=0 // pred_region
    _
  $region9: #{makeup_gan_forward.77} parent=0 // pred_fallthru
    _
  // Predicated region
  $region10: #{makeup_gan_forward.77} parent=0 // pred_check
    _
  $region11: #{makeup_gan_forward.77} parent=0 // pred_check_branch
    %13 = sbr.rel (0) target = $region13
  $region12: #{makeup_gan_forward.77} parent=0 // pred_region
    _
  $region13: #{makeup_gan_forward.77} parent=0 // pred_fallthru
    _
  %v15 = vld [vmem:[%s0] sm:$0xf]
  %v16 = vld [vmem:[%s0 + $0x4] sm:$0xf]
  %v17 = vld [vmem:[%s0 + $0x8] sm:$0xf]
  %v18 = vld [vmem:[%s0 + $0xc] sm:$0xf]
  %v19 = vld [vmem:[%s0 + $0x10] sm:$0xf]
  %v20 = vld [vmem:[%s0 + $0x14] sm:$0xf]
  %v21 = vld [vmem:[%s0 + $0x18] sm:$0xf]
  %v22 = vld [vmem:[%s0 + $0x1c] sm:$0xf]
  %v23 = vld [vmem:[%s0 + $0x20] sm:$0xf]
  %v24 = vld [vmem:[%s0 + $0x24] sm:$0xf]
  %v25 = vld [vmem:[%s0 + $0x28] sm:$0xf]
  %v26 = vld [vmem:[%s0 + $0x2c] sm:$0xf]
  %v27 = vld [vmem:[%s0 + $0x30] sm:$0xf]
  %v28 = vld [vmem:[%s0 + $0x34] sm:$0xf]
  %v29 = vld [vmem:[%s0 + $0x38] sm:$0xf]
  %v30 = vld [vmem:[%s0 + $0x3c] sm:$0xf]
  %v31 = vld [vmem:[%s1] sm:$0xf]
  %v32 = vld [vmem:[%s1 + $0x4] sm:$0xf]
  %v33 = vld [vmem:[%s1 + $0x8] sm:$0xf]
  %v34 = vld [vmem:[%s1 + $0xc] sm:$0xf]
  %v35 = vld [vmem:[%s1 + $0x10] sm:$0xf]
  %v36 = vld [vmem:[%s1 + $0x14] sm:$0xf]
  %v37 = vld [vmem:[%s1 + $0x18] sm:$0xf]
  %v38 = vld [vmem:[%s1 + $0x1c] sm:$0xf]
  %v39 = vld [vmem:[%s1 + $0x20] sm:$0xf]
  %v40 = vld [vmem:[%s1 + $0x24] sm:$0xf]
  %v41 = vld [vmem:[%s2] sm:$0x1]
  %v43 = vlaneseq
  %v44 = vshrl.u32 %v43, 7
  %v45 = vsub.s32 0, %v44
  %v46 = vrot.slane %v41, %v45
  %v64 = vunpack.c.l.b16 %v15
  %v65 = vunpack.c.l.b16 %v16
  %v66 = vunpack.c.l.b16 %v17
  %v67 = vunpack.c.l.b16 %v18
  %v68 = vunpack.c.l.b16 %v19
  %v69 = vunpack.c.l.b16 %v20
  %v70 = vunpack.c.l.b16 %v21
  %v71 = vunpack.c.l.b16 %v22
  %v72 = vunpack.c.l.b16 %v23
  %v73 = vunpack.c.l.b16 %v24
  %v74 = vunpack.c.l.b16 %v25
  %v75 = vunpack.c.l.b16 %v26
  %v76 = vunpack.c.l.b16 %v27
  %v77 = vunpack.c.l.b16 %v28
  %v78 = vunpack.c.l.b16 %v29
  %v79 = vunpack.c.l.b16 %v30
  %v80 = vpack.c.b16 %v65, %v64
  %v81 = vpack.c.b16 %v67, %v66
  %v82 = vpack.c.b16 %v69, %v68
  %v83 = vpack.c.b16 %v71, %v70
  %v84 = vpack.c.b16 %v73, %v72
  %v85 = vpack.c.b16 %v75, %v74
  %v86 = vpack.c.b16 %v77, %v76
  %v87 = vpack.c.b16 %v79, %v78
  %v98 = vunpack.c.l.b16 %v31
  %v99 = vunpack.c.l.b16 %v32
  %v100 = vunpack.c.l.b16 %v33
  %v101 = vunpack.c.l.b16 %v34
  %v102 = vunpack.c.l.b16 %v35
  %v103 = vunpack.c.l.b16 %v36
  %v104 = vunpack.c.l.b16 %v37
  %v105 = vunpack.c.l.b16 %v38
  %v106 = vunpack.c.l.b16 %v39
  %v107 = vunpack.c.l.b16 %v40
  %v108 = vpack.c.b16 %v99, %v98
  %v109 = vpack.c.b16 %v101, %v100
  %v110 = vpack.c.b16 %v103, %v102
  %v111 = vpack.c.b16 %v105, %v104
  %v112 = vpack.c.b16 %v107, %v106
  %vm118 = vcmask 654336
  %v120 = vsel %vm118, %v80, 0
  %v123 = vsel %vm118, %v81, 0
  %v126 = vsel %vm118, %v82, 0
  %v129 = vsel %vm118, %v83, 0
  %v132 = vsel %vm118, %v84, 0
  %v135 = vsel %vm118, %v85, 0
  %v138 = vsel %vm118, %v86, 0
  %v141 = vsel %vm118, %v87, 0
  %143 = vmatprep.subr.bf16.mxu0 0
  %144 = vmatpush1.bf16.msra.mxu0 %v108
  %145 = vmatprep.subr.bf16.mxu0 0
  %146 = vmatpush1.bf16.msra.mxu0 %v109
  %147 = vmatprep.subr.bf16.mxu0 0
  %148 = vmatpush1.bf16.msra.mxu0 %v110
  %149 = vmatprep.subr.bf16.mxu0 0
  %150 = vmatpush1.bf16.msra.mxu0 %v111
  %151 = vmatprep.subr.bf16.mxu0 0
  %152 = vmatpush1.bf16.msra.mxu0 %v112
  %153 = vmatprep.subr.bf16.mxu0 0
  %154 = vmatpush1.bf16.msra.mxu0 0
  %155 = vmatprep.subr.bf16.mxu0 0
  %156 = vmatpush1.bf16.msra.mxu0 0
  %157 = vmatprep.subr.bf16.mxu0 0
  %158 = vmatpush1.bf16.msra.mxu0 0
  %159 = vmatprep.subr.bf16.mxu0 0
  %160 = vmatpush1.bf16.msra.mxu0 0
  %161 = vmatprep.subr.bf16.mxu0 0
  %162 = vmatpush1.bf16.msra.mxu0 0
  %163 = vmatprep.subr.bf16.mxu0 0
  %164 = vmatpush1.bf16.msra.mxu0 0
  %165 = vmatprep.subr.bf16.mxu0 0
  %166 = vmatpush1.bf16.msra.mxu0 0
  %167 = vmatprep.subr.bf16.mxu0 0
  %168 = vmatpush1.bf16.msra.mxu0 0
  %169 = vmatprep.subr.bf16.mxu0 0
  %170 = vmatpush1.bf16.msra.mxu0 0
  %171 = vmatprep.subr.bf16.mxu0 0
  %172 = vmatpush1.bf16.msra.mxu0 0
  %173 = vmatprep.subr.bf16.mxu0 0
  %174 = vmatpush1.bf16.msra.mxu0 0
  %175 = vmatprep.mubr.bf16.mxu0 0
  %176 = vmatmul.mubr.bf16.gmra.mrb[0].mxu0 %v120
  %v177 = vpop.f32.mrb[0].mxu0
  %v178 = vadd.f32 %v46, %v177
  %v179 = vpop.f32.mrb[0].mxu0
  %v180 = vpop.f32.mrb[0].mxu0
  %v181 = vadd.f32 %v46, %v180
  %v182 = vpop.f32.mrb[0].mxu0
  %183 = vmatprep.mubr.bf16.mxu0 0
  %184 = vmatmul.mubr.bf16.gmra.mrb[0].mxu0 %v123
  %v185 = vpop.f32.mrb[0].mxu0
  %v186 = vadd.f32 %v46, %v185
  %v187 = vpop.f32.mrb[0].mxu0
  %v188 = vpop.f32.mrb[0].mxu0
  %v189 = vadd.f32 %v46, %v188
  %v190 = vpop.f32.mrb[0].mxu0
  %191 = vmatprep.mubr.bf16.mxu0 0
  %192 = vmatmul.mubr.bf16.gmra.mrb[0].mxu0 %v126
  %v193 = vpop.f32.mrb[0].mxu0
  %v194 = vadd.f32 %v46, %v193
  %v195 = vpop.f32.mrb[0].mxu0
  %v196 = vpop.f32.mrb[0].mxu0
  %v197 = vadd.f32 %v46, %v196
  %v198 = vpop.f32.mrb[0].mxu0
  %199 = vmatprep.mubr.bf16.mxu0 0
  %200 = vmatmul.mubr.bf16.gmra.mrb[0].mxu0 %v129
  %v201 = vpop.f32.mrb[0].mxu0
  %v202 = vadd.f32 %v46, %v201
  %v203 = vpop.f32.mrb[0].mxu0
  %v204 = vpop.f32.mrb[0].mxu0
  %v205 = vadd.f32 %v46, %v204
  %v206 = vpop.f32.mrb[0].mxu0
  %207 = vmatprep.mubr.bf16.mxu0 0
  %208 = vmatmul.mubr.bf16.gmra.mrb[0].mxu0 %v132
  %v209 = vpop.f32.mrb[0].mxu0
  %v210 = vadd.f32 %v46, %v209
  %v211 = vpop.f32.mrb[0].mxu0
  %v212 = vpop.f32.mrb[0].mxu0
  %v213 = vadd.f32 %v46, %v212
  %v214 = vpop.f32.mrb[0].mxu0
  %215 = vmatprep.mubr.bf16.mxu0 0
  %216 = vmatmul.mubr.bf16.gmra.mrb[0].mxu0 %v135
  %v217 = vpop.f32.mrb[0].mxu0
  %v218 = vadd.f32 %v46, %v217
  %v219 = vpop.f32.mrb[0].mxu0
  %v220 = vpop.f32.mrb[0].mxu0
  %v221 = vadd.f32 %v46, %v220
  %v222 = vpop.f32.mrb[0].mxu0
  %223 = vmatprep.mubr.bf16.mxu0 0
  %224 = vmatmul.mubr.bf16.gmra.mrb[0].mxu0 %v138
  %v225 = vpop.f32.mrb[0].mxu0
  %v226 = vadd.f32 %v46, %v225
  %v227 = vpop.f32.mrb[0].mxu0
  %v228 = vpop.f32.mrb[0].mxu0
  %v229 = vadd.f32 %v46, %v228
  %v230 = vpop.f32.mrb[0].mxu0
  %231 = vmatprep.mubr.bf16.mxu0 0
  %232 = vmatmul.mubr.bf16.gmra.mrb[0].mxu0 %v141
  %v233 = vpop.f32.mrb[0].mxu0
  %v234 = vadd.f32 %v46, %v233
  %v235 = vpop.f32.mrb[0].mxu0
  %v236 = vpop.f32.mrb[0].mxu0
  %v237 = vadd.f32 %v46, %v236
  %v238 = vpop.f32.mrb[0].mxu0
  %239 = vdwg.mxu0
  %vm240 = vcmp.ge.f32.partialorder %v178, 0.0
  %vm241 = vcmp.ge.f32.partialorder %v181, 0.0
  %vm242 = vcmp.ge.f32.partialorder %v186, 0.0
  %vm243 = vcmp.ge.f32.partialorder %v189, 0.0
  %vm244 = vcmp.ge.f32.partialorder %v194, 0.0
  %vm245 = vcmp.ge.f32.partialorder %v197, 0.0
  %vm246 = vcmp.ge.f32.partialorder %v202, 0.0
  %vm247 = vcmp.ge.f32.partialorder %v205, 0.0
  %vm248 = vcmp.ge.f32.partialorder %v210, 0.0
  %vm249 = vcmp.ge.f32.partialorder %v213, 0.0
  %vm250 = vcmp.ge.f32.partialorder %v218, 0.0
  %vm251 = vcmp.ge.f32.partialorder %v221, 0.0
  %vm252 = vcmp.ge.f32.partialorder %v226, 0.0
  %vm253 = vcmp.ge.f32.partialorder %v229, 0.0
  %vm254 = vcmp.ge.f32.partialorder %v234, 0.0
  %vm255 = vcmp.ge.f32.partialorder %v237, 0.0
  %v256 = vmul.f32 %v178, 0.2
  %v257 = vmul.f32 %v181, 0.2
  %v258 = vmul.f32 %v186, 0.2
  %v259 = vmul.f32 %v189, 0.2
  %v260 = vmul.f32 %v194, 0.2
  %v261 = vmul.f32 %v197, 0.2
  %v262 = vmul.f32 %v202, 0.2
  %v263 = vmul.f32 %v205, 0.2
  %v264 = vmul.f32 %v210, 0.2
  %v265 = vmul.f32 %v213, 0.2
  %v266 = vmul.f32 %v218, 0.2
  %v267 = vmul.f32 %v221, 0.2
  %v268 = vmul.f32 %v226, 0.2
  %v269 = vmul.f32 %v229, 0.2
  %v270 = vmul.f32 %v234, 0.2
  %v271 = vmul.f32 %v237, 0.2
  %v272 = vsel %vm240, %v178, %v256
  %v273 = vsel %vm241, %v181, %v257
  %v274 = vsel %vm242, %v186, %v258
  %v275 = vsel %vm243, %v189, %v259
  %v276 = vsel %vm244, %v194, %v260
  %v277 = vsel %vm245, %v197, %v261
  %v278 = vsel %vm246, %v202, %v262
  %v279 = vsel %vm247, %v205, %v263
  %v280 = vsel %vm248, %v210, %v264
  %v281 = vsel %vm249, %v213, %v265
  %v282 = vsel %vm250, %v218, %v266
  %v283 = vsel %vm251, %v221, %v267
  %v284 = vsel %vm252, %v226, %v268
  %v285 = vsel %vm253, %v229, %v269
  %v286 = vsel %vm254, %v234, %v270
  %v287 = vsel %vm255, %v237, %v271
  %v288 = vpack.c.bf16 %v273, %v272
  %v289 = vpack.c.bf16 %v275, %v274
  %v290 = vpack.c.bf16 %v277, %v276
  %v291 = vpack.c.bf16 %v279, %v278
  %v292 = vpack.c.bf16 %v281, %v280
  %v293 = vpack.c.bf16 %v283, %v282
  %v294 = vpack.c.bf16 %v285, %v284
  %v295 = vpack.c.bf16 %v287, %v286
  %v304 = vunpack.c.l.b16 %v288
  %v305 = vunpack.c.h.b16 %v288
  %v306 = vunpack.c.l.b16 %v289
  %v307 = vunpack.c.h.b16 %v289
  %v308 = vunpack.c.l.b16 %v290
  %v309 = vunpack.c.h.b16 %v290
  %v310 = vunpack.c.l.b16 %v291
  %v311 = vunpack.c.h.b16 %v291
  %v312 = vunpack.c.l.b16 %v292
  %v313 = vunpack.c.h.b16 %v292
  %v314 = vunpack.c.l.b16 %v293
  %v315 = vunpack.c.h.b16 %v293
  %v316 = vunpack.c.l.b16 %v294
  %v317 = vunpack.c.h.b16 %v294
  %v318 = vunpack.c.l.b16 %v295
  %v319 = vunpack.c.h.b16 %v295
  %v320 = vpack.c.b16 %v304, %v304
  %v321 = vpack.c.b16 %v305, %v305
  %v322 = vpack.c.b16 %v306, %v306
  %v323 = vpack.c.b16 %v307, %v307
  %v324 = vpack.c.b16 %v308, %v308
  %v325 = vpack.c.b16 %v309, %v309
  %v326 = vpack.c.b16 %v310, %v310
  %v327 = vpack.c.b16 %v311, %v311
  %v328 = vpack.c.b16 %v312, %v312
  %v329 = vpack.c.b16 %v313, %v313
  %v330 = vpack.c.b16 %v314, %v314
  %v331 = vpack.c.b16 %v315, %v315
  %v332 = vpack.c.b16 %v316, %v316
  %v333 = vpack.c.b16 %v317, %v317
  %v334 = vpack.c.b16 %v318, %v318
  %v335 = vpack.c.b16 %v319, %v319
  %352 = vst [vmem:[%s3] sm:$0xf] %v320
  %353 = vst [vmem:[%s3 + $0x4] sm:$0xf] %v321
  %354 = vst [vmem:[%s3 + $0x8] sm:$0xf] %v322
  %355 = vst [vmem:[%s3 + $0xc] sm:$0xf] %v323
  %356 = vst [vmem:[%s3 + $0x10] sm:$0xf] %v324
  %357 = vst [vmem:[%s3 + $0x14] sm:$0xf] %v325
  %358 = vst [vmem:[%s3 + $0x18] sm:$0xf] %v326
  %359 = vst [vmem:[%s3 + $0x1c] sm:$0xf] %v327
  %360 = vst [vmem:[%s3 + $0x20] sm:$0xf] %v328
  %361 = vst [vmem:[%s3 + $0x24] sm:$0xf] %v329
  %362 = vst [vmem:[%s3 + $0x28] sm:$0xf] %v330
  %363 = vst [vmem:[%s3 + $0x2c] sm:$0xf] %v331
  %364 = vst [vmem:[%s3 + $0x30] sm:$0xf] %v332
  %365 = vst [vmem:[%s3 + $0x34] sm:$0xf] %v333
  %366 = vst [vmem:[%s3 + $0x38] sm:$0xf] %v334
  %367 = vst [vmem:[%s3 + $0x3c] sm:$0xf] %v335
  // Predicated region
  $region14: #{makeup_gan_forward.77} parent=0 // pred_check
    _
  $region15: #{makeup_gan_forward.77} parent=0 // pred_check_branch
    %369 = sbr.rel (0) target = $region17
  $region16: #{makeup_gan_forward.77} parent=0 // pred_region
    _
  $region17: #{makeup_gan_forward.77} parent=0 // pred_fallthru
    _
  // Predicated region
  $region18: #{makeup_gan_forward.77} parent=0 // pred_check
    _
  $region19: #{makeup_gan_forward.77} parent=0 // pred_check_branch
    %371 = sbr.rel (0) target = $region21
  $region20: #{makeup_gan_forward.77} parent=0 // pred_region
    _
  $region21: #{makeup_gan_forward.77} parent=0 // pred_fallthru
    _

// kernel: makeup_gan_forward.78
$region0: #{makeup_gan_forward.78}
  #allocation0 [shape = 'u32[]', space=smem, size = 0x4, offset = 0x4, fixed_abs, tag = 'smem constant byte address 0x4 - core index']
  #allocation1 [shape = 'u32[144,128]{1,0:T(1,128)}', space=vmem, size = 0x12000, scoped, tag = 'internal scratch']
  %s0 = inlined_call_operand.vmem [shape: bf16[32,144], index: 0, kind: input, shape index: {}]
  %s1 = inlined_call_operand.vmem [shape: bf16[144,128], index: 1, kind: input, shape index: {}]
  %s2 = inlined_call_operand.vmem [shape: f32[1,128], index: 2, kind: input, shape index: {}]
  %s3 = inlined_call_operand.vmem [shape: bf16[32,128], index: 3, kind: output, shape index: {}]
  %s4 = sld [smem:[#allocation0]]
  $region22: #{makeup_gan_forward.78} parent=0
    _
  %s6 = ssub.s32 1, %s4
  %s7 = scalar_select 0, %s6, %s4
  // Predicated region
  $region2: #{makeup_gan_forward.78} parent=0 // pred_check
    _
  $region3: #{makeup_gan_forward.78} parent=0 // pred_check_branch
    %9 = sbr.rel (0) target = $region5
  $region4: #{makeup_gan_forward.78} parent=0 // pred_region
    _
  $region5: #{makeup_gan_forward.78} parent=0 // pred_fallthru
    _
  // Predicated region
  $region6: #{makeup_gan_forward.78} parent=0 // pred_check
    _
  $region7: #{makeup_gan_forward.78} parent=0 // pred_check_branch
    %11 = sbr.rel (0) target = $region9
  $region8: #{makeup_gan_forward.78} parent=0 // pred_region
    _
  $region9: #{makeup_gan_forward.78} parent=0 // pred_fallthru
    _
  // Predicated region
  $region10: #{makeup_gan_forward.78} parent=0 // pred_check
    _
  $region11: #{makeup_gan_forward.78} parent=0 // pred_check_branch
    %13 = sbr.rel (0) target = $region13
  $region12: #{makeup_gan_forward.78} parent=0 // pred_region
    _
  $region13: #{makeup_gan_forward.78} parent=0 // pred_fallthru
    _
  %v15 = vld [vmem:[%s0] sm:$0xff]
  %v16 = vld [vmem:[%s0 + $0x8] sm:$0xff]
  %v17 = vld [vmem:[%s0 + $0x10] sm:$0xff]
  %v18 = vld [vmem:[%s0 + $0x18] sm:$0xff]
  %v19 = vld [vmem:[%s1] sm:$0xf]
  %v20 = vld [vmem:[%s1 + $0x4] sm:$0xf]
  %v21 = vld [vmem:[%s1 + $0x8] sm:$0xf]
  %v22 = vld [vmem:[%s1 + $0xc] sm:$0xf]
  %v23 = vld [vmem:[%s1 + $0x10] sm:$0xf]
  %v24 = vld [vmem:[%s1 + $0x14] sm:$0xf]
  %v25 = vld [vmem:[%s1 + $0x18] sm:$0xf]
  %v26 = vld [vmem:[%s1 + $0x1c] sm:$0xf]
  %v27 = vld [vmem:[%s1 + $0x20] sm:$0xf]
  %v28 = vld [vmem:[%s1 + $0x24] sm:$0xf]
  %v29 = vld [vmem:[%s1 + $0x28] sm:$0xf]
  %v30 = vld [vmem:[%s1 + $0x2c] sm:$0xf]
  %v31 = vld [vmem:[%s1 + $0x30] sm:$0xf]
  %v32 = vld [vmem:[%s1 + $0x34] sm:$0xf]
  %v33 = vld [vmem:[%s1 + $0x38] sm:$0xf]
  %v34 = vld [vmem:[%s1 + $0x3c] sm:$0xf]
  %v35 = vld [vmem:[%s1 + $0x40] sm:$0xf]
  %v36 = vld [vmem:[%s1 + $0x44] sm:$0xf]
  %v37 = vld [vmem:[%s2] sm:$0x1]
  %v39 = vlaneseq
  %v40 = vshrl.u32 %v39, 7
  %v41 = vsub.s32 0, %v40
  %v42 = vrot.slane %v37, %v41
  %v48 = vunpack.c.l.b16 %v15
  %v49 = vunpack.c.h.b16 %v15
  %v50 = vunpack.c.l.b16 %v16
  %v51 = vunpack.c.h.b16 %v16
  %v52 = vunpack.c.l.b16 %v17
  %v53 = vunpack.c.h.b16 %v17
  %v54 = vunpack.c.l.b16 %v18
  %v55 = vunpack.c.h.b16 %v18
  %v56 = vpack.c.b16 %v50, %v48
  %v57 = vpack.c.b16 %v51, %v49
  %v58 = vpack.c.b16 %v54, %v52
  %v59 = vpack.c.b16 %v55, %v53
  %v80 = vunpack.c.l.b16 %v19
  %v81 = vunpack.c.l.b16 %v20
  %v82 = vunpack.c.l.b16 %v21
  %v83 = vunpack.c.l.b16 %v22
  %v84 = vunpack.c.l.b16 %v23
  %v85 = vunpack.c.l.b16 %v24
  %v86 = vunpack.c.l.b16 %v25
  %v87 = vunpack.c.l.b16 %v26
  %v88 = vunpack.c.l.b16 %v27
  %v89 = vunpack.c.l.b16 %v28
  %v90 = vunpack.c.l.b16 %v29
  %v91 = vunpack.c.l.b16 %v30
  %v92 = vunpack.c.l.b16 %v31
  %v93 = vunpack.c.l.b16 %v32
  %v94 = vunpack.c.l.b16 %v33
  %v95 = vunpack.c.l.b16 %v34
  %v96 = vunpack.c.l.b16 %v35
  %v97 = vunpack.c.l.b16 %v36
  %v98 = vpack.c.b16 %v81, %v80
  %v99 = vpack.c.b16 %v83, %v82
  %v100 = vpack.c.b16 %v85, %v84
  %v101 = vpack.c.b16 %v87, %v86
  %v102 = vpack.c.b16 %v89, %v88
  %v103 = vpack.c.b16 %v91, %v90
  %v104 = vpack.c.b16 %v93, %v92
  %v105 = vpack.c.b16 %v95, %v94
  %v106 = vpack.c.b16 %v97, %v96
  %vm116 = vcmask 130048
  %v118 = vsel %vm116, %v57, 0
  %v121 = vsel %vm116, %v59, 0
  %123 = vmatprep.subr.bf16.mxu0 0
  %124 = vmatpush1.bf16.msra.mxu0 %v98
  %125 = vmatprep.subr.bf16.mxu0 0
  %126 = vmatpush1.bf16.msra.mxu0 %v99
  %127 = vmatprep.subr.bf16.mxu0 0
  %128 = vmatpush1.bf16.msra.mxu0 %v100
  %129 = vmatprep.subr.bf16.mxu0 0
  %130 = vmatpush1.bf16.msra.mxu0 %v101
  %131 = vmatprep.subr.bf16.mxu0 0
  %132 = vmatpush1.bf16.msra.mxu0 %v102
  %133 = vmatprep.subr.bf16.mxu0 0
  %134 = vmatpush1.bf16.msra.mxu0 %v103
  %135 = vmatprep.subr.bf16.mxu0 0
  %136 = vmatpush1.bf16.msra.mxu0 %v104
  %137 = vmatprep.subr.bf16.mxu0 0
  %138 = vmatpush1.bf16.msra.mxu0 %v105
  %139 = vmatprep.subr.bf16.mxu0 0
  %140 = vmatpush1.bf16.msra.mxu0 %v106
  %141 = vmatprep.subr.bf16.mxu0 0
  %142 = vmatpush1.bf16.msra.mxu0 0
  %143 = vmatprep.subr.bf16.mxu0 0
  %144 = vmatpush1.bf16.msra.mxu0 0
  %145 = vmatprep.subr.bf16.mxu0 0
  %146 = vmatpush1.bf16.msra.mxu0 0
  %147 = vmatprep.subr.bf16.mxu0 0
  %148 = vmatpush1.bf16.msra.mxu0 0
  %149 = vmatprep.subr.bf16.mxu0 0
  %150 = vmatpush1.bf16.msra.mxu0 0
  %151 = vmatprep.subr.bf16.mxu0 0
  %152 = vmatpush1.bf16.msra.mxu0 0
  %153 = vmatprep.subr.bf16.mxu0 0
  %154 = vmatpush1.bf16.msra.mxu0 0
  %155 = vmatprep.mubr.bf16.mxu0 %v118
  %156 = vmatmul.mubr.bf16.gmra.mrb[0].mxu0 %v56
  %v157 = vpop.f32.mrb[0].mxu0
  %v158 = vadd.f32 %v42, %v157
  %v159 = vpop.f32.mrb[0].mxu0
  %v160 = vpop.f32.mrb[0].mxu0
  %v161 = vadd.f32 %v42, %v160
  %v162 = vpop.f32.mrb[0].mxu0
  %163 = vmatprep.mubr.bf16.mxu0 %v121
  %164 = vmatmul.mubr.bf16.gmra.mrb[0].mxu0 %v58
  %v165 = vpop.f32.mrb[0].mxu0
  %v166 = vadd.f32 %v42, %v165
  %v167 = vpop.f32.mrb[0].mxu0
  %v168 = vpop.f32.mrb[0].mxu0
  %v169 = vadd.f32 %v42, %v168
  %v170 = vpop.f32.mrb[0].mxu0
  %171 = vdwg.mxu0
  %vm172 = vcmp.ge.f32.partialorder %v158, 0.0
  %vm173 = vcmp.ge.f32.partialorder %v161, 0.0
  %vm174 = vcmp.ge.f32.partialorder %v166, 0.0
  %vm175 = vcmp.ge.f32.partialorder %v169, 0.0
  %v176 = vmul.f32 %v158, 0.2
  %v177 = vmul.f32 %v161, 0.2
  %v178 = vmul.f32 %v166, 0.2
  %v179 = vmul.f32 %v169, 0.2
  %v180 = vsel %vm172, %v158, %v176
  %v181 = vsel %vm173, %v161, %v177
  %v182 = vsel %vm174, %v166, %v178
  %v183 = vsel %vm175, %v169, %v179
  %v184 = vpack.c.bf16 %v181, %v180
  %v185 = vpack.c.bf16 %v183, %v182
  %v188 = vunpack.c.l.b16 %v184
  %v189 = vunpack.c.h.b16 %v184
  %v190 = vunpack.c.l.b16 %v185
  %v191 = vunpack.c.h.b16 %v185
  %v192 = vpack.c.b16 %v188, %v188
  %v193 = vpack.c.b16 %v189, %v189
  %v194 = vpack.c.b16 %v190, %v190
  %v195 = vpack.c.b16 %v191, %v191
  %200 = vst [vmem:[%s3] sm:$0xf] %v192
  %201 = vst [vmem:[%s3 + $0x4] sm:$0xf] %v193
  %202 = vst [vmem:[%s3 + $0x8] sm:$0xf] %v194
  %203 = vst [vmem:[%s3 + $0xc] sm:$0xf] %v195
  // Predicated region
  $region14: #{makeup_gan_forward.78} parent=0 // pred_check
    _
  $region15: #{makeup_gan_forward.78} parent=0 // pred_check_branch
    %205 = sbr.rel (0) target = $region17
  $region16: #{makeup_gan_forward.78} parent=0 // pred_region
    _
  $region17: #{makeup_gan_forward.78} parent=0 // pred_fallthru
    _
  // Predicated region
  $region18: #{makeup_gan_forward.78} parent=0 // pred_check
    _
  $region19: #{makeup_gan_forward.78} parent=0 // pred_check_branch
    %207 = sbr.rel (0) target = $region21
  $region20: #{makeup_gan_forward.78} parent=0 // pred_region
    _
  $region21: #{makeup_gan_forward.78} parent=0 // pred_fallthru
    _

// kernel: makeup_gan_forward.101
$region0: #{makeup_gan_forward.101}
  #allocation0 [shape = 'u32[]', space=smem, size = 0x4, offset = 0x4, fixed_abs, tag = 'smem constant byte address 0x4 - core index']
  #allocation1 [shape = 'u32[144,128]{1,0:T(1,128)}', space=vmem, size = 0x12000, scoped, tag = 'internal scratch']
  %s0 = inlined_call_operand.vmem [shape: bf16[2,16,128], index: 0, kind: input, shape index: {}]
  %s1 = inlined_call_operand.vmem [shape: s32[2,4,128], index: 1, kind: input, shape index: {}]
  %s2 = inlined_call_operand.vmem [shape: f32[2,4,128], index: 2, kind: input, shape index: {}]
  %s3 = inlined_call_operand.vmem [shape: bf16[2,16,128], index: 3, kind: output, shape index: {}]
  %s4 = sld [smem:[#allocation0]]
  $region45: #{makeup_gan_forward.101} parent=0
    _
  %s6 = ssub.s32 1, %s4
  %s7 = scalar_select 0, %s6, %s4
  loop: start=0, step=1, limit=4
  $region2: #{makeup_gan_forward.101} parent=0 // loop_pre_header
    _
  $region3: #{makeup_gan_forward.101} parent=0 // loop_header
    %s9 = sphi 0, %s13
    %p10 = scmp.ge.s32.totalorder %s9, 4
    %s16 = sphi 0, %s28
    %s17 = sphi 0, %s24
    %s18 = sphi 0, %s16
    %s19 = sphi 0, %s17
    %s20 = sphi 0, %s18
    %s21 = sphi 0, %s19
    %s31 = sphi 0, %s33
    %s34 = sphi 0, %s31
    %s35 = sphi 0, %s34
    %s51 = sphi 0, %s35
    %s59 = sphi 0, %s61
    %s62 = sphi 0, %s59
    %s63 = sphi 0, %s62
    %s79 = sphi 0, %s63
    %s87 = sphi 0, %s89
    %s90 = sphi 0, %s87
    %s91 = sphi 0, %s90
    %s107 = sphi 0, %s91
    %s115 = sphi 0, %s117
    %s118 = sphi 0, %s115
    %s119 = sphi 0, %s118
    %s135 = sphi 0, %s119
  $region4: #{makeup_gan_forward.101} parent=0 // loop_header_branch
    %12 = sbr.rel (%p10) target = $region8
  $region5: #{makeup_gan_forward.101} parent=0 // loop_body
    %s14 = ssub.s32 %s9, 1
    %s15 = ssub.s32 %s9, 2
    %s22 = sadd.s32 1, %s17
    %p23 = scmp.ge.s32.totalorder %s22, 1
    %s24 = scalar_select %p23, 0, %s22
    %s25 = sadd.s32 1, %s16
    %s26 = scalar_select %p23, %s25, %s16
    %p27 = scmp.ge.s32.totalorder %s26, 2
    %s28 = scalar_select %p27, 0, %s26
    %s29 = ssub.s32 %s16, %s28
    %p30 = scmp.eq.s32.totalorder %s29, 0
    %s32 = sadd.s32 %s31, 1
    %s33 = scalar_select %p30, %s31, %s32
    %p36 = pneg %p30
    %p37 = scmp.eq.s32.totalorder %s9, 1
    %p38 = por %p36, %p37
    %p39 = scmp.ne.s32.totalorder %s31, %s34
    %p40 = scmp.eq.s32.totalorder %s9, 0
    %p41 = por %p39, %p40
    %p42 = scmp.ne.s32.totalorder %s31, %s34
    %p43 = scmp.eq.s32.totalorder %s14, 1
    %p44 = por %p42, %p43
    %p45 = scmp.ne.s32.totalorder %s34, %s35
    %p46 = scmp.eq.s32.totalorder %s14, 0
    %p47 = por %p45, %p46
    %p48 = scmp.ne.s32.totalorder %s34, %s35
    %p49 = scmp.eq.s32.totalorder %s15, 1
    %p50 = por %p48, %p49
    %p52 = scmp.ne.s32.totalorder %s35, %s51
    %p53 = scmp.eq.s32.totalorder %s15, 0
    %p54 = por %p52, %p53
    %s55 = ssub.s32 %s16, %s28
    %s56 = ssub.s32 %s17, %s24
    %s57 = sor.u32 %s55, %s56
    %p58 = scmp.eq.s32.totalorder %s57, 0
    %s60 = sadd.s32 %s59, 1
    %s61 = scalar_select %p58, %s59, %s60
    %p64 = pneg %p58
    %p65 = scmp.eq.s32.totalorder %s9, 1
    %p66 = por %p64, %p65
    %p67 = scmp.ne.s32.totalorder %s59, %s62
    %p68 = scmp.eq.s32.totalorder %s9, 0
    %p69 = por %p67, %p68
    %p70 = scmp.ne.s32.totalorder %s59, %s62
    %p71 = scmp.eq.s32.totalorder %s14, 1
    %p72 = por %p70, %p71
    %p73 = scmp.ne.s32.totalorder %s62, %s63
    %p74 = scmp.eq.s32.totalorder %s14, 0
    %p75 = por %p73, %p74
    %p76 = scmp.ne.s32.totalorder %s62, %s63
    %p77 = scmp.eq.s32.totalorder %s15, 1
    %p78 = por %p76, %p77
    %p80 = scmp.ne.s32.totalorder %s63, %s79
    %p81 = scmp.eq.s32.totalorder %s15, 0
    %p82 = por %p80, %p81
    %s83 = ssub.s32 %s16, %s28
    %s84 = ssub.s32 %s17, %s24
    %s85 = sor.u32 %s83, %s84
    %p86 = scmp.eq.s32.totalorder %s85, 0
    %s88 = sadd.s32 %s87, 1
    %s89 = scalar_select %p86, %s87, %s88
    %p92 = pneg %p86
    %p93 = scmp.eq.s32.totalorder %s9, 1
    %p94 = por %p92, %p93
    %p95 = scmp.ne.s32.totalorder %s87, %s90
    %p96 = scmp.eq.s32.totalorder %s9, 0
    %p97 = por %p95, %p96
    %p98 = scmp.ne.s32.totalorder %s87, %s90
    %p99 = scmp.eq.s32.totalorder %s14, 1
    %p100 = por %p98, %p99
    %p101 = scmp.ne.s32.totalorder %s90, %s91
    %p102 = scmp.eq.s32.totalorder %s14, 0
    %p103 = por %p101, %p102
    %p104 = scmp.ne.s32.totalorder %s90, %s91
    %p105 = scmp.eq.s32.totalorder %s15, 1
    %p106 = por %p104, %p105
    %p108 = scmp.ne.s32.totalorder %s91, %s107
    %p109 = scmp.eq.s32.totalorder %s15, 0
    %p110 = por %p108, %p109
    %s111 = ssub.s32 %s16, %s28
    %s112 = ssub.s32 %s17, %s24
    %s113 = sor.u32 %s111, %s112
    %p114 = scmp.eq.s32.totalorder %s113, 0
    %s116 = sadd.s32 %s115, 1
    %s117 = scalar_select %p114, %s115, %s116
    %p120 = pneg %p114
    %p121 = scmp.eq.s32.totalorder %s9, 1
    %p122 = por %p120, %p121
    %p123 = scmp.ne.s32.totalorder %s115, %s118
    %p124 = scmp.eq.s32.totalorder %s9, 0
    %p125 = por %p123, %p124
    %p126 = scmp.ne.s32.totalorder %s115, %s118
    %p127 = scmp.eq.s32.totalorder %s14, 1
    %p128 = por %p126, %p127
    %p129 = scmp.ne.s32.totalorder %s118, %s119
    %p130 = scmp.eq.s32.totalorder %s14, 0
    %p131 = por %p129, %p130
    %p132 = scmp.ne.s32.totalorder %s118, %s119
    %p133 = scmp.eq.s32.totalorder %s15, 1
    %p134 = por %p132, %p133
    %p136 = scmp.ne.s32.totalorder %s119, %s135
    %p137 = scmp.eq.s32.totalorder %s15, 0
    %p138 = por %p136, %p137
    %p139 = scmp.le.s32.totalorder 1, %s9
    %p140 = scmp.lt.s32.totalorder %s9, 3
    %p141 = pnand %p139, %p140
    %p142 = pneg %p141
    // Predicated region
    $region9: #{makeup_gan_forward.101} parent=5 // pred_check
      _
    $region10: #{makeup_gan_forward.101} parent=5 // pred_check_branch
      %144 = sbr.rel (%p141) target = $region12
    $region11: #{makeup_gan_forward.101} parent=5 // pred_region
      %s145 = ssub.s32 %s9, 1
    $region12: #{makeup_gan_forward.101} parent=5 // pred_fallthru
      _
    %p146 = scmp.lt.s32.totalorder %s9, 2
    // Predicated region
    $region13: #{makeup_gan_forward.101} parent=5 // pred_check
      %p147 = pneg %p146
    $region14: #{makeup_gan_forward.101} parent=5 // pred_check_branch
      %149 = sbr.rel (%p147) target = $region16
    $region15: #{makeup_gan_forward.101} parent=5 // pred_region
      // Predicated region
      $region17: #{makeup_gan_forward.101} parent=15 // pred_check
        %p150 = pneg %p41
      $region18: #{makeup_gan_forward.101} parent=15 // pred_check_branch
        %152 = sbr.rel (%p150) target = $region20
      $region19: #{makeup_gan_forward.101} parent=15 // pred_region
        %p153 = scmp.lt.s32.totalorder %s16, 1
        %s154 = scalar_select %p153, %s16, 1
        %s155 = smul.addr %s154, 2
        %s156 = smul.addr %s155, 4
        %s157 = scalar_lea.vmem %s0, %s156
      $region20: #{makeup_gan_forward.101} parent=15 // pred_fallthru
        _
      // Predicated region
      $region21: #{makeup_gan_forward.101} parent=15 // pred_check
        %p158 = pneg %p69
      $region22: #{makeup_gan_forward.101} parent=15 // pred_check_branch
        %160 = sbr.rel (%p158) target = $region24
      $region23: #{makeup_gan_forward.101} parent=15 // pred_region
        %p161 = scmp.lt.s32.totalorder %s16, 1
        %s162 = scalar_select %p161, %s16, 1
        %p163 = scmp.lt.s32.totalorder %s17, 0
        %s164 = scalar_select %p163, %s17, 0
        %s165 = sadd.s32 %s164, %s162
        %s166 = smul.addr %s165, 4
        %s167 = scalar_lea.vmem %s1, %s166
      $region24: #{makeup_gan_forward.101} parent=15 // pred_fallthru
        _
      // Predicated region
      $region25: #{makeup_gan_forward.101} parent=15 // pred_check
        %p168 = pneg %p97
      $region26: #{makeup_gan_forward.101} parent=15 // pred_check_branch
        %170 = sbr.rel (%p168) target = $region28
      $region27: #{makeup_gan_forward.101} parent=15 // pred_region
        %p171 = scmp.lt.s32.totalorder %s16, 1
        %s172 = scalar_select %p171, %s16, 1
        %p173 = scmp.lt.s32.totalorder %s17, 0
        %s174 = scalar_select %p173, %s17, 0
        %s175 = sadd.s32 %s174, %s172
        %s176 = smul.addr %s175, 4
        %s177 = scalar_lea.vmem %s2, %s176
      $region28: #{makeup_gan_forward.101} parent=15 // pred_fallthru
        _
    $region16: #{makeup_gan_forward.101} parent=5 // pred_fallthru
      _
    %p178 = scmp.le.s32.totalorder 1, %s9
    %p179 = scmp.lt.s32.totalorder %s9, 3
    %p180 = pnand %p178, %p179
    %p181 = pneg %p180
    // Predicated region
    $region29: #{makeup_gan_forward.101} parent=5 // pred_check
      _
    $region30: #{makeup_gan_forward.101} parent=5 // pred_check_branch
      %183 = sbr.rel (%p180) target = $region32
    $region31: #{makeup_gan_forward.101} parent=5 // pred_region
      %s184 = ssub.s32 %s9, 1
      %p185 = scmp.lt.s32.totalorder %s18, 1
      %s186 = scalar_select %p185, %s18, 1
      %s187 = smul.addr %s186, 2
      %s188 = smul.addr %s187, 4
      %s189 = scalar_lea.vmem %s0, %s188
      %p190 = pneg %p47
      %p191 = pneg %p44
      %p192 = scmp.lt.s32.totalorder %s18, 1
      %s193 = scalar_select %p192, %s18, 1
      %p194 = scmp.lt.s32.totalorder %s19, 0
      %s195 = scalar_select %p194, %s19, 0
      %s196 = sadd.s32 %s195, %s193
      %s197 = smul.addr %s196, 4
      %s198 = scalar_lea.vmem %s1, %s197
      %p199 = pneg %p75
      %p200 = pneg %p72
      %p201 = scmp.lt.s32.totalorder %s18, 1
      %s202 = scalar_select %p201, %s18, 1
      %p203 = scmp.lt.s32.totalorder %s19, 0
      %s204 = scalar_select %p203, %s19, 0
      %s205 = sadd.s32 %s204, %s202
      %s206 = smul.addr %s205, 4
      %s207 = scalar_lea.vmem %s2, %s206
      %p208 = pneg %p103
      %p209 = pneg %p100
      %p210 = pneg %p131
      %p211 = pneg %p128
      %p212 = scmp.lt.s32.totalorder %s18, 1
      %s213 = scalar_select %p212, %s18, 1
      %p214 = scmp.lt.s32.totalorder %s19, 0
      %s215 = scalar_select %p214, %s19, 0
      %s216 = smul.addr %s213, 2
      %s217 = sadd.s32 %s215, %s216
      %s218 = smul.addr %s217, 4
      %s219 = scalar_lea.vmem %s3, %s218
      %p220 = scmp.lt.s32.totalorder %s18, 1
      %s221 = scalar_select %p220, %s18, 1
      %s222 = smul.addr %s221, 2
      %s223 = smul.addr %s222, 4
      %s224 = scalar_lea.vmem %s0, %s223
      %p225 = scmp.lt.s32.totalorder %s18, 1
      %s226 = scalar_select %p225, %s18, 1
      %p227 = scmp.lt.s32.totalorder %s19, 0
      %s228 = scalar_select %p227, %s19, 0
      %s229 = sadd.s32 %s228, %s226
      %s230 = smul.addr %s229, 4
      %s231 = scalar_lea.vmem %s1, %s230
      %p232 = scmp.lt.s32.totalorder %s18, 1
      %s233 = scalar_select %p232, %s18, 1
      %p234 = scmp.lt.s32.totalorder %s19, 0
      %s235 = scalar_select %p234, %s19, 0
      %s236 = sadd.s32 %s235, %s233
      %s237 = smul.addr %s236, 4
      %s238 = scalar_lea.vmem %s2, %s237
      %p239 = scmp.lt.s32.totalorder %s18, 1
      %s240 = scalar_select %p239, %s18, 1
      %p241 = scmp.lt.s32.totalorder %s19, 0
      %s242 = scalar_select %p241, %s19, 0
      %s243 = smul.addr %s240, 2
      %s244 = sadd.s32 %s242, %s243
      %s245 = smul.addr %s244, 4
      %s246 = scalar_lea.vmem %s3, %s245
      %v248 = vld [vmem:[%s224] sm:$0xf]
      %v249 = vld [vmem:[%s224 + $0x4] sm:$0xf]
      %v250 = vld [vmem:[%s231] sm:$0xf]
      %v251 = vld [vmem:[%s238] sm:$0xf]
      %v252 = vlaneseq
      %v253 = vshrl.u32 %v252, 7
      %v254 = vadd.s32 %v253, 8
      %v255 = vadd.s32 %v253, 16
      %v256 = vadd.s32 %v253, 24
      %v257 = vadd.s32 %v253, 32
      %v258 = vadd.s32 %v253, 40
      %v259 = vadd.s32 %v253, 48
      %v260 = vadd.s32 %v253, 56
      %v261 = vadd.s32 %v253, 64
      %v262 = vadd.s32 %v253, 72
      %v263 = vadd.s32 %v253, 80
      %v264 = vadd.s32 %v253, 88
      %v265 = vadd.s32 %v253, 96
      %v266 = vadd.s32 %v253, 104
      %v267 = vadd.s32 %v253, 112
      %v268 = vadd.s32 %v253, 120
      %v269 = vlaneseq
      %v270 = vshrl.u32 %v269, 7
      %v271 = vsub.s32 0, %v270
      %v272 = vrot.slane %v250, %v271
      %vm273 = vcmp.eq.s32.totalorder %v253, %v272
      %vm274 = vcmp.eq.s32.totalorder %v254, %v272
      %vm275 = vcmp.eq.s32.totalorder %v255, %v272
      %vm276 = vcmp.eq.s32.totalorder %v256, %v272
      %vm277 = vcmp.eq.s32.totalorder %v257, %v272
      %vm278 = vcmp.eq.s32.totalorder %v258, %v272
      %vm279 = vcmp.eq.s32.totalorder %v259, %v272
      %vm280 = vcmp.eq.s32.totalorder %v260, %v272
      %vm281 = vcmp.eq.s32.totalorder %v261, %v272
      %vm282 = vcmp.eq.s32.totalorder %v262, %v272
      %vm283 = vcmp.eq.s32.totalorder %v263, %v272
      %vm284 = vcmp.eq.s32.totalorder %v264, %v272
      %vm285 = vcmp.eq.s32.totalorder %v265, %v272
      %vm286 = vcmp.eq.s32.totalorder %v266, %v272
      %vm287 = vcmp.eq.s32.totalorder %v267, %v272
      %vm288 = vcmp.eq.s32.totalorder %v268, %v272
      %v289 = vlaneseq
      %v290 = vshrl.u32 %v289, 7
      %v291 = vsub.s32 0, %v290
      %v292 = vrot.slane %v251, %v291
      %v293 = vsel %vm273, %v292, 0.0
      %v294 = vsel %vm274, %v292, 0.0
      %v295 = vsel %vm275, %v292, 0.0
      %v296 = vsel %vm276, %v292, 0.0
      %v297 = vsel %vm277, %v292, 0.0
      %v298 = vsel %vm278, %v292, 0.0
      %v299 = vsel %vm279, %v292, 0.0
      %v300 = vsel %vm280, %v292, 0.0
      %v301 = vsel %vm281, %v292, 0.0
      %v302 = vsel %vm282, %v292, 0.0
      %v303 = vsel %vm283, %v292, 0.0
      %v304 = vsel %vm284, %v292, 0.0
      %v305 = vsel %vm285, %v292, 0.0
      %v306 = vsel %vm286, %v292, 0.0
      %v307 = vsel %vm287, %v292, 0.0
      %v308 = vsel %vm288, %v292, 0.0
      %v309 = vlaneseq
      %v310 = vshrl.u32 %v309, 7
      %v311 = vsub.s32 1, %v310
      %v312 = vrot.slane %v250, %v311
      %vm313 = vcmp.eq.s32.totalorder %v253, %v312
      %vm314 = vcmp.eq.s32.totalorder %v254, %v312
      %vm315 = vcmp.eq.s32.totalorder %v255, %v312
      %vm316 = vcmp.eq.s32.totalorder %v256, %v312
      %vm317 = vcmp.eq.s32.totalorder %v257, %v312
      %vm318 = vcmp.eq.s32.totalorder %v258, %v312
      %vm319 = vcmp.eq.s32.totalorder %v259, %v312
      %vm320 = vcmp.eq.s32.totalorder %v260, %v312
      %vm321 = vcmp.eq.s32.totalorder %v261, %v312
      %vm322 = vcmp.eq.s32.totalorder %v262, %v312
      %vm323 = vcmp.eq.s32.totalorder %v263, %v312
      %vm324 = vcmp.eq.s32.totalorder %v264, %v312
      %vm325 = vcmp.eq.s32.totalorder %v265, %v312
      %vm326 = vcmp.eq.s32.totalorder %v266, %v312
      %vm327 = vcmp.eq.s32.totalorder %v267, %v312
      %vm328 = vcmp.eq.s32.totalorder %v268, %v312
      %v329 = vlaneseq
      %v330 = vshrl.u32 %v329, 7
      %v331 = vsub.s32 1, %v330
      %v332 = vrot.slane %v251, %v331
      %v333 = vsel %vm313, %v332, 0.0
      %v334 = vsel %vm314, %v332, 0.0
      %v335 = vsel %vm315, %v332, 0.0
      %v336 = vsel %vm316, %v332, 0.0
      %v337 = vsel %vm317, %v332, 0.0
      %v338 = vsel %vm318, %v332, 0.0
      %v339 = vsel %vm319, %v332, 0.0
      %v340 = vsel %vm320, %v332, 0.0
      %v341 = vsel %vm321, %v332, 0.0
      %v342 = vsel %vm322, %v332, 0.0
      %v343 = vsel %vm323, %v332, 0.0
      %v344 = vsel %vm324, %v332, 0.0
      %v345 = vsel %vm325, %v332, 0.0
      %v346 = vsel %vm326, %v332, 0.0
      %v347 = vsel %vm327, %v332, 0.0
      %v348 = vsel %vm328, %v332, 0.0
      %v349 = vadd.f32 %v293, %v333
      %v350 = vadd.f32 %v294, %v334
      %v351 = vadd.f32 %v295, %v335
      %v352 = vadd.f32 %v296, %v336
      %v353 = vadd.f32 %v297, %v337
      %v354 = vadd.f32 %v298, %v338
      %v355 = vadd.f32 %v299, %v339
      %v356 = vadd.f32 %v300, %v340
      %v357 = vadd.f32 %v301, %v341
      %v358 = vadd.f32 %v302, %v342
      %v359 = vadd.f32 %v303, %v343
      %v360 = vadd.f32 %v304, %v344
      %v361 = vadd.f32 %v305, %v345
      %v362 = vadd.f32 %v306, %v346
      %v363 = vadd.f32 %v307, %v347
      %v364 = vadd.f32 %v308, %v348
      %v365 = vlaneseq
      %v366 = vshrl.u32 %v365, 7
      %v367 = vsub.s32 2, %v366
      %v368 = vrot.slane %v250, %v367
      %vm369 = vcmp.eq.s32.totalorder %v253, %v368
      %vm370 = vcmp.eq.s32.totalorder %v254, %v368
      %vm371 = vcmp.eq.s32.totalorder %v255, %v368
      %vm372 = vcmp.eq.s32.totalorder %v256, %v368
      %vm373 = vcmp.eq.s32.totalorder %v257, %v368
      %vm374 = vcmp.eq.s32.totalorder %v258, %v368
      %vm375 = vcmp.eq.s32.totalorder %v259, %v368
      %vm376 = vcmp.eq.s32.totalorder %v260, %v368
      %vm377 = vcmp.eq.s32.totalorder %v261, %v368
      %vm378 = vcmp.eq.s32.totalorder %v262, %v368
      %vm379 = vcmp.eq.s32.totalorder %v263, %v368
      %vm380 = vcmp.eq.s32.totalorder %v264, %v368
      %vm381 = vcmp.eq.s32.totalorder %v265, %v368
      %vm382 = vcmp.eq.s32.totalorder %v266, %v368
      %vm383 = vcmp.eq.s32.totalorder %v267, %v368
      %vm384 = vcmp.eq.s32.totalorder %v268, %v368
      %v385 = vlaneseq
      %v386 = vshrl.u32 %v385, 7
      %v387 = vsub.s32 2, %v386
      %v388 = vrot.slane %v251, %v387
      %v389 = vsel %vm369, %v388, 0.0
      %v390 = vsel %vm370, %v388, 0.0
      %v391 = vsel %vm371, %v388, 0.0
      %v392 = vsel %vm372, %v388, 0.0
      %v393 = vsel %vm373, %v388, 0.0
      %v394 = vsel %vm374, %v388, 0.0
      %v395 = vsel %vm375, %v388, 0.0
      %v396 = vsel %vm376, %v388, 0.0
      %v397 = vsel %vm377, %v388, 0.0
      %v398 = vsel %vm378, %v388, 0.0
      %v399 = vsel %vm379, %v388, 0.0
      %v400 = vsel %vm380, %v388, 0.0
      %v401 = vsel %vm381, %v388, 0.0
      %v402 = vsel %vm382, %v388, 0.0
      %v403 = vsel %vm383, %v388, 0.0
      %v404 = vsel %vm384, %v388, 0.0
      %v405 = vadd.f32 %v349, %v389
      %v406 = vadd.f32 %v350, %v390
      %v407 = vadd.f32 %v351, %v391
      %v408 = vadd.f32 %v352, %v392
      %v409 = vadd.f32 %v353, %v393
      %v410 = vadd.f32 %v354, %v394
      %v411 = vadd.f32 %v355, %v395
      %v412 = vadd.f32 %v356, %v396
      %v413 = vadd.f32 %v357, %v397
      %v414 = vadd.f32 %v358, %v398
      %v415 = vadd.f32 %v359, %v399
      %v416 = vadd.f32 %v360, %v400
      %v417 = vadd.f32 %v361, %v401
      %v418 = vadd.f32 %v362, %v402
      %v419 = vadd.f32 %v363, %v403
      %v420 = vadd.f32 %v364, %v404
      %v421 = vlaneseq
      %v422 = vshrl.u32 %v421, 7
      %v423 = vsub.s32 3, %v422
      %v424 = vrot.slane %v250, %v423
      %vm425 = vcmp.eq.s32.totalorder %v253, %v424
      %vm426 = vcmp.eq.s32.totalorder %v254, %v424
      %vm427 = vcmp.eq.s32.totalorder %v255, %v424
      %vm428 = vcmp.eq.s32.totalorder %v256, %v424
      %vm429 = vcmp.eq.s32.totalorder %v257, %v424
      %vm430 = vcmp.eq.s32.totalorder %v258, %v424
      %vm431 = vcmp.eq.s32.totalorder %v259, %v424
      %vm432 = vcmp.eq.s32.totalorder %v260, %v424
      %vm433 = vcmp.eq.s32.totalorder %v261, %v424
      %vm434 = vcmp.eq.s32.totalorder %v262, %v424
      %vm435 = vcmp.eq.s32.totalorder %v263, %v424
      %vm436 = vcmp.eq.s32.totalorder %v264, %v424
      %vm437 = vcmp.eq.s32.totalorder %v265, %v424
      %vm438 = vcmp.eq.s32.totalorder %v266, %v424
      %vm439 = vcmp.eq.s32.totalorder %v267, %v424
      %vm440 = vcmp.eq.s32.totalorder %v268, %v424
      %v441 = vlaneseq
      %v442 = vshrl.u32 %v441, 7
      %v443 = vsub.s32 3, %v442
      %v444 = vrot.slane %v251, %v443
      %v445 = vsel %vm425, %v444, 0.0
      %v446 = vsel %vm426, %v444, 0.0
      %v447 = vsel %vm427, %v444, 0.0
      %v448 = vsel %vm428, %v444, 0.0
      %v449 = vsel %vm429, %v444, 0.0
      %v450 = vsel %vm430, %v444, 0.0
      %v451 = vsel %vm431, %v444, 0.0
      %v452 = vsel %vm432, %v444, 0.0
      %v453 = vsel %vm433, %v444, 0.0
      %v454 = vsel %vm434, %v444, 0.0
      %v455 = vsel %vm435, %v444, 0.0
      %v456 = vsel %vm436, %v444, 0.0
      %v457 = vsel %vm437, %v444, 0.0
      %v458 = vsel %vm438, %v444, 0.0
      %v459 = vsel %vm439, %v444, 0.0
      %v460 = vsel %vm440, %v444, 0.0
      %v461 = vadd.f32 %v405, %v445
      %v462 = vadd.f32 %v406, %v446
      %v463 = vadd.f32 %v407, %v447
      %v464 = vadd.f32 %v408, %v448
      %v465 = vadd.f32 %v409, %v449
      %v466 = vadd.f32 %v410, %v450
      %v467 = vadd.f32 %v411, %v451
      %v468 = vadd.f32 %v412, %v452
      %v469 = vadd.f32 %v413, %v453
      %v470 = vadd.f32 %v414, %v454
      %v471 = vadd.f32 %v415, %v455
      %v472 = vadd.f32 %v416, %v456
      %v473 = vadd.f32 %v417, %v457
      %v474 = vadd.f32 %v418, %v458
      %v475 = vadd.f32 %v419, %v459
      %v476 = vadd.f32 %v420, %v460
      %v477 = vpack.c.bf16 %v462, %v461
      %v478 = vpack.c.bf16 %v464, %v463
      %v479 = vpack.c.bf16 %v466, %v465
      %v480 = vpack.c.bf16 %v468, %v467
      %v481 = vpack.c.bf16 %v470, %v469
      %v482 = vpack.c.bf16 %v472, %v471
      %v483 = vpack.c.bf16 %v474, %v473
      %v484 = vpack.c.bf16 %v476, %v475
      %v487 = vunpack.c.l.b16 %v248
      %v488 = vunpack.c.l.b16 %v249
      %v489 = vpack.c.b16 %v488, %v487
      %491 = vmatprep.subr.bf16.mxu0 0
      %492 = vmatpush1.bf16.msra.mxu0 %v477
      %493 = vmatprep.subr.bf16.mxu0 0
      %494 = vmatpush1.bf16.msra.mxu0 %v478
      %495 = vmatprep.subr.bf16.mxu0 0
      %496 = vmatpush1.bf16.msra.mxu0 %v479
      %497 = vmatprep.subr.bf16.mxu0 0
      %498 = vmatpush1.bf16.msra.mxu0 %v480
      %499 = vmatprep.subr.bf16.mxu0 0
      %500 = vmatpush1.bf16.msra.mxu0 %v481
      %501 = vmatprep.subr.bf16.mxu0 0
      %502 = vmatpush1.bf16.msra.mxu0 %v482
      %503 = vmatprep.subr.bf16.mxu0 0
      %504 = vmatpush1.bf16.msra.mxu0 %v483
      %505 = vmatprep.subr.bf16.mxu0 0
      %506 = vmatpush1.bf16.msra.mxu0 %v484
      %507 = vmatprep.subr.bf16.mxu0 0
      %508 = vmatpush1.bf16.msra.mxu0 0
      %509 = vmatprep.subr.bf16.mxu0 0
      %510 = vmatpush1.bf16.msra.mxu0 0
      %511 = vmatprep.subr.bf16.mxu0 0
      %512 = vmatpush1.bf16.msra.mxu0 0
      %513 = vmatprep.subr.bf16.mxu0 0
      %514 = vmatpush1.bf16.msra.mxu0 0
      %515 = vmatprep.subr.bf16.mxu0 0
      %516 = vmatpush1.bf16.msra.mxu0 0
      %517 = vmatprep.subr.bf16.mxu0 0
      %518 = vmatpush1.bf16.msra.mxu0 0
      %519 = vmatprep.subr.bf16.mxu0 0
      %520 = vmatpush1.bf16.msra.mxu0 0
      %521 = vmatprep.subr.bf16.mxu0 0
      %522 = vmatpush1.bf16.msra.mxu0 0
      %523 = vmatprep.mubr.bf16.mxu0 0
      %524 = vmatmul.mubr.bf16.gmra.mrb[0].mxu0 %v489
      %v525 = vpop.f32.mrb[0].mxu0
      %v526 = vadd.f32 0.0, %v525
      %v527 = vpop.f32.mrb[0].mxu0
      %v528 = vpop.f32.mrb[0].mxu0
      %v529 = vadd.f32 0.0, %v528
      %v530 = vpop.f32.mrb[0].mxu0
      %531 = vdwg.mxu0
      %v532 = vpack.c.bf16 %v529, %v526
      %v534 = vunpack.c.l.b16 %v532
      %v535 = vunpack.c.h.b16 %v532
      %v536 = vpack.c.b16 %v534, %v534
      %v537 = vpack.c.b16 %v535, %v535
      %540 = vst [vmem:[%s246] sm:$0xf] %v536
      %541 = vst [vmem:[%s246 + $0x4] sm:$0xf] %v537
      %p542 = scmp.lt.s32.totalorder %s18, 1
      %s543 = scalar_select %p542, %s18, 1
      %p544 = scmp.lt.s32.totalorder %s19, 0
      %s545 = scalar_select %p544, %s19, 0
      %s546 = smul.addr %s543, 2
      %s547 = sadd.s32 %s545, %s546
      %s548 = smul.addr %s547, 4
      %s549 = scalar_lea.vmem %s3, %s548
      // Predicated region
      $region33: #{makeup_gan_forward.101} parent=31 // pred_check
        %p550 = pneg %p128
      $region34: #{makeup_gan_forward.101} parent=31 // pred_check_branch
        %552 = sbr.rel (%p550) target = $region36
      $region35: #{makeup_gan_forward.101} parent=31 // pred_region
        _
      $region36: #{makeup_gan_forward.101} parent=31 // pred_fallthru
        _
    $region32: #{makeup_gan_forward.101} parent=5 // pred_fallthru
      _
    %p553 = scmp.le.s32.totalorder 2, %s9
    // Predicated region
    $region37: #{makeup_gan_forward.101} parent=5 // pred_check
      %p554 = pneg %p553
    $region38: #{makeup_gan_forward.101} parent=5 // pred_check_branch
      %556 = sbr.rel (%p554) target = $region40
    $region39: #{makeup_gan_forward.101} parent=5 // pred_region
      %s557 = ssub.s32 %s9, 2
      // Predicated region
      $region41: #{makeup_gan_forward.101} parent=39 // pred_check
        %p558 = pneg %p134
      $region42: #{makeup_gan_forward.101} parent=39 // pred_check_branch
        %560 = sbr.rel (%p558) target = $region44
      $region43: #{makeup_gan_forward.101} parent=39 // pred_region
        %p561 = scmp.lt.s32.totalorder %s20, 1
        %s562 = scalar_select %p561, %s20, 1
        %p563 = scmp.lt.s32.totalorder %s21, 0
        %s564 = scalar_select %p563, %s21, 0
        %s565 = smul.addr %s562, 2
        %s566 = sadd.s32 %s564, %s565
        %s567 = smul.addr %s566, 4
        %s568 = scalar_lea.vmem %s3, %s567
      $region44: #{makeup_gan_forward.101} parent=39 // pred_fallthru
        _
    $region40: #{makeup_gan_forward.101} parent=5 // pred_fallthru
      _
  $region6: #{makeup_gan_forward.101} parent=0 // loop_footer
    %s13 = sadd.s32 1, %s9
  $region7: #{makeup_gan_forward.101} parent=0 // loop_footer_branch
    %8 = sbr.rel target = $region3
  $region8: #{makeup_gan_forward.101} parent=0 // loop_exit
    _

// kernel: makeup_gan_forward.102
$region0: #{makeup_gan_forward.102}
  #allocation0 [shape = 'u32[]', space=smem, size = 0x4, offset = 0x4, fixed_abs, tag = 'smem constant byte address 0x4 - core index']
  #allocation1 [shape = 'u32[144,128]{1,0:T(1,128)}', space=vmem, size = 0x12000, scoped, tag = 'internal scratch']
  %s0 = inlined_call_operand.vmem [shape: bf16[32,288], index: 0, kind: input, shape index: {}]
  %s1 = inlined_call_operand.vmem [shape: bf16[288,128], index: 1, kind: input, shape index: {}]
  %s2 = inlined_call_operand.vmem [shape: f32[1,128], index: 2, kind: input, shape index: {}]
  %s3 = inlined_call_operand.vmem [shape: bf16[32,128], index: 3, kind: output, shape index: {}]
  %s4 = sld [smem:[#allocation0]]
  $region22: #{makeup_gan_forward.102} parent=0
    _
  %s6 = ssub.s32 1, %s4
  %s7 = scalar_select 0, %s6, %s4
  // Predicated region
  $region2: #{makeup_gan_forward.102} parent=0 // pred_check
    _
  $region3: #{makeup_gan_forward.102} parent=0 // pred_check_branch
    %9 = sbr.rel (0) target = $region5
  $region4: #{makeup_gan_forward.102} parent=0 // pred_region
    _
  $region5: #{makeup_gan_forward.102} parent=0 // pred_fallthru
    _
  // Predicated region
  $region6: #{makeup_gan_forward.102} parent=0 // pred_check
    _
  $region7: #{makeup_gan_forward.102} parent=0 // pred_check_branch
    %11 = sbr.rel (0) target = $region9
  $region8: #{makeup_gan_forward.102} parent=0 // pred_region
    _
  $region9: #{makeup_gan_forward.102} parent=0 // pred_fallthru
    _
  // Predicated region
  $region10: #{makeup_gan_forward.102} parent=0 // pred_check
    _
  $region11: #{makeup_gan_forward.102} parent=0 // pred_check_branch
    %13 = sbr.rel (0) target = $region13
  $region12: #{makeup_gan_forward.102} parent=0 // pred_region
    _
  $region13: #{makeup_gan_forward.102} parent=0 // pred_fallthru
    _
  %v15 = vld [vmem:[%s0] sm:$0xff]
  %v16 = vld [vmem:[%s0 + $0x8] sm:$0xf]
  %v17 = vld [vmem:[%s0 + $0xc] sm:$0xff]
  %v18 = vld [vmem:[%s0 + $0x14] sm:$0xf]
  %v19 = vld [vmem:[%s0 + $0x18] sm:$0xff]
  %v20 = vld [vmem:[%s0 + $0x20] sm:$0xf]
  %v21 = vld [vmem:[%s0 + $0x24] sm:$0xff]
  %v22 = vld [vmem:[%s0 + $0x2c] sm:$0xf]
  %v23 = vld [vmem:[%s1] sm:$0xf]
  %v24 = vld [vmem:[%s1 + $0x4] sm:$0xf]
  %v25 = vld [vmem:[%s1 + $0x8] sm:$0xf]
  %v26 = vld [vmem:[%s1 + $0xc] sm:$0xf]
  %v27 = vld [vmem:[%s1 + $0x10] sm:$0xf]
  %v28 = vld [vmem:[%s1 + $0x14] sm:$0xf]
  %v29 = vld [vmem:[%s1 + $0x18] sm:$0xf]
  %v30 = vld [vmem:[%s1 + $0x1c] sm:$0xf]
  %v31 = vld [vmem:[%s1 + $0x20] sm:$0xf]
  %v32 = vld [vmem:[%s1 + $0x24] sm:$0xf]
  %v33 = vld [vmem:[%s1 + $0x28] sm:$0xf]
  %v34 = vld [vmem:[%s1 + $0x2c] sm:$0xf]
  %v35 = vld [vmem:[%s1 + $0x30] sm:$0xf]
  %v36 = vld [vmem:[%s1 + $0x34] sm:$0xf]
  %v37 = vld [vmem:[%s1 + $0x38] sm:$0xf]
  %v38 = vld [vmem:[%s1 + $0x3c] sm:$0xf]
  %v39 = vld [vmem:[%s1 + $0x40] sm:$0xf]
  %v40 = vld [vmem:[%s1 + $0x44] sm:$0xf]
  %v41 = vld [vmem:[%s1 + $0x48] sm:$0xf]
  %v42 = vld [vmem:[%s1 + $0x4c] sm:$0xf]
  %v43 = vld [vmem:[%s1 + $0x50] sm:$0xf]
  %v44 = vld [vmem:[%s1 + $0x54] sm:$0xf]
  %v45 = vld [vmem:[%s1 + $0x58] sm:$0xf]
  %v46 = vld [vmem:[%s1 + $0x5c] sm:$0xf]
  %v47 = vld [vmem:[%s1 + $0x60] sm:$0xf]
  %v48 = vld [vmem:[%s1 + $0x64] sm:$0xf]
  %v49 = vld [vmem:[%s1 + $0x68] sm:$0xf]
  %v50 = vld [vmem:[%s1 + $0x6c] sm:$0xf]
  %v51 = vld [vmem:[%s1 + $0x70] sm:$0xf]
  %v52 = vld [vmem:[%s1 + $0x74] sm:$0xf]
  %v53 = vld [vmem:[%s1 + $0x78] sm:$0xf]
  %v54 = vld [vmem:[%s1 + $0x7c] sm:$0xf]
  %v55 = vld [vmem:[%s1 + $0x80] sm:$0xf]
  %v56 = vld [vmem:[%s1 + $0x84] sm:$0xf]
  %v57 = vld [vmem:[%s1 + $0x88] sm:$0xf]
  %v58 = vld [vmem:[%s1 + $0x8c] sm:$0xf]
  %v59 = vld [vmem:[%s2] sm:$0x1]
  %v61 = vlaneseq
  %v62 = vshrl.u32 %v61, 7
  %v63 = vsub.s32 0, %v62
  %v64 = vrot.slane %v59, %v63
  %v74 = vunpack.c.l.b16 %v15
  %v75 = vunpack.c.h.b16 %v15
  %v76 = vunpack.c.l.b16 %v16
  %v77 = vunpack.c.l.b16 %v17
  %v78 = vunpack.c.h.b16 %v17
  %v79 = vunpack.c.l.b16 %v18
  %v80 = vunpack.c.l.b16 %v19
  %v81 = vunpack.c.h.b16 %v19
  %v82 = vunpack.c.l.b16 %v20
  %v83 = vunpack.c.l.b16 %v21
  %v84 = vunpack.c.h.b16 %v21
  %v85 = vunpack.c.l.b16 %v22
  %v86 = vpack.c.b16 %v77, %v74
  %v87 = vpack.c.b16 %v78, %v75
  %v88 = vpack.c.b16 %v79, %v76
  %v89 = vpack.c.b16 %v83, %v80
  %v90 = vpack.c.b16 %v84, %v81
  %v91 = vpack.c.b16 %v85, %v82
  %v132 = vunpack.c.l.b16 %v23
  %v133 = vunpack.c.l.b16 %v24
  %v134 = vunpack.c.l.b16 %v25
  %v135 = vunpack.c.l.b16 %v26
  %v136 = vunpack.c.l.b16 %v27
  %v137 = vunpack.c.l.b16 %v28
  %v138 = vunpack.c.l.b16 %v29
  %v139 = vunpack.c.l.b16 %v30
  %v140 = vunpack.c.l.b16 %v31
  %v141 = vunpack.c.l.b16 %v32
  %v142 = vunpack.c.l.b16 %v33
  %v143 = vunpack.c.l.b16 %v34
  %v144 = vunpack.c.l.b16 %v35
  %v145 = vunpack.c.l.b16 %v36
  %v146 = vunpack.c.l.b16 %v37
  %v147 = vunpack.c.l.b16 %v38
  %v148 = vunpack.c.l.b16 %v39
  %v149 = vunpack.c.l.b16 %v40
  %v150 = vunpack.c.l.b16 %v41
  %v151 = vunpack.c.l.b16 %v42
  %v152 = vunpack.c.l.b16 %v43
  %v153 = vunpack.c.l.b16 %v44
  %v154 = vunpack.c.l.b16 %v45
  %v155 = vunpack.c.l.b16 %v46
  %v156 = vunpack.c.l.b16 %v47
  %v157 = vunpack.c.l.b16 %v48
  %v158 = vunpack.c.l.b16 %v49
  %v159 = vunpack.c.l.b16 %v50
  %v160 = vunpack.c.l.b16 %v51
  %v161 = vunpack.c.l.b16 %v52
  %v162 = vunpack.c.l.b16 %v53
  %v163 = vunpack.c.l.b16 %v54
  %v164 = vunpack.c.l.b16 %v55
  %v165 = vunpack.c.l.b16 %v56
  %v166 = vunpack.c.l.b16 %v57
  %v167 = vunpack.c.l.b16 %v58
  %v168 = vpack.c.b16 %v133, %v132
  %v169 = vpack.c.b16 %v135, %v134
  %v170 = vpack.c.b16 %v137, %v136
  %v171 = vpack.c.b16 %v139, %v138
  %v172 = vpack.c.b16 %v141, %v140
  %v173 = vpack.c.b16 %v143, %v142
  %v174 = vpack.c.b16 %v145, %v144
  %v175 = vpack.c.b16 %v147, %v146
  %v176 = vpack.c.b16 %v149, %v148
  %v177 = vpack.c.b16 %v151, %v150
  %v178 = vpack.c.b16 %v153, %v152
  %v179 = vpack.c.b16 %v155, %v154
  %v180 = vpack.c.b16 %v157, %v156
  %v181 = vpack.c.b16 %v159, %v158
  %v182 = vpack.c.b16 %v161, %v160
  %v183 = vpack.c.b16 %v163, %v162
  %v184 = vpack.c.b16 %v165, %v164
  %v185 = vpack.c.b16 %v167, %v166
  %vm204 = vcmask 261120
  %v206 = vsel %vm204, %v88, 0
  %v209 = vsel %vm204, %v91, 0
  %211 = vmatprep.subr.bf16.mxu0 0
  %212 = vmatpush1.bf16.msra.mxu0 %v168
  %213 = vmatprep.subr.bf16.mxu0 0
  %214 = vmatpush1.bf16.msra.mxu0 %v169
  %215 = vmatprep.subr.bf16.mxu0 0
  %216 = vmatpush1.bf16.msra.mxu0 %v170
  %217 = vmatprep.subr.bf16.mxu0 0
  %218 = vmatpush1.bf16.msra.mxu0 %v171
  %219 = vmatprep.subr.bf16.mxu0 0
  %220 = vmatpush1.bf16.msra.mxu0 %v172
  %221 = vmatprep.subr.bf16.mxu0 0
  %222 = vmatpush1.bf16.msra.mxu0 %v173
  %223 = vmatprep.subr.bf16.mxu0 0
  %224 = vmatpush1.bf16.msra.mxu0 %v174
  %225 = vmatprep.subr.bf16.mxu0 0
  %226 = vmatpush1.bf16.msra.mxu0 %v175
  %227 = vmatprep.subr.bf16.mxu0 0
  %228 = vmatpush1.bf16.msra.mxu0 %v176
  %229 = vmatprep.subr.bf16.mxu0 0
  %230 = vmatpush1.bf16.msra.mxu0 %v177
  %231 = vmatprep.subr.bf16.mxu0 0
  %232 = vmatpush1.bf16.msra.mxu0 %v178
  %233 = vmatprep.subr.bf16.mxu0 0
  %234 = vmatpush1.bf16.msra.mxu0 %v179
  %235 = vmatprep.subr.bf16.mxu0 0
  %236 = vmatpush1.bf16.msra.mxu0 %v180
  %237 = vmatprep.subr.bf16.mxu0 0
  %238 = vmatpush1.bf16.msra.mxu0 %v181
  %239 = vmatprep.subr.bf16.mxu0 0
  %240 = vmatpush1.bf16.msra.mxu0 %v182
  %241 = vmatprep.subr.bf16.mxu0 0
  %242 = vmatpush1.bf16.msra.mxu0 %v183
  %243 = vmatprep.mubr.bf16.mxu0 %v87
  %244 = vmatmul.mubr.bf16.gmra.mrb[0].mxu0 %v86
  %v245 = vpop.f32.mrb[0].mxu0
  %v246 = vadd.f32 %v64, %v245
  %v247 = vpop.f32.mrb[0].mxu0
  %v248 = vpop.f32.mrb[0].mxu0
  %v249 = vadd.f32 %v64, %v248
  %v250 = vpop.f32.mrb[0].mxu0
  %251 = vmatprep.mubr.bf16.mxu0 %v90
  %252 = vmatmul.mubr.bf16.gmra.mrb[0].mxu0 %v89
  %v253 = vpop.f32.mrb[0].mxu0
  %v254 = vadd.f32 %v64, %v253
  %v255 = vpop.f32.mrb[0].mxu0
  %v256 = vpop.f32.mrb[0].mxu0
  %v257 = vadd.f32 %v64, %v256
  %v258 = vpop.f32.mrb[0].mxu0
  %259 = vdwg.mxu0
  %260 = vmatprep.subr.bf16.mxu0 0
  %261 = vmatpush1.bf16.msra.mxu0 %v184
  %262 = vmatprep.subr.bf16.mxu0 0
  %263 = vmatpush1.bf16.msra.mxu0 %v185
  %264 = vmatprep.subr.bf16.mxu0 0
  %265 = vmatpush1.bf16.msra.mxu0 0
  %266 = vmatprep.subr.bf16.mxu0 0
  %267 = vmatpush1.bf16.msra.mxu0 0
  %268 = vmatprep.subr.bf16.mxu0 0
  %269 = vmatpush1.bf16.msra.mxu0 0
  %270 = vmatprep.subr.bf16.mxu0 0
  %271 = vmatpush1.bf16.msra.mxu0 0
  %272 = vmatprep.subr.bf16.mxu0 0
  %273 = vmatpush1.bf16.msra.mxu0 0
  %274 = vmatprep.subr.bf16.mxu0 0
  %275 = vmatpush1.bf16.msra.mxu0 0
  %276 = vmatprep.subr.bf16.mxu0 0
  %277 = vmatpush1.bf16.msra.mxu0 0
  %278 = vmatprep.subr.bf16.mxu0 0
  %279 = vmatpush1.bf16.msra.mxu0 0
  %280 = vmatprep.subr.bf16.mxu0 0
  %281 = vmatpush1.bf16.msra.mxu0 0
  %282 = vmatprep.subr.bf16.mxu0 0
  %283 = vmatpush1.bf16.msra.mxu0 0
  %284 = vmatprep.subr.bf16.mxu0 0
  %285 = vmatpush1.bf16.msra.mxu0 0
  %286 = vmatprep.subr.bf16.mxu0 0
  %287 = vmatpush1.bf16.msra.mxu0 0
  %288 = vmatprep.subr.bf16.mxu0 0
  %289 = vmatpush1.bf16.msra.mxu0 0
  %290 = vmatprep.subr.bf16.mxu0 0
  %291 = vmatpush1.bf16.msra.mxu0 0
  %292 = vmatprep.mubr.bf16.mxu0 0
  %293 = vmatmul.mubr.bf16.gmra.mrb[0].mxu0 %v206
  %v294 = vpop.f32.mrb[0].mxu0
  %v295 = vadd.f32 %v246, %v294
  %v296 = vpop.f32.mrb[0].mxu0
  %v297 = vpop.f32.mrb[0].mxu0
  %v298 = vadd.f32 %v249, %v297
  %v299 = vpop.f32.mrb[0].mxu0
  %300 = vmatprep.mubr.bf16.mxu0 0
  %301 = vmatmul.mubr.bf16.gmra.mrb[0].mxu0 %v209
  %v302 = vpop.f32.mrb[0].mxu0
  %v303 = vadd.f32 %v254, %v302
  %v304 = vpop.f32.mrb[0].mxu0
  %v305 = vpop.f32.mrb[0].mxu0
  %v306 = vadd.f32 %v257, %v305
  %v307 = vpop.f32.mrb[0].mxu0
  %308 = vdwg.mxu0
  %v309 = vmax.f32 %v295, 0.0
  %v310 = vmax.f32 %v298, 0.0
  %v311 = vmax.f32 %v303, 0.0
  %v312 = vmax.f32 %v306, 0.0
  %v313 = vpack.c.bf16 %v310, %v309
  %v314 = vpack.c.bf16 %v312, %v311
  %v317 = vunpack.c.l.b16 %v313
  %v318 = vunpack.c.h.b16 %v313
  %v319 = vunpack.c.l.b16 %v314
  %v320 = vunpack.c.h.b16 %v314
  %v321 = vpack.c.b16 %v317, %v317
  %v322 = vpack.c.b16 %v318, %v318
  %v323 = vpack.c.b16 %v319, %v319
  %v324 = vpack.c.b16 %v320, %v320
  %329 = vst [vmem:[%s3] sm:$0xf] %v321
  %330 = vst [vmem:[%s3 + $0x4] sm:$0xf] %v322
  %331 = vst [vmem:[%s3 + $0x8] sm:$0xf] %v323
  %332 = vst [vmem:[%s3 + $0xc] sm:$0xf] %v324
  // Predicated region
  $region14: #{makeup_gan_forward.102} parent=0 // pred_check
    _
  $region15: #{makeup_gan_forward.102} parent=0 // pred_check_branch
    %334 = sbr.rel (0) target = $region17
  $region16: #{makeup_gan_forward.102} parent=0 // pred_region
    _
  $region17: #{makeup_gan_forward.102} parent=0 // pred_fallthru
    _
  // Predicated region
  $region18: #{makeup_gan_forward.102} parent=0 // pred_check
    _
  $region19: #{makeup_gan_forward.102} parent=0 // pred_check_branch
    %336 = sbr.rel (0) target = $region21
  $region20: #{makeup_gan_forward.102} parent=0 // pred_region
    _
  $region21: #{makeup_gan_forward.102} parent=0 // pred_fallthru
    _

// kernel: makeup_gan_forward.104
$region0: #{makeup_gan_forward.104}
  #allocation0 [shape = 'u32[]', space=smem, size = 0x4, offset = 0x4, fixed_abs, tag = 'smem constant byte address 0x4 - core index']
  #allocation1 [shape = 'u32[144,128]{1,0:T(1,128)}', space=vmem, size = 0x12000, scoped, tag = 'internal scratch']
  %s0 = inlined_call_operand.vmem [shape: bf16[32,144], index: 0, kind: input, shape index: {}]
  %s1 = inlined_call_operand.vmem [shape: bf16[144,128], index: 1, kind: input, shape index: {}]
  %s2 = inlined_call_operand.vmem [shape: f32[1,128], index: 2, kind: input, shape index: {}]
  %s3 = inlined_call_operand.vmem [shape: bf16[32,128], index: 3, kind: output, shape index: {}]
  %s4 = sld [smem:[#allocation0]]
  $region22: #{makeup_gan_forward.104} parent=0
    _
  %s6 = ssub.s32 1, %s4
  %s7 = scalar_select 0, %s6, %s4
  // Predicated region
  $region2: #{makeup_gan_forward.104} parent=0 // pred_check
    _
  $region3: #{makeup_gan_forward.104} parent=0 // pred_check_branch
    %9 = sbr.rel (0) target = $region5
  $region4: #{makeup_gan_forward.104} parent=0 // pred_region
    _
  $region5: #{makeup_gan_forward.104} parent=0 // pred_fallthru
    _
  // Predicated region
  $region6: #{makeup_gan_forward.104} parent=0 // pred_check
    _
  $region7: #{makeup_gan_forward.104} parent=0 // pred_check_branch
    %11 = sbr.rel (0) target = $region9
  $region8: #{makeup_gan_forward.104} parent=0 // pred_region
    _
  $region9: #{makeup_gan_forward.104} parent=0 // pred_fallthru
    _
  // Predicated region
  $region10: #{makeup_gan_forward.104} parent=0 // pred_check
    _
  $region11: #{makeup_gan_forward.104} parent=0 // pred_check_branch
    %13 = sbr.rel (0) target = $region13
  $region12: #{makeup_gan_forward.104} parent=0 // pred_region
    _
  $region13: #{makeup_gan_forward.104} parent=0 // pred_fallthru
    _
  %v15 = vld [vmem:[%s0] sm:$0xff]
  %v16 = vld [vmem:[%s0 + $0x8] sm:$0xff]
  %v17 = vld [vmem:[%s0 + $0x10] sm:$0xff]
  %v18 = vld [vmem:[%s0 + $0x18] sm:$0xff]
  %v19 = vld [vmem:[%s1] sm:$0xf]
  %v20 = vld [vmem:[%s1 + $0x4] sm:$0xf]
  %v21 = vld [vmem:[%s1 + $0x8] sm:$0xf]
  %v22 = vld [vmem:[%s1 + $0xc] sm:$0xf]
  %v23 = vld [vmem:[%s1 + $0x10] sm:$0xf]
  %v24 = vld [vmem:[%s1 + $0x14] sm:$0xf]
  %v25 = vld [vmem:[%s1 + $0x18] sm:$0xf]
  %v26 = vld [vmem:[%s1 + $0x1c] sm:$0xf]
  %v27 = vld [vmem:[%s1 + $0x20] sm:$0xf]
  %v28 = vld [vmem:[%s1 + $0x24] sm:$0xf]
  %v29 = vld [vmem:[%s1 + $0x28] sm:$0xf]
  %v30 = vld [vmem:[%s1 + $0x2c] sm:$0xf]
  %v31 = vld [vmem:[%s1 + $0x30] sm:$0xf]
  %v32 = vld [vmem:[%s1 + $0x34] sm:$0xf]
  %v33 = vld [vmem:[%s1 + $0x38] sm:$0xf]
  %v34 = vld [vmem:[%s1 + $0x3c] sm:$0xf]
  %v35 = vld [vmem:[%s1 + $0x40] sm:$0xf]
  %v36 = vld [vmem:[%s1 + $0x44] sm:$0xf]
  %v37 = vld [vmem:[%s2] sm:$0x1]
  %v39 = vlaneseq
  %v40 = vshrl.u32 %v39, 7
  %v41 = vsub.s32 0, %v40
  %v42 = vrot.slane %v37, %v41
  %v48 = vunpack.c.l.b16 %v15
  %v49 = vunpack.c.h.b16 %v15
  %v50 = vunpack.c.l.b16 %v16
  %v51 = vunpack.c.h.b16 %v16
  %v52 = vunpack.c.l.b16 %v17
  %v53 = vunpack.c.h.b16 %v17
  %v54 = vunpack.c.l.b16 %v18
  %v55 = vunpack.c.h.b16 %v18
  %v56 = vpack.c.b16 %v50, %v48
  %v57 = vpack.c.b16 %v51, %v49
  %v58 = vpack.c.b16 %v54, %v52
  %v59 = vpack.c.b16 %v55, %v53
  %v80 = vunpack.c.l.b16 %v19
  %v81 = vunpack.c.l.b16 %v20
  %v82 = vunpack.c.l.b16 %v21
  %v83 = vunpack.c.l.b16 %v22
  %v84 = vunpack.c.l.b16 %v23
  %v85 = vunpack.c.l.b16 %v24
  %v86 = vunpack.c.l.b16 %v25
  %v87 = vunpack.c.l.b16 %v26
  %v88 = vunpack.c.l.b16 %v27
  %v89 = vunpack.c.l.b16 %v28
  %v90 = vunpack.c.l.b16 %v29
  %v91 = vunpack.c.l.b16 %v30
  %v92 = vunpack.c.l.b16 %v31
  %v93 = vunpack.c.l.b16 %v32
  %v94 = vunpack.c.l.b16 %v33
  %v95 = vunpack.c.l.b16 %v34
  %v96 = vunpack.c.l.b16 %v35
  %v97 = vunpack.c.l.b16 %v36
  %v98 = vpack.c.b16 %v81, %v80
  %v99 = vpack.c.b16 %v83, %v82
  %v100 = vpack.c.b16 %v85, %v84
  %v101 = vpack.c.b16 %v87, %v86
  %v102 = vpack.c.b16 %v89, %v88
  %v103 = vpack.c.b16 %v91, %v90
  %v104 = vpack.c.b16 %v93, %v92
  %v105 = vpack.c.b16 %v95, %v94
  %v106 = vpack.c.b16 %v97, %v96
  %vm116 = vcmask 130048
  %v118 = vsel %vm116, %v57, 0
  %v121 = vsel %vm116, %v59, 0
  %123 = vmatprep.subr.bf16.mxu0 0
  %124 = vmatpush1.bf16.msra.mxu0 %v98
  %125 = vmatprep.subr.bf16.mxu0 0
  %126 = vmatpush1.bf16.msra.mxu0 %v99
  %127 = vmatprep.subr.bf16.mxu0 0
  %128 = vmatpush1.bf16.msra.mxu0 %v100
  %129 = vmatprep.subr.bf16.mxu0 0
  %130 = vmatpush1.bf16.msra.mxu0 %v101
  %131 = vmatprep.subr.bf16.mxu0 0
  %132 = vmatpush1.bf16.msra.mxu0 %v102
  %133 = vmatprep.subr.bf16.mxu0 0
  %134 = vmatpush1.bf16.msra.mxu0 %v103
  %135 = vmatprep.subr.bf16.mxu0 0
  %136 = vmatpush1.bf16.msra.mxu0 %v104
  %137 = vmatprep.subr.bf16.mxu0 0
  %138 = vmatpush1.bf16.msra.mxu0 %v105
  %139 = vmatprep.subr.bf16.mxu0 0
  %140 = vmatpush1.bf16.msra.mxu0 %v106
  %141 = vmatprep.subr.bf16.mxu0 0
  %142 = vmatpush1.bf16.msra.mxu0 0
  %143 = vmatprep.subr.bf16.mxu0 0
  %144 = vmatpush1.bf16.msra.mxu0 0
  %145 = vmatprep.subr.bf16.mxu0 0
  %146 = vmatpush1.bf16.msra.mxu0 0
  %147 = vmatprep.subr.bf16.mxu0 0
  %148 = vmatpush1.bf16.msra.mxu0 0
  %149 = vmatprep.subr.bf16.mxu0 0
  %150 = vmatpush1.bf16.msra.mxu0 0
  %151 = vmatprep.subr.bf16.mxu0 0
  %152 = vmatpush1.bf16.msra.mxu0 0
  %153 = vmatprep.subr.bf16.mxu0 0
  %154 = vmatpush1.bf16.msra.mxu0 0
  %155 = vmatprep.mubr.bf16.mxu0 %v118
  %156 = vmatmul.mubr.bf16.gmra.mrb[0].mxu0 %v56
  %v157 = vpop.f32.mrb[0].mxu0
  %v158 = vadd.f32 %v42, %v157
  %v159 = vpop.f32.mrb[0].mxu0
  %v160 = vpop.f32.mrb[0].mxu0
  %v161 = vadd.f32 %v42, %v160
  %v162 = vpop.f32.mrb[0].mxu0
  %163 = vmatprep.mubr.bf16.mxu0 %v121
  %164 = vmatmul.mubr.bf16.gmra.mrb[0].mxu0 %v58
  %v165 = vpop.f32.mrb[0].mxu0
  %v166 = vadd.f32 %v42, %v165
  %v167 = vpop.f32.mrb[0].mxu0
  %v168 = vpop.f32.mrb[0].mxu0
  %v169 = vadd.f32 %v42, %v168
  %v170 = vpop.f32.mrb[0].mxu0
  %171 = vdwg.mxu0
  %v172 = vpack.c.bf16 %v161, %v158
  %v173 = vpack.c.bf16 %v169, %v166
  %v176 = vunpack.c.l.b16 %v172
  %v177 = vunpack.c.h.b16 %v172
  %v178 = vunpack.c.l.b16 %v173
  %v179 = vunpack.c.h.b16 %v173
  %v180 = vpack.c.b16 %v176, %v176
  %v181 = vpack.c.b16 %v177, %v177
  %v182 = vpack.c.b16 %v178, %v178
  %v183 = vpack.c.b16 %v179, %v179
  %188 = vst [vmem:[%s3] sm:$0xf] %v180
  %189 = vst [vmem:[%s3 + $0x4] sm:$0xf] %v181
  %190 = vst [vmem:[%s3 + $0x8] sm:$0xf] %v182
  %191 = vst [vmem:[%s3 + $0xc] sm:$0xf] %v183
  // Predicated region
  $region14: #{makeup_gan_forward.104} parent=0 // pred_check
    _
  $region15: #{makeup_gan_forward.104} parent=0 // pred_check_branch
    %193 = sbr.rel (0) target = $region17
  $region16: #{makeup_gan_forward.104} parent=0 // pred_region
    _
  $region17: #{makeup_gan_forward.104} parent=0 // pred_fallthru
    _
  // Predicated region
  $region18: #{makeup_gan_forward.104} parent=0 // pred_check
    _
  $region19: #{makeup_gan_forward.104} parent=0 // pred_check_branch
    %195 = sbr.rel (0) target = $region21
  $region20: #{makeup_gan_forward.104} parent=0 // pred_region
    _
  $region21: #{makeup_gan_forward.104} parent=0 // pred_fallthru
    _

// kernel: makeup_gan_forward.103
$region0: #{makeup_gan_forward.103}
  #allocation0 [shape = 'u32[]', space=smem, size = 0x4, offset = 0x4, fixed_abs, tag = 'smem constant byte address 0x4 - core index']
  #allocation1 [shape = 'u32[144,128]{1,0:T(1,128)}', space=vmem, size = 0x12000, scoped, tag = 'internal scratch']
  %s0 = inlined_call_operand.vmem [shape: bf16[32,144], index: 0, kind: input, shape index: {}]
  %s1 = inlined_call_operand.vmem [shape: bf16[144,128], index: 1, kind: input, shape index: {}]
  %s2 = inlined_call_operand.vmem [shape: f32[1,128], index: 2, kind: input, shape index: {}]
  %s3 = inlined_call_operand.vmem [shape: bf16[32,128], index: 3, kind: output, shape index: {}]
  %s4 = sld [smem:[#allocation0]]
  $region22: #{makeup_gan_forward.103} parent=0
    _
  %s6 = ssub.s32 1, %s4
  %s7 = scalar_select 0, %s6, %s4
  // Predicated region
  $region2: #{makeup_gan_forward.103} parent=0 // pred_check
    _
  $region3: #{makeup_gan_forward.103} parent=0 // pred_check_branch
    %9 = sbr.rel (0) target = $region5
  $region4: #{makeup_gan_forward.103} parent=0 // pred_region
    _
  $region5: #{makeup_gan_forward.103} parent=0 // pred_fallthru
    _
  // Predicated region
  $region6: #{makeup_gan_forward.103} parent=0 // pred_check
    _
  $region7: #{makeup_gan_forward.103} parent=0 // pred_check_branch
    %11 = sbr.rel (0) target = $region9
  $region8: #{makeup_gan_forward.103} parent=0 // pred_region
    _
  $region9: #{makeup_gan_forward.103} parent=0 // pred_fallthru
    _
  // Predicated region
  $region10: #{makeup_gan_forward.103} parent=0 // pred_check
    _
  $region11: #{makeup_gan_forward.103} parent=0 // pred_check_branch
    %13 = sbr.rel (0) target = $region13
  $region12: #{makeup_gan_forward.103} parent=0 // pred_region
    _
  $region13: #{makeup_gan_forward.103} parent=0 // pred_fallthru
    _
  %v15 = vld [vmem:[%s0] sm:$0xff]
  %v16 = vld [vmem:[%s0 + $0x8] sm:$0xff]
  %v17 = vld [vmem:[%s0 + $0x10] sm:$0xff]
  %v18 = vld [vmem:[%s0 + $0x18] sm:$0xff]
  %v19 = vld [vmem:[%s1] sm:$0xf]
  %v20 = vld [vmem:[%s1 + $0x4] sm:$0xf]
  %v21 = vld [vmem:[%s1 + $0x8] sm:$0xf]
  %v22 = vld [vmem:[%s1 + $0xc] sm:$0xf]
  %v23 = vld [vmem:[%s1 + $0x10] sm:$0xf]
  %v24 = vld [vmem:[%s1 + $0x14] sm:$0xf]
  %v25 = vld [vmem:[%s1 + $0x18] sm:$0xf]
  %v26 = vld [vmem:[%s1 + $0x1c] sm:$0xf]
  %v27 = vld [vmem:[%s1 + $0x20] sm:$0xf]
  %v28 = vld [vmem:[%s1 + $0x24] sm:$0xf]
  %v29 = vld [vmem:[%s1 + $0x28] sm:$0xf]
  %v30 = vld [vmem:[%s1 + $0x2c] sm:$0xf]
  %v31 = vld [vmem:[%s1 + $0x30] sm:$0xf]
  %v32 = vld [vmem:[%s1 + $0x34] sm:$0xf]
  %v33 = vld [vmem:[%s1 + $0x38] sm:$0xf]
  %v34 = vld [vmem:[%s1 + $0x3c] sm:$0xf]
  %v35 = vld [vmem:[%s1 + $0x40] sm:$0xf]
  %v36 = vld [vmem:[%s1 + $0x44] sm:$0xf]
  %v37 = vld [vmem:[%s2] sm:$0x1]
  %v39 = vlaneseq
  %v40 = vshrl.u32 %v39, 7
  %v41 = vsub.s32 0, %v40
  %v42 = vrot.slane %v37, %v41
  %v48 = vunpack.c.l.b16 %v15
  %v49 = vunpack.c.h.b16 %v15
  %v50 = vunpack.c.l.b16 %v16
  %v51 = vunpack.c.h.b16 %v16
  %v52 = vunpack.c.l.b16 %v17
  %v53 = vunpack.c.h.b16 %v17
  %v54 = vunpack.c.l.b16 %v18
  %v55 = vunpack.c.h.b16 %v18
  %v56 = vpack.c.b16 %v50, %v48
  %v57 = vpack.c.b16 %v51, %v49
  %v58 = vpack.c.b16 %v54, %v52
  %v59 = vpack.c.b16 %v55, %v53
  %v80 = vunpack.c.l.b16 %v19
  %v81 = vunpack.c.l.b16 %v20
  %v82 = vunpack.c.l.b16 %v21
  %v83 = vunpack.c.l.b16 %v22
  %v84 = vunpack.c.l.b16 %v23
  %v85 = vunpack.c.l.b16 %v24
  %v86 = vunpack.c.l.b16 %v25
  %v87 = vunpack.c.l.b16 %v26
  %v88 = vunpack.c.l.b16 %v27
  %v89 = vunpack.c.l.b16 %v28
  %v90 = vunpack.c.l.b16 %v29
  %v91 = vunpack.c.l.b16 %v30
  %v92 = vunpack.c.l.b16 %v31
  %v93 = vunpack.c.l.b16 %v32
  %v94 = vunpack.c.l.b16 %v33
  %v95 = vunpack.c.l.b16 %v34
  %v96 = vunpack.c.l.b16 %v35
  %v97 = vunpack.c.l.b16 %v36
  %v98 = vpack.c.b16 %v81, %v80
  %v99 = vpack.c.b16 %v83, %v82
  %v100 = vpack.c.b16 %v85, %v84
  %v101 = vpack.c.b16 %v87, %v86
  %v102 = vpack.c.b16 %v89, %v88
  %v103 = vpack.c.b16 %v91, %v90
  %v104 = vpack.c.b16 %v93, %v92
  %v105 = vpack.c.b16 %v95, %v94
  %v106 = vpack.c.b16 %v97, %v96
  %vm116 = vcmask 130048
  %v118 = vsel %vm116, %v57, 0
  %v121 = vsel %vm116, %v59, 0
  %123 = vmatprep.subr.bf16.mxu0 0
  %124 = vmatpush1.bf16.msra.mxu0 %v98
  %125 = vmatprep.subr.bf16.mxu0 0
  %126 = vmatpush1.bf16.msra.mxu0 %v99
  %127 = vmatprep.subr.bf16.mxu0 0
  %128 = vmatpush1.bf16.msra.mxu0 %v100
  %129 = vmatprep.subr.bf16.mxu0 0
  %130 = vmatpush1.bf16.msra.mxu0 %v101
  %131 = vmatprep.subr.bf16.mxu0 0
  %132 = vmatpush1.bf16.msra.mxu0 %v102
  %133 = vmatprep.subr.bf16.mxu0 0
  %134 = vmatpush1.bf16.msra.mxu0 %v103
  %135 = vmatprep.subr.bf16.mxu0 0
  %136 = vmatpush1.bf16.msra.mxu0 %v104
  %137 = vmatprep.subr.bf16.mxu0 0
  %138 = vmatpush1.bf16.msra.mxu0 %v105
  %139 = vmatprep.subr.bf16.mxu0 0
  %140 = vmatpush1.bf16.msra.mxu0 %v106
  %141 = vmatprep.subr.bf16.mxu0 0
  %142 = vmatpush1.bf16.msra.mxu0 0
  %143 = vmatprep.subr.bf16.mxu0 0
  %144 = vmatpush1.bf16.msra.mxu0 0
  %145 = vmatprep.subr.bf16.mxu0 0
  %146 = vmatpush1.bf16.msra.mxu0 0
  %147 = vmatprep.subr.bf16.mxu0 0
  %148 = vmatpush1.bf16.msra.mxu0 0
  %149 = vmatprep.subr.bf16.mxu0 0
  %150 = vmatpush1.bf16.msra.mxu0 0
  %151 = vmatprep.subr.bf16.mxu0 0
  %152 = vmatpush1.bf16.msra.mxu0 0
  %153 = vmatprep.subr.bf16.mxu0 0
  %154 = vmatpush1.bf16.msra.mxu0 0
  %155 = vmatprep.mubr.bf16.mxu0 %v118
  %156 = vmatmul.mubr.bf16.gmra.mrb[0].mxu0 %v56
  %v157 = vpop.f32.mrb[0].mxu0
  %v158 = vadd.f32 %v42, %v157
  %v159 = vpop.f32.mrb[0].mxu0
  %v160 = vpop.f32.mrb[0].mxu0
  %v161 = vadd.f32 %v42, %v160
  %v162 = vpop.f32.mrb[0].mxu0
  %163 = vmatprep.mubr.bf16.mxu0 %v121
  %164 = vmatmul.mubr.bf16.gmra.mrb[0].mxu0 %v58
  %v165 = vpop.f32.mrb[0].mxu0
  %v166 = vadd.f32 %v42, %v165
  %v167 = vpop.f32.mrb[0].mxu0
  %v168 = vpop.f32.mrb[0].mxu0
  %v169 = vadd.f32 %v42, %v168
  %v170 = vpop.f32.mrb[0].mxu0
  %171 = vdwg.mxu0
  %v172 = vmax.f32 %v158, 0.0
  %v173 = vmax.f32 %v161, 0.0
  %v174 = vmax.f32 %v166, 0.0
  %v175 = vmax.f32 %v169, 0.0
  %v176 = vpack.c.bf16 %v173, %v172
  %v177 = vpack.c.bf16 %v175, %v174
  %v180 = vunpack.c.l.b16 %v176
  %v181 = vunpack.c.h.b16 %v176
  %v182 = vunpack.c.l.b16 %v177
  %v183 = vunpack.c.h.b16 %v177
  %v184 = vpack.c.b16 %v180, %v180
  %v185 = vpack.c.b16 %v181, %v181
  %v186 = vpack.c.b16 %v182, %v182
  %v187 = vpack.c.b16 %v183, %v183
  %192 = vst [vmem:[%s3] sm:$0xf] %v184
  %193 = vst [vmem:[%s3 + $0x4] sm:$0xf] %v185
  %194 = vst [vmem:[%s3 + $0x8] sm:$0xf] %v186
  %195 = vst [vmem:[%s3 + $0xc] sm:$0xf] %v187
  // Predicated region
  $region14: #{makeup_gan_forward.103} parent=0 // pred_check
    _
  $region15: #{makeup_gan_forward.103} parent=0 // pred_check_branch
    %197 = sbr.rel (0) target = $region17
  $region16: #{makeup_gan_forward.103} parent=0 // pred_region
    _
  $region17: #{makeup_gan_forward.103} parent=0 // pred_fallthru
    _
  // Predicated region
  $region18: #{makeup_gan_forward.103} parent=0 // pred_check
    _
  $region19: #{makeup_gan_forward.103} parent=0 // pred_check_branch
    %199 = sbr.rel (0) target = $region21
  $region20: #{makeup_gan_forward.103} parent=0 // pred_region
    _
  $region21: #{makeup_gan_forward.103} parent=0 // pred_fallthru
    _

// kernel: makeup_gan_forward.105
$region0: #{makeup_gan_forward.105}
  #allocation0 [shape = 'u32[]', space=smem, size = 0x4, offset = 0x4, fixed_abs, tag = 'smem constant byte address 0x4 - core index']
  #allocation1 [shape = 'u32[144,128]{1,0:T(1,128)}', space=vmem, size = 0x12000, scoped, tag = 'internal scratch']
  %s0 = inlined_call_operand.vmem [shape: bf16[128,16], index: 0, kind: input, shape index: {}]
  %s1 = inlined_call_operand.vmem [shape: bf16[16,128], index: 1, kind: input, shape index: {}]
  %s2 = inlined_call_operand.vmem [shape: f32[1,128], index: 2, kind: input, shape index: {}]
  %s3 = inlined_call_operand.vmem [shape: bf16[128,128], index: 3, kind: output, shape index: {}]
  %s4 = sld [smem:[#allocation0]]
  $region22: #{makeup_gan_forward.105} parent=0
    _
  %s6 = ssub.s32 1, %s4
  %s7 = scalar_select 0, %s6, %s4
  // Predicated region
  $region2: #{makeup_gan_forward.105} parent=0 // pred_check
    _
  $region3: #{makeup_gan_forward.105} parent=0 // pred_check_branch
    %9 = sbr.rel (0) target = $region5
  $region4: #{makeup_gan_forward.105} parent=0 // pred_region
    _
  $region5: #{makeup_gan_forward.105} parent=0 // pred_fallthru
    _
  // Predicated region
  $region6: #{makeup_gan_forward.105} parent=0 // pred_check
    _
  $region7: #{makeup_gan_forward.105} parent=0 // pred_check_branch
    %11 = sbr.rel (0) target = $region9
  $region8: #{makeup_gan_forward.105} parent=0 // pred_region
    _
  $region9: #{makeup_gan_forward.105} parent=0 // pred_fallthru
    _
  // Predicated region
  $region10: #{makeup_gan_forward.105} parent=0 // pred_check
    _
  $region11: #{makeup_gan_forward.105} parent=0 // pred_check_branch
    %13 = sbr.rel (0) target = $region13
  $region12: #{makeup_gan_forward.105} parent=0 // pred_region
    _
  $region13: #{makeup_gan_forward.105} parent=0 // pred_fallthru
    _
  %v15 = vld [vmem:[%s0] sm:$0xf]
  %v16 = vld [vmem:[%s0 + $0x4] sm:$0xf]
  %v17 = vld [vmem:[%s0 + $0x8] sm:$0xf]
  %v18 = vld [vmem:[%s0 + $0xc] sm:$0xf]
  %v19 = vld [vmem:[%s0 + $0x10] sm:$0xf]
  %v20 = vld [vmem:[%s0 + $0x14] sm:$0xf]
  %v21 = vld [vmem:[%s0 + $0x18] sm:$0xf]
  %v22 = vld [vmem:[%s0 + $0x1c] sm:$0xf]
  %v23 = vld [vmem:[%s0 + $0x20] sm:$0xf]
  %v24 = vld [vmem:[%s0 + $0x24] sm:$0xf]
  %v25 = vld [vmem:[%s0 + $0x28] sm:$0xf]
  %v26 = vld [vmem:[%s0 + $0x2c] sm:$0xf]
  %v27 = vld [vmem:[%s0 + $0x30] sm:$0xf]
  %v28 = vld [vmem:[%s0 + $0x34] sm:$0xf]
  %v29 = vld [vmem:[%s0 + $0x38] sm:$0xf]
  %v30 = vld [vmem:[%s0 + $0x3c] sm:$0xf]
  %v31 = vld [vmem:[%s1] sm:$0xf]
  %v32 = vld [vmem:[%s1 + $0x4] sm:$0xf]
  %v33 = vld [vmem:[%s2] sm:$0x1]
  %v35 = vlaneseq
  %v36 = vshrl.u32 %v35, 7
  %v37 = vsub.s32 0, %v36
  %v38 = vrot.slane %v33, %v37
  %v56 = vunpack.c.l.b16 %v15
  %v57 = vunpack.c.l.b16 %v16
  %v58 = vunpack.c.l.b16 %v17
  %v59 = vunpack.c.l.b16 %v18
  %v60 = vunpack.c.l.b16 %v19
  %v61 = vunpack.c.l.b16 %v20
  %v62 = vunpack.c.l.b16 %v21
  %v63 = vunpack.c.l.b16 %v22
  %v64 = vunpack.c.l.b16 %v23
  %v65 = vunpack.c.l.b16 %v24
  %v66 = vunpack.c.l.b16 %v25
  %v67 = vunpack.c.l.b16 %v26
  %v68 = vunpack.c.l.b16 %v27
  %v69 = vunpack.c.l.b16 %v28
  %v70 = vunpack.c.l.b16 %v29
  %v71 = vunpack.c.l.b16 %v30
  %v72 = vpack.c.b16 %v57, %v56
  %v73 = vpack.c.b16 %v59, %v58
  %v74 = vpack.c.b16 %v61, %v60
  %v75 = vpack.c.b16 %v63, %v62
  %v76 = vpack.c.b16 %v65, %v64
  %v77 = vpack.c.b16 %v67, %v66
  %v78 = vpack.c.b16 %v69, %v68
  %v79 = vpack.c.b16 %v71, %v70
  %v82 = vunpack.c.l.b16 %v31
  %v83 = vunpack.c.l.b16 %v32
  %v84 = vpack.c.b16 %v83, %v82
  %vm86 = vcmask 130048
  %v88 = vsel %vm86, %v72, 0
  %v91 = vsel %vm86, %v73, 0
  %v94 = vsel %vm86, %v74, 0
  %v97 = vsel %vm86, %v75, 0
  %v100 = vsel %vm86, %v76, 0
  %v103 = vsel %vm86, %v77, 0
  %v106 = vsel %vm86, %v78, 0
  %v109 = vsel %vm86, %v79, 0
  %111 = vmatprep.subr.bf16.mxu0 0
  %112 = vmatpush1.bf16.msra.mxu0 %v84
  %113 = vmatprep.subr.bf16.mxu0 0
  %114 = vmatpush1.bf16.msra.mxu0 0
  %115 = vmatprep.subr.bf16.mxu0 0
  %116 = vmatpush1.bf16.msra.mxu0 0
  %117 = vmatprep.subr.bf16.mxu0 0
  %118 = vmatpush1.bf16.msra.mxu0 0
  %119 = vmatprep.subr.bf16.mxu0 0
  %120 = vmatpush1.bf16.msra.mxu0 0
  %121 = vmatprep.subr.bf16.mxu0 0
  %122 = vmatpush1.bf16.msra.mxu0 0
  %123 = vmatprep.subr.bf16.mxu0 0
  %124 = vmatpush1.bf16.msra.mxu0 0
  %125 = vmatprep.subr.bf16.mxu0 0
  %126 = vmatpush1.bf16.msra.mxu0 0
  %127 = vmatprep.subr.bf16.mxu0 0
  %128 = vmatpush1.bf16.msra.mxu0 0
  %129 = vmatprep.subr.bf16.mxu0 0
  %130 = vmatpush1.bf16.msra.mxu0 0
  %131 = vmatprep.subr.bf16.mxu0 0
  %132 = vmatpush1.bf16.msra.mxu0 0
  %133 = vmatprep.subr.bf16.mxu0 0
  %134 = vmatpush1.bf16.msra.mxu0 0
  %135 = vmatprep.subr.bf16.mxu0 0
  %136 = vmatpush1.bf16.msra.mxu0 0
  %137 = vmatprep.subr.bf16.mxu0 0
  %138 = vmatpush1.bf16.msra.mxu0 0
  %139 = vmatprep.subr.bf16.mxu0 0
  %140 = vmatpush1.bf16.msra.mxu0 0
  %141 = vmatprep.subr.bf16.mxu0 0
  %142 = vmatpush1.bf16.msra.mxu0 0
  %143 = vmatprep.mubr.bf16.mxu0 0
  %144 = vmatmul.mubr.bf16.gmra.mrb[0].mxu0 %v88
  %v145 = vpop.f32.mrb[0].mxu0
  %v146 = vadd.f32 %v38, %v145
  %v147 = vpop.f32.mrb[0].mxu0
  %v148 = vpop.f32.mrb[0].mxu0
  %v149 = vadd.f32 %v38, %v148
  %v150 = vpop.f32.mrb[0].mxu0
  %151 = vmatprep.mubr.bf16.mxu0 0
  %152 = vmatmul.mubr.bf16.gmra.mrb[0].mxu0 %v91
  %v153 = vpop.f32.mrb[0].mxu0
  %v154 = vadd.f32 %v38, %v153
  %v155 = vpop.f32.mrb[0].mxu0
  %v156 = vpop.f32.mrb[0].mxu0
  %v157 = vadd.f32 %v38, %v156
  %v158 = vpop.f32.mrb[0].mxu0
  %159 = vmatprep.mubr.bf16.mxu0 0
  %160 = vmatmul.mubr.bf16.gmra.mrb[0].mxu0 %v94
  %v161 = vpop.f32.mrb[0].mxu0
  %v162 = vadd.f32 %v38, %v161
  %v163 = vpop.f32.mrb[0].mxu0
  %v164 = vpop.f32.mrb[0].mxu0
  %v165 = vadd.f32 %v38, %v164
  %v166 = vpop.f32.mrb[0].mxu0
  %167 = vmatprep.mubr.bf16.mxu0 0
  %168 = vmatmul.mubr.bf16.gmra.mrb[0].mxu0 %v97
  %v169 = vpop.f32.mrb[0].mxu0
  %v170 = vadd.f32 %v38, %v169
  %v171 = vpop.f32.mrb[0].mxu0
  %v172 = vpop.f32.mrb[0].mxu0
  %v173 = vadd.f32 %v38, %v172
  %v174 = vpop.f32.mrb[0].mxu0
  %175 = vmatprep.mubr.bf16.mxu0 0
  %176 = vmatmul.mubr.bf16.gmra.mrb[0].mxu0 %v100
  %v177 = vpop.f32.mrb[0].mxu0
  %v178 = vadd.f32 %v38, %v177
  %v179 = vpop.f32.mrb[0].mxu0
  %v180 = vpop.f32.mrb[0].mxu0
  %v181 = vadd.f32 %v38, %v180
  %v182 = vpop.f32.mrb[0].mxu0
  %183 = vmatprep.mubr.bf16.mxu0 0
  %184 = vmatmul.mubr.bf16.gmra.mrb[0].mxu0 %v103
  %v185 = vpop.f32.mrb[0].mxu0
  %v186 = vadd.f32 %v38, %v185
  %v187 = vpop.f32.mrb[0].mxu0
  %v188 = vpop.f32.mrb[0].mxu0
  %v189 = vadd.f32 %v38, %v188
  %v190 = vpop.f32.mrb[0].mxu0
  %191 = vmatprep.mubr.bf16.mxu0 0
  %192 = vmatmul.mubr.bf16.gmra.mrb[0].mxu0 %v106
  %v193 = vpop.f32.mrb[0].mxu0
  %v194 = vadd.f32 %v38, %v193
  %v195 = vpop.f32.mrb[0].mxu0
  %v196 = vpop.f32.mrb[0].mxu0
  %v197 = vadd.f32 %v38, %v196
  %v198 = vpop.f32.mrb[0].mxu0
  %199 = vmatprep.mubr.bf16.mxu0 0
  %200 = vmatmul.mubr.bf16.gmra.mrb[0].mxu0 %v109
  %v201 = vpop.f32.mrb[0].mxu0
  %v202 = vadd.f32 %v38, %v201
  %v203 = vpop.f32.mrb[0].mxu0
  %v204 = vpop.f32.mrb[0].mxu0
  %v205 = vadd.f32 %v38, %v204
  %v206 = vpop.f32.mrb[0].mxu0
  %207 = vdwg.mxu0
  %v208 = vpack.c.bf16 %v149, %v146
  %v209 = vpack.c.bf16 %v157, %v154
  %v210 = vpack.c.bf16 %v165, %v162
  %v211 = vpack.c.bf16 %v173, %v170
  %v212 = vpack.c.bf16 %v181, %v178
  %v213 = vpack.c.bf16 %v189, %v186
  %v214 = vpack.c.bf16 %v197, %v194
  %v215 = vpack.c.bf16 %v205, %v202
  %v224 = vunpack.c.l.b16 %v208
  %v225 = vunpack.c.h.b16 %v208
  %v226 = vunpack.c.l.b16 %v209
  %v227 = vunpack.c.h.b16 %v209
  %v228 = vunpack.c.l.b16 %v210
  %v229 = vunpack.c.h.b16 %v210
  %v230 = vunpack.c.l.b16 %v211
  %v231 = vunpack.c.h.b16 %v211
  %v232 = vunpack.c.l.b16 %v212
  %v233 = vunpack.c.h.b16 %v212
  %v234 = vunpack.c.l.b16 %v213
  %v235 = vunpack.c.h.b16 %v213
  %v236 = vunpack.c.l.b16 %v214
  %v237 = vunpack.c.h.b16 %v214
  %v238 = vunpack.c.l.b16 %v215
  %v239 = vunpack.c.h.b16 %v215
  %v240 = vpack.c.b16 %v224, %v224
  %v241 = vpack.c.b16 %v225, %v225
  %v242 = vpack.c.b16 %v226, %v226
  %v243 = vpack.c.b16 %v227, %v227
  %v244 = vpack.c.b16 %v228, %v228
  %v245 = vpack.c.b16 %v229, %v229
  %v246 = vpack.c.b16 %v230, %v230
  %v247 = vpack.c.b16 %v231, %v231
  %v248 = vpack.c.b16 %v232, %v232
  %v249 = vpack.c.b16 %v233, %v233
  %v250 = vpack.c.b16 %v234, %v234
  %v251 = vpack.c.b16 %v235, %v235
  %v252 = vpack.c.b16 %v236, %v236
  %v253 = vpack.c.b16 %v237, %v237
  %v254 = vpack.c.b16 %v238, %v238
  %v255 = vpack.c.b16 %v239, %v239
  %272 = vst [vmem:[%s3] sm:$0xf] %v240
  %273 = vst [vmem:[%s3 + $0x4] sm:$0xf] %v241
  %274 = vst [vmem:[%s3 + $0x8] sm:$0xf] %v242
  %275 = vst [vmem:[%s3 + $0xc] sm:$0xf] %v243
  %276 = vst [vmem:[%s3 + $0x10] sm:$0xf] %v244
  %277 = vst [vmem:[%s3 + $0x14] sm:$0xf] %v245
  %278 = vst [vmem:[%s3 + $0x18] sm:$0xf] %v246
  %279 = vst [vmem:[%s3 + $0x1c] sm:$0xf] %v247
  %280 = vst [vmem:[%s3 + $0x20] sm:$0xf] %v248
  %281 = vst [vmem:[%s3 + $0x24] sm:$0xf] %v249
  %282 = vst [vmem:[%s3 + $0x28] sm:$0xf] %v250
  %283 = vst [vmem:[%s3 + $0x2c] sm:$0xf] %v251
  %284 = vst [vmem:[%s3 + $0x30] sm:$0xf] %v252
  %285 = vst [vmem:[%s3 + $0x34] sm:$0xf] %v253
  %286 = vst [vmem:[%s3 + $0x38] sm:$0xf] %v254
  %287 = vst [vmem:[%s3 + $0x3c] sm:$0xf] %v255
  // Predicated region
  $region14: #{makeup_gan_forward.105} parent=0 // pred_check
    _
  $region15: #{makeup_gan_forward.105} parent=0 // pred_check_branch
    %289 = sbr.rel (0) target = $region17
  $region16: #{makeup_gan_forward.105} parent=0 // pred_region
    _
  $region17: #{makeup_gan_forward.105} parent=0 // pred_fallthru
    _
  // Predicated region
  $region18: #{makeup_gan_forward.105} parent=0 // pred_check
    _
  $region19: #{makeup_gan_forward.105} parent=0 // pred_check_branch
    %291 = sbr.rel (0) target = $region21
  $region20: #{makeup_gan_forward.105} parent=0 // pred_region
    _
  $region21: #{makeup_gan_forward.105} parent=0 // pred_fallthru
    _

// kernel: makeup_gan_forward.106
$region0: #{makeup_gan_forward.106}
  #allocation0 [shape = 'u32[]', space=smem, size = 0x4, offset = 0x4, fixed_abs, tag = 'smem constant byte address 0x4 - core index']
  #allocation1 [shape = 'u32[144,128]{1,0:T(1,128)}', space=vmem, size = 0x12000, scoped, tag = 'internal scratch']
  %s0 = inlined_call_operand.vmem [shape: bf16[256,16], index: 0, kind: input, shape index: {}]
  %s1 = inlined_call_operand.vmem [shape: bf16[16,128], index: 1, kind: input, shape index: {}]
  %s2 = inlined_call_operand.vmem [shape: f32[1,128], index: 2, kind: input, shape index: {}]
  %s3 = inlined_call_operand.vmem [shape: bf16[256,128], index: 3, kind: output, shape index: {}]
  %s4 = sld [smem:[#allocation0]]
  $region22: #{makeup_gan_forward.106} parent=0
    _
  %s6 = ssub.s32 1, %s4
  %s7 = scalar_select 0, %s6, %s4
  // Predicated region
  $region2: #{makeup_gan_forward.106} parent=0 // pred_check
    _
  $region3: #{makeup_gan_forward.106} parent=0 // pred_check_branch
    %9 = sbr.rel (0) target = $region5
  $region4: #{makeup_gan_forward.106} parent=0 // pred_region
    _
  $region5: #{makeup_gan_forward.106} parent=0 // pred_fallthru
    _
  // Predicated region
  $region6: #{makeup_gan_forward.106} parent=0 // pred_check
    _
  $region7: #{makeup_gan_forward.106} parent=0 // pred_check_branch
    %11 = sbr.rel (0) target = $region9
  $region8: #{makeup_gan_forward.106} parent=0 // pred_region
    _
  $region9: #{makeup_gan_forward.106} parent=0 // pred_fallthru
    _
  // Predicated region
  $region10: #{makeup_gan_forward.106} parent=0 // pred_check
    _
  $region11: #{makeup_gan_forward.106} parent=0 // pred_check_branch
    %13 = sbr.rel (0) target = $region13
  $region12: #{makeup_gan_forward.106} parent=0 // pred_region
    _
  $region13: #{makeup_gan_forward.106} parent=0 // pred_fallthru
    _
  %v15 = vld [vmem:[%s0] sm:$0xf]
  %v16 = vld [vmem:[%s0 + $0x4] sm:$0xf]
  %v17 = vld [vmem:[%s0 + $0x8] sm:$0xf]
  %v18 = vld [vmem:[%s0 + $0xc] sm:$0xf]
  %v19 = vld [vmem:[%s0 + $0x10] sm:$0xf]
  %v20 = vld [vmem:[%s0 + $0x14] sm:$0xf]
  %v21 = vld [vmem:[%s0 + $0x18] sm:$0xf]
  %v22 = vld [vmem:[%s0 + $0x1c] sm:$0xf]
  %v23 = vld [vmem:[%s0 + $0x20] sm:$0xf]
  %v24 = vld [vmem:[%s0 + $0x24] sm:$0xf]
  %v25 = vld [vmem:[%s0 + $0x28] sm:$0xf]
  %v26 = vld [vmem:[%s0 + $0x2c] sm:$0xf]
  %v27 = vld [vmem:[%s0 + $0x30] sm:$0xf]
  %v28 = vld [vmem:[%s0 + $0x34] sm:$0xf]
  %v29 = vld [vmem:[%s0 + $0x38] sm:$0xf]
  %v30 = vld [vmem:[%s0 + $0x3c] sm:$0xf]
  %v31 = vld [vmem:[%s0 + $0x40] sm:$0xf]
  %v32 = vld [vmem:[%s0 + $0x44] sm:$0xf]
  %v33 = vld [vmem:[%s0 + $0x48] sm:$0xf]
  %v34 = vld [vmem:[%s0 + $0x4c] sm:$0xf]
  %v35 = vld [vmem:[%s0 + $0x50] sm:$0xf]
  %v36 = vld [vmem:[%s0 + $0x54] sm:$0xf]
  %v37 = vld [vmem:[%s0 + $0x58] sm:$0xf]
  %v38 = vld [vmem:[%s0 + $0x5c] sm:$0xf]
  %v39 = vld [vmem:[%s0 + $0x60] sm:$0xf]
  %v40 = vld [vmem:[%s0 + $0x64] sm:$0xf]
  %v41 = vld [vmem:[%s0 + $0x68] sm:$0xf]
  %v42 = vld [vmem:[%s0 + $0x6c] sm:$0xf]
  %v43 = vld [vmem:[%s0 + $0x70] sm:$0xf]
  %v44 = vld [vmem:[%s0 + $0x74] sm:$0xf]
  %v45 = vld [vmem:[%s0 + $0x78] sm:$0xf]
  %v46 = vld [vmem:[%s0 + $0x7c] sm:$0xf]
  %v47 = vld [vmem:[%s1] sm:$0xf]
  %v48 = vld [vmem:[%s1 + $0x4] sm:$0xf]
  %v49 = vld [vmem:[%s2] sm:$0x1]
  %v51 = vlaneseq
  %v52 = vshrl.u32 %v51, 7
  %v53 = vsub.s32 0, %v52
  %v54 = vrot.slane %v49, %v53
  %v88 = vunpack.c.l.b16 %v15
  %v89 = vunpack.c.l.b16 %v16
  %v90 = vunpack.c.l.b16 %v17
  %v91 = vunpack.c.l.b16 %v18
  %v92 = vunpack.c.l.b16 %v19
  %v93 = vunpack.c.l.b16 %v20
  %v94 = vunpack.c.l.b16 %v21
  %v95 = vunpack.c.l.b16 %v22
  %v96 = vunpack.c.l.b16 %v23
  %v97 = vunpack.c.l.b16 %v24
  %v98 = vunpack.c.l.b16 %v25
  %v99 = vunpack.c.l.b16 %v26
  %v100 = vunpack.c.l.b16 %v27
  %v101 = vunpack.c.l.b16 %v28
  %v102 = vunpack.c.l.b16 %v29
  %v103 = vunpack.c.l.b16 %v30
  %v104 = vunpack.c.l.b16 %v31
  %v105 = vunpack.c.l.b16 %v32
  %v106 = vunpack.c.l.b16 %v33
  %v107 = vunpack.c.l.b16 %v34
  %v108 = vunpack.c.l.b16 %v35
  %v109 = vunpack.c.l.b16 %v36
  %v110 = vunpack.c.l.b16 %v37
  %v111 = vunpack.c.l.b16 %v38
  %v112 = vunpack.c.l.b16 %v39
  %v113 = vunpack.c.l.b16 %v40
  %v114 = vunpack.c.l.b16 %v41
  %v115 = vunpack.c.l.b16 %v42
  %v116 = vunpack.c.l.b16 %v43
  %v117 = vunpack.c.l.b16 %v44
  %v118 = vunpack.c.l.b16 %v45
  %v119 = vunpack.c.l.b16 %v46
  %v120 = vpack.c.b16 %v89, %v88
  %v121 = vpack.c.b16 %v91, %v90
  %v122 = vpack.c.b16 %v93, %v92
  %v123 = vpack.c.b16 %v95, %v94
  %v124 = vpack.c.b16 %v97, %v96
  %v125 = vpack.c.b16 %v99, %v98
  %v126 = vpack.c.b16 %v101, %v100
  %v127 = vpack.c.b16 %v103, %v102
  %v128 = vpack.c.b16 %v105, %v104
  %v129 = vpack.c.b16 %v107, %v106
  %v130 = vpack.c.b16 %v109, %v108
  %v131 = vpack.c.b16 %v111, %v110
  %v132 = vpack.c.b16 %v113, %v112
  %v133 = vpack.c.b16 %v115, %v114
  %v134 = vpack.c.b16 %v117, %v116
  %v135 = vpack.c.b16 %v119, %v118
  %v138 = vunpack.c.l.b16 %v47
  %v139 = vunpack.c.l.b16 %v48
  %v140 = vpack.c.b16 %v139, %v138
  %vm142 = vcmask 130048
  %v144 = vsel %vm142, %v120, 0
  %v147 = vsel %vm142, %v121, 0
  %v150 = vsel %vm142, %v122, 0
  %v153 = vsel %vm142, %v123, 0
  %v156 = vsel %vm142, %v124, 0
  %v159 = vsel %vm142, %v125, 0
  %v162 = vsel %vm142, %v126, 0
  %v165 = vsel %vm142, %v127, 0
  %v168 = vsel %vm142, %v128, 0
  %v171 = vsel %vm142, %v129, 0
  %v174 = vsel %vm142, %v130, 0
  %v177 = vsel %vm142, %v131, 0
  %v180 = vsel %vm142, %v132, 0
  %v183 = vsel %vm142, %v133, 0
  %v186 = vsel %vm142, %v134, 0
  %v189 = vsel %vm142, %v135, 0
  %191 = vmatprep.subr.bf16.mxu0 0
  %192 = vmatpush1.bf16.msra.mxu0 %v140
  %193 = vmatprep.subr.bf16.mxu0 0
  %194 = vmatpush1.bf16.msra.mxu0 0
  %195 = vmatprep.subr.bf16.mxu0 0
  %196 = vmatpush1.bf16.msra.mxu0 0
  %197 = vmatprep.subr.bf16.mxu0 0
  %198 = vmatpush1.bf16.msra.mxu0 0
  %199 = vmatprep.subr.bf16.mxu0 0
  %200 = vmatpush1.bf16.msra.mxu0 0
  %201 = vmatprep.subr.bf16.mxu0 0
  %202 = vmatpush1.bf16.msra.mxu0 0
  %203 = vmatprep.subr.bf16.mxu0 0
  %204 = vmatpush1.bf16.msra.mxu0 0
  %205 = vmatprep.subr.bf16.mxu0 0
  %206 = vmatpush1.bf16.msra.mxu0 0
  %207 = vmatprep.subr.bf16.mxu0 0
  %208 = vmatpush1.bf16.msra.mxu0 0
  %209 = vmatprep.subr.bf16.mxu0 0
  %210 = vmatpush1.bf16.msra.mxu0 0
  %211 = vmatprep.subr.bf16.mxu0 0
  %212 = vmatpush1.bf16.msra.mxu0 0
  %213 = vmatprep.subr.bf16.mxu0 0
  %214 = vmatpush1.bf16.msra.mxu0 0
  %215 = vmatprep.subr.bf16.mxu0 0
  %216 = vmatpush1.bf16.msra.mxu0 0
  %217 = vmatprep.subr.bf16.mxu0 0
  %218 = vmatpush1.bf16.msra.mxu0 0
  %219 = vmatprep.subr.bf16.mxu0 0
  %220 = vmatpush1.bf16.msra.mxu0 0
  %221 = vmatprep.subr.bf16.mxu0 0
  %222 = vmatpush1.bf16.msra.mxu0 0
  %223 = vmatprep.mubr.bf16.mxu0 0
  %224 = vmatmul.mubr.bf16.gmra.mrb[0].mxu0 %v144
  %v225 = vpop.f32.mrb[0].mxu0
  %v226 = vadd.f32 %v54, %v225
  %v227 = vpop.f32.mrb[0].mxu0
  %v228 = vpop.f32.mrb[0].mxu0
  %v229 = vadd.f32 %v54, %v228
  %v230 = vpop.f32.mrb[0].mxu0
  %231 = vmatprep.mubr.bf16.mxu0 0
  %232 = vmatmul.mubr.bf16.gmra.mrb[0].mxu0 %v147
  %v233 = vpop.f32.mrb[0].mxu0
  %v234 = vadd.f32 %v54, %v233
  %v235 = vpop.f32.mrb[0].mxu0
  %v236 = vpop.f32.mrb[0].mxu0
  %v237 = vadd.f32 %v54, %v236
  %v238 = vpop.f32.mrb[0].mxu0
  %239 = vmatprep.mubr.bf16.mxu0 0
  %240 = vmatmul.mubr.bf16.gmra.mrb[0].mxu0 %v150
  %v241 = vpop.f32.mrb[0].mxu0
  %v242 = vadd.f32 %v54, %v241
  %v243 = vpop.f32.mrb[0].mxu0
  %v244 = vpop.f32.mrb[0].mxu0
  %v245 = vadd.f32 %v54, %v244
  %v246 = vpop.f32.mrb[0].mxu0
  %247 = vmatprep.mubr.bf16.mxu0 0
  %248 = vmatmul.mubr.bf16.gmra.mrb[0].mxu0 %v153
  %v249 = vpop.f32.mrb[0].mxu0
  %v250 = vadd.f32 %v54, %v249
  %v251 = vpop.f32.mrb[0].mxu0
  %v252 = vpop.f32.mrb[0].mxu0
  %v253 = vadd.f32 %v54, %v252
  %v254 = vpop.f32.mrb[0].mxu0
  %255 = vmatprep.mubr.bf16.mxu0 0
  %256 = vmatmul.mubr.bf16.gmra.mrb[0].mxu0 %v156
  %v257 = vpop.f32.mrb[0].mxu0
  %v258 = vadd.f32 %v54, %v257
  %v259 = vpop.f32.mrb[0].mxu0
  %v260 = vpop.f32.mrb[0].mxu0
  %v261 = vadd.f32 %v54, %v260
  %v262 = vpop.f32.mrb[0].mxu0
  %263 = vmatprep.mubr.bf16.mxu0 0
  %264 = vmatmul.mubr.bf16.gmra.mrb[0].mxu0 %v159
  %v265 = vpop.f32.mrb[0].mxu0
  %v266 = vadd.f32 %v54, %v265
  %v267 = vpop.f32.mrb[0].mxu0
  %v268 = vpop.f32.mrb[0].mxu0
  %v269 = vadd.f32 %v54, %v268
  %v270 = vpop.f32.mrb[0].mxu0
  %271 = vmatprep.mubr.bf16.mxu0 0
  %272 = vmatmul.mubr.bf16.gmra.mrb[0].mxu0 %v162
  %v273 = vpop.f32.mrb[0].mxu0
  %v274 = vadd.f32 %v54, %v273
  %v275 = vpop.f32.mrb[0].mxu0
  %v276 = vpop.f32.mrb[0].mxu0
  %v277 = vadd.f32 %v54, %v276
  %v278 = vpop.f32.mrb[0].mxu0
  %279 = vmatprep.mubr.bf16.mxu0 0
  %280 = vmatmul.mubr.bf16.gmra.mrb[0].mxu0 %v165
  %v281 = vpop.f32.mrb[0].mxu0
  %v282 = vadd.f32 %v54, %v281
  %v283 = vpop.f32.mrb[0].mxu0
  %v284 = vpop.f32.mrb[0].mxu0
  %v285 = vadd.f32 %v54, %v284
  %v286 = vpop.f32.mrb[0].mxu0
  %287 = vmatprep.mubr.bf16.mxu0 0
  %288 = vmatmul.mubr.bf16.gmra.mrb[0].mxu0 %v168
  %v289 = vpop.f32.mrb[0].mxu0
  %v290 = vadd.f32 %v54, %v289
  %v291 = vpop.f32.mrb[0].mxu0
  %v292 = vpop.f32.mrb[0].mxu0
  %v293 = vadd.f32 %v54, %v292
  %v294 = vpop.f32.mrb[0].mxu0
  %295 = vmatprep.mubr.bf16.mxu0 0
  %296 = vmatmul.mubr.bf16.gmra.mrb[0].mxu0 %v171
  %v297 = vpop.f32.mrb[0].mxu0
  %v298 = vadd.f32 %v54, %v297
  %v299 = vpop.f32.mrb[0].mxu0
  %v300 = vpop.f32.mrb[0].mxu0
  %v301 = vadd.f32 %v54, %v300
  %v302 = vpop.f32.mrb[0].mxu0
  %303 = vmatprep.mubr.bf16.mxu0 0
  %304 = vmatmul.mubr.bf16.gmra.mrb[0].mxu0 %v174
  %v305 = vpop.f32.mrb[0].mxu0
  %v306 = vadd.f32 %v54, %v305
  %v307 = vpop.f32.mrb[0].mxu0
  %v308 = vpop.f32.mrb[0].mxu0
  %v309 = vadd.f32 %v54, %v308
  %v310 = vpop.f32.mrb[0].mxu0
  %311 = vmatprep.mubr.bf16.mxu0 0
  %312 = vmatmul.mubr.bf16.gmra.mrb[0].mxu0 %v177
  %v313 = vpop.f32.mrb[0].mxu0
  %v314 = vadd.f32 %v54, %v313
  %v315 = vpop.f32.mrb[0].mxu0
  %v316 = vpop.f32.mrb[0].mxu0
  %v317 = vadd.f32 %v54, %v316
  %v318 = vpop.f32.mrb[0].mxu0
  %319 = vmatprep.mubr.bf16.mxu0 0
  %320 = vmatmul.mubr.bf16.gmra.mrb[0].mxu0 %v180
  %v321 = vpop.f32.mrb[0].mxu0
  %v322 = vadd.f32 %v54, %v321
  %v323 = vpop.f32.mrb[0].mxu0
  %v324 = vpop.f32.mrb[0].mxu0
  %v325 = vadd.f32 %v54, %v324
  %v326 = vpop.f32.mrb[0].mxu0
  %327 = vmatprep.mubr.bf16.mxu0 0
  %328 = vmatmul.mubr.bf16.gmra.mrb[0].mxu0 %v183
  %v329 = vpop.f32.mrb[0].mxu0
  %v330 = vadd.f32 %v54, %v329
  %v331 = vpop.f32.mrb[0].mxu0
  %v332 = vpop.f32.mrb[0].mxu0
  %v333 = vadd.f32 %v54, %v332
  %v334 = vpop.f32.mrb[0].mxu0
  %335 = vmatprep.mubr.bf16.mxu0 0
  %336 = vmatmul.mubr.bf16.gmra.mrb[0].mxu0 %v186
  %v337 = vpop.f32.mrb[0].mxu0
  %v338 = vadd.f32 %v54, %v337
  %v339 = vpop.f32.mrb[0].mxu0
  %v340 = vpop.f32.mrb[0].mxu0
  %v341 = vadd.f32 %v54, %v340
  %v342 = vpop.f32.mrb[0].mxu0
  %343 = vmatprep.mubr.bf16.mxu0 0
  %344 = vmatmul.mubr.bf16.gmra.mrb[0].mxu0 %v189
  %v345 = vpop.f32.mrb[0].mxu0
  %v346 = vadd.f32 %v54, %v345
  %v347 = vpop.f32.mrb[0].mxu0
  %v348 = vpop.f32.mrb[0].mxu0
  %v349 = vadd.f32 %v54, %v348
  %v350 = vpop.f32.mrb[0].mxu0
  %351 = vdwg.mxu0
  %v352 = vpack.c.bf16 %v229, %v226
  %v353 = vpack.c.bf16 %v237, %v234
  %v354 = vpack.c.bf16 %v245, %v242
  %v355 = vpack.c.bf16 %v253, %v250
  %v356 = vpack.c.bf16 %v261, %v258
  %v357 = vpack.c.bf16 %v269, %v266
  %v358 = vpack.c.bf16 %v277, %v274
  %v359 = vpack.c.bf16 %v285, %v282
  %v360 = vpack.c.bf16 %v293, %v290
  %v361 = vpack.c.bf16 %v301, %v298
  %v362 = vpack.c.bf16 %v309, %v306
  %v363 = vpack.c.bf16 %v317, %v314
  %v364 = vpack.c.bf16 %v325, %v322
  %v365 = vpack.c.bf16 %v333, %v330
  %v366 = vpack.c.bf16 %v341, %v338
  %v367 = vpack.c.bf16 %v349, %v346
  %v384 = vunpack.c.l.b16 %v352
  %v385 = vunpack.c.h.b16 %v352
  %v386 = vunpack.c.l.b16 %v353
  %v387 = vunpack.c.h.b16 %v353
  %v388 = vunpack.c.l.b16 %v354
  %v389 = vunpack.c.h.b16 %v354
  %v390 = vunpack.c.l.b16 %v355
  %v391 = vunpack.c.h.b16 %v355
  %v392 = vunpack.c.l.b16 %v356
  %v393 = vunpack.c.h.b16 %v356
  %v394 = vunpack.c.l.b16 %v357
  %v395 = vunpack.c.h.b16 %v357
  %v396 = vunpack.c.l.b16 %v358
  %v397 = vunpack.c.h.b16 %v358
  %v398 = vunpack.c.l.b16 %v359
  %v399 = vunpack.c.h.b16 %v359
  %v400 = vunpack.c.l.b16 %v360
  %v401 = vunpack.c.h.b16 %v360
  %v402 = vunpack.c.l.b16 %v361
  %v403 = vunpack.c.h.b16 %v361
  %v404 = vunpack.c.l.b16 %v362
  %v405 = vunpack.c.h.b16 %v362
  %v406 = vunpack.c.l.b16 %v363
  %v407 = vunpack.c.h.b16 %v363
  %v408 = vunpack.c.l.b16 %v364
  %v409 = vunpack.c.h.b16 %v364
  %v410 = vunpack.c.l.b16 %v365
  %v411 = vunpack.c.h.b16 %v365
  %v412 = vunpack.c.l.b16 %v366
  %v413 = vunpack.c.h.b16 %v366
  %v414 = vunpack.c.l.b16 %v367
  %v415 = vunpack.c.h.b16 %v367
  %v416 = vpack.c.b16 %v384, %v384
  %v417 = vpack.c.b16 %v385, %v385
  %v418 = vpack.c.b16 %v386, %v386
  %v419 = vpack.c.b16 %v387, %v387
  %v420 = vpack.c.b16 %v388, %v388
  %v421 = vpack.c.b16 %v389, %v389
  %v422 = vpack.c.b16 %v390, %v390
  %v423 = vpack.c.b16 %v391, %v391
  %v424 = vpack.c.b16 %v392, %v392
  %v425 = vpack.c.b16 %v393, %v393
  %v426 = vpack.c.b16 %v394, %v394
  %v427 = vpack.c.b16 %v395, %v395
  %v428 = vpack.c.b16 %v396, %v396
  %v429 = vpack.c.b16 %v397, %v397
  %v430 = vpack.c.b16 %v398, %v398
  %v431 = vpack.c.b16 %v399, %v399
  %v432 = vpack.c.b16 %v400, %v400
  %v433 = vpack.c.b16 %v401, %v401
  %v434 = vpack.c.b16 %v402, %v402
  %v435 = vpack.c.b16 %v403, %v403
  %v436 = vpack.c.b16 %v404, %v404
  %v437 = vpack.c.b16 %v405, %v405
  %v438 = vpack.c.b16 %v406, %v406
  %v439 = vpack.c.b16 %v407, %v407
  %v440 = vpack.c.b16 %v408, %v408
  %v441 = vpack.c.b16 %v409, %v409
  %v442 = vpack.c.b16 %v410, %v410
  %v443 = vpack.c.b16 %v411, %v411
  %v444 = vpack.c.b16 %v412, %v412
  %v445 = vpack.c.b16 %v413, %v413
  %v446 = vpack.c.b16 %v414, %v414
  %v447 = vpack.c.b16 %v415, %v415
  %480 = vst [vmem:[%s3] sm:$0xf] %v416
  %481 = vst [vmem:[%s3 + $0x4] sm:$0xf] %v417
  %482 = vst [vmem:[%s3 + $0x8] sm:$0xf] %v418
  %483 = vst [vmem:[%s3 + $0xc] sm:$0xf] %v419
  %484 = vst [vmem:[%s3 + $0x10] sm:$0xf] %v420
  %485 = vst [vmem:[%s3 + $0x14] sm:$0xf] %v421
  %486 = vst [vmem:[%s3 + $0x18] sm:$0xf] %v422
  %487 = vst [vmem:[%s3 + $0x1c] sm:$0xf] %v423
  %488 = vst [vmem:[%s3 + $0x20] sm:$0xf] %v424
  %489 = vst [vmem:[%s3 + $0x24] sm:$0xf] %v425
  %490 = vst [vmem:[%s3 + $0x28] sm:$0xf] %v426
  %491 = vst [vmem:[%s3 + $0x2c] sm:$0xf] %v427
  %492 = vst [vmem:[%s3 + $0x30] sm:$0xf] %v428
  %493 = vst [vmem:[%s3 + $0x34] sm:$0xf] %v429
  %494 = vst [vmem:[%s3 + $0x38] sm:$0xf] %v430
  %495 = vst [vmem:[%s3 + $0x3c] sm:$0xf] %v431
  %496 = vst [vmem:[%s3 + $0x40] sm:$0xf] %v432
  %497 = vst [vmem:[%s3 + $0x44] sm:$0xf] %v433
  %498 = vst [vmem:[%s3 + $0x48] sm:$0xf] %v434
  %499 = vst [vmem:[%s3 + $0x4c] sm:$0xf] %v435
  %500 = vst [vmem:[%s3 + $0x50] sm:$0xf] %v436
  %501 = vst [vmem:[%s3 + $0x54] sm:$0xf] %v437
  %502 = vst [vmem:[%s3 + $0x58] sm:$0xf] %v438
  %503 = vst [vmem:[%s3 + $0x5c] sm:$0xf] %v439
  %504 = vst [vmem:[%s3 + $0x60] sm:$0xf] %v440
  %505 = vst [vmem:[%s3 + $0x64] sm:$0xf] %v441
  %506 = vst [vmem:[%s3 + $0x68] sm:$0xf] %v442
  %507 = vst [vmem:[%s3 + $0x6c] sm:$0xf] %v443
  %508 = vst [vmem:[%s3 + $0x70] sm:$0xf] %v444
  %509 = vst [vmem:[%s3 + $0x74] sm:$0xf] %v445
  %510 = vst [vmem:[%s3 + $0x78] sm:$0xf] %v446
  %511 = vst [vmem:[%s3 + $0x7c] sm:$0xf] %v447
  // Predicated region
  $region14: #{makeup_gan_forward.106} parent=0 // pred_check
    _
  $region15: #{makeup_gan_forward.106} parent=0 // pred_check_branch
    %513 = sbr.rel (0) target = $region17
  $region16: #{makeup_gan_forward.106} parent=0 // pred_region
    _
  $region17: #{makeup_gan_forward.106} parent=0 // pred_fallthru
    _
  // Predicated region
  $region18: #{makeup_gan_forward.106} parent=0 // pred_check
    _
  $region19: #{makeup_gan_forward.106} parent=0 // pred_check_branch
    %515 = sbr.rel (0) target = $region21
  $region20: #{makeup_gan_forward.106} parent=0 // pred_region
    _
  $region21: #{makeup_gan_forward.106} parent=0 // pred_fallthru
    _

// kernel: makeup_gan_forward.116
$region0: #{makeup_gan_forward.116}
  #allocation0 [shape = 'u32[]', space=smem, size = 0x4, offset = 0x4, fixed_abs, tag = 'smem constant byte address 0x4 - core index']
  #allocation1 [shape = 'u32[144,128]{1,0:T(1,128)}', space=vmem, size = 0x12000, scoped, tag = 'internal scratch']
  %s0 = inlined_call_operand.vmem [shape: bf16[128,144], index: 0, kind: input, shape index: {}]
  %s1 = inlined_call_operand.vmem [shape: bf16[144,128], index: 1, kind: input, shape index: {}]
  %s2 = inlined_call_operand.vmem [shape: f32[1,128], index: 2, kind: input, shape index: {}]
  %s3 = inlined_call_operand.vmem [shape: bf16[128,128], index: 3, kind: output, shape index: {}]
  %s4 = sld [smem:[#allocation0]]
  $region22: #{makeup_gan_forward.116} parent=0
    _
  %s6 = ssub.s32 1, %s4
  %s7 = scalar_select 0, %s6, %s4
  // Predicated region
  $region2: #{makeup_gan_forward.116} parent=0 // pred_check
    _
  $region3: #{makeup_gan_forward.116} parent=0 // pred_check_branch
    %9 = sbr.rel (0) target = $region5
  $region4: #{makeup_gan_forward.116} parent=0 // pred_region
    _
  $region5: #{makeup_gan_forward.116} parent=0 // pred_fallthru
    _
  // Predicated region
  $region6: #{makeup_gan_forward.116} parent=0 // pred_check
    _
  $region7: #{makeup_gan_forward.116} parent=0 // pred_check_branch
    %11 = sbr.rel (0) target = $region9
  $region8: #{makeup_gan_forward.116} parent=0 // pred_region
    _
  $region9: #{makeup_gan_forward.116} parent=0 // pred_fallthru
    _
  // Predicated region
  $region10: #{makeup_gan_forward.116} parent=0 // pred_check
    _
  $region11: #{makeup_gan_forward.116} parent=0 // pred_check_branch
    %13 = sbr.rel (0) target = $region13
  $region12: #{makeup_gan_forward.116} parent=0 // pred_region
    _
  $region13: #{makeup_gan_forward.116} parent=0 // pred_fallthru
    _
  %v15 = vld [vmem:[%s0] sm:$0xff]
  %v16 = vld [vmem:[%s0 + $0x8] sm:$0xff]
  %v17 = vld [vmem:[%s0 + $0x10] sm:$0xff]
  %v18 = vld [vmem:[%s0 + $0x18] sm:$0xff]
  %v19 = vld [vmem:[%s0 + $0x20] sm:$0xff]
  %v20 = vld [vmem:[%s0 + $0x28] sm:$0xff]
  %v21 = vld [vmem:[%s0 + $0x30] sm:$0xff]
  %v22 = vld [vmem:[%s0 + $0x38] sm:$0xff]
  %v23 = vld [vmem:[%s0 + $0x40] sm:$0xff]
  %v24 = vld [vmem:[%s0 + $0x48] sm:$0xff]
  %v25 = vld [vmem:[%s0 + $0x50] sm:$0xff]
  %v26 = vld [vmem:[%s0 + $0x58] sm:$0xff]
  %v27 = vld [vmem:[%s0 + $0x60] sm:$0xff]
  %v28 = vld [vmem:[%s0 + $0x68] sm:$0xff]
  %v29 = vld [vmem:[%s0 + $0x70] sm:$0xff]
  %v30 = vld [vmem:[%s0 + $0x78] sm:$0xff]
  %v31 = vld [vmem:[%s1] sm:$0xf]
  %v32 = vld [vmem:[%s1 + $0x4] sm:$0xf]
  %v33 = vld [vmem:[%s1 + $0x8] sm:$0xf]
  %v34 = vld [vmem:[%s1 + $0xc] sm:$0xf]
  %v35 = vld [vmem:[%s1 + $0x10] sm:$0xf]
  %v36 = vld [vmem:[%s1 + $0x14] sm:$0xf]
  %v37 = vld [vmem:[%s1 + $0x18] sm:$0xf]
  %v38 = vld [vmem:[%s1 + $0x1c] sm:$0xf]
  %v39 = vld [vmem:[%s1 + $0x20] sm:$0xf]
  %v40 = vld [vmem:[%s1 + $0x24] sm:$0xf]
  %v41 = vld [vmem:[%s1 + $0x28] sm:$0xf]
  %v42 = vld [vmem:[%s1 + $0x2c] sm:$0xf]
  %v43 = vld [vmem:[%s1 + $0x30] sm:$0xf]
  %v44 = vld [vmem:[%s1 + $0x34] sm:$0xf]
  %v45 = vld [vmem:[%s1 + $0x38] sm:$0xf]
  %v46 = vld [vmem:[%s1 + $0x3c] sm:$0xf]
  %v47 = vld [vmem:[%s1 + $0x40] sm:$0xf]
  %v48 = vld [vmem:[%s1 + $0x44] sm:$0xf]
  %v49 = vld [vmem:[%s2] sm:$0x1]
  %v51 = vlaneseq
  %v52 = vshrl.u32 %v51, 7
  %v53 = vsub.s32 0, %v52
  %v54 = vrot.slane %v49, %v53
  %v72 = vunpack.c.l.b16 %v15
  %v73 = vunpack.c.h.b16 %v15
  %v74 = vunpack.c.l.b16 %v16
  %v75 = vunpack.c.h.b16 %v16
  %v76 = vunpack.c.l.b16 %v17
  %v77 = vunpack.c.h.b16 %v17
  %v78 = vunpack.c.l.b16 %v18
  %v79 = vunpack.c.h.b16 %v18
  %v80 = vunpack.c.l.b16 %v19
  %v81 = vunpack.c.h.b16 %v19
  %v82 = vunpack.c.l.b16 %v20
  %v83 = vunpack.c.h.b16 %v20
  %v84 = vunpack.c.l.b16 %v21
  %v85 = vunpack.c.h.b16 %v21
  %v86 = vunpack.c.l.b16 %v22
  %v87 = vunpack.c.h.b16 %v22
  %v88 = vunpack.c.l.b16 %v23
  %v89 = vunpack.c.h.b16 %v23
  %v90 = vunpack.c.l.b16 %v24
  %v91 = vunpack.c.h.b16 %v24
  %v92 = vunpack.c.l.b16 %v25
  %v93 = vunpack.c.h.b16 %v25
  %v94 = vunpack.c.l.b16 %v26
  %v95 = vunpack.c.h.b16 %v26
  %v96 = vunpack.c.l.b16 %v27
  %v97 = vunpack.c.h.b16 %v27
  %v98 = vunpack.c.l.b16 %v28
  %v99 = vunpack.c.h.b16 %v28
  %v100 = vunpack.c.l.b16 %v29
  %v101 = vunpack.c.h.b16 %v29
  %v102 = vunpack.c.l.b16 %v30
  %v103 = vunpack.c.h.b16 %v30
  %v104 = vpack.c.b16 %v74, %v72
  %v105 = vpack.c.b16 %v75, %v73
  %v106 = vpack.c.b16 %v78, %v76
  %v107 = vpack.c.b16 %v79, %v77
  %v108 = vpack.c.b16 %v82, %v80
  %v109 = vpack.c.b16 %v83, %v81
  %v110 = vpack.c.b16 %v86, %v84
  %v111 = vpack.c.b16 %v87, %v85
  %v112 = vpack.c.b16 %v90, %v88
  %v113 = vpack.c.b16 %v91, %v89
  %v114 = vpack.c.b16 %v94, %v92
  %v115 = vpack.c.b16 %v95, %v93
  %v116 = vpack.c.b16 %v98, %v96
  %v117 = vpack.c.b16 %v99, %v97
  %v118 = vpack.c.b16 %v102, %v100
  %v119 = vpack.c.b16 %v103, %v101
  %v146 = vunpack.c.l.b16 %v31
  %v147 = vunpack.c.l.b16 %v32
  %v148 = vunpack.c.l.b16 %v33
  %v149 = vunpack.c.l.b16 %v34
  %v150 = vunpack.c.l.b16 %v35
  %v151 = vunpack.c.l.b16 %v36
  %v152 = vunpack.c.l.b16 %v37
  %v153 = vunpack.c.l.b16 %v38
  %v154 = vunpack.c.l.b16 %v39
  %v155 = vunpack.c.l.b16 %v40
  %v156 = vunpack.c.l.b16 %v41
  %v157 = vunpack.c.l.b16 %v42
  %v158 = vunpack.c.l.b16 %v43
  %v159 = vunpack.c.l.b16 %v44
  %v160 = vunpack.c.l.b16 %v45
  %v161 = vunpack.c.l.b16 %v46
  %v162 = vunpack.c.l.b16 %v47
  %v163 = vunpack.c.l.b16 %v48
  %v164 = vpack.c.b16 %v147, %v146
  %v165 = vpack.c.b16 %v149, %v148
  %v166 = vpack.c.b16 %v151, %v150
  %v167 = vpack.c.b16 %v153, %v152
  %v168 = vpack.c.b16 %v155, %v154
  %v169 = vpack.c.b16 %v157, %v156
  %v170 = vpack.c.b16 %v159, %v158
  %v171 = vpack.c.b16 %v161, %v160
  %v172 = vpack.c.b16 %v163, %v162
  %vm182 = vcmask 130048
  %v184 = vsel %vm182, %v105, 0
  %v187 = vsel %vm182, %v107, 0
  %v190 = vsel %vm182, %v109, 0
  %v193 = vsel %vm182, %v111, 0
  %v196 = vsel %vm182, %v113, 0
  %v199 = vsel %vm182, %v115, 0
  %v202 = vsel %vm182, %v117, 0
  %v205 = vsel %vm182, %v119, 0
  %207 = vmatprep.subr.bf16.mxu0 0
  %208 = vmatpush1.bf16.msra.mxu0 %v164
  %209 = vmatprep.subr.bf16.mxu0 0
  %210 = vmatpush1.bf16.msra.mxu0 %v165
  %211 = vmatprep.subr.bf16.mxu0 0
  %212 = vmatpush1.bf16.msra.mxu0 %v166
  %213 = vmatprep.subr.bf16.mxu0 0
  %214 = vmatpush1.bf16.msra.mxu0 %v167
  %215 = vmatprep.subr.bf16.mxu0 0
  %216 = vmatpush1.bf16.msra.mxu0 %v168
  %217 = vmatprep.subr.bf16.mxu0 0
  %218 = vmatpush1.bf16.msra.mxu0 %v169
  %219 = vmatprep.subr.bf16.mxu0 0
  %220 = vmatpush1.bf16.msra.mxu0 %v170
  %221 = vmatprep.subr.bf16.mxu0 0
  %222 = vmatpush1.bf16.msra.mxu0 %v171
  %223 = vmatprep.subr.bf16.mxu0 0
  %224 = vmatpush1.bf16.msra.mxu0 %v172
  %225 = vmatprep.subr.bf16.mxu0 0
  %226 = vmatpush1.bf16.msra.mxu0 0
  %227 = vmatprep.subr.bf16.mxu0 0
  %228 = vmatpush1.bf16.msra.mxu0 0
  %229 = vmatprep.subr.bf16.mxu0 0
  %230 = vmatpush1.bf16.msra.mxu0 0
  %231 = vmatprep.subr.bf16.mxu0 0
  %232 = vmatpush1.bf16.msra.mxu0 0
  %233 = vmatprep.subr.bf16.mxu0 0
  %234 = vmatpush1.bf16.msra.mxu0 0
  %235 = vmatprep.subr.bf16.mxu0 0
  %236 = vmatpush1.bf16.msra.mxu0 0
  %237 = vmatprep.subr.bf16.mxu0 0
  %238 = vmatpush1.bf16.msra.mxu0 0
  %239 = vmatprep.mubr.bf16.mxu0 %v184
  %240 = vmatmul.mubr.bf16.gmra.mrb[0].mxu0 %v104
  %v241 = vpop.f32.mrb[0].mxu0
  %v242 = vadd.f32 %v54, %v241
  %v243 = vpop.f32.mrb[0].mxu0
  %v244 = vpop.f32.mrb[0].mxu0
  %v245 = vadd.f32 %v54, %v244
  %v246 = vpop.f32.mrb[0].mxu0
  %247 = vmatprep.mubr.bf16.mxu0 %v187
  %248 = vmatmul.mubr.bf16.gmra.mrb[0].mxu0 %v106
  %v249 = vpop.f32.mrb[0].mxu0
  %v250 = vadd.f32 %v54, %v249
  %v251 = vpop.f32.mrb[0].mxu0
  %v252 = vpop.f32.mrb[0].mxu0
  %v253 = vadd.f32 %v54, %v252
  %v254 = vpop.f32.mrb[0].mxu0
  %255 = vmatprep.mubr.bf16.mxu0 %v190
  %256 = vmatmul.mubr.bf16.gmra.mrb[0].mxu0 %v108
  %v257 = vpop.f32.mrb[0].mxu0
  %v258 = vadd.f32 %v54, %v257
  %v259 = vpop.f32.mrb[0].mxu0
  %v260 = vpop.f32.mrb[0].mxu0
  %v261 = vadd.f32 %v54, %v260
  %v262 = vpop.f32.mrb[0].mxu0
  %263 = vmatprep.mubr.bf16.mxu0 %v193
  %264 = vmatmul.mubr.bf16.gmra.mrb[0].mxu0 %v110
  %v265 = vpop.f32.mrb[0].mxu0
  %v266 = vadd.f32 %v54, %v265
  %v267 = vpop.f32.mrb[0].mxu0
  %v268 = vpop.f32.mrb[0].mxu0
  %v269 = vadd.f32 %v54, %v268
  %v270 = vpop.f32.mrb[0].mxu0
  %271 = vmatprep.mubr.bf16.mxu0 %v196
  %272 = vmatmul.mubr.bf16.gmra.mrb[0].mxu0 %v112
  %v273 = vpop.f32.mrb[0].mxu0
  %v274 = vadd.f32 %v54, %v273
  %v275 = vpop.f32.mrb[0].mxu0
  %v276 = vpop.f32.mrb[0].mxu0
  %v277 = vadd.f32 %v54, %v276
  %v278 = vpop.f32.mrb[0].mxu0
  %279 = vmatprep.mubr.bf16.mxu0 %v199
  %280 = vmatmul.mubr.bf16.gmra.mrb[0].mxu0 %v114
  %v281 = vpop.f32.mrb[0].mxu0
  %v282 = vadd.f32 %v54, %v281
  %v283 = vpop.f32.mrb[0].mxu0
  %v284 = vpop.f32.mrb[0].mxu0
  %v285 = vadd.f32 %v54, %v284
  %v286 = vpop.f32.mrb[0].mxu0
  %287 = vmatprep.mubr.bf16.mxu0 %v202
  %288 = vmatmul.mubr.bf16.gmra.mrb[0].mxu0 %v116
  %v289 = vpop.f32.mrb[0].mxu0
  %v290 = vadd.f32 %v54, %v289
  %v291 = vpop.f32.mrb[0].mxu0
  %v292 = vpop.f32.mrb[0].mxu0
  %v293 = vadd.f32 %v54, %v292
  %v294 = vpop.f32.mrb[0].mxu0
  %295 = vmatprep.mubr.bf16.mxu0 %v205
  %296 = vmatmul.mubr.bf16.gmra.mrb[0].mxu0 %v118
  %v297 = vpop.f32.mrb[0].mxu0
  %v298 = vadd.f32 %v54, %v297
  %v299 = vpop.f32.mrb[0].mxu0
  %v300 = vpop.f32.mrb[0].mxu0
  %v301 = vadd.f32 %v54, %v300
  %v302 = vpop.f32.mrb[0].mxu0
  %303 = vdwg.mxu0
  %v304 = vmax.f32 %v242, 0.0
  %v305 = vmax.f32 %v245, 0.0
  %v306 = vmax.f32 %v250, 0.0
  %v307 = vmax.f32 %v253, 0.0
  %v308 = vmax.f32 %v258, 0.0
  %v309 = vmax.f32 %v261, 0.0
  %v310 = vmax.f32 %v266, 0.0
  %v311 = vmax.f32 %v269, 0.0
  %v312 = vmax.f32 %v274, 0.0
  %v313 = vmax.f32 %v277, 0.0
  %v314 = vmax.f32 %v282, 0.0
  %v315 = vmax.f32 %v285, 0.0
  %v316 = vmax.f32 %v290, 0.0
  %v317 = vmax.f32 %v293, 0.0
  %v318 = vmax.f32 %v298, 0.0
  %v319 = vmax.f32 %v301, 0.0
  %v320 = vpack.c.bf16 %v305, %v304
  %v321 = vpack.c.bf16 %v307, %v306
  %v322 = vpack.c.bf16 %v309, %v308
  %v323 = vpack.c.bf16 %v311, %v310
  %v324 = vpack.c.bf16 %v313, %v312
  %v325 = vpack.c.bf16 %v315, %v314
  %v326 = vpack.c.bf16 %v317, %v316
  %v327 = vpack.c.bf16 %v319, %v318
  %v336 = vunpack.c.l.b16 %v320
  %v337 = vunpack.c.h.b16 %v320
  %v338 = vunpack.c.l.b16 %v321
  %v339 = vunpack.c.h.b16 %v321
  %v340 = vunpack.c.l.b16 %v322
  %v341 = vunpack.c.h.b16 %v322
  %v342 = vunpack.c.l.b16 %v323
  %v343 = vunpack.c.h.b16 %v323
  %v344 = vunpack.c.l.b16 %v324
  %v345 = vunpack.c.h.b16 %v324
  %v346 = vunpack.c.l.b16 %v325
  %v347 = vunpack.c.h.b16 %v325
  %v348 = vunpack.c.l.b16 %v326
  %v349 = vunpack.c.h.b16 %v326
  %v350 = vunpack.c.l.b16 %v327
  %v351 = vunpack.c.h.b16 %v327
  %v352 = vpack.c.b16 %v336, %v336
  %v353 = vpack.c.b16 %v337, %v337
  %v354 = vpack.c.b16 %v338, %v338
  %v355 = vpack.c.b16 %v339, %v339
  %v356 = vpack.c.b16 %v340, %v340
  %v357 = vpack.c.b16 %v341, %v341
  %v358 = vpack.c.b16 %v342, %v342
  %v359 = vpack.c.b16 %v343, %v343
  %v360 = vpack.c.b16 %v344, %v344
  %v361 = vpack.c.b16 %v345, %v345
  %v362 = vpack.c.b16 %v346, %v346
  %v363 = vpack.c.b16 %v347, %v347
  %v364 = vpack.c.b16 %v348, %v348
  %v365 = vpack.c.b16 %v349, %v349
  %v366 = vpack.c.b16 %v350, %v350
  %v367 = vpack.c.b16 %v351, %v351
  %384 = vst [vmem:[%s3] sm:$0xf] %v352
  %385 = vst [vmem:[%s3 + $0x4] sm:$0xf] %v353
  %386 = vst [vmem:[%s3 + $0x8] sm:$0xf] %v354
  %387 = vst [vmem:[%s3 + $0xc] sm:$0xf] %v355
  %388 = vst [vmem:[%s3 + $0x10] sm:$0xf] %v356
  %389 = vst [vmem:[%s3 + $0x14] sm:$0xf] %v357
  %390 = vst [vmem:[%s3 + $0x18] sm:$0xf] %v358
  %391 = vst [vmem:[%s3 + $0x1c] sm:$0xf] %v359
  %392 = vst [vmem:[%s3 + $0x20] sm:$0xf] %v360
  %393 = vst [vmem:[%s3 + $0x24] sm:$0xf] %v361
  %394 = vst [vmem:[%s3 + $0x28] sm:$0xf] %v362
  %395 = vst [vmem:[%s3 + $0x2c] sm:$0xf] %v363
  %396 = vst [vmem:[%s3 + $0x30] sm:$0xf] %v364
  %397 = vst [vmem:[%s3 + $0x34] sm:$0xf] %v365
  %398 = vst [vmem:[%s3 + $0x38] sm:$0xf] %v366
  %399 = vst [vmem:[%s3 + $0x3c] sm:$0xf] %v367
  // Predicated region
  $region14: #{makeup_gan_forward.116} parent=0 // pred_check
    _
  $region15: #{makeup_gan_forward.116} parent=0 // pred_check_branch
    %401 = sbr.rel (0) target = $region17
  $region16: #{makeup_gan_forward.116} parent=0 // pred_region
    _
  $region17: #{makeup_gan_forward.116} parent=0 // pred_fallthru
    _
  // Predicated region
  $region18: #{makeup_gan_forward.116} parent=0 // pred_check
    _
  $region19: #{makeup_gan_forward.116} parent=0 // pred_check_branch
    %403 = sbr.rel (0) target = $region21
  $region20: #{makeup_gan_forward.116} parent=0 // pred_region
    _
  $region21: #{makeup_gan_forward.116} parent=0 // pred_fallthru
    _

// kernel: makeup_gan_forward.110
$region0: #{makeup_gan_forward.110}
  #allocation0 [shape = 'u32[]', space=smem, size = 0x4, offset = 0x4, fixed_abs, tag = 'smem constant byte address 0x4 - core index']
  #allocation1 [shape = 'u32[144,128]{1,0:T(1,128)}', space=vmem, size = 0x12000, scoped, tag = 'internal scratch']
  %s0 = inlined_call_operand.vmem [shape: bf16[512,80], index: 0, kind: input, shape index: {}]
  %s1 = inlined_call_operand.vmem [shape: bf16[80,128], index: 1, kind: input, shape index: {}]
  %s2 = inlined_call_operand.vmem [shape: f32[1,128], index: 2, kind: input, shape index: {}]
  %s3 = inlined_call_operand.vmem [shape: f32[512,128], index: 3, kind: output, shape index: {}]
  %s4 = sld [smem:[#allocation0]]
  $region45: #{makeup_gan_forward.110} parent=0
    _
  %s6 = ssub.s32 1, %s4
  %s7 = scalar_select 0, %s6, %s4
  loop: start=0, step=1, limit=4
  $region2: #{makeup_gan_forward.110} parent=0 // loop_pre_header
    _
  $region3: #{makeup_gan_forward.110} parent=0 // loop_header
    %s9 = sphi 0, %s13
    %p10 = scmp.ge.s32.totalorder %s9, 4
    %s16 = sphi 0, %s28
    %s17 = sphi 0, %s24
    %s18 = sphi 0, %s16
    %s19 = sphi 0, %s17
    %s20 = sphi 0, %s18
    %s21 = sphi 0, %s19
    %s31 = sphi 0, %s33
    %s34 = sphi 0, %s31
    %s35 = sphi 0, %s34
    %s51 = sphi 0, %s35
    %s57 = sphi 0, %s59
    %s60 = sphi 0, %s57
    %s61 = sphi 0, %s60
    %s77 = sphi 0, %s61
    %s83 = sphi 0, %s85
    %s86 = sphi 0, %s83
    %s87 = sphi 0, %s86
    %s103 = sphi 0, %s87
    %s111 = sphi 0, %s113
    %s114 = sphi 0, %s111
    %s115 = sphi 0, %s114
    %s131 = sphi 0, %s115
  $region4: #{makeup_gan_forward.110} parent=0 // loop_header_branch
    %12 = sbr.rel (%p10) target = $region8
  $region5: #{makeup_gan_forward.110} parent=0 // loop_body
    %s14 = ssub.s32 %s9, 1
    %s15 = ssub.s32 %s9, 2
    %s22 = sadd.s32 1, %s17
    %p23 = scmp.ge.s32.totalorder %s22, 1
    %s24 = scalar_select %p23, 0, %s22
    %s25 = sadd.s32 1, %s16
    %s26 = scalar_select %p23, %s25, %s16
    %p27 = scmp.ge.s32.totalorder %s26, 2
    %s28 = scalar_select %p27, 0, %s26
    %s29 = ssub.s32 %s16, %s28
    %p30 = scmp.eq.s32.totalorder %s29, 0
    %s32 = sadd.s32 %s31, 1
    %s33 = scalar_select %p30, %s31, %s32
    %p36 = pneg %p30
    %p37 = scmp.eq.s32.totalorder %s9, 1
    %p38 = por %p36, %p37
    %p39 = scmp.ne.s32.totalorder %s31, %s34
    %p40 = scmp.eq.s32.totalorder %s9, 0
    %p41 = por %p39, %p40
    %p42 = scmp.ne.s32.totalorder %s31, %s34
    %p43 = scmp.eq.s32.totalorder %s14, 1
    %p44 = por %p42, %p43
    %p45 = scmp.ne.s32.totalorder %s34, %s35
    %p46 = scmp.eq.s32.totalorder %s14, 0
    %p47 = por %p45, %p46
    %p48 = scmp.ne.s32.totalorder %s34, %s35
    %p49 = scmp.eq.s32.totalorder %s15, 1
    %p50 = por %p48, %p49
    %p52 = scmp.ne.s32.totalorder %s35, %s51
    %p53 = scmp.eq.s32.totalorder %s15, 0
    %p54 = por %p52, %p53
    %s55 = ssub.s32 %s17, %s24
    %p56 = scmp.eq.s32.totalorder %s55, 0
    %s58 = sadd.s32 %s57, 1
    %s59 = scalar_select %p56, %s57, %s58
    %p62 = pneg %p56
    %p63 = scmp.eq.s32.totalorder %s9, 1
    %p64 = por %p62, %p63
    %p65 = scmp.ne.s32.totalorder %s57, %s60
    %p66 = scmp.eq.s32.totalorder %s9, 0
    %p67 = por %p65, %p66
    %p68 = scmp.ne.s32.totalorder %s57, %s60
    %p69 = scmp.eq.s32.totalorder %s14, 1
    %p70 = por %p68, %p69
    %p71 = scmp.ne.s32.totalorder %s60, %s61
    %p72 = scmp.eq.s32.totalorder %s14, 0
    %p73 = por %p71, %p72
    %p74 = scmp.ne.s32.totalorder %s60, %s61
    %p75 = scmp.eq.s32.totalorder %s15, 1
    %p76 = por %p74, %p75
    %p78 = scmp.ne.s32.totalorder %s61, %s77
    %p79 = scmp.eq.s32.totalorder %s15, 0
    %p80 = por %p78, %p79
    %s81 = ssub.s32 %s17, %s24
    %p82 = scmp.eq.s32.totalorder %s81, 0
    %s84 = sadd.s32 %s83, 1
    %s85 = scalar_select %p82, %s83, %s84
    %p88 = pneg %p82
    %p89 = scmp.eq.s32.totalorder %s9, 1
    %p90 = por %p88, %p89
    %p91 = scmp.ne.s32.totalorder %s83, %s86
    %p92 = scmp.eq.s32.totalorder %s9, 0
    %p93 = por %p91, %p92
    %p94 = scmp.ne.s32.totalorder %s83, %s86
    %p95 = scmp.eq.s32.totalorder %s14, 1
    %p96 = por %p94, %p95
    %p97 = scmp.ne.s32.totalorder %s86, %s87
    %p98 = scmp.eq.s32.totalorder %s14, 0
    %p99 = por %p97, %p98
    %p100 = scmp.ne.s32.totalorder %s86, %s87
    %p101 = scmp.eq.s32.totalorder %s15, 1
    %p102 = por %p100, %p101
    %p104 = scmp.ne.s32.totalorder %s87, %s103
    %p105 = scmp.eq.s32.totalorder %s15, 0
    %p106 = por %p104, %p105
    %s107 = ssub.s32 %s16, %s28
    %s108 = ssub.s32 %s17, %s24
    %s109 = sor.u32 %s107, %s108
    %p110 = scmp.eq.s32.totalorder %s109, 0
    %s112 = sadd.s32 %s111, 1
    %s113 = scalar_select %p110, %s111, %s112
    %p116 = pneg %p110
    %p117 = scmp.eq.s32.totalorder %s9, 1
    %p118 = por %p116, %p117
    %p119 = scmp.ne.s32.totalorder %s111, %s114
    %p120 = scmp.eq.s32.totalorder %s9, 0
    %p121 = por %p119, %p120
    %p122 = scmp.ne.s32.totalorder %s111, %s114
    %p123 = scmp.eq.s32.totalorder %s14, 1
    %p124 = por %p122, %p123
    %p125 = scmp.ne.s32.totalorder %s114, %s115
    %p126 = scmp.eq.s32.totalorder %s14, 0
    %p127 = por %p125, %p126
    %p128 = scmp.ne.s32.totalorder %s114, %s115
    %p129 = scmp.eq.s32.totalorder %s15, 1
    %p130 = por %p128, %p129
    %p132 = scmp.ne.s32.totalorder %s115, %s131
    %p133 = scmp.eq.s32.totalorder %s15, 0
    %p134 = por %p132, %p133
    %p135 = scmp.le.s32.totalorder 1, %s9
    %p136 = scmp.lt.s32.totalorder %s9, 3
    %p137 = pnand %p135, %p136
    %p138 = pneg %p137
    // Predicated region
    $region9: #{makeup_gan_forward.110} parent=5 // pred_check
      _
    $region10: #{makeup_gan_forward.110} parent=5 // pred_check_branch
      %140 = sbr.rel (%p137) target = $region12
    $region11: #{makeup_gan_forward.110} parent=5 // pred_region
      %s141 = ssub.s32 %s9, 1
      // Predicated region
      $region13: #{makeup_gan_forward.110} parent=11 // pred_check
        %p142 = pneg %p73
      $region14: #{makeup_gan_forward.110} parent=11 // pred_check_branch
        %144 = sbr.rel (%p142) target = $region16
      $region15: #{makeup_gan_forward.110} parent=11 // pred_region
        %p145 = scmp.lt.s32.totalorder %s19, 0
        %s146 = scalar_select %p145, %s19, 0
        %s147 = smul.addr %s146, 4
        %s148 = scalar_lea.vmem %s1, %s147
      $region16: #{makeup_gan_forward.110} parent=11 // pred_fallthru
        _
      // Predicated region
      $region17: #{makeup_gan_forward.110} parent=11 // pred_check
        %p149 = pneg %p99
      $region18: #{makeup_gan_forward.110} parent=11 // pred_check_branch
        %151 = sbr.rel (%p149) target = $region20
      $region19: #{makeup_gan_forward.110} parent=11 // pred_region
        %p152 = scmp.lt.s32.totalorder %s19, 0
        %s153 = scalar_select %p152, %s19, 0
        %s154 = scalar_lea.vmem %s2, %s153
      $region20: #{makeup_gan_forward.110} parent=11 // pred_fallthru
        _
    $region12: #{makeup_gan_forward.110} parent=5 // pred_fallthru
      _
    %p155 = scmp.lt.s32.totalorder %s9, 2
    // Predicated region
    $region21: #{makeup_gan_forward.110} parent=5 // pred_check
      %p156 = pneg %p155
    $region22: #{makeup_gan_forward.110} parent=5 // pred_check_branch
      %158 = sbr.rel (%p156) target = $region24
    $region23: #{makeup_gan_forward.110} parent=5 // pred_region
      // Predicated region
      $region25: #{makeup_gan_forward.110} parent=23 // pred_check
        %p159 = pneg %p41
      $region26: #{makeup_gan_forward.110} parent=23 // pred_check_branch
        %161 = sbr.rel (%p159) target = $region28
      $region27: #{makeup_gan_forward.110} parent=23 // pred_region
        %s162 = smul.u32 32, %s16
        %p163 = scmp.lt.s32.totalorder %s162, 63
        %s164 = scalar_select %p163, %s162, 63
        %s165 = smul.addr %s164, 4
        %s166 = scalar_lea.vmem %s0, %s165
        %s167 = smul.u32 32, %s16
      $region28: #{makeup_gan_forward.110} parent=23 // pred_fallthru
        _
    $region24: #{makeup_gan_forward.110} parent=5 // pred_fallthru
      _
    %p168 = scmp.le.s32.totalorder 1, %s9
    %p169 = scmp.lt.s32.totalorder %s9, 3
    %p170 = pnand %p168, %p169
    %p171 = pneg %p170
    // Predicated region
    $region29: #{makeup_gan_forward.110} parent=5 // pred_check
      _
    $region30: #{makeup_gan_forward.110} parent=5 // pred_check_branch
      %173 = sbr.rel (%p170) target = $region32
    $region31: #{makeup_gan_forward.110} parent=5 // pred_region
      %s174 = ssub.s32 %s9, 1
      %s175 = smul.u32 32, %s18
      %p176 = scmp.lt.s32.totalorder %s175, 63
      %s177 = scalar_select %p176, %s175, 63
      %s178 = smul.addr %s177, 4
      %s179 = scalar_lea.vmem %s0, %s178
      %p180 = pneg %p47
      %p181 = pneg %p44
      %p182 = scmp.lt.s32.totalorder %s19, 0
      %s183 = scalar_select %p182, %s19, 0
      %s184 = smul.addr %s183, 4
      %s185 = scalar_lea.vmem %s1, %s184
      %p186 = pneg %p73
      %p187 = pneg %p70
      %p188 = scmp.lt.s32.totalorder %s19, 0
      %s189 = scalar_select %p188, %s19, 0
      %s190 = scalar_lea.vmem %s2, %s189
      %p191 = pneg %p99
      %p192 = pneg %p96
      %p193 = pneg %p127
      %p194 = pneg %p124
      %s195 = smul.u32 32, %s18
      %p196 = scmp.lt.s32.totalorder %s195, 63
      %s197 = scalar_select %p196, %s195, 63
      %p198 = scmp.lt.s32.totalorder %s19, 0
      %s199 = scalar_select %p198, %s19, 0
      %s200 = sadd.s32 %s199, %s197
      %s201 = smul.addr %s200, 8
      %s202 = scalar_lea.vmem %s3, %s201
      %s203 = smul.u32 32, %s18
      %p204 = scmp.lt.s32.totalorder %s203, 63
      %s205 = scalar_select %p204, %s203, 63
      %s206 = smul.addr %s205, 4
      %s207 = scalar_lea.vmem %s0, %s206
      %s208 = smul.u32 32, %s18
      %p209 = scmp.lt.s32.totalorder %s19, 0
      %s210 = scalar_select %p209, %s19, 0
      %s211 = smul.addr %s210, 4
      %s212 = scalar_lea.vmem %s1, %s211
      %p213 = scmp.lt.s32.totalorder %s19, 0
      %s214 = scalar_select %p213, %s19, 0
      %s215 = scalar_lea.vmem %s2, %s214
      %s216 = smul.u32 32, %s18
      %p217 = scmp.lt.s32.totalorder %s216, 63
      %s218 = scalar_select %p217, %s216, 63
      %p219 = scmp.lt.s32.totalorder %s19, 0
      %s220 = scalar_select %p219, %s19, 0
      %s221 = sadd.s32 %s220, %s218
      %s222 = smul.addr %s221, 8
      %s223 = scalar_lea.vmem %s3, %s222
      %s224 = smul.u32 32, %s18
      %v226 = vld [vmem:[%s207] sm:$0xf]
      %v227 = vld [vmem:[%s207 + $0x4] sm:$0xf]
      %v228 = vld [vmem:[%s207 + $0x8] sm:$0xf]
      %v229 = vld [vmem:[%s207 + $0xc] sm:$0xf]
      %v230 = vld [vmem:[%s207 + $0x10] sm:$0xf]
      %v231 = vld [vmem:[%s207 + $0x14] sm:$0xf]
      %v232 = vld [vmem:[%s207 + $0x18] sm:$0xf]
      %v233 = vld [vmem:[%s207 + $0x1c] sm:$0xf]
      %v234 = vld [vmem:[%s207 + $0x20] sm:$0xf]
      %v235 = vld [vmem:[%s207 + $0x24] sm:$0xf]
      %v236 = vld [vmem:[%s207 + $0x28] sm:$0xf]
      %v237 = vld [vmem:[%s207 + $0x2c] sm:$0xf]
      %v238 = vld [vmem:[%s207 + $0x30] sm:$0xf]
      %v239 = vld [vmem:[%s207 + $0x34] sm:$0xf]
      %v240 = vld [vmem:[%s207 + $0x38] sm:$0xf]
      %v241 = vld [vmem:[%s207 + $0x3c] sm:$0xf]
      %v242 = vld [vmem:[%s207 + $0x40] sm:$0xf]
      %v243 = vld [vmem:[%s207 + $0x44] sm:$0xf]
      %v244 = vld [vmem:[%s207 + $0x48] sm:$0xf]
      %v245 = vld [vmem:[%s207 + $0x4c] sm:$0xf]
      %v246 = vld [vmem:[%s207 + $0x50] sm:$0xf]
      %v247 = vld [vmem:[%s207 + $0x54] sm:$0xf]
      %v248 = vld [vmem:[%s207 + $0x58] sm:$0xf]
      %v249 = vld [vmem:[%s207 + $0x5c] sm:$0xf]
      %v250 = vld [vmem:[%s207 + $0x60] sm:$0xf]
      %v251 = vld [vmem:[%s207 + $0x64] sm:$0xf]
      %v252 = vld [vmem:[%s207 + $0x68] sm:$0xf]
      %v253 = vld [vmem:[%s207 + $0x6c] sm:$0xf]
      %v254 = vld [vmem:[%s207 + $0x70] sm:$0xf]
      %v255 = vld [vmem:[%s207 + $0x74] sm:$0xf]
      %v256 = vld [vmem:[%s207 + $0x78] sm:$0xf]
      %v257 = vld [vmem:[%s207 + $0x7c] sm:$0xf]
      %v258 = vld [vmem:[%s212] sm:$0xf]
      %v259 = vld [vmem:[%s212 + $0x4] sm:$0xf]
      %v260 = vld [vmem:[%s212 + $0x8] sm:$0xf]
      %v261 = vld [vmem:[%s212 + $0xc] sm:$0xf]
      %v262 = vld [vmem:[%s212 + $0x10] sm:$0xf]
      %v263 = vld [vmem:[%s212 + $0x14] sm:$0xf]
      %v264 = vld [vmem:[%s212 + $0x18] sm:$0xf]
      %v265 = vld [vmem:[%s212 + $0x1c] sm:$0xf]
      %v266 = vld [vmem:[%s212 + $0x20] sm:$0xf]
      %v267 = vld [vmem:[%s212 + $0x24] sm:$0xf]
      %v268 = vld [vmem:[%s215] sm:$0x1]
      %v270 = vlaneseq
      %v271 = vshrl.u32 %v270, 7
      %v272 = vsub.s32 0, %v271
      %v273 = vrot.slane %v268, %v272
      %v307 = vunpack.c.l.b16 %v226
      %v308 = vunpack.c.l.b16 %v227
      %v309 = vunpack.c.l.b16 %v228
      %v310 = vunpack.c.l.b16 %v229
      %v311 = vunpack.c.l.b16 %v230
      %v312 = vunpack.c.l.b16 %v231
      %v313 = vunpack.c.l.b16 %v232
      %v314 = vunpack.c.l.b16 %v233
      %v315 = vunpack.c.l.b16 %v234
      %v316 = vunpack.c.l.b16 %v235
      %v317 = vunpack.c.l.b16 %v236
      %v318 = vunpack.c.l.b16 %v237
      %v319 = vunpack.c.l.b16 %v238
      %v320 = vunpack.c.l.b16 %v239
      %v321 = vunpack.c.l.b16 %v240
      %v322 = vunpack.c.l.b16 %v241
      %v323 = vunpack.c.l.b16 %v242
      %v324 = vunpack.c.l.b16 %v243
      %v325 = vunpack.c.l.b16 %v244
      %v326 = vunpack.c.l.b16 %v245
      %v327 = vunpack.c.l.b16 %v246
      %v328 = vunpack.c.l.b16 %v247
      %v329 = vunpack.c.l.b16 %v248
      %v330 = vunpack.c.l.b16 %v249
      %v331 = vunpack.c.l.b16 %v250
      %v332 = vunpack.c.l.b16 %v251
      %v333 = vunpack.c.l.b16 %v252
      %v334 = vunpack.c.l.b16 %v253
      %v335 = vunpack.c.l.b16 %v254
      %v336 = vunpack.c.l.b16 %v255
      %v337 = vunpack.c.l.b16 %v256
      %v338 = vunpack.c.l.b16 %v257
      %v339 = vpack.c.b16 %v308, %v307
      %v340 = vpack.c.b16 %v310, %v309
      %v341 = vpack.c.b16 %v312, %v311
      %v342 = vpack.c.b16 %v314, %v313
      %v343 = vpack.c.b16 %v316, %v315
      %v344 = vpack.c.b16 %v318, %v317
      %v345 = vpack.c.b16 %v320, %v319
      %v346 = vpack.c.b16 %v322, %v321
      %v347 = vpack.c.b16 %v324, %v323
      %v348 = vpack.c.b16 %v326, %v325
      %v349 = vpack.c.b16 %v328, %v327
      %v350 = vpack.c.b16 %v330, %v329
      %v351 = vpack.c.b16 %v332, %v331
      %v352 = vpack.c.b16 %v334, %v333
      %v353 = vpack.c.b16 %v336, %v335
      %v354 = vpack.c.b16 %v338, %v337
      %v365 = vunpack.c.l.b16 %v258
      %v366 = vunpack.c.l.b16 %v259
      %v367 = vunpack.c.l.b16 %v260
      %v368 = vunpack.c.l.b16 %v261
      %v369 = vunpack.c.l.b16 %v262
      %v370 = vunpack.c.l.b16 %v263
      %v371 = vunpack.c.l.b16 %v264
      %v372 = vunpack.c.l.b16 %v265
      %v373 = vunpack.c.l.b16 %v266
      %v374 = vunpack.c.l.b16 %v267
      %v375 = vpack.c.b16 %v366, %v365
      %v376 = vpack.c.b16 %v368, %v367
      %v377 = vpack.c.b16 %v370, %v369
      %v378 = vpack.c.b16 %v372, %v371
      %v379 = vpack.c.b16 %v374, %v373
      %vm385 = vcmask 654336
      %v387 = vsel %vm385, %v339, 0
      %v390 = vsel %vm385, %v340, 0
      %v393 = vsel %vm385, %v341, 0
      %v396 = vsel %vm385, %v342, 0
      %v399 = vsel %vm385, %v343, 0
      %v402 = vsel %vm385, %v344, 0
      %v405 = vsel %vm385, %v345, 0
      %v408 = vsel %vm385, %v346, 0
      %v411 = vsel %vm385, %v347, 0
      %v414 = vsel %vm385, %v348, 0
      %v417 = vsel %vm385, %v349, 0
      %v420 = vsel %vm385, %v350, 0
      %v423 = vsel %vm385, %v351, 0
      %v426 = vsel %vm385, %v352, 0
      %v429 = vsel %vm385, %v353, 0
      %v432 = vsel %vm385, %v354, 0
      %434 = vmatprep.subr.bf16.mxu0 0
      %435 = vmatpush1.bf16.msra.mxu0 %v375
      %436 = vmatprep.subr.bf16.mxu0 0
      %437 = vmatpush1.bf16.msra.mxu0 %v376
      %438 = vmatprep.subr.bf16.mxu0 0
      %439 = vmatpush1.bf16.msra.mxu0 %v377
      %440 = vmatprep.subr.bf16.mxu0 0
      %441 = vmatpush1.bf16.msra.mxu0 %v378
      %442 = vmatprep.subr.bf16.mxu0 0
      %443 = vmatpush1.bf16.msra.mxu0 %v379
      %444 = vmatprep.subr.bf16.mxu0 0
      %445 = vmatpush1.bf16.msra.mxu0 0
      %446 = vmatprep.subr.bf16.mxu0 0
      %447 = vmatpush1.bf16.msra.mxu0 0
      %448 = vmatprep.subr.bf16.mxu0 0
      %449 = vmatpush1.bf16.msra.mxu0 0
      %450 = vmatprep.subr.bf16.mxu0 0
      %451 = vmatpush1.bf16.msra.mxu0 0
      %452 = vmatprep.subr.bf16.mxu0 0
      %453 = vmatpush1.bf16.msra.mxu0 0
      %454 = vmatprep.subr.bf16.mxu0 0
      %455 = vmatpush1.bf16.msra.mxu0 0
      %456 = vmatprep.subr.bf16.mxu0 0
      %457 = vmatpush1.bf16.msra.mxu0 0
      %458 = vmatprep.subr.bf16.mxu0 0
      %459 = vmatpush1.bf16.msra.mxu0 0
      %460 = vmatprep.subr.bf16.mxu0 0
      %461 = vmatpush1.bf16.msra.mxu0 0
      %462 = vmatprep.subr.bf16.mxu0 0
      %463 = vmatpush1.bf16.msra.mxu0 0
      %464 = vmatprep.subr.bf16.mxu0 0
      %465 = vmatpush1.bf16.msra.mxu0 0
      %466 = vmatprep.mubr.bf16.mxu0 0
      %467 = vmatmul.mubr.bf16.gmra.mrb[0].mxu0 %v387
      %v468 = vpop.f32.mrb[0].mxu0
      %v469 = vadd.f32 %v273, %v468
      %v470 = vpop.f32.mrb[0].mxu0
      %v471 = vpop.f32.mrb[0].mxu0
      %v472 = vadd.f32 %v273, %v471
      %v473 = vpop.f32.mrb[0].mxu0
      %474 = vmatprep.mubr.bf16.mxu0 0
      %475 = vmatmul.mubr.bf16.gmra.mrb[0].mxu0 %v390
      %v476 = vpop.f32.mrb[0].mxu0
      %v477 = vadd.f32 %v273, %v476
      %v478 = vpop.f32.mrb[0].mxu0
      %v479 = vpop.f32.mrb[0].mxu0
      %v480 = vadd.f32 %v273, %v479
      %v481 = vpop.f32.mrb[0].mxu0
      %482 = vmatprep.mubr.bf16.mxu0 0
      %483 = vmatmul.mubr.bf16.gmra.mrb[0].mxu0 %v393
      %v484 = vpop.f32.mrb[0].mxu0
      %v485 = vadd.f32 %v273, %v484
      %v486 = vpop.f32.mrb[0].mxu0
      %v487 = vpop.f32.mrb[0].mxu0
      %v488 = vadd.f32 %v273, %v487
      %v489 = vpop.f32.mrb[0].mxu0
      %490 = vmatprep.mubr.bf16.mxu0 0
      %491 = vmatmul.mubr.bf16.gmra.mrb[0].mxu0 %v396
      %v492 = vpop.f32.mrb[0].mxu0
      %v493 = vadd.f32 %v273, %v492
      %v494 = vpop.f32.mrb[0].mxu0
      %v495 = vpop.f32.mrb[0].mxu0
      %v496 = vadd.f32 %v273, %v495
      %v497 = vpop.f32.mrb[0].mxu0
      %498 = vmatprep.mubr.bf16.mxu0 0
      %499 = vmatmul.mubr.bf16.gmra.mrb[0].mxu0 %v399
      %v500 = vpop.f32.mrb[0].mxu0
      %v501 = vadd.f32 %v273, %v500
      %v502 = vpop.f32.mrb[0].mxu0
      %v503 = vpop.f32.mrb[0].mxu0
      %v504 = vadd.f32 %v273, %v503
      %v505 = vpop.f32.mrb[0].mxu0
      %506 = vmatprep.mubr.bf16.mxu0 0
      %507 = vmatmul.mubr.bf16.gmra.mrb[0].mxu0 %v402
      %v508 = vpop.f32.mrb[0].mxu0
      %v509 = vadd.f32 %v273, %v508
      %v510 = vpop.f32.mrb[0].mxu0
      %v511 = vpop.f32.mrb[0].mxu0
      %v512 = vadd.f32 %v273, %v511
      %v513 = vpop.f32.mrb[0].mxu0
      %514 = vmatprep.mubr.bf16.mxu0 0
      %515 = vmatmul.mubr.bf16.gmra.mrb[0].mxu0 %v405
      %v516 = vpop.f32.mrb[0].mxu0
      %v517 = vadd.f32 %v273, %v516
      %v518 = vpop.f32.mrb[0].mxu0
      %v519 = vpop.f32.mrb[0].mxu0
      %v520 = vadd.f32 %v273, %v519
      %v521 = vpop.f32.mrb[0].mxu0
      %522 = vmatprep.mubr.bf16.mxu0 0
      %523 = vmatmul.mubr.bf16.gmra.mrb[0].mxu0 %v408
      %v524 = vpop.f32.mrb[0].mxu0
      %v525 = vadd.f32 %v273, %v524
      %v526 = vpop.f32.mrb[0].mxu0
      %v527 = vpop.f32.mrb[0].mxu0
      %v528 = vadd.f32 %v273, %v527
      %v529 = vpop.f32.mrb[0].mxu0
      %530 = vmatprep.mubr.bf16.mxu0 0
      %531 = vmatmul.mubr.bf16.gmra.mrb[0].mxu0 %v411
      %v532 = vpop.f32.mrb[0].mxu0
      %v533 = vadd.f32 %v273, %v532
      %v534 = vpop.f32.mrb[0].mxu0
      %v535 = vpop.f32.mrb[0].mxu0
      %v536 = vadd.f32 %v273, %v535
      %v537 = vpop.f32.mrb[0].mxu0
      %538 = vmatprep.mubr.bf16.mxu0 0
      %539 = vmatmul.mubr.bf16.gmra.mrb[0].mxu0 %v414
      %v540 = vpop.f32.mrb[0].mxu0
      %v541 = vadd.f32 %v273, %v540
      %v542 = vpop.f32.mrb[0].mxu0
      %v543 = vpop.f32.mrb[0].mxu0
      %v544 = vadd.f32 %v273, %v543
      %v545 = vpop.f32.mrb[0].mxu0
      %546 = vmatprep.mubr.bf16.mxu0 0
      %547 = vmatmul.mubr.bf16.gmra.mrb[0].mxu0 %v417
      %v548 = vpop.f32.mrb[0].mxu0
      %v549 = vadd.f32 %v273, %v548
      %v550 = vpop.f32.mrb[0].mxu0
      %v551 = vpop.f32.mrb[0].mxu0
      %v552 = vadd.f32 %v273, %v551
      %v553 = vpop.f32.mrb[0].mxu0
      %554 = vmatprep.mubr.bf16.mxu0 0
      %555 = vmatmul.mubr.bf16.gmra.mrb[0].mxu0 %v420
      %v556 = vpop.f32.mrb[0].mxu0
      %v557 = vadd.f32 %v273, %v556
      %v558 = vpop.f32.mrb[0].mxu0
      %v559 = vpop.f32.mrb[0].mxu0
      %v560 = vadd.f32 %v273, %v559
      %v561 = vpop.f32.mrb[0].mxu0
      %562 = vmatprep.mubr.bf16.mxu0 0
      %563 = vmatmul.mubr.bf16.gmra.mrb[0].mxu0 %v423
      %v564 = vpop.f32.mrb[0].mxu0
      %v565 = vadd.f32 %v273, %v564
      %v566 = vpop.f32.mrb[0].mxu0
      %v567 = vpop.f32.mrb[0].mxu0
      %v568 = vadd.f32 %v273, %v567
      %v569 = vpop.f32.mrb[0].mxu0
      %570 = vmatprep.mubr.bf16.mxu0 0
      %571 = vmatmul.mubr.bf16.gmra.mrb[0].mxu0 %v426
      %v572 = vpop.f32.mrb[0].mxu0
      %v573 = vadd.f32 %v273, %v572
      %v574 = vpop.f32.mrb[0].mxu0
      %v575 = vpop.f32.mrb[0].mxu0
      %v576 = vadd.f32 %v273, %v575
      %v577 = vpop.f32.mrb[0].mxu0
      %578 = vmatprep.mubr.bf16.mxu0 0
      %579 = vmatmul.mubr.bf16.gmra.mrb[0].mxu0 %v429
      %v580 = vpop.f32.mrb[0].mxu0
      %v581 = vadd.f32 %v273, %v580
      %v582 = vpop.f32.mrb[0].mxu0
      %v583 = vpop.f32.mrb[0].mxu0
      %v584 = vadd.f32 %v273, %v583
      %v585 = vpop.f32.mrb[0].mxu0
      %586 = vmatprep.mubr.bf16.mxu0 0
      %587 = vmatmul.mubr.bf16.gmra.mrb[0].mxu0 %v432
      %v588 = vpop.f32.mrb[0].mxu0
      %v589 = vadd.f32 %v273, %v588
      %v590 = vpop.f32.mrb[0].mxu0
      %v591 = vpop.f32.mrb[0].mxu0
      %v592 = vadd.f32 %v273, %v591
      %v593 = vpop.f32.mrb[0].mxu0
      %594 = vdwg.mxu0
      %v595 = vtanh.pop %v469
      %v596 = vtanh.pop %v472
      %v597 = vtanh.pop %v477
      %v598 = vtanh.pop %v480
      %v599 = vtanh.pop %v485
      %v600 = vtanh.pop %v488
      %v601 = vtanh.pop %v493
      %v602 = vtanh.pop %v496
      %v603 = vtanh.pop %v501
      %v604 = vtanh.pop %v504
      %v605 = vtanh.pop %v509
      %v606 = vtanh.pop %v512
      %v607 = vtanh.pop %v517
      %v608 = vtanh.pop %v520
      %v609 = vtanh.pop %v525
      %v610 = vtanh.pop %v528
      %v611 = vtanh.pop %v533
      %v612 = vtanh.pop %v536
      %v613 = vtanh.pop %v541
      %v614 = vtanh.pop %v544
      %v615 = vtanh.pop %v549
      %v616 = vtanh.pop %v552
      %v617 = vtanh.pop %v557
      %v618 = vtanh.pop %v560
      %v619 = vtanh.pop %v565
      %v620 = vtanh.pop %v568
      %v621 = vtanh.pop %v573
      %v622 = vtanh.pop %v576
      %v623 = vtanh.pop %v581
      %v624 = vtanh.pop %v584
      %v625 = vtanh.pop %v589
      %v626 = vtanh.pop %v592
      %627 = vst [vmem:[%s223] sm:$0xff] %v595
      %628 = vst [vmem:[%s223 + $0x8] sm:$0xff] %v596
      %629 = vst [vmem:[%s223 + $0x10] sm:$0xff] %v597
      %630 = vst [vmem:[%s223 + $0x18] sm:$0xff] %v598
      %631 = vst [vmem:[%s223 + $0x20] sm:$0xff] %v599
      %632 = vst [vmem:[%s223 + $0x28] sm:$0xff] %v600
      %633 = vst [vmem:[%s223 + $0x30] sm:$0xff] %v601
      %634 = vst [vmem:[%s223 + $0x38] sm:$0xff] %v602
      %635 = vst [vmem:[%s223 + $0x40] sm:$0xff] %v603
      %636 = vst [vmem:[%s223 + $0x48] sm:$0xff] %v604
      %637 = vst [vmem:[%s223 + $0x50] sm:$0xff] %v605
      %638 = vst [vmem:[%s223 + $0x58] sm:$0xff] %v606
      %639 = vst [vmem:[%s223 + $0x60] sm:$0xff] %v607
      %640 = vst [vmem:[%s223 + $0x68] sm:$0xff] %v608
      %641 = vst [vmem:[%s223 + $0x70] sm:$0xff] %v609
      %642 = vst [vmem:[%s223 + $0x78] sm:$0xff] %v610
      %643 = vst [vmem:[%s223 + $0x80] sm:$0xff] %v611
      %644 = vst [vmem:[%s223 + $0x88] sm:$0xff] %v612
      %645 = vst [vmem:[%s223 + $0x90] sm:$0xff] %v613
      %646 = vst [vmem:[%s223 + $0x98] sm:$0xff] %v614
      %647 = vst [vmem:[%s223 + $0xa0] sm:$0xff] %v615
      %648 = vst [vmem:[%s223 + $0xa8] sm:$0xff] %v616
      %649 = vst [vmem:[%s223 + $0xb0] sm:$0xff] %v617
      %650 = vst [vmem:[%s223 + $0xb8] sm:$0xff] %v618
      %651 = vst [vmem:[%s223 + $0xc0] sm:$0xff] %v619
      %652 = vst [vmem:[%s223 + $0xc8] sm:$0xff] %v620
      %653 = vst [vmem:[%s223 + $0xd0] sm:$0xff] %v621
      %654 = vst [vmem:[%s223 + $0xd8] sm:$0xff] %v622
      %655 = vst [vmem:[%s223 + $0xe0] sm:$0xff] %v623
      %656 = vst [vmem:[%s223 + $0xe8] sm:$0xff] %v624
      %657 = vst [vmem:[%s223 + $0xf0] sm:$0xff] %v625
      %658 = vst [vmem:[%s223 + $0xf8] sm:$0xff] %v626
      %s659 = smul.u32 32, %s18
      %p660 = scmp.lt.s32.totalorder %s659, 63
      %s661 = scalar_select %p660, %s659, 63
      %p662 = scmp.lt.s32.totalorder %s19, 0
      %s663 = scalar_select %p662, %s19, 0
      %s664 = sadd.s32 %s663, %s661
      %s665 = smul.addr %s664, 8
      %s666 = scalar_lea.vmem %s3, %s665
      // Predicated region
      $region33: #{makeup_gan_forward.110} parent=31 // pred_check
        %p667 = pneg %p124
      $region34: #{makeup_gan_forward.110} parent=31 // pred_check_branch
        %669 = sbr.rel (%p667) target = $region36
      $region35: #{makeup_gan_forward.110} parent=31 // pred_region
        %s670 = smul.u32 32, %s18
      $region36: #{makeup_gan_forward.110} parent=31 // pred_fallthru
        _
    $region32: #{makeup_gan_forward.110} parent=5 // pred_fallthru
      _
    %p671 = scmp.le.s32.totalorder 2, %s9
    // Predicated region
    $region37: #{makeup_gan_forward.110} parent=5 // pred_check
      %p672 = pneg %p671
    $region38: #{makeup_gan_forward.110} parent=5 // pred_check_branch
      %674 = sbr.rel (%p672) target = $region40
    $region39: #{makeup_gan_forward.110} parent=5 // pred_region
      %s675 = ssub.s32 %s9, 2
      // Predicated region
      $region41: #{makeup_gan_forward.110} parent=39 // pred_check
        %p676 = pneg %p130
      $region42: #{makeup_gan_forward.110} parent=39 // pred_check_branch
        %678 = sbr.rel (%p676) target = $region44
      $region43: #{makeup_gan_forward.110} parent=39 // pred_region
        %s679 = smul.u32 32, %s20
        %p680 = scmp.lt.s32.totalorder %s679, 63
        %s681 = scalar_select %p680, %s679, 63
        %p682 = scmp.lt.s32.totalorder %s21, 0
        %s683 = scalar_select %p682, %s21, 0
        %s684 = sadd.s32 %s683, %s681
        %s685 = smul.addr %s684, 8
        %s686 = scalar_lea.vmem %s3, %s685
      $region44: #{makeup_gan_forward.110} parent=39 // pred_fallthru
        _
    $region40: #{makeup_gan_forward.110} parent=5 // pred_fallthru
      _
  $region6: #{makeup_gan_forward.110} parent=0 // loop_footer
    %s13 = sadd.s32 1, %s9
  $region7: #{makeup_gan_forward.110} parent=0 // loop_footer_branch
    %8 = sbr.rel target = $region3
  $region8: #{makeup_gan_forward.110} parent=0 // loop_exit
    _

</llo_original>
